<compile_context>
chip_gen: v5e
topology: v5e:2x2
jax: 0.10.0
libtpu: 0.0.40
codegen_flags: <defaults>
</compile_context>

<pallas_src>
import functools

import jax
import jax.numpy as jnp
import numpy as np
from jax.experimental import pallas as pl
from jax.experimental.pallas import tpu as pltpu


def _round_up(a, b):
    return ((a + b - 1) // b) * b


# ---------------------------------------------------------------------------
# Kernel 1: value-branch conv as a single K=27*cin MXU dot + masked BN partials
# ---------------------------------------------------------------------------
def _bn_stats_kernel(xa_ref, xh_ref, wv_ref, bv_ref, valid_ref,
                     stats_ref, xbuf_ref, stk_ref, *, offs, cin, cout):
    tm = xa_ref.shape[1]

    # Contiguous [tile | halo] bf16 window in VMEM.
    xbuf_ref[:, :tm] = xa_ref[...]
    xbuf_ref[:, tm:] = xh_ref[...]

    # Stacked RHS: row t*cin + ci holds x[ci, q + off_t].  Each lane-misaligned
    # shift is paid exactly once here, then a single dense matmul consumes it.
    for t, off in enumerate(offs):
        stk_ref[t * cin:(t + 1) * cin, :] = xbuf_ref[:, off:off + tm]

    # One (cout, 27*cin) @ (27*cin, tm) MXU matmul, f32 accumulation.
    xc = jnp.dot(wv_ref[...], stk_ref[...],
                 preferred_element_type=jnp.float32) + bv_ref[...]

    # Masked partial BN statistics (sum / sum-of-squares over valid voxels).
    v = valid_ref[...].astype(jnp.float32)            # (1, tm), 1.0 at voxels
    xcv = xc * v
    s = jnp.sum(xcv, axis=1, keepdims=True)           # (cout, 1)
    ss = jnp.sum(xcv * xc, axis=1, keepdims=True)     # (cout, 1)
    part = jnp.concatenate([s, ss], axis=0)           # (2*cout, 1)
    srows = stats_ref.shape[1]
    if 2 * cout < srows:                               # static padding to 8 rows
        part = jnp.pad(part, ((0, srows - 2 * cout), (0, 0)))
    stats_ref[0] = part


# ---------------------------------------------------------------------------
# Kernel 2: both conv branches (recomputed) + BN apply + LeakyReLU * sigmoid
# ---------------------------------------------------------------------------
def _conv_bn_gate_kernel(xa_ref, xh_ref, w_ref, b_ref, scale_ref, shift_ref,
                         o_ref, xbuf_ref, stk_ref, *, offs, cin, cout):
    tm = xa_ref.shape[1]

    xbuf_ref[:, :tm] = xa_ref[...]
    xbuf_ref[:, tm:] = xh_ref[...]
    for t, off in enumerate(offs):
        stk_ref[t * cin:(t + 1) * cin, :] = xbuf_ref[:, off:off + tm]

    # Fused dual-branch conv: one (2*cout, 27*cin) @ (27*cin, tm) matmul.
    acc = jnp.dot(w_ref[...], stk_ref[...],
                  preferred_element_type=jnp.float32) + b_ref[...]
    x, m = acc[:cout, :], acc[cout:, :]

    bn = x * scale_ref[...] + shift_ref[...]          # per-channel affine
    act = jnp.where(bn >= 0, bn, 0.2 * bn)            # LeakyReLU(0.2)
    o_ref[...] = (act * jax.nn.sigmoid(m)).astype(o_ref.dtype)


# ---------------------------------------------------------------------------
# Wrapper
# ---------------------------------------------------------------------------
def lesion_gate_deconv(x_ncdhw, params, *, k=3, pad=1, tm_target=32768,
                       eps=1e-5):
    wx, bx, wm, bm, gamma, beta = params
    cout = wx.shape[0]
    cout2 = 2 * cout
    N, cin, d0, h0, w0 = x_ncdhw.shape
    ktaps = k ** 3

    # --- glue: bf16 channels-first, nearest x2 (single broadcast), halo pad --
    x_low = jnp.transpose(x_ncdhw, (1, 0, 2, 3, 4)).astype(jnp.bfloat16)
    D, H, W = 2 * d0, 2 * h0, 2 * w0
    xu = jnp.broadcast_to(x_low[:, :, :, None, :, None, :, None],
                          (cin, N, d0, 2, h0, 2, w0, 2)).reshape(cin, N, D, H, W)
    Dp, Hp, Wp = D + 2 * pad, H + 2 * pad, W + 2 * pad
    xp = jnp.pad(xu, ((0, 0), (0, 0), (pad, pad), (pad, pad), (pad, pad)))

    Qn = Dp * Hp * Wp                                  # padded voxels / sample
    Q = N * Qn

    # tap offsets in the padded flattened domain; halo / tile sizing
    offs = tuple(kd * Hp * Wp + kh * Wp + kw
                 for kd in range(k) for kh in range(k) for kw in range(k))
    halo = _round_up(max(offs), 128)
    tm = _round_up(min(max(tm_target, halo), _round_up(Q, halo)), halo)
    r = tm // halo
    G = -(-Q // tm)                                    # ceil
    Qt = G * tm

    x_flat = jnp.pad(xp.reshape(cin, Q), ((0, 0), (0, Qt + halo - Q)))

    # bf16 validity mask (1.0 at true output voxels) — only read by kernel 1
    valid = jnp.pad(jnp.ones((N, D, H, W), jnp.bfloat16),
                    ((0, 0), (0, 2 * pad), (0, 2 * pad), (0, 2 * pad)))
    valid = jnp.pad(valid.reshape(1, Q), ((0, 0), (0, Qt - Q)))

    # stacked weights: taps (kd,kh,kw)-major, cin-minor -> (cout*, 27*cin) bf16
    def stack_w(w):
        return jnp.transpose(w, (0, 2, 3, 4, 1)).reshape(
            w.shape[0], ktaps * cin).astype(jnp.bfloat16)

    wv_stk = stack_w(wx)                                    # (cout,  27*cin)
    w_stk = stack_w(jnp.concatenate([wx, wm], axis=0))      # (2cout, 27*cin)
    bv_col = bx.astype(jnp.float32).reshape(cout, 1)
    b_all = jnp.concatenate([bx, bm]).astype(jnp.float32).reshape(cout2, 1)

    grid = (G,)
    cparams = pltpu.CompilerParams(
        dimension_semantics=("parallel",),        # megacore / v7x dual-TC
        vmem_limit_bytes=48 * 1024 * 1024)        # fits v7x's 64 MiB/TC

    srows = _round_up(cout2, 8)

    # --- kernel 1: masked BN partial stats of the value-branch conv ---------
    kern1 = functools.partial(_bn_stats_kernel, offs=offs, cin=cin, cout=cout)
    stats = pl.pallas_call(
        kern1,
        out_shape=jax.ShapeDtypeStruct((G, srows, 1), jnp.float32),
        grid=grid,
        in_specs=[
            pl.BlockSpec((cin, tm), lambda i: (0, i)),               # tile
            pl.BlockSpec((cin, halo), lambda i: (0, r * (i + 1))),   # halo
            pl.BlockSpec((cout, ktaps * cin), lambda i: (0, 0)),     # weights
            pl.BlockSpec((cout, 1), lambda i: (0, 0)),               # bias
            pl.BlockSpec((1, tm), lambda i: (0, i)),                 # mask
        ],
        out_specs=pl.BlockSpec((1, srows, 1), lambda i: (i, 0, 0)),
        scratch_shapes=[pltpu.VMEM((cin, tm + halo), jnp.bfloat16),
                        pltpu.VMEM((ktaps * cin, tm), jnp.bfloat16)],
        compiler_params=cparams,
    )(x_flat, x_flat, wv_stk, bv_col, valid)

    # --- tiny reduce of per-tile partials -> BN scale / shift ---------------
    # NOTE: E[x^2]-E[x]^2 in f32; fine at these magnitudes (training-mode BN,
    # biased variance, matching PyTorch).
    P = N * D * H * W
    tot = jnp.sum(stats[:, :cout2, 0], axis=0)               # (2*cout,)
    mean = tot[:cout] / P
    var = jnp.maximum(tot[cout:] / P - mean * mean, 0.0)
    scale_v = gamma * jax.lax.rsqrt(var + eps)
    shift_v = beta - mean * scale_v
    scale = scale_v.astype(jnp.float32).reshape(cout, 1)
    shift = shift_v.astype(jnp.float32).reshape(cout, 1)

    # --- kernel 2: recompute both conv branches + BN + LeakyReLU*sigmoid ----
    kern2 = functools.partial(_conv_bn_gate_kernel, offs=offs, cin=cin,
                              cout=cout)
    out_flat = pl.pallas_call(
        kern2,
        out_shape=jax.ShapeDtypeStruct((cout, Qt), jnp.float32),
        grid=grid,
        in_specs=[
            pl.BlockSpec((cin, tm), lambda i: (0, i)),
            pl.BlockSpec((cin, halo), lambda i: (0, r * (i + 1))),
            pl.BlockSpec((cout2, ktaps * cin), lambda i: (0, 0)),
            pl.BlockSpec((cout2, 1), lambda i: (0, 0)),
            pl.BlockSpec((cout, 1), lambda i: (0, 0)),
            pl.BlockSpec((cout, 1), lambda i: (0, 0)),
        ],
        out_specs=pl.BlockSpec((cout, tm), lambda i: (0, i)),
        scratch_shapes=[pltpu.VMEM((cin, tm + halo), jnp.bfloat16),
                        pltpu.VMEM((ktaps * cin, tm), jnp.bfloat16)],
        compiler_params=cparams,
    )(x_flat, x_flat, w_stk, b_all, scale, shift)

    # --- glue: extract valid voxels, NCDHW to match PyTorch -----------------
    # TODO(synk): callers that accept channels-first flat output can consume
    #             out_flat directly and skip this transpose copy.
    y = out_flat[:, :Q].reshape(cout, N, Dp, Hp, Wp)[:, :, :D, :H, :W]
    return jnp.transpose(y, (1, 0, 2, 3, 4))


# ---------------------------------------------------------------------------
# Pure-JAX f32 reference (matches the PyTorch module) for a sanity check
# ---------------------------------------------------------------------------
def _reference(x_ncdhw, params, eps=1e-5):
    wx, bx, wm, bm, gamma, beta = params
    x = jnp.repeat(jnp.repeat(jnp.repeat(x_ncdhw, 2, axis=2), 2, axis=3),
                   2, axis=4)

    def conv3d(x, w, b):
        y = jax.lax.conv_general_dilated(
            x, w, window_strides=(1, 1, 1), padding=[(1, 1)] * 3,
            dimension_numbers=("NCDHW", "OIDHW", "NCDHW"))
        return y + b[None, :, None, None, None]

    xc = conv3d(x, wx, bx)
    mc = conv3d(x, wm, bm)
    mean = jnp.mean(xc, axis=(0, 2, 3, 4), keepdims=True)
    var = jnp.mean((xc - mean) ** 2, axis=(0, 2, 3, 4), keepdims=True)
    g = gamma[None, :, None, None, None]
    b = beta[None, :, None, None, None]
    xbn = (xc - mean) / jnp.sqrt(var + eps) * g + b
    act = jnp.where(xbn >= 0, xbn, 0.2 * xbn)
    return act * jax.nn.sigmoid(mc)


# ---------------------------------------------------------------------------
if __name__ == "__main__":
    # module config: LesionGateDeConv(scale_factor=2, in_ch=4, out_ch=4,
    #                                 kernel_size=3, stride=1, padding=1)
    N, Cin, Cout, k = 2, 4, 4, 3
    D0, H0, W0 = 4, 8, 8                       # upsampled to (8, 16, 16)

    key = jax.random.PRNGKey(0)
    ks = jax.random.split(key, 7)
    x = jax.random.normal(ks[0], (N, Cin, D0, H0, W0), jnp.float32)

    fan_in = Cin * k ** 3
    wx = jax.random.normal(ks[1], (Cout, Cin, k, k, k), jnp.float32) / np.sqrt(fan_in)
    bx = jax.random.normal(ks[2], (Cout,), jnp.float32) * 0.1
    wm = jax.random.normal(ks[3], (Cout, Cin, k, k, k), jnp.float32) / np.sqrt(fan_in)
    bm = jax.random.normal(ks[4], (Cout,), jnp.float32) * 0.1
    gamma = 1.0 + 0.1 * jax.random.normal(ks[5], (Cout,), jnp.float32)
    beta = 0.1 * jax.random.normal(ks[6], (Cout,), jnp.float32)
    params = (wx, bx, wm, bm, gamma, beta)

    ref = jax.block_until_ready(_reference(x, params))

    # default (large-tile) path: single grid step for this small test volume
    out = jax.block_until_ready(lesion_gate_deconv(x, params))
    np.testing.assert_allclose(np.asarray(out), np.asarray(ref),
                               rtol=2e-2, atol=2e-2)

    # multi-tile path: small tm_target exercises halo indexing across tiles
    out_mt = jax.block_until_ready(lesion_gate_deconv(x, params,
                                                      tm_target=1536))
    np.testing.assert_allclose(np.asarray(out_mt), np.asarray(ref),
                               rtol=2e-2, atol=2e-2)

    print("KERNEL_OK")
</pallas_src>

<mosaic_0001>
module attributes {stable_mosaic.version = 11 : i64} {
  func.func @_bn_stats_kernel(%arg0: i32, %arg1: memref<4x6912xbf16, #tpu.memory_space<vmem>>, %arg2: memref<4x768xbf16, #tpu.memory_space<vmem>>, %arg3: memref<4x108xbf16, #tpu.memory_space<vmem>>, %arg4: memref<4x1xf32, #tpu.memory_space<vmem>>, %arg5: memref<1x6912xbf16, #tpu.memory_space<vmem>>, %arg6: memref<1x8x1xf32, #tpu.memory_space<vmem>>, %arg7: memref<4x7680xbf16, #tpu.memory_space<vmem>>, %arg8: memref<108x6912xbf16, #tpu.memory_space<vmem>>) attributes {dimension_semantics = [#tpu.dimension_semantics<parallel>], iteration_bounds = array<i64: 1>, scalar_prefetch = 0 : i64, scratch_operands = 2 : i64, tpu.core_type = #tpu.core_type<tc>, window_params = [{transform_indices = @transform_0, window_bounds = array<i64: 4, 6912>}, {transform_indices = @transform_1, window_bounds = array<i64: 4, 768>}, {pipeline_mode = #tpu.pipeline_mode<synchronous>, transform_indices = @transform_2, window_bounds = array<i64: 4, 108>}, {pipeline_mode = #tpu.pipeline_mode<synchronous>, transform_indices = @transform_3, window_bounds = array<i64: 4, 1>}, {transform_indices = @transform_4, window_bounds = array<i64: 1, 6912>}, {transform_indices = @transform_5, window_bounds = array<i64: 1, 8, 1>}]} {
    %c0 = arith.constant 0 : index
    %c0_0 = arith.constant 0 : index
    %0 = vector.load %arg1[%c0, %c0_0] : memref<4x6912xbf16, #tpu.memory_space<vmem>>, vector<4x6912xbf16>
    %c0_1 = arith.constant 0 : index
    %c0_2 = arith.constant 0 : index
    %1 = vector.load %arg7[%c0_1, %c0_2] : memref<4x7680xbf16, #tpu.memory_space<vmem>>, vector<4x6912xbf16>
    tpu.vector_store %arg7[%c0_1, %c0_2], %0 {strides = array<i32>} : memref<4x7680xbf16, #tpu.memory_space<vmem>>, vector<4x6912xbf16>,
    %c0_3 = arith.constant 0 : index
    %c0_4 = arith.constant 0 : index
    %2 = vector.load %arg2[%c0_3, %c0_4] : memref<4x768xbf16, #tpu.memory_space<vmem>>, vector<4x768xbf16>
    %c0_5 = arith.constant 0 : index
    %c6912 = arith.constant 6912 : index
    %3 = vector.load %arg7[%c0_5, %c6912] : memref<4x7680xbf16, #tpu.memory_space<vmem>>, vector<4x768xbf16>
    tpu.vector_store %arg7[%c0_5, %c6912], %2 {strides = array<i32>} : memref<4x7680xbf16, #tpu.memory_space<vmem>>, vector<4x768xbf16>,
    %c0_6 = arith.constant 0 : index
    %c0_7 = arith.constant 0 : index
    %4 = vector.load %arg7[%c0_6, %c0_7] : memref<4x7680xbf16, #tpu.memory_space<vmem>>, vector<4x6912xbf16>
    %c0_8 = arith.constant 0 : index
    %c0_9 = arith.constant 0 : index
    %5 = vector.load %arg8[%c0_8, %c0_9] : memref<108x6912xbf16, #tpu.memory_space<vmem>>, vector<4x6912xbf16>
    tpu.vector_store %arg8[%c0_8, %c0_9], %4 {strides = array<i32>} : memref<108x6912xbf16, #tpu.memory_space<vmem>>, vector<4x6912xbf16>,
    %c0_10 = arith.constant 0 : index
    %c1 = arith.constant 1 : index
    %6 = vector.load %arg7[%c0_10, %c1] : memref<4x7680xbf16, #tpu.memory_space<vmem>>, vector<4x6912xbf16>
    %c4 = arith.constant 4 : index
    %c0_11 = arith.constant 0 : index
    %7 = vector.load %arg8[%c4, %c0_11] : memref<108x6912xbf16, #tpu.memory_space<vmem>>, vector<4x6912xbf16>
    tpu.vector_store %arg8[%c4, %c0_11], %6 {strides = array<i32>} : memref<108x6912xbf16, #tpu.memory_space<vmem>>, vector<4x6912xbf16>,
    %c0_12 = arith.constant 0 : index
    %c2 = arith.constant 2 : index
    %8 = vector.load %arg7[%c0_12, %c2] : memref<4x7680xbf16, #tpu.memory_space<vmem>>, vector<4x6912xbf16>
    %c8 = arith.constant 8 : index
    %c0_13 = arith.constant 0 : index
    %9 = vector.load %arg8[%c8, %c0_13] : memref<108x6912xbf16, #tpu.memory_space<vmem>>, vector<4x6912xbf16>
    tpu.vector_store %arg8[%c8, %c0_13], %8 {strides = array<i32>} : memref<108x6912xbf16, #tpu.memory_space<vmem>>, vector<4x6912xbf16>,
    %c0_14 = arith.constant 0 : index
    %c18 = arith.constant 18 : index
    %10 = vector.load %arg7[%c0_14, %c18] : memref<4x7680xbf16, #tpu.memory_space<vmem>>, vector<4x6912xbf16>
    %c12 = arith.constant 12 : index
    %c0_15 = arith.constant 0 : index
    %11 = vector.load %arg8[%c12, %c0_15] : memref<108x6912xbf16, #tpu.memory_space<vmem>>, vector<4x6912xbf16>
    tpu.vector_store %arg8[%c12, %c0_15], %10 {strides = array<i32>} : memref<108x6912xbf16, #tpu.memory_space<vmem>>, vector<4x6912xbf16>,
    %c0_16 = arith.constant 0 : index
    %c19 = arith.constant 19 : index
    %12 = vector.load %arg7[%c0_16, %c19] : memref<4x7680xbf16, #tpu.memory_space<vmem>>, vector<4x6912xbf16>
    %c16 = arith.constant 16 : index
    %c0_17 = arith.constant 0 : index
    %13 = vector.load %arg8[%c16, %c0_17] : memref<108x6912xbf16, #tpu.memory_space<vmem>>, vector<4x6912xbf16>
    tpu.vector_store %arg8[%c16, %c0_17], %12 {strides = array<i32>} : memref<108x6912xbf16, #tpu.memory_space<vmem>>, vector<4x6912xbf16>,
    %c0_18 = arith.constant 0 : index
    %c20 = arith.constant 20 : index
    %14 = vector.load %arg7[%c0_18, %c20] : memref<4x7680xbf16, #tpu.memory_space<vmem>>, vector<4x6912xbf16>
    %c20_19 = arith.constant 20 : index
    %c0_20 = arith.constant 0 : index
    %15 = vector.load %arg8[%c20_19, %c0_20] : memref<108x6912xbf16, #tpu.memory_space<vmem>>, vector<4x6912xbf16>
    tpu.vector_store %arg8[%c20_19, %c0_20], %14 {strides = array<i32>} : memref<108x6912xbf16, #tpu.memory_space<vmem>>, vector<4x6912xbf16>,
    %c0_21 = arith.constant 0 : index
    %c36 = arith.constant 36 : index
    %16 = vector.load %arg7[%c0_21, %c36] : memref<4x7680xbf16, #tpu.memory_space<vmem>>, vector<4x6912xbf16>
    %c24 = arith.constant 24 : index
    %c0_22 = arith.constant 0 : index
    %17 = vector.load %arg8[%c24, %c0_22] : memref<108x6912xbf16, #tpu.memory_space<vmem>>, vector<4x6912xbf16>
    tpu.vector_store %arg8[%c24, %c0_22], %16 {strides = array<i32>} : memref<108x6912xbf16, #tpu.memory_space<vmem>>, vector<4x6912xbf16>,
    %c0_23 = arith.constant 0 : index
    %c37 = arith.constant 37 : index
    %18 = vector.load %arg7[%c0_23, %c37] : memref<4x7680xbf16, #tpu.memory_space<vmem>>, vector<4x6912xbf16>
    %c28 = arith.constant 28 : index
    %c0_24 = arith.constant 0 : index
    %19 = vector.load %arg8[%c28, %c0_24] : memref<108x6912xbf16, #tpu.memory_space<vmem>>, vector<4x6912xbf16>
    tpu.vector_store %arg8[%c28, %c0_24], %18 {strides = array<i32>} : memref<108x6912xbf16, #tpu.memory_space<vmem>>, vector<4x6912xbf16>,
    %c0_25 = arith.constant 0 : index
    %c38 = arith.constant 38 : index
    %20 = vector.load %arg7[%c0_25, %c38] : memref<4x7680xbf16, #tpu.memory_space<vmem>>, vector<4x6912xbf16>
    %c32 = arith.constant 32 : index
    %c0_26 = arith.constant 0 : index
    %21 = vector.load %arg8[%c32, %c0_26] : memref<108x6912xbf16, #tpu.memory_space<vmem>>, vector<4x6912xbf16>
    tpu.vector_store %arg8[%c32, %c0_26], %20 {strides = array<i32>} : memref<108x6912xbf16, #tpu.memory_space<vmem>>, vector<4x6912xbf16>,
    %c0_27 = arith.constant 0 : index
    %c324 = arith.constant 324 : index
    %22 = vector.load %arg7[%c0_27, %c324] : memref<4x7680xbf16, #tpu.memory_space<vmem>>, vector<4x6912xbf16>
    %c36_28 = arith.constant 36 : index
    %c0_29 = arith.constant 0 : index
    %23 = vector.load %arg8[%c36_28, %c0_29] : memref<108x6912xbf16, #tpu.memory_space<vmem>>, vector<4x6912xbf16>
    tpu.vector_store %arg8[%c36_28, %c0_29], %22 {strides = array<i32>} : memref<108x6912xbf16, #tpu.memory_space<vmem>>, vector<4x6912xbf16>,
    %c0_30 = arith.constant 0 : index
    %c325 = arith.constant 325 : index
    %24 = vector.load %arg7[%c0_30, %c325] : memref<4x7680xbf16, #tpu.memory_space<vmem>>, vector<4x6912xbf16>
    %c40 = arith.constant 40 : index
    %c0_31 = arith.constant 0 : index
    %25 = vector.load %arg8[%c40, %c0_31] : memref<108x6912xbf16, #tpu.memory_space<vmem>>, vector<4x6912xbf16>
    tpu.vector_store %arg8[%c40, %c0_31], %24 {strides = array<i32>} : memref<108x6912xbf16, #tpu.memory_space<vmem>>, vector<4x6912xbf16>,
    %c0_32 = arith.constant 0 : index
    %c326 = arith.constant 326 : index
    %26 = vector.load %arg7[%c0_32, %c326] : memref<4x7680xbf16, #tpu.memory_space<vmem>>, vector<4x6912xbf16>
    %c44 = arith.constant 44 : index
    %c0_33 = arith.constant 0 : index
    %27 = vector.load %arg8[%c44, %c0_33] : memref<108x6912xbf16, #tpu.memory_space<vmem>>, vector<4x6912xbf16>
    tpu.vector_store %arg8[%c44, %c0_33], %26 {strides = array<i32>} : memref<108x6912xbf16, #tpu.memory_space<vmem>>, vector<4x6912xbf16>,
    %c0_34 = arith.constant 0 : index
    %c342 = arith.constant 342 : index
    %28 = vector.load %arg7[%c0_34, %c342] : memref<4x7680xbf16, #tpu.memory_space<vmem>>, vector<4x6912xbf16>
    %c48 = arith.constant 48 : index
    %c0_35 = arith.constant 0 : index
    %29 = vector.load %arg8[%c48, %c0_35] : memref<108x6912xbf16, #tpu.memory_space<vmem>>, vector<4x6912xbf16>
    tpu.vector_store %arg8[%c48, %c0_35], %28 {strides = array<i32>} : memref<108x6912xbf16, #tpu.memory_space<vmem>>, vector<4x6912xbf16>,
    %c0_36 = arith.constant 0 : index
    %c343 = arith.constant 343 : index
    %30 = vector.load %arg7[%c0_36, %c343] : memref<4x7680xbf16, #tpu.memory_space<vmem>>, vector<4x6912xbf16>
    %c52 = arith.constant 52 : index
    %c0_37 = arith.constant 0 : index
    %31 = vector.load %arg8[%c52, %c0_37] : memref<108x6912xbf16, #tpu.memory_space<vmem>>, vector<4x6912xbf16>
    tpu.vector_store %arg8[%c52, %c0_37], %30 {strides = array<i32>} : memref<108x6912xbf16, #tpu.memory_space<vmem>>, vector<4x6912xbf16>,
    %c0_38 = arith.constant 0 : index
    %c344 = arith.constant 344 : index
    %32 = vector.load %arg7[%c0_38, %c344] : memref<4x7680xbf16, #tpu.memory_space<vmem>>, vector<4x6912xbf16>
    %c56 = arith.constant 56 : index
    %c0_39 = arith.constant 0 : index
    %33 = vector.load %arg8[%c56, %c0_39] : memref<108x6912xbf16, #tpu.memory_space<vmem>>, vector<4x6912xbf16>
    tpu.vector_store %arg8[%c56, %c0_39], %32 {strides = array<i32>} : memref<108x6912xbf16, #tpu.memory_space<vmem>>, vector<4x6912xbf16>,
    %c0_40 = arith.constant 0 : index
    %c360 = arith.constant 360 : index
    %34 = vector.load %arg7[%c0_40, %c360] : memref<4x7680xbf16, #tpu.memory_space<vmem>>, vector<4x6912xbf16>
    %c60 = arith.constant 60 : index
    %c0_41 = arith.constant 0 : index
    %35 = vector.load %arg8[%c60, %c0_41] : memref<108x6912xbf16, #tpu.memory_space<vmem>>, vector<4x6912xbf16>
    tpu.vector_store %arg8[%c60, %c0_41], %34 {strides = array<i32>} : memref<108x6912xbf16, #tpu.memory_space<vmem>>, vector<4x6912xbf16>,
    %c0_42 = arith.constant 0 : index
    %c361 = arith.constant 361 : index
    %36 = vector.load %arg7[%c0_42, %c361] : memref<4x7680xbf16, #tpu.memory_space<vmem>>, vector<4x6912xbf16>
    %c64 = arith.constant 64 : index
    %c0_43 = arith.constant 0 : index
    %37 = vector.load %arg8[%c64, %c0_43] : memref<108x6912xbf16, #tpu.memory_space<vmem>>, vector<4x6912xbf16>
    tpu.vector_store %arg8[%c64, %c0_43], %36 {strides = array<i32>} : memref<108x6912xbf16, #tpu.memory_space<vmem>>, vector<4x6912xbf16>,
    %c0_44 = arith.constant 0 : index
    %c362 = arith.constant 362 : index
    %38 = vector.load %arg7[%c0_44, %c362] : memref<4x7680xbf16, #tpu.memory_space<vmem>>, vector<4x6912xbf16>
    %c68 = arith.constant 68 : index
    %c0_45 = arith.constant 0 : index
    %39 = vector.load %arg8[%c68, %c0_45] : memref<108x6912xbf16, #tpu.memory_space<vmem>>, vector<4x6912xbf16>
    tpu.vector_store %arg8[%c68, %c0_45], %38 {strides = array<i32>} : memref<108x6912xbf16, #tpu.memory_space<vmem>>, vector<4x6912xbf16>,
    %c0_46 = arith.constant 0 : index
    %c648 = arith.constant 648 : index
    %40 = vector.load %arg7[%c0_46, %c648] : memref<4x7680xbf16, #tpu.memory_space<vmem>>, vector<4x6912xbf16>
    %c72 = arith.constant 72 : index
    %c0_47 = arith.constant 0 : index
    %41 = vector.load %arg8[%c72, %c0_47] : memref<108x6912xbf16, #tpu.memory_space<vmem>>, vector<4x6912xbf16>
    tpu.vector_store %arg8[%c72, %c0_47], %40 {strides = array<i32>} : memref<108x6912xbf16, #tpu.memory_space<vmem>>, vector<4x6912xbf16>,
    %c0_48 = arith.constant 0 : index
    %c649 = arith.constant 649 : index
    %42 = vector.load %arg7[%c0_48, %c649] : memref<4x7680xbf16, #tpu.memory_space<vmem>>, vector<4x6912xbf16>
    %c76 = arith.constant 76 : index
    %c0_49 = arith.constant 0 : index
    %43 = vector.load %arg8[%c76, %c0_49] : memref<108x6912xbf16, #tpu.memory_space<vmem>>, vector<4x6912xbf16>
    tpu.vector_store %arg8[%c76, %c0_49], %42 {strides = array<i32>} : memref<108x6912xbf16, #tpu.memory_space<vmem>>, vector<4x6912xbf16>,
    %c0_50 = arith.constant 0 : index
    %c650 = arith.constant 650 : index
    %44 = vector.load %arg7[%c0_50, %c650] : memref<4x7680xbf16, #tpu.memory_space<vmem>>, vector<4x6912xbf16>
    %c80 = arith.constant 80 : index
    %c0_51 = arith.constant 0 : index
    %45 = vector.load %arg8[%c80, %c0_51] : memref<108x6912xbf16, #tpu.memory_space<vmem>>, vector<4x6912xbf16>
    tpu.vector_store %arg8[%c80, %c0_51], %44 {strides = array<i32>} : memref<108x6912xbf16, #tpu.memory_space<vmem>>, vector<4x6912xbf16>,
    %c0_52 = arith.constant 0 : index
    %c666 = arith.constant 666 : index
    %46 = vector.load %arg7[%c0_52, %c666] : memref<4x7680xbf16, #tpu.memory_space<vmem>>, vector<4x6912xbf16>
    %c84 = arith.constant 84 : index
    %c0_53 = arith.constant 0 : index
    %47 = vector.load %arg8[%c84, %c0_53] : memref<108x6912xbf16, #tpu.memory_space<vmem>>, vector<4x6912xbf16>
    tpu.vector_store %arg8[%c84, %c0_53], %46 {strides = array<i32>} : memref<108x6912xbf16, #tpu.memory_space<vmem>>, vector<4x6912xbf16>,
    %c0_54 = arith.constant 0 : index
    %c667 = arith.constant 667 : index
    %48 = vector.load %arg7[%c0_54, %c667] : memref<4x7680xbf16, #tpu.memory_space<vmem>>, vector<4x6912xbf16>
    %c88 = arith.constant 88 : index
    %c0_55 = arith.constant 0 : index
    %49 = vector.load %arg8[%c88, %c0_55] : memref<108x6912xbf16, #tpu.memory_space<vmem>>, vector<4x6912xbf16>
    tpu.vector_store %arg8[%c88, %c0_55], %48 {strides = array<i32>} : memref<108x6912xbf16, #tpu.memory_space<vmem>>, vector<4x6912xbf16>,
    %c0_56 = arith.constant 0 : index
    %c668 = arith.constant 668 : index
    %50 = vector.load %arg7[%c0_56, %c668] : memref<4x7680xbf16, #tpu.memory_space<vmem>>, vector<4x6912xbf16>
    %c92 = arith.constant 92 : index
    %c0_57 = arith.constant 0 : index
    %51 = vector.load %arg8[%c92, %c0_57] : memref<108x6912xbf16, #tpu.memory_space<vmem>>, vector<4x6912xbf16>
    tpu.vector_store %arg8[%c92, %c0_57], %50 {strides = array<i32>} : memref<108x6912xbf16, #tpu.memory_space<vmem>>, vector<4x6912xbf16>,
    %c0_58 = arith.constant 0 : index
    %c684 = arith.constant 684 : index
    %52 = vector.load %arg7[%c0_58, %c684] : memref<4x7680xbf16, #tpu.memory_space<vmem>>, vector<4x6912xbf16>
    %c96 = arith.constant 96 : index
    %c0_59 = arith.constant 0 : index
    %53 = vector.load %arg8[%c96, %c0_59] : memref<108x6912xbf16, #tpu.memory_space<vmem>>, vector<4x6912xbf16>
    tpu.vector_store %arg8[%c96, %c0_59], %52 {strides = array<i32>} : memref<108x6912xbf16, #tpu.memory_space<vmem>>, vector<4x6912xbf16>,
    %c0_60 = arith.constant 0 : index
    %c685 = arith.constant 685 : index
    %54 = vector.load %arg7[%c0_60, %c685] : memref<4x7680xbf16, #tpu.memory_space<vmem>>, vector<4x6912xbf16>
    %c100 = arith.constant 100 : index
    %c0_61 = arith.constant 0 : index
    %55 = vector.load %arg8[%c100, %c0_61] : memref<108x6912xbf16, #tpu.memory_space<vmem>>, vector<4x6912xbf16>
    tpu.vector_store %arg8[%c100, %c0_61], %54 {strides = array<i32>} : memref<108x6912xbf16, #tpu.memory_space<vmem>>, vector<4x6912xbf16>,
    %c0_62 = arith.constant 0 : index
    %c686 = arith.constant 686 : index
    %56 = vector.load %arg7[%c0_62, %c686] : memref<4x7680xbf16, #tpu.memory_space<vmem>>, vector<4x6912xbf16>
    %c104 = arith.constant 104 : index
    %c0_63 = arith.constant 0 : index
    %57 = vector.load %arg8[%c104, %c0_63] : memref<108x6912xbf16, #tpu.memory_space<vmem>>, vector<4x6912xbf16>
    tpu.vector_store %arg8[%c104, %c0_63], %56 {strides = array<i32>} : memref<108x6912xbf16, #tpu.memory_space<vmem>>, vector<4x6912xbf16>,
    %c0_64 = arith.constant 0 : index
    %c0_65 = arith.constant 0 : index
    %58 = vector.load %arg3[%c0_64, %c0_65] : memref<4x108xbf16, #tpu.memory_space<vmem>>, vector<4x108xbf16>
    %c0_66 = arith.constant 0 : index
    %c0_67 = arith.constant 0 : index
    %59 = vector.load %arg8[%c0_66, %c0_67] : memref<108x6912xbf16, #tpu.memory_space<vmem>>, vector<108x6912xbf16>
    %cst = arith.constant dense<0.000000e+00> : vector<4x6912xf32>
    %60 = tpu.matmul %58, %59, %cst {dimension_numbers = #tpu.dot_dimension_numbers<[1], [0], [0], [1], [0, 0, 1, 1], [], []>} : vector<4x108xbf16>, vector<108x6912xbf16>, vector<4x6912xf32> -> vector<4x6912xf32>
    %c0_68 = arith.constant 0 : index
    %c0_69 = arith.constant 0 : index
    %61 = vector.load %arg4[%c0_68, %c0_69] : memref<4x1xf32, #tpu.memory_space<vmem>>, vector<4x1xf32>
    %62 = vector.broadcast %61 : vector<4x1xf32> to vector<4x6912xf32>
    %63 = arith.addf %60, %62 : vector<4x6912xf32>
    %c0_70 = arith.constant 0 : index
    %c0_71 = arith.constant 0 : index
    %64 = vector.load %arg5[%c0_70, %c0_71] : memref<1x6912xbf16, #tpu.memory_space<vmem>>, vector<1x6912xbf16>
    %65 = arith.extf %64 : vector<1x6912xbf16> to vector<1x6912xf32>
    %66 = vector.broadcast %65 : vector<1x6912xf32> to vector<4x6912xf32>
    %67 = arith.mulf %63, %66 : vector<4x6912xf32>
    %cst_72 = arith.constant dense<0.000000e+00> : vector<4xf32>
    %68 = vector.multi_reduction <add>, %67, %cst_72 [1] : vector<4x6912xf32> to vector<4xf32>
    %69 = vector.shape_cast %68 : vector<4xf32> to vector<4x1xf32>
    %70 = arith.mulf %67, %63 : vector<4x6912xf32>
    %cst_73 = arith.constant dense<0.000000e+00> : vector<4xf32>
    %71 = vector.multi_reduction <add>, %70, %cst_73 [1] : vector<4x6912xf32> to vector<4xf32>
    %72 = vector.shape_cast %71 : vector<4xf32> to vector<4x1xf32>
    %73 = tpu.concatenate %69, %72 in 0 : vector<4x1xf32>, vector<4x1xf32> -> vector<8x1xf32>
    %c0_74 = arith.constant 0 : index
    %c0_75 = arith.constant 0 : index
    %c0_76 = arith.constant 0 : index
    %74 = vector.load %arg6[%c0_74, %c0_75, %c0_76] : memref<1x8x1xf32, #tpu.memory_space<vmem>>, vector<1x8x1xf32>
    %75 = vector.shape_cast %74 : vector<1x8x1xf32> to vector<8x1xf32>
    %76 = vector.shape_cast %73 : vector<8x1xf32> to vector<1x8x1xf32>
    tpu.vector_store %arg6[%c0_74, %c0_75, %c0_76], %76 {strides = array<i32>} : memref<1x8x1xf32, #tpu.memory_space<vmem>>, vector<1x8x1xf32>,
    return
  }
  func.func @transform_0(%arg0: i32) -> (i32, i32) {
    %c0_i32 = arith.constant 0 : i32
    %c0_i32_0 = arith.constant 0 : i32
    return %c0_i32, %arg0 : i32, i32
  }
  func.func @transform_1(%arg0: i32) -> (i32, i32) {
    %c1_i32 = arith.constant 1 : i32
    %0 = arith.addi %arg0, %c1_i32 : i32
    %c9_i32 = arith.constant 9 : i32
    %1 = arith.muli %c9_i32, %0 : i32
    %c0_i32 = arith.constant 0 : i32
    %c0_i32_0 = arith.constant 0 : i32
    return %c0_i32, %1 : i32, i32
  }
  func.func @transform_2(%arg0: i32) -> (i32, i32) {
    %c0_i32 = arith.constant 0 : i32
    %c0_i32_0 = arith.constant 0 : i32
    %c0_i32_1 = arith.constant 0 : i32
    return %c0_i32, %c0_i32_0 : i32, i32
  }
  func.func @transform_3(%arg0: i32) -> (i32, i32) {
    %c0_i32 = arith.constant 0 : i32
    %c0_i32_0 = arith.constant 0 : i32
    %c0_i32_1 = arith.constant 0 : i32
    return %c0_i32, %c0_i32_0 : i32, i32
  }
  func.func @transform_4(%arg0: i32) -> (i32, i32) {
    %c0_i32 = arith.constant 0 : i32
    %c0_i32_0 = arith.constant 0 : i32
    return %c0_i32, %arg0 : i32, i32
  }
  func.func @transform_5(%arg0: i32) -> (i32, i32, i32) {
    %c0_i32 = arith.constant 0 : i32
    %c0_i32_0 = arith.constant 0 : i32
    %c0_i32_1 = arith.constant 0 : i32
    return %arg0, %c0_i32, %c0_i32_0 : i32, i32, i32
  }
}

</mosaic_0001>

<llo_original>
// kernel: tpu_custom_call.1
$region0: #{tpu_custom_call.1}
  #allocation0 [shape = 'u32[]', space=smem, size = 0x4, offset = 0x4, fixed_abs, tag = 'smem constant byte address 0x4 - core index']
  #allocation1 [shape = 'u32[72,128]{1,0:T(1,128)}', space=vmem, size = 0x9000, scoped, tag = 'internal scratch']
  #allocation2 [shape = 'bf16[4,7680]{1,0:T(4,128)(2,1)}', space=vmem, size = 0xf000, scoped, tag = 'scratch operand']
  #allocation3 [shape = 'bf16[108,6912]{1,0:T(8,128)(2,1)}', space=vmem, size = 0x17a000, scoped, tag = 'scratch operand']
  %s0 = inlined_call_operand.hbm [shape: bf16[4,7680], index: 0, kind: input, shape index: {}]
  %s1 = inlined_call_operand.hbm [shape: bf16[4,7680], index: 1, kind: input, shape index: {}]
  %s2 = inlined_call_operand.vmem [shape: bf16[4,108], index: 2, kind: input, shape index: {}]
  %s3 = inlined_call_operand.vmem [shape: f32[4,1], index: 3, kind: input, shape index: {}]
  %s4 = inlined_call_operand.hbm [shape: bf16[1,6912], index: 4, kind: input, shape index: {}]
  %s5 = inlined_call_operand.vmem [shape: f32[1,8,1], index: 5, kind: output, shape index: {}]
  %s6 = sld [smem:[#allocation0]]
  $region42: #{tpu_custom_call.1} parent=0
    _
  %s8 = ssub.s32 1, %s6
  %s9 = scalar_select 0, %s8, %s6
  $region1: #{tpu_custom_call.1} parent=0
    #allocation4 [shape = 'u8[55296]{0}', space=vmem, size = 0xd800, scoped, tag = 'input window, operand 0, single buffered']
    #allocation5 [shape = 's32[1]{0}', space=sflag, size = 0x4, scoped, tag = 'scoped memory for tpu_custom_call.1']
    #allocation6 [shape = 'u8[6144]{0}', space=vmem, size = 0x1800, scoped, tag = 'input window, operand 1, single buffered']
    #allocation7 [shape = 's32[1]{0}', space=sflag, size = 0x4, scoped, tag = 'scoped memory for tpu_custom_call.1']
    #allocation8 [shape = 'u8[27648]{0}', space=vmem, size = 0x6c00, scoped, tag = 'input window, operand 4, single buffered']
    %10 = vsyncpa [#allocation5], 0
    %11 = vsyncpa [#allocation7], 0
    // Predicated region
    $region2: #{tpu_custom_call.1} parent=1 // pred_check
      _
    $region3: #{tpu_custom_call.1} parent=1 // pred_check_branch
      %13 = sbr.rel (0) target = $region5
    $region4: #{tpu_custom_call.1} parent=1 // pred_region
      %15 = vsyncadd [#allocation5], 0
      %s17 = sshll.u32 %s0, 4
      %s18 = int_to_ptr.hbm [resolvable:$true] %s17
      %s19 = sshll.u32 [#allocation4], 4
      %s20 = int_to_ptr.vmem [resolvable:$true] %s19
      %22 = dma.hbm_to_vmem [thread:$0]  %s18, 1728, %s20, [#allocation5]
    $region5: #{tpu_custom_call.1} parent=1 // pred_fallthru
      _
    // Predicated region
    $region6: #{tpu_custom_call.1} parent=1 // pred_check
      _
    $region7: #{tpu_custom_call.1} parent=1 // pred_check_branch
      %24 = sbr.rel (0) target = $region9
    $region8: #{tpu_custom_call.1} parent=1 // pred_region
      %s25 = sadd.s32 0, 1
      %s26 = smul.u32 %s25, 9
      %s27 = smul.u32 6, %s26
      %29 = vsyncadd [#allocation7], 0
      %s30 = smul.addr %s27, 2
      %s31 = scalar_lea.hbm %s1, %s30
      %s33 = sshll.u32 %s31, 4
      %s34 = int_to_ptr.hbm [resolvable:$true] %s33
      %s35 = sshll.u32 [#allocation6], 4
      %s36 = int_to_ptr.vmem [resolvable:$true] %s35
      %38 = dma.hbm_to_vmem [thread:$0]  %s34, 192, %s36, [#allocation7]
    $region9: #{tpu_custom_call.1} parent=1 // pred_fallthru
      _
    // Predicated region
    $region10: #{tpu_custom_call.1} parent=1 // pred_check
      _
    $region11: #{tpu_custom_call.1} parent=1 // pred_check_branch
      %40 = sbr.rel (0) target = $region13
    $region12: #{tpu_custom_call.1} parent=1 // pred_region
      _
    $region13: #{tpu_custom_call.1} parent=1 // pred_fallthru
      _
    // Predicated region
    $region14: #{tpu_custom_call.1} parent=1 // pred_check
      _
    $region15: #{tpu_custom_call.1} parent=1 // pred_check_branch
      %42 = sbr.rel (0) target = $region17
    $region16: #{tpu_custom_call.1} parent=1 // pred_region
      _
    $region17: #{tpu_custom_call.1} parent=1 // pred_fallthru
      _
    // Predicated region
    $region18: #{tpu_custom_call.1} parent=1 // pred_check
      _
    $region19: #{tpu_custom_call.1} parent=1 // pred_check_branch
      %44 = sbr.rel (0) target = $region21
    $region20: #{tpu_custom_call.1} parent=1 // pred_region
      %46 = vsyncadd [#allocation7], 0
      %s48 = sshll.u32 %s4, 4
      %s49 = int_to_ptr.hbm [resolvable:$true] %s48
      %s50 = sshll.u32 [#allocation8], 4
      %s51 = int_to_ptr.vmem [resolvable:$true] %s50
      %53 = dma.hbm_to_vmem [thread:$0]  %s49, 864, %s51, [#allocation7]
    $region21: #{tpu_custom_call.1} parent=1 // pred_fallthru
      _
    // Predicated region
    $region22: #{tpu_custom_call.1} parent=1 // pred_check
      _
    $region23: #{tpu_custom_call.1} parent=1 // pred_check_branch
      %55 = sbr.rel (0) target = $region25
    $region24: #{tpu_custom_call.1} parent=1 // pred_region
      %57 = dma.done [#allocation5], 1728
    $region25: #{tpu_custom_call.1} parent=1 // pred_fallthru
      _
    // Predicated region
    $region26: #{tpu_custom_call.1} parent=1 // pred_check
      _
    $region27: #{tpu_custom_call.1} parent=1 // pred_check_branch
      %59 = sbr.rel (0) target = $region29
    $region28: #{tpu_custom_call.1} parent=1 // pred_region
      %61 = dma.done [#allocation7], 192
    $region29: #{tpu_custom_call.1} parent=1 // pred_fallthru
      _
    // Predicated region
    $region30: #{tpu_custom_call.1} parent=1 // pred_check
      _
    $region31: #{tpu_custom_call.1} parent=1 // pred_check_branch
      %63 = sbr.rel (0) target = $region33
    $region32: #{tpu_custom_call.1} parent=1 // pred_region
      %65 = dma.done [#allocation7], 864
    $region33: #{tpu_custom_call.1} parent=1 // pred_fallthru
      _
    %s66 = sadd.s32 0, 1
    %s67 = smul.u32 %s66, 9
    %s68 = smul.u32 6, %s67
    %v70 = vld [vmem:[#allocation4] sm:$0xff]
    %v71 = vld [vmem:[#allocation4 + $0x8] sm:$0xff]
    %v72 = vld [vmem:[#allocation4 + $0x10] sm:$0xff]
    %v73 = vld [vmem:[#allocation4 + $0x18] sm:$0xff]
    %v74 = vld [vmem:[#allocation4 + $0x20] sm:$0xff]
    %v75 = vld [vmem:[#allocation4 + $0x28] sm:$0xff]
    %v76 = vld [vmem:[#allocation4 + $0x30] sm:$0xff]
    %v77 = vld [vmem:[#allocation4 + $0x38] sm:$0xff]
    %v78 = vld [vmem:[#allocation4 + $0x40] sm:$0xff]
    %v79 = vld [vmem:[#allocation4 + $0x48] sm:$0xff]
    %v80 = vld [vmem:[#allocation4 + $0x50] sm:$0xff]
    %v81 = vld [vmem:[#allocation4 + $0x58] sm:$0xff]
    %v82 = vld [vmem:[#allocation4 + $0x60] sm:$0xff]
    %v83 = vld [vmem:[#allocation4 + $0x68] sm:$0xf]
    %84 = vst [vmem:[#allocation2] sm:$0xff] %v70
    %85 = vst [vmem:[#allocation2 + $0x8] sm:$0xff] %v71
    %86 = vst [vmem:[#allocation2 + $0x10] sm:$0xff] %v72
    %87 = vst [vmem:[#allocation2 + $0x18] sm:$0xff] %v73
    %88 = vst [vmem:[#allocation2 + $0x20] sm:$0xff] %v74
    %89 = vst [vmem:[#allocation2 + $0x28] sm:$0xff] %v75
    %90 = vst [vmem:[#allocation2 + $0x30] sm:$0xff] %v76
    %91 = vst [vmem:[#allocation2 + $0x38] sm:$0xff] %v77
    %92 = vst [vmem:[#allocation2 + $0x40] sm:$0xff] %v78
    %93 = vst [vmem:[#allocation2 + $0x48] sm:$0xff] %v79
    %94 = vst [vmem:[#allocation2 + $0x50] sm:$0xff] %v80
    %95 = vst [vmem:[#allocation2 + $0x58] sm:$0xff] %v81
    %96 = vst [vmem:[#allocation2 + $0x60] sm:$0xff] %v82
    %97 = vst [vmem:[#allocation2 + $0x68] sm:$0xf] %v83
    %v98 = vld [vmem:[#allocation6] sm:$0xff]
    %v99 = vld [vmem:[#allocation6 + $0x8] sm:$0xf]
    %100 = vst [vmem:[#allocation2 + $0x6c] sm:$0xff] %v98
    %101 = vst [vmem:[#allocation2 + $0x74] sm:$0xf] %v99
    %v102 = vld [vmem:[#allocation2] sm:$0xff]
    %v103 = vld [vmem:[#allocation2 + $0x8] sm:$0xff]
    %v104 = vld [vmem:[#allocation2 + $0x10] sm:$0xff]
    %v105 = vld [vmem:[#allocation2 + $0x18] sm:$0xff]
    %v106 = vld [vmem:[#allocation2 + $0x20] sm:$0xff]
    %v107 = vld [vmem:[#allocation2 + $0x28] sm:$0xff]
    %v108 = vld [vmem:[#allocation2 + $0x30] sm:$0xff]
    %v109 = vld [vmem:[#allocation2 + $0x38] sm:$0xff]
    %v110 = vld [vmem:[#allocation2 + $0x40] sm:$0xff]
    %v111 = vld [vmem:[#allocation2 + $0x48] sm:$0xff]
    %v112 = vld [vmem:[#allocation2 + $0x50] sm:$0xff]
    %v113 = vld [vmem:[#allocation2 + $0x58] sm:$0xff]
    %v114 = vld [vmem:[#allocation2 + $0x60] sm:$0xff]
    %v115 = vld [vmem:[#allocation2 + $0x68] sm:$0xf]
    %117 = vst [vmem:[#allocation1] ss:$2 sm:$0xff] %v102
    %s119 = scalar_lea.vmem [#allocation1], 16
    %120 = vst [vmem:[%s119] ss:$2 sm:$0xff] %v103
    %s122 = scalar_lea.vmem [#allocation1], 32
    %123 = vst [vmem:[%s122] ss:$2 sm:$0xff] %v104
    %s125 = scalar_lea.vmem [#allocation1], 48
    %126 = vst [vmem:[%s125] ss:$2 sm:$0xff] %v105
    %v127 = vld.sshfl [vmem:[#allocation1] sm:$0xff pattern:$0x75643120]
    %v128 = vld.sshfl [vmem:[#allocation1 + $0x8] sm:$0xff pattern:$0x75643120]
    %v129 = vld.sshfl [vmem:[#allocation1 + $0x10] sm:$0xff pattern:$0x75643120]
    %v130 = vld.sshfl [vmem:[#allocation1 + $0x18] sm:$0xff pattern:$0x75643120]
    %v131 = vld.sshfl [vmem:[#allocation1 + $0x20] sm:$0xff pattern:$0x75643120]
    %v132 = vld.sshfl [vmem:[#allocation1 + $0x28] sm:$0xff pattern:$0x75643120]
    %v133 = vld.sshfl [vmem:[#allocation1 + $0x30] sm:$0xff pattern:$0x75643120]
    %v134 = vld.sshfl [vmem:[#allocation1 + $0x38] sm:$0xff pattern:$0x75643120]
    %136 = vst [vmem:[#allocation1] ss:$2 sm:$0xff] %v106
    %138 = vst [vmem:[%s119] ss:$2 sm:$0xff] %v107
    %140 = vst [vmem:[%s122] ss:$2 sm:$0xff] %v108
    %142 = vst [vmem:[%s125] ss:$2 sm:$0xff] %v109
    %v143 = vld.sshfl [vmem:[#allocation1] sm:$0xff pattern:$0x75643120]
    %v144 = vld.sshfl [vmem:[#allocation1 + $0x8] sm:$0xff pattern:$0x75643120]
    %v145 = vld.sshfl [vmem:[#allocation1 + $0x10] sm:$0xff pattern:$0x75643120]
    %v146 = vld.sshfl [vmem:[#allocation1 + $0x18] sm:$0xff pattern:$0x75643120]
    %v147 = vld.sshfl [vmem:[#allocation1 + $0x20] sm:$0xff pattern:$0x75643120]
    %v148 = vld.sshfl [vmem:[#allocation1 + $0x28] sm:$0xff pattern:$0x75643120]
    %v149 = vld.sshfl [vmem:[#allocation1 + $0x30] sm:$0xff pattern:$0x75643120]
    %v150 = vld.sshfl [vmem:[#allocation1 + $0x38] sm:$0xff pattern:$0x75643120]
    %152 = vst [vmem:[#allocation1] ss:$2 sm:$0xff] %v110
    %154 = vst [vmem:[%s119] ss:$2 sm:$0xff] %v111
    %156 = vst [vmem:[%s122] ss:$2 sm:$0xff] %v112
    %158 = vst [vmem:[%s125] ss:$2 sm:$0xff] %v113
    %v159 = vld.sshfl [vmem:[#allocation1] sm:$0xff pattern:$0x75643120]
    %v160 = vld.sshfl [vmem:[#allocation1 + $0x8] sm:$0xff pattern:$0x75643120]
    %v161 = vld.sshfl [vmem:[#allocation1 + $0x10] sm:$0xff pattern:$0x75643120]
    %v162 = vld.sshfl [vmem:[#allocation1 + $0x18] sm:$0xff pattern:$0x75643120]
    %v163 = vld.sshfl [vmem:[#allocation1 + $0x20] sm:$0xff pattern:$0x75643120]
    %v164 = vld.sshfl [vmem:[#allocation1 + $0x28] sm:$0xff pattern:$0x75643120]
    %v165 = vld.sshfl [vmem:[#allocation1 + $0x30] sm:$0xff pattern:$0x75643120]
    %v166 = vld.sshfl [vmem:[#allocation1 + $0x38] sm:$0xff pattern:$0x75643120]
    %168 = vst [vmem:[#allocation1] ss:$2 sm:$0xff] %v114
    %170 = vst [vmem:[%s119] ss:$2 sm:$0xff] %v115
    %v171 = vld.sshfl [vmem:[#allocation1] sm:$0xff pattern:$0x75643120]
    %v172 = vld.sshfl [vmem:[#allocation1 + $0x8] sm:$0xff pattern:$0x75643120]
    %v173 = vld.sshfl [vmem:[#allocation1 + $0x10] sm:$0xff pattern:$0x75643120]
    %201 = vst [vmem:[#allocation3] sm:$0x33] %v127
    %202 = vst [vmem:[#allocation3 + $0x8] sm:$0x33] %v128
    %203 = vst [vmem:[#allocation3 + $0x10] sm:$0x33] %v129
    %204 = vst [vmem:[#allocation3 + $0x18] sm:$0x33] %v130
    %205 = vst [vmem:[#allocation3 + $0x20] sm:$0x33] %v131
    %206 = vst [vmem:[#allocation3 + $0x28] sm:$0x33] %v132
    %207 = vst [vmem:[#allocation3 + $0x30] sm:$0x33] %v133
    %208 = vst [vmem:[#allocation3 + $0x38] sm:$0x33] %v134
    %209 = vst [vmem:[#allocation3 + $0x40] sm:$0x33] %v143
    %210 = vst [vmem:[#allocation3 + $0x48] sm:$0x33] %v144
    %211 = vst [vmem:[#allocation3 + $0x50] sm:$0x33] %v145
    %212 = vst [vmem:[#allocation3 + $0x58] sm:$0x33] %v146
    %213 = vst [vmem:[#allocation3 + $0x60] sm:$0x33] %v147
    %214 = vst [vmem:[#allocation3 + $0x68] sm:$0x33] %v148
    %215 = vst [vmem:[#allocation3 + $0x70] sm:$0x33] %v149
    %216 = vst [vmem:[#allocation3 + $0x78] sm:$0x33] %v150
    %217 = vst [vmem:[#allocation3 + $0x80] sm:$0x33] %v159
    %218 = vst [vmem:[#allocation3 + $0x88] sm:$0x33] %v160
    %219 = vst [vmem:[#allocation3 + $0x90] sm:$0x33] %v161
    %220 = vst [vmem:[#allocation3 + $0x98] sm:$0x33] %v162
    %221 = vst [vmem:[#allocation3 + $0xa0] sm:$0x33] %v163
    %222 = vst [vmem:[#allocation3 + $0xa8] sm:$0x33] %v164
    %223 = vst [vmem:[#allocation3 + $0xb0] sm:$0x33] %v165
    %224 = vst [vmem:[#allocation3 + $0xb8] sm:$0x33] %v166
    %225 = vst [vmem:[#allocation3 + $0xc0] sm:$0x33] %v171
    %226 = vst [vmem:[#allocation3 + $0xc8] sm:$0x33] %v172
    %227 = vst [vmem:[#allocation3 + $0xd0] sm:$0x33] %v173
    %v228 = vld [vmem:[#allocation2] sm:$0xff]
    %v229 = vld [vmem:[#allocation2 + $0x8] sm:$0xff]
    %v230 = vld [vmem:[#allocation2 + $0x10] sm:$0xff]
    %v231 = vld [vmem:[#allocation2 + $0x18] sm:$0xff]
    %v232 = vld [vmem:[#allocation2 + $0x20] sm:$0xff]
    %v233 = vld [vmem:[#allocation2 + $0x28] sm:$0xff]
    %v234 = vld [vmem:[#allocation2 + $0x30] sm:$0xff]
    %v235 = vld [vmem:[#allocation2 + $0x38] sm:$0xff]
    %v236 = vld [vmem:[#allocation2 + $0x40] sm:$0xff]
    %v237 = vld [vmem:[#allocation2 + $0x48] sm:$0xff]
    %v238 = vld [vmem:[#allocation2 + $0x50] sm:$0xff]
    %v239 = vld [vmem:[#allocation2 + $0x58] sm:$0xff]
    %v240 = vld [vmem:[#allocation2 + $0x60] sm:$0xff]
    %v241 = vld [vmem:[#allocation2 + $0x68] sm:$0x3f]
    %s243 = scalar_lea.vmem [#allocation1], 1
    %244 = vst [vmem:[%s243] ss:$2 sm:$0xff] %v228
    %s246 = scalar_lea.vmem [#allocation1], 17
    %247 = vst [vmem:[%s246] ss:$2 sm:$0xff] %v229
    %s249 = scalar_lea.vmem [#allocation1], 33
    %250 = vst [vmem:[%s249] ss:$2 sm:$0xff] %v230
    %s252 = scalar_lea.vmem [#allocation1], 49
    %253 = vst [vmem:[%s252] ss:$2 sm:$0xff] %v231
    %v254 = vld.sshfl [vmem:[#allocation1] sm:$0xff pattern:$0x75643120]
    %v256 = vld.sshfl [vmem:[#allocation1 + $0x8] sm:$0xff pattern:$0x75643120]
    %v258 = vld.sshfl [vmem:[#allocation1 + $0x10] sm:$0xff pattern:$0x75643120]
    %v260 = vld.sshfl [vmem:[#allocation1 + $0x18] sm:$0xff pattern:$0x75643120]
    %v262 = vld.sshfl [vmem:[#allocation1 + $0x20] sm:$0xff pattern:$0x75643120]
    %v264 = vld.sshfl [vmem:[#allocation1 + $0x28] sm:$0xff pattern:$0x75643120]
    %v266 = vld.sshfl [vmem:[#allocation1 + $0x30] sm:$0xff pattern:$0x75643120]
    %v268 = vld.sshfl [vmem:[#allocation1 + $0x38] sm:$0xff pattern:$0x75643120]
    %271 = vst [vmem:[%s243] ss:$2 sm:$0xff] %v232
    %273 = vst [vmem:[%s246] ss:$2 sm:$0xff] %v233
    %275 = vst [vmem:[%s249] ss:$2 sm:$0xff] %v234
    %277 = vst [vmem:[%s252] ss:$2 sm:$0xff] %v235
    %v278 = vld.sshfl [vmem:[#allocation1] sm:$0xff pattern:$0x75643120]
    %v280 = vld.sshfl [vmem:[#allocation1 + $0x8] sm:$0xff pattern:$0x75643120]
    %v282 = vld.sshfl [vmem:[#allocation1 + $0x10] sm:$0xff pattern:$0x75643120]
    %v284 = vld.sshfl [vmem:[#allocation1 + $0x18] sm:$0xff pattern:$0x75643120]
    %v286 = vld.sshfl [vmem:[#allocation1 + $0x20] sm:$0xff pattern:$0x75643120]
    %v288 = vld.sshfl [vmem:[#allocation1 + $0x28] sm:$0xff pattern:$0x75643120]
    %v290 = vld.sshfl [vmem:[#allocation1 + $0x30] sm:$0xff pattern:$0x75643120]
    %v292 = vld.sshfl [vmem:[#allocation1 + $0x38] sm:$0xff pattern:$0x75643120]
    %295 = vst [vmem:[%s243] ss:$2 sm:$0xff] %v236
    %297 = vst [vmem:[%s246] ss:$2 sm:$0xff] %v237
    %299 = vst [vmem:[%s249] ss:$2 sm:$0xff] %v238
    %301 = vst [vmem:[%s252] ss:$2 sm:$0xff] %v239
    %v302 = vld.sshfl [vmem:[#allocation1] sm:$0xff pattern:$0x75643120]
    %v304 = vld.sshfl [vmem:[#allocation1 + $0x8] sm:$0xff pattern:$0x75643120]
    %v306 = vld.sshfl [vmem:[#allocation1 + $0x10] sm:$0xff pattern:$0x75643120]
    %v308 = vld.sshfl [vmem:[#allocation1 + $0x18] sm:$0xff pattern:$0x75643120]
    %v310 = vld.sshfl [vmem:[#allocation1 + $0x20] sm:$0xff pattern:$0x75643120]
    %v312 = vld.sshfl [vmem:[#allocation1 + $0x28] sm:$0xff pattern:$0x75643120]
    %v314 = vld.sshfl [vmem:[#allocation1 + $0x30] sm:$0xff pattern:$0x75643120]
    %v316 = vld.sshfl [vmem:[#allocation1 + $0x38] sm:$0xff pattern:$0x75643120]
    %319 = vst [vmem:[%s243] ss:$2 sm:$0xff] %v240
    %321 = vst [vmem:[%s246] ss:$2 sm:$0xff] %v241
    %v322 = vld.sshfl [vmem:[#allocation1] sm:$0xff pattern:$0x75643120]
    %v324 = vld.sshfl [vmem:[#allocation1 + $0x8] sm:$0xff pattern:$0x75643120]
    %v326 = vld.sshfl [vmem:[#allocation1 + $0x10] sm:$0xff pattern:$0x75643120]
    %v328 = vld.sshfl [vmem:[#allocation1 + $0x18] sm:$0xff pattern:$0x75643120]
    %330 = vrot.lane.b32.xlu0 %v254, 127
    %v331 = vpop.permute.xlu0 %330
    %332 = vrot.lane.b32.xlu0 %v256, 127
    %v333 = vpop.permute.xlu0 %332
    %334 = vrot.lane.b32.xlu0 %v258, 127
    %v335 = vpop.permute.xlu0 %334
    %336 = vrot.lane.b32.xlu0 %v260, 127
    %v337 = vpop.permute.xlu0 %336
    %338 = vrot.lane.b32.xlu0 %v262, 127
    %v339 = vpop.permute.xlu0 %338
    %340 = vrot.lane.b32.xlu0 %v264, 127
    %v341 = vpop.permute.xlu0 %340
    %342 = vrot.lane.b32.xlu0 %v266, 127
    %v343 = vpop.permute.xlu0 %342
    %344 = vrot.lane.b32.xlu0 %v268, 127
    %v345 = vpop.permute.xlu0 %344
    %346 = vrot.lane.b32.xlu0 %v278, 127
    %v347 = vpop.permute.xlu0 %346
    %348 = vrot.lane.b32.xlu0 %v280, 127
    %v349 = vpop.permute.xlu0 %348
    %350 = vrot.lane.b32.xlu0 %v282, 127
    %v351 = vpop.permute.xlu0 %350
    %352 = vrot.lane.b32.xlu0 %v284, 127
    %v353 = vpop.permute.xlu0 %352
    %354 = vrot.lane.b32.xlu0 %v286, 127
    %v355 = vpop.permute.xlu0 %354
    %356 = vrot.lane.b32.xlu0 %v288, 127
    %v357 = vpop.permute.xlu0 %356
    %358 = vrot.lane.b32.xlu0 %v290, 127
    %v359 = vpop.permute.xlu0 %358
    %360 = vrot.lane.b32.xlu0 %v292, 127
    %v361 = vpop.permute.xlu0 %360
    %362 = vrot.lane.b32.xlu0 %v302, 127
    %v363 = vpop.permute.xlu0 %362
    %364 = vrot.lane.b32.xlu0 %v304, 127
    %v365 = vpop.permute.xlu0 %364
    %366 = vrot.lane.b32.xlu0 %v306, 127
    %v367 = vpop.permute.xlu0 %366
    %368 = vrot.lane.b32.xlu0 %v308, 127
    %v369 = vpop.permute.xlu0 %368
    %370 = vrot.lane.b32.xlu0 %v310, 127
    %v371 = vpop.permute.xlu0 %370
    %372 = vrot.lane.b32.xlu0 %v312, 127
    %v373 = vpop.permute.xlu0 %372
    %374 = vrot.lane.b32.xlu0 %v314, 127
    %v375 = vpop.permute.xlu0 %374
    %376 = vrot.lane.b32.xlu0 %v316, 127
    %v377 = vpop.permute.xlu0 %376
    %378 = vrot.lane.b32.xlu0 %v322, 127
    %v379 = vpop.permute.xlu0 %378
    %380 = vrot.lane.b32.xlu0 %v324, 127
    %v381 = vpop.permute.xlu0 %380
    %382 = vrot.lane.b32.xlu0 %v326, 127
    %v383 = vpop.permute.xlu0 %382
    %384 = vrot.lane.b32.xlu0 %v328, 127
    %v385 = vpop.permute.xlu0 %384
    %v386 = vrot.slane %v331, 4
    %v387 = vrot.slane %v333, 4
    %v388 = vrot.slane %v335, 4
    %v389 = vrot.slane %v337, 4
    %v390 = vrot.slane %v339, 4
    %v391 = vrot.slane %v341, 4
    %v392 = vrot.slane %v343, 4
    %v393 = vrot.slane %v345, 4
    %v394 = vrot.slane %v347, 4
    %v395 = vrot.slane %v349, 4
    %v396 = vrot.slane %v351, 4
    %v397 = vrot.slane %v353, 4
    %v398 = vrot.slane %v355, 4
    %v399 = vrot.slane %v357, 4
    %v400 = vrot.slane %v359, 4
    %v401 = vrot.slane %v361, 4
    %v402 = vrot.slane %v363, 4
    %v403 = vrot.slane %v365, 4
    %v404 = vrot.slane %v367, 4
    %v405 = vrot.slane %v369, 4
    %v406 = vrot.slane %v371, 4
    %v407 = vrot.slane %v373, 4
    %v408 = vrot.slane %v375, 4
    %v409 = vrot.slane %v377, 4
    %v410 = vrot.slane %v379, 4
    %v411 = vrot.slane %v381, 4
    %v412 = vrot.slane %v383, 4
    %v413 = vrot.slane %v385, 4
    %vm414 = vcmask 1043456
    %v415 = vsel %vm414, %v386, %v387
    %vm416 = vcmask 1039360
    %v417 = vsel %vm416, %v331, %v415
    %v418 = vsel %vm414, %v387, %v388
    %v419 = vsel %vm416, %v333, %v418
    %v420 = vsel %vm414, %v388, %v389
    %v421 = vsel %vm416, %v335, %v420
    %v422 = vsel %vm414, %v389, %v390
    %v423 = vsel %vm416, %v337, %v422
    %v424 = vsel %vm414, %v390, %v391
    %v425 = vsel %vm416, %v339, %v424
    %v426 = vsel %vm414, %v391, %v392
    %v427 = vsel %vm416, %v341, %v426
    %v428 = vsel %vm414, %v392, %v393
    %v429 = vsel %vm416, %v343, %v428
    %v430 = vsel %vm414, %v393, %v394
    %v431 = vsel %vm416, %v345, %v430
    %v432 = vsel %vm414, %v394, %v395
    %v433 = vsel %vm416, %v347, %v432
    %v434 = vsel %vm414, %v395, %v396
    %v435 = vsel %vm416, %v349, %v434
    %v436 = vsel %vm414, %v396, %v397
    %v437 = vsel %vm416, %v351, %v436
    %v438 = vsel %vm414, %v397, %v398
    %v439 = vsel %vm416, %v353, %v438
    %v440 = vsel %vm414, %v398, %v399
    %v441 = vsel %vm416, %v355, %v440
    %v442 = vsel %vm414, %v399, %v400
    %v443 = vsel %vm416, %v357, %v442
    %v444 = vsel %vm414, %v400, %v401
    %v445 = vsel %vm416, %v359, %v444
    %v446 = vsel %vm414, %v401, %v402
    %v447 = vsel %vm416, %v361, %v446
    %v448 = vsel %vm414, %v402, %v403
    %v449 = vsel %vm416, %v363, %v448
    %v450 = vsel %vm414, %v403, %v404
    %v451 = vsel %vm416, %v365, %v450
    %v452 = vsel %vm414, %v404, %v405
    %v453 = vsel %vm416, %v367, %v452
    %v454 = vsel %vm414, %v405, %v406
    %v455 = vsel %vm416, %v369, %v454
    %v456 = vsel %vm414, %v406, %v407
    %v457 = vsel %vm416, %v371, %v456
    %v458 = vsel %vm414, %v407, %v408
    %v459 = vsel %vm416, %v373, %v458
    %v460 = vsel %vm414, %v408, %v409
    %v461 = vsel %vm416, %v375, %v460
    %v462 = vsel %vm414, %v409, %v410
    %v463 = vsel %vm416, %v377, %v462
    %v464 = vsel %vm414, %v410, %v411
    %v465 = vsel %vm416, %v379, %v464
    %v466 = vsel %vm414, %v411, %v412
    %v467 = vsel %vm416, %v381, %v466
    %v468 = vsel %vm414, %v412, %v413
    %v469 = vsel %vm416, %v383, %v468
    %497 = vst [vmem:[#allocation3] sm:$0xcc] %v417
    %498 = vst [vmem:[#allocation3 + $0x8] sm:$0xcc] %v419
    %499 = vst [vmem:[#allocation3 + $0x10] sm:$0xcc] %v421
    %500 = vst [vmem:[#allocation3 + $0x18] sm:$0xcc] %v423
    %501 = vst [vmem:[#allocation3 + $0x20] sm:$0xcc] %v425
    %502 = vst [vmem:[#allocation3 + $0x28] sm:$0xcc] %v427
    %503 = vst [vmem:[#allocation3 + $0x30] sm:$0xcc] %v429
    %504 = vst [vmem:[#allocation3 + $0x38] sm:$0xcc] %v431
    %505 = vst [vmem:[#allocation3 + $0x40] sm:$0xcc] %v433
    %506 = vst [vmem:[#allocation3 + $0x48] sm:$0xcc] %v435
    %507 = vst [vmem:[#allocation3 + $0x50] sm:$0xcc] %v437
    %508 = vst [vmem:[#allocation3 + $0x58] sm:$0xcc] %v439
    %509 = vst [vmem:[#allocation3 + $0x60] sm:$0xcc] %v441
    %510 = vst [vmem:[#allocation3 + $0x68] sm:$0xcc] %v443
    %511 = vst [vmem:[#allocation3 + $0x70] sm:$0xcc] %v445
    %512 = vst [vmem:[#allocation3 + $0x78] sm:$0xcc] %v447
    %513 = vst [vmem:[#allocation3 + $0x80] sm:$0xcc] %v449
    %514 = vst [vmem:[#allocation3 + $0x88] sm:$0xcc] %v451
    %515 = vst [vmem:[#allocation3 + $0x90] sm:$0xcc] %v453
    %516 = vst [vmem:[#allocation3 + $0x98] sm:$0xcc] %v455
    %517 = vst [vmem:[#allocation3 + $0xa0] sm:$0xcc] %v457
    %518 = vst [vmem:[#allocation3 + $0xa8] sm:$0xcc] %v459
    %519 = vst [vmem:[#allocation3 + $0xb0] sm:$0xcc] %v461
    %520 = vst [vmem:[#allocation3 + $0xb8] sm:$0xcc] %v463
    %521 = vst [vmem:[#allocation3 + $0xc0] sm:$0xcc] %v465
    %522 = vst [vmem:[#allocation3 + $0xc8] sm:$0xcc] %v467
    %523 = vst [vmem:[#allocation3 + $0xd0] sm:$0xcc] %v469
    %v524 = vld [vmem:[#allocation2] sm:$0xff]
    %v525 = vld [vmem:[#allocation2 + $0x8] sm:$0xff]
    %v526 = vld [vmem:[#allocation2 + $0x10] sm:$0xff]
    %v527 = vld [vmem:[#allocation2 + $0x18] sm:$0xff]
    %v528 = vld [vmem:[#allocation2 + $0x20] sm:$0xff]
    %v529 = vld [vmem:[#allocation2 + $0x28] sm:$0xff]
    %v530 = vld [vmem:[#allocation2 + $0x30] sm:$0xff]
    %v531 = vld [vmem:[#allocation2 + $0x38] sm:$0xff]
    %v532 = vld [vmem:[#allocation2 + $0x40] sm:$0xff]
    %v533 = vld [vmem:[#allocation2 + $0x48] sm:$0xff]
    %v534 = vld [vmem:[#allocation2 + $0x50] sm:$0xff]
    %v535 = vld [vmem:[#allocation2 + $0x58] sm:$0xff]
    %v536 = vld [vmem:[#allocation2 + $0x60] sm:$0xff]
    %v537 = vld [vmem:[#allocation2 + $0x68] sm:$0x3f]
    %539 = vst [vmem:[#allocation1] ss:$2 sm:$0xff] %v524
    %s541 = scalar_lea.vmem [#allocation1], 16
    %542 = vst [vmem:[%s541] ss:$2 sm:$0xff] %v525
    %s544 = scalar_lea.vmem [#allocation1], 32
    %545 = vst [vmem:[%s544] ss:$2 sm:$0xff] %v526
    %s547 = scalar_lea.vmem [#allocation1], 48
    %548 = vst [vmem:[%s547] ss:$2 sm:$0xff] %v527
    %v549 = vld.sshfl [vmem:[#allocation1] sm:$0xff pattern:$0x75643120]
    %v551 = vld.sshfl [vmem:[#allocation1 + $0x8] sm:$0xff pattern:$0x75643120]
    %v553 = vld.sshfl [vmem:[#allocation1 + $0x10] sm:$0xff pattern:$0x75643120]
    %v555 = vld.sshfl [vmem:[#allocation1 + $0x18] sm:$0xff pattern:$0x75643120]
    %v557 = vld.sshfl [vmem:[#allocation1 + $0x20] sm:$0xff pattern:$0x75643120]
    %v559 = vld.sshfl [vmem:[#allocation1 + $0x28] sm:$0xff pattern:$0x75643120]
    %v561 = vld.sshfl [vmem:[#allocation1 + $0x30] sm:$0xff pattern:$0x75643120]
    %v563 = vld.sshfl [vmem:[#allocation1 + $0x38] sm:$0xff pattern:$0x75643120]
    %566 = vst [vmem:[#allocation1] ss:$2 sm:$0xff] %v528
    %568 = vst [vmem:[%s541] ss:$2 sm:$0xff] %v529
    %570 = vst [vmem:[%s544] ss:$2 sm:$0xff] %v530
    %572 = vst [vmem:[%s547] ss:$2 sm:$0xff] %v531
    %v573 = vld.sshfl [vmem:[#allocation1] sm:$0xff pattern:$0x75643120]
    %v575 = vld.sshfl [vmem:[#allocation1 + $0x8] sm:$0xff pattern:$0x75643120]
    %v577 = vld.sshfl [vmem:[#allocation1 + $0x10] sm:$0xff pattern:$0x75643120]
    %v579 = vld.sshfl [vmem:[#allocation1 + $0x18] sm:$0xff pattern:$0x75643120]
    %v581 = vld.sshfl [vmem:[#allocation1 + $0x20] sm:$0xff pattern:$0x75643120]
    %v583 = vld.sshfl [vmem:[#allocation1 + $0x28] sm:$0xff pattern:$0x75643120]
    %v585 = vld.sshfl [vmem:[#allocation1 + $0x30] sm:$0xff pattern:$0x75643120]
    %v587 = vld.sshfl [vmem:[#allocation1 + $0x38] sm:$0xff pattern:$0x75643120]
    %590 = vst [vmem:[#allocation1] ss:$2 sm:$0xff] %v532
    %592 = vst [vmem:[%s541] ss:$2 sm:$0xff] %v533
    %594 = vst [vmem:[%s544] ss:$2 sm:$0xff] %v534
    %596 = vst [vmem:[%s547] ss:$2 sm:$0xff] %v535
    %v597 = vld.sshfl [vmem:[#allocation1] sm:$0xff pattern:$0x75643120]
    %v599 = vld.sshfl [vmem:[#allocation1 + $0x8] sm:$0xff pattern:$0x75643120]
    %v601 = vld.sshfl [vmem:[#allocation1 + $0x10] sm:$0xff pattern:$0x75643120]
    %v603 = vld.sshfl [vmem:[#allocation1 + $0x18] sm:$0xff pattern:$0x75643120]
    %v605 = vld.sshfl [vmem:[#allocation1 + $0x20] sm:$0xff pattern:$0x75643120]
    %v607 = vld.sshfl [vmem:[#allocation1 + $0x28] sm:$0xff pattern:$0x75643120]
    %v609 = vld.sshfl [vmem:[#allocation1 + $0x30] sm:$0xff pattern:$0x75643120]
    %v611 = vld.sshfl [vmem:[#allocation1 + $0x38] sm:$0xff pattern:$0x75643120]
    %614 = vst [vmem:[#allocation1] ss:$2 sm:$0xff] %v536
    %616 = vst [vmem:[%s541] ss:$2 sm:$0xff] %v537
    %v617 = vld.sshfl [vmem:[#allocation1] sm:$0xff pattern:$0x75643120]
    %v619 = vld.sshfl [vmem:[#allocation1 + $0x8] sm:$0xff pattern:$0x75643120]
    %v621 = vld.sshfl [vmem:[#allocation1 + $0x10] sm:$0xff pattern:$0x75643120]
    %v623 = vld.sshfl [vmem:[#allocation1 + $0x18] sm:$0xff pattern:$0x75643120]
    %625 = vrot.lane.b32.xlu0 %v549, 126
    %v626 = vpop.permute.xlu0 %625
    %627 = vrot.lane.b32.xlu0 %v551, 126
    %v628 = vpop.permute.xlu0 %627
    %629 = vrot.lane.b32.xlu0 %v553, 126
    %v630 = vpop.permute.xlu0 %629
    %631 = vrot.lane.b32.xlu0 %v555, 126
    %v632 = vpop.permute.xlu0 %631
    %633 = vrot.lane.b32.xlu0 %v557, 126
    %v634 = vpop.permute.xlu0 %633
    %635 = vrot.lane.b32.xlu0 %v559, 126
    %v636 = vpop.permute.xlu0 %635
    %637 = vrot.lane.b32.xlu0 %v561, 126
    %v638 = vpop.permute.xlu0 %637
    %639 = vrot.lane.b32.xlu0 %v563, 126
    %v640 = vpop.permute.xlu0 %639
    %641 = vrot.lane.b32.xlu0 %v573, 126
    %v642 = vpop.permute.xlu0 %641
    %643 = vrot.lane.b32.xlu0 %v575, 126
    %v644 = vpop.permute.xlu0 %643
    %645 = vrot.lane.b32.xlu0 %v577, 126
    %v646 = vpop.permute.xlu0 %645
    %647 = vrot.lane.b32.xlu0 %v579, 126
    %v648 = vpop.permute.xlu0 %647
    %649 = vrot.lane.b32.xlu0 %v581, 126
    %v650 = vpop.permute.xlu0 %649
    %651 = vrot.lane.b32.xlu0 %v583, 126
    %v652 = vpop.permute.xlu0 %651
    %653 = vrot.lane.b32.xlu0 %v585, 126
    %v654 = vpop.permute.xlu0 %653
    %655 = vrot.lane.b32.xlu0 %v587, 126
    %v656 = vpop.permute.xlu0 %655
    %657 = vrot.lane.b32.xlu0 %v597, 126
    %v658 = vpop.permute.xlu0 %657
    %659 = vrot.lane.b32.xlu0 %v599, 126
    %v660 = vpop.permute.xlu0 %659
    %661 = vrot.lane.b32.xlu0 %v601, 126
    %v662 = vpop.permute.xlu0 %661
    %663 = vrot.lane.b32.xlu0 %v603, 126
    %v664 = vpop.permute.xlu0 %663
    %665 = vrot.lane.b32.xlu0 %v605, 126
    %v666 = vpop.permute.xlu0 %665
    %667 = vrot.lane.b32.xlu0 %v607, 126
    %v668 = vpop.permute.xlu0 %667
    %669 = vrot.lane.b32.xlu0 %v609, 126
    %v670 = vpop.permute.xlu0 %669
    %671 = vrot.lane.b32.xlu0 %v611, 126
    %v672 = vpop.permute.xlu0 %671
    %673 = vrot.lane.b32.xlu0 %v617, 126
    %v674 = vpop.permute.xlu0 %673
    %675 = vrot.lane.b32.xlu0 %v619, 126
    %v676 = vpop.permute.xlu0 %675
    %677 = vrot.lane.b32.xlu0 %v621, 126
    %v678 = vpop.permute.xlu0 %677
    %679 = vrot.lane.b32.xlu0 %v623, 126
    %v680 = vpop.permute.xlu0 %679
    %v681 = vrot.slane %v626, 4
    %v682 = vrot.slane %v628, 4
    %v683 = vrot.slane %v630, 4
    %v684 = vrot.slane %v632, 4
    %v685 = vrot.slane %v634, 4
    %v686 = vrot.slane %v636, 4
    %v687 = vrot.slane %v638, 4
    %v688 = vrot.slane %v640, 4
    %v689 = vrot.slane %v642, 4
    %v690 = vrot.slane %v644, 4
    %v691 = vrot.slane %v646, 4
    %v692 = vrot.slane %v648, 4
    %v693 = vrot.slane %v650, 4
    %v694 = vrot.slane %v652, 4
    %v695 = vrot.slane %v654, 4
    %v696 = vrot.slane %v656, 4
    %v697 = vrot.slane %v658, 4
    %v698 = vrot.slane %v660, 4
    %v699 = vrot.slane %v662, 4
    %v700 = vrot.slane %v664, 4
    %v701 = vrot.slane %v666, 4
    %v702 = vrot.slane %v668, 4
    %v703 = vrot.slane %v670, 4
    %v704 = vrot.slane %v672, 4
    %v705 = vrot.slane %v674, 4
    %v706 = vrot.slane %v676, 4
    %v707 = vrot.slane %v678, 4
    %v708 = vrot.slane %v680, 4
    %v709 = vsel %vm414, %v681, %v682
    %vm710 = vcmask 1031168
    %v711 = vsel %vm710, %v626, %v709
    %v712 = vsel %vm414, %v682, %v683
    %v713 = vsel %vm710, %v628, %v712
    %v714 = vsel %vm414, %v683, %v684
    %v715 = vsel %vm710, %v630, %v714
    %v716 = vsel %vm414, %v684, %v685
    %v717 = vsel %vm710, %v632, %v716
    %v718 = vsel %vm414, %v685, %v686
    %v719 = vsel %vm710, %v634, %v718
    %v720 = vsel %vm414, %v686, %v687
    %v721 = vsel %vm710, %v636, %v720
    %v722 = vsel %vm414, %v687, %v688
    %v723 = vsel %vm710, %v638, %v722
    %v724 = vsel %vm414, %v688, %v689
    %v725 = vsel %vm710, %v640, %v724
    %v726 = vsel %vm414, %v689, %v690
    %v727 = vsel %vm710, %v642, %v726
    %v728 = vsel %vm414, %v690, %v691
    %v729 = vsel %vm710, %v644, %v728
    %v730 = vsel %vm414, %v691, %v692
    %v731 = vsel %vm710, %v646, %v730
    %v732 = vsel %vm414, %v692, %v693
    %v733 = vsel %vm710, %v648, %v732
    %v734 = vsel %vm414, %v693, %v694
    %v735 = vsel %vm710, %v650, %v734
    %v736 = vsel %vm414, %v694, %v695
    %v737 = vsel %vm710, %v652, %v736
    %v738 = vsel %vm414, %v695, %v696
    %v739 = vsel %vm710, %v654, %v738
    %v740 = vsel %vm414, %v696, %v697
    %v741 = vsel %vm710, %v656, %v740
    %v742 = vsel %vm414, %v697, %v698
    %v743 = vsel %vm710, %v658, %v742
    %v744 = vsel %vm414, %v698, %v699
    %v745 = vsel %vm710, %v660, %v744
    %v746 = vsel %vm414, %v699, %v700
    %v747 = vsel %vm710, %v662, %v746
    %v748 = vsel %vm414, %v700, %v701
    %v749 = vsel %vm710, %v664, %v748
    %v750 = vsel %vm414, %v701, %v702
    %v751 = vsel %vm710, %v666, %v750
    %v752 = vsel %vm414, %v702, %v703
    %v753 = vsel %vm710, %v668, %v752
    %v754 = vsel %vm414, %v703, %v704
    %v755 = vsel %vm710, %v670, %v754
    %v756 = vsel %vm414, %v704, %v705
    %v757 = vsel %vm710, %v672, %v756
    %v758 = vsel %vm414, %v705, %v706
    %v759 = vsel %vm710, %v674, %v758
    %v760 = vsel %vm414, %v706, %v707
    %v761 = vsel %vm710, %v676, %v760
    %v762 = vsel %vm414, %v707, %v708
    %v763 = vsel %vm710, %v678, %v762
    %791 = vst [vmem:[#allocation3 + $0xd8] sm:$0x33] %v711
    %792 = vst [vmem:[#allocation3 + $0xe0] sm:$0x33] %v713
    %793 = vst [vmem:[#allocation3 + $0xe8] sm:$0x33] %v715
    %794 = vst [vmem:[#allocation3 + $0xf0] sm:$0x33] %v717
    %795 = vst [vmem:[#allocation3 + $0xf8] sm:$0x33] %v719
    %796 = vst [vmem:[#allocation3 + $0x100] sm:$0x33] %v721
    %797 = vst [vmem:[#allocation3 + $0x108] sm:$0x33] %v723
    %798 = vst [vmem:[#allocation3 + $0x110] sm:$0x33] %v725
    %799 = vst [vmem:[#allocation3 + $0x118] sm:$0x33] %v727
    %800 = vst [vmem:[#allocation3 + $0x120] sm:$0x33] %v729
    %801 = vst [vmem:[#allocation3 + $0x128] sm:$0x33] %v731
    %802 = vst [vmem:[#allocation3 + $0x130] sm:$0x33] %v733
    %803 = vst [vmem:[#allocation3 + $0x138] sm:$0x33] %v735
    %804 = vst [vmem:[#allocation3 + $0x140] sm:$0x33] %v737
    %805 = vst [vmem:[#allocation3 + $0x148] sm:$0x33] %v739
    %806 = vst [vmem:[#allocation3 + $0x150] sm:$0x33] %v741
    %807 = vst [vmem:[#allocation3 + $0x158] sm:$0x33] %v743
    %808 = vst [vmem:[#allocation3 + $0x160] sm:$0x33] %v745
    %809 = vst [vmem:[#allocation3 + $0x168] sm:$0x33] %v747
    %810 = vst [vmem:[#allocation3 + $0x170] sm:$0x33] %v749
    %811 = vst [vmem:[#allocation3 + $0x178] sm:$0x33] %v751
    %812 = vst [vmem:[#allocation3 + $0x180] sm:$0x33] %v753
    %813 = vst [vmem:[#allocation3 + $0x188] sm:$0x33] %v755
    %814 = vst [vmem:[#allocation3 + $0x190] sm:$0x33] %v757
    %815 = vst [vmem:[#allocation3 + $0x198] sm:$0x33] %v759
    %816 = vst [vmem:[#allocation3 + $0x1a0] sm:$0x33] %v761
    %817 = vst [vmem:[#allocation3 + $0x1a8] sm:$0x33] %v763
    %v818 = vld [vmem:[#allocation2] sm:$0xff]
    %v819 = vld [vmem:[#allocation2 + $0x8] sm:$0xff]
    %v820 = vld [vmem:[#allocation2 + $0x10] sm:$0xff]
    %v821 = vld [vmem:[#allocation2 + $0x18] sm:$0xff]
    %v822 = vld [vmem:[#allocation2 + $0x20] sm:$0xff]
    %v823 = vld [vmem:[#allocation2 + $0x28] sm:$0xff]
    %v824 = vld [vmem:[#allocation2 + $0x30] sm:$0xff]
    %v825 = vld [vmem:[#allocation2 + $0x38] sm:$0xff]
    %v826 = vld [vmem:[#allocation2 + $0x40] sm:$0xff]
    %v827 = vld [vmem:[#allocation2 + $0x48] sm:$0xff]
    %v828 = vld [vmem:[#allocation2 + $0x50] sm:$0xff]
    %v829 = vld [vmem:[#allocation2 + $0x58] sm:$0xff]
    %v830 = vld [vmem:[#allocation2 + $0x60] sm:$0xff]
    %v831 = vld [vmem:[#allocation2 + $0x68] sm:$0x3f]
    %s833 = scalar_lea.vmem [#allocation1], 1
    %834 = vst [vmem:[%s833] ss:$2 sm:$0xff] %v818
    %s836 = scalar_lea.vmem [#allocation1], 17
    %837 = vst [vmem:[%s836] ss:$2 sm:$0xff] %v819
    %s839 = scalar_lea.vmem [#allocation1], 33
    %840 = vst [vmem:[%s839] ss:$2 sm:$0xff] %v820
    %s842 = scalar_lea.vmem [#allocation1], 49
    %843 = vst [vmem:[%s842] ss:$2 sm:$0xff] %v821
    %v844 = vld.sshfl [vmem:[#allocation1] sm:$0xff pattern:$0x75643120]
    %v846 = vld.sshfl [vmem:[#allocation1 + $0x8] sm:$0xff pattern:$0x75643120]
    %v848 = vld.sshfl [vmem:[#allocation1 + $0x10] sm:$0xff pattern:$0x75643120]
    %v850 = vld.sshfl [vmem:[#allocation1 + $0x18] sm:$0xff pattern:$0x75643120]
    %v852 = vld.sshfl [vmem:[#allocation1 + $0x20] sm:$0xff pattern:$0x75643120]
    %v854 = vld.sshfl [vmem:[#allocation1 + $0x28] sm:$0xff pattern:$0x75643120]
    %v856 = vld.sshfl [vmem:[#allocation1 + $0x30] sm:$0xff pattern:$0x75643120]
    %v858 = vld.sshfl [vmem:[#allocation1 + $0x38] sm:$0xff pattern:$0x75643120]
    %861 = vst [vmem:[%s833] ss:$2 sm:$0xff] %v822
    %863 = vst [vmem:[%s836] ss:$2 sm:$0xff] %v823
    %865 = vst [vmem:[%s839] ss:$2 sm:$0xff] %v824
    %867 = vst [vmem:[%s842] ss:$2 sm:$0xff] %v825
    %v868 = vld.sshfl [vmem:[#allocation1] sm:$0xff pattern:$0x75643120]
    %v870 = vld.sshfl [vmem:[#allocation1 + $0x8] sm:$0xff pattern:$0x75643120]
    %v872 = vld.sshfl [vmem:[#allocation1 + $0x10] sm:$0xff pattern:$0x75643120]
    %v874 = vld.sshfl [vmem:[#allocation1 + $0x18] sm:$0xff pattern:$0x75643120]
    %v876 = vld.sshfl [vmem:[#allocation1 + $0x20] sm:$0xff pattern:$0x75643120]
    %v878 = vld.sshfl [vmem:[#allocation1 + $0x28] sm:$0xff pattern:$0x75643120]
    %v880 = vld.sshfl [vmem:[#allocation1 + $0x30] sm:$0xff pattern:$0x75643120]
    %v882 = vld.sshfl [vmem:[#allocation1 + $0x38] sm:$0xff pattern:$0x75643120]
    %885 = vst [vmem:[%s833] ss:$2 sm:$0xff] %v826
    %887 = vst [vmem:[%s836] ss:$2 sm:$0xff] %v827
    %889 = vst [vmem:[%s839] ss:$2 sm:$0xff] %v828
    %891 = vst [vmem:[%s842] ss:$2 sm:$0xff] %v829
    %v892 = vld.sshfl [vmem:[#allocation1] sm:$0xff pattern:$0x75643120]
    %v894 = vld.sshfl [vmem:[#allocation1 + $0x8] sm:$0xff pattern:$0x75643120]
    %v896 = vld.sshfl [vmem:[#allocation1 + $0x10] sm:$0xff pattern:$0x75643120]
    %v898 = vld.sshfl [vmem:[#allocation1 + $0x18] sm:$0xff pattern:$0x75643120]
    %v900 = vld.sshfl [vmem:[#allocation1 + $0x20] sm:$0xff pattern:$0x75643120]
    %v902 = vld.sshfl [vmem:[#allocation1 + $0x28] sm:$0xff pattern:$0x75643120]
    %v904 = vld.sshfl [vmem:[#allocation1 + $0x30] sm:$0xff pattern:$0x75643120]
    %v906 = vld.sshfl [vmem:[#allocation1 + $0x38] sm:$0xff pattern:$0x75643120]
    %909 = vst [vmem:[%s833] ss:$2 sm:$0xff] %v830
    %911 = vst [vmem:[%s836] ss:$2 sm:$0xff] %v831
    %v912 = vld.sshfl [vmem:[#allocation1] sm:$0xff pattern:$0x75643120]
    %v914 = vld.sshfl [vmem:[#allocation1 + $0x8] sm:$0xff pattern:$0x75643120]
    %v916 = vld.sshfl [vmem:[#allocation1 + $0x10] sm:$0xff pattern:$0x75643120]
    %v918 = vld.sshfl [vmem:[#allocation1 + $0x18] sm:$0xff pattern:$0x75643120]
    %920 = vrot.lane.b32.xlu0 %v844, 110
    %v921 = vpop.permute.xlu0 %920
    %922 = vrot.lane.b32.xlu0 %v846, 110
    %v923 = vpop.permute.xlu0 %922
    %924 = vrot.lane.b32.xlu0 %v848, 110
    %v925 = vpop.permute.xlu0 %924
    %926 = vrot.lane.b32.xlu0 %v850, 110
    %v927 = vpop.permute.xlu0 %926
    %928 = vrot.lane.b32.xlu0 %v852, 110
    %v929 = vpop.permute.xlu0 %928
    %930 = vrot.lane.b32.xlu0 %v854, 110
    %v931 = vpop.permute.xlu0 %930
    %932 = vrot.lane.b32.xlu0 %v856, 110
    %v933 = vpop.permute.xlu0 %932
    %934 = vrot.lane.b32.xlu0 %v858, 110
    %v935 = vpop.permute.xlu0 %934
    %936 = vrot.lane.b32.xlu0 %v868, 110
    %v937 = vpop.permute.xlu0 %936
    %938 = vrot.lane.b32.xlu0 %v870, 110
    %v939 = vpop.permute.xlu0 %938
    %940 = vrot.lane.b32.xlu0 %v872, 110
    %v941 = vpop.permute.xlu0 %940
    %942 = vrot.lane.b32.xlu0 %v874, 110
    %v943 = vpop.permute.xlu0 %942
    %944 = vrot.lane.b32.xlu0 %v876, 110
    %v945 = vpop.permute.xlu0 %944
    %946 = vrot.lane.b32.xlu0 %v878, 110
    %v947 = vpop.permute.xlu0 %946
    %948 = vrot.lane.b32.xlu0 %v880, 110
    %v949 = vpop.permute.xlu0 %948
    %950 = vrot.lane.b32.xlu0 %v882, 110
    %v951 = vpop.permute.xlu0 %950
    %952 = vrot.lane.b32.xlu0 %v892, 110
    %v953 = vpop.permute.xlu0 %952
    %954 = vrot.lane.b32.xlu0 %v894, 110
    %v955 = vpop.permute.xlu0 %954
    %956 = vrot.lane.b32.xlu0 %v896, 110
    %v957 = vpop.permute.xlu0 %956
    %958 = vrot.lane.b32.xlu0 %v898, 110
    %v959 = vpop.permute.xlu0 %958
    %960 = vrot.lane.b32.xlu0 %v900, 110
    %v961 = vpop.permute.xlu0 %960
    %962 = vrot.lane.b32.xlu0 %v902, 110
    %v963 = vpop.permute.xlu0 %962
    %964 = vrot.lane.b32.xlu0 %v904, 110
    %v965 = vpop.permute.xlu0 %964
    %966 = vrot.lane.b32.xlu0 %v906, 110
    %v967 = vpop.permute.xlu0 %966
    %968 = vrot.lane.b32.xlu0 %v912, 110
    %v969 = vpop.permute.xlu0 %968
    %970 = vrot.lane.b32.xlu0 %v914, 110
    %v971 = vpop.permute.xlu0 %970
    %972 = vrot.lane.b32.xlu0 %v916, 110
    %v973 = vpop.permute.xlu0 %972
    %974 = vrot.lane.b32.xlu0 %v918, 110
    %v975 = vpop.permute.xlu0 %974
    %v976 = vrot.slane %v921, 4
    %v977 = vrot.slane %v923, 4
    %v978 = vrot.slane %v925, 4
    %v979 = vrot.slane %v927, 4
    %v980 = vrot.slane %v929, 4
    %v981 = vrot.slane %v931, 4
    %v982 = vrot.slane %v933, 4
    %v983 = vrot.slane %v935, 4
    %v984 = vrot.slane %v937, 4
    %v985 = vrot.slane %v939, 4
    %v986 = vrot.slane %v941, 4
    %v987 = vrot.slane %v943, 4
    %v988 = vrot.slane %v945, 4
    %v989 = vrot.slane %v947, 4
    %v990 = vrot.slane %v949, 4
    %v991 = vrot.slane %v951, 4
    %v992 = vrot.slane %v953, 4
    %v993 = vrot.slane %v955, 4
    %v994 = vrot.slane %v957, 4
    %v995 = vrot.slane %v959, 4
    %v996 = vrot.slane %v961, 4
    %v997 = vrot.slane %v963, 4
    %v998 = vrot.slane %v965, 4
    %v999 = vrot.slane %v967, 4
    %v1000 = vrot.slane %v969, 4
    %v1001 = vrot.slane %v971, 4
    %v1002 = vrot.slane %v973, 4
    %v1003 = vrot.slane %v975, 4
    %v1004 = vsel %vm414, %v976, %v977
    %vm1005 = vcmask 900096
    %v1006 = vsel %vm1005, %v921, %v1004
    %v1007 = vsel %vm414, %v977, %v978
    %v1008 = vsel %vm1005, %v923, %v1007
    %v1009 = vsel %vm414, %v978, %v979
    %v1010 = vsel %vm1005, %v925, %v1009
    %v1011 = vsel %vm414, %v979, %v980
    %v1012 = vsel %vm1005, %v927, %v1011
    %v1013 = vsel %vm414, %v980, %v981
    %v1014 = vsel %vm1005, %v929, %v1013
    %v1015 = vsel %vm414, %v981, %v982
    %v1016 = vsel %vm1005, %v931, %v1015
    %v1017 = vsel %vm414, %v982, %v983
    %v1018 = vsel %vm1005, %v933, %v1017
    %v1019 = vsel %vm414, %v983, %v984
    %v1020 = vsel %vm1005, %v935, %v1019
    %v1021 = vsel %vm414, %v984, %v985
    %v1022 = vsel %vm1005, %v937, %v1021
    %v1023 = vsel %vm414, %v985, %v986
    %v1024 = vsel %vm1005, %v939, %v1023
    %v1025 = vsel %vm414, %v986, %v987
    %v1026 = vsel %vm1005, %v941, %v1025
    %v1027 = vsel %vm414, %v987, %v988
    %v1028 = vsel %vm1005, %v943, %v1027
    %v1029 = vsel %vm414, %v988, %v989
    %v1030 = vsel %vm1005, %v945, %v1029
    %v1031 = vsel %vm414, %v989, %v990
    %v1032 = vsel %vm1005, %v947, %v1031
    %v1033 = vsel %vm414, %v990, %v991
    %v1034 = vsel %vm1005, %v949, %v1033
    %v1035 = vsel %vm414, %v991, %v992
    %v1036 = vsel %vm1005, %v951, %v1035
    %v1037 = vsel %vm414, %v992, %v993
    %v1038 = vsel %vm1005, %v953, %v1037
    %v1039 = vsel %vm414, %v993, %v994
    %v1040 = vsel %vm1005, %v955, %v1039
    %v1041 = vsel %vm414, %v994, %v995
    %v1042 = vsel %vm1005, %v957, %v1041
    %v1043 = vsel %vm414, %v995, %v996
    %v1044 = vsel %vm1005, %v959, %v1043
    %v1045 = vsel %vm414, %v996, %v997
    %v1046 = vsel %vm1005, %v961, %v1045
    %v1047 = vsel %vm414, %v997, %v998
    %v1048 = vsel %vm1005, %v963, %v1047
    %v1049 = vsel %vm414, %v998, %v999
    %v1050 = vsel %vm1005, %v965, %v1049
    %v1051 = vsel %vm414, %v999, %v1000
    %v1052 = vsel %vm1005, %v967, %v1051
    %v1053 = vsel %vm414, %v1000, %v1001
    %v1054 = vsel %vm1005, %v969, %v1053
    %v1055 = vsel %vm414, %v1001, %v1002
    %v1056 = vsel %vm1005, %v971, %v1055
    %v1057 = vsel %vm414, %v1002, %v1003
    %v1058 = vsel %vm1005, %v973, %v1057
    %1086 = vst [vmem:[#allocation3 + $0xd8] sm:$0xcc] %v1006
    %1087 = vst [vmem:[#allocation3 + $0xe0] sm:$0xcc] %v1008
    %1088 = vst [vmem:[#allocation3 + $0xe8] sm:$0xcc] %v1010
    %1089 = vst [vmem:[#allocation3 + $0xf0] sm:$0xcc] %v1012
    %1090 = vst [vmem:[#allocation3 + $0xf8] sm:$0xcc] %v1014
    %1091 = vst [vmem:[#allocation3 + $0x100] sm:$0xcc] %v1016
    %1092 = vst [vmem:[#allocation3 + $0x108] sm:$0xcc] %v1018
    %1093 = vst [vmem:[#allocation3 + $0x110] sm:$0xcc] %v1020
    %1094 = vst [vmem:[#allocation3 + $0x118] sm:$0xcc] %v1022
    %1095 = vst [vmem:[#allocation3 + $0x120] sm:$0xcc] %v1024
    %1096 = vst [vmem:[#allocation3 + $0x128] sm:$0xcc] %v1026
    %1097 = vst [vmem:[#allocation3 + $0x130] sm:$0xcc] %v1028
    %1098 = vst [vmem:[#allocation3 + $0x138] sm:$0xcc] %v1030
    %1099 = vst [vmem:[#allocation3 + $0x140] sm:$0xcc] %v1032
    %1100 = vst [vmem:[#allocation3 + $0x148] sm:$0xcc] %v1034
    %1101 = vst [vmem:[#allocation3 + $0x150] sm:$0xcc] %v1036
    %1102 = vst [vmem:[#allocation3 + $0x158] sm:$0xcc] %v1038
    %1103 = vst [vmem:[#allocation3 + $0x160] sm:$0xcc] %v1040
    %1104 = vst [vmem:[#allocation3 + $0x168] sm:$0xcc] %v1042
    %1105 = vst [vmem:[#allocation3 + $0x170] sm:$0xcc] %v1044
    %1106 = vst [vmem:[#allocation3 + $0x178] sm:$0xcc] %v1046
    %1107 = vst [vmem:[#allocation3 + $0x180] sm:$0xcc] %v1048
    %1108 = vst [vmem:[#allocation3 + $0x188] sm:$0xcc] %v1050
    %1109 = vst [vmem:[#allocation3 + $0x190] sm:$0xcc] %v1052
    %1110 = vst [vmem:[#allocation3 + $0x198] sm:$0xcc] %v1054
    %1111 = vst [vmem:[#allocation3 + $0x1a0] sm:$0xcc] %v1056
    %1112 = vst [vmem:[#allocation3 + $0x1a8] sm:$0xcc] %v1058
    %v1113 = vld [vmem:[#allocation2] sm:$0xff]
    %v1114 = vld [vmem:[#allocation2 + $0x8] sm:$0xff]
    %v1115 = vld [vmem:[#allocation2 + $0x10] sm:$0xff]
    %v1116 = vld [vmem:[#allocation2 + $0x18] sm:$0xff]
    %v1117 = vld [vmem:[#allocation2 + $0x20] sm:$0xff]
    %v1118 = vld [vmem:[#allocation2 + $0x28] sm:$0xff]
    %v1119 = vld [vmem:[#allocation2 + $0x30] sm:$0xff]
    %v1120 = vld [vmem:[#allocation2 + $0x38] sm:$0xff]
    %v1121 = vld [vmem:[#allocation2 + $0x40] sm:$0xff]
    %v1122 = vld [vmem:[#allocation2 + $0x48] sm:$0xff]
    %v1123 = vld [vmem:[#allocation2 + $0x50] sm:$0xff]
    %v1124 = vld [vmem:[#allocation2 + $0x58] sm:$0xff]
    %v1125 = vld [vmem:[#allocation2 + $0x60] sm:$0xff]
    %v1126 = vld [vmem:[#allocation2 + $0x68] sm:$0x3f]
    %1128 = vst [vmem:[#allocation1] ss:$2 sm:$0xff] %v1113
    %s1130 = scalar_lea.vmem [#allocation1], 16
    %1131 = vst [vmem:[%s1130] ss:$2 sm:$0xff] %v1114
    %s1133 = scalar_lea.vmem [#allocation1], 32
    %1134 = vst [vmem:[%s1133] ss:$2 sm:$0xff] %v1115
    %s1136 = scalar_lea.vmem [#allocation1], 48
    %1137 = vst [vmem:[%s1136] ss:$2 sm:$0xff] %v1116
    %v1138 = vld.sshfl [vmem:[#allocation1] sm:$0xff pattern:$0x75643120]
    %v1140 = vld.sshfl [vmem:[#allocation1 + $0x8] sm:$0xff pattern:$0x75643120]
    %v1142 = vld.sshfl [vmem:[#allocation1 + $0x10] sm:$0xff pattern:$0x75643120]
    %v1144 = vld.sshfl [vmem:[#allocation1 + $0x18] sm:$0xff pattern:$0x75643120]
    %v1146 = vld.sshfl [vmem:[#allocation1 + $0x20] sm:$0xff pattern:$0x75643120]
    %v1148 = vld.sshfl [vmem:[#allocation1 + $0x28] sm:$0xff pattern:$0x75643120]
    %v1150 = vld.sshfl [vmem:[#allocation1 + $0x30] sm:$0xff pattern:$0x75643120]
    %v1152 = vld.sshfl [vmem:[#allocation1 + $0x38] sm:$0xff pattern:$0x75643120]
    %1155 = vst [vmem:[#allocation1] ss:$2 sm:$0xff] %v1117
    %1157 = vst [vmem:[%s1130] ss:$2 sm:$0xff] %v1118
    %1159 = vst [vmem:[%s1133] ss:$2 sm:$0xff] %v1119
    %1161 = vst [vmem:[%s1136] ss:$2 sm:$0xff] %v1120
    %v1162 = vld.sshfl [vmem:[#allocation1] sm:$0xff pattern:$0x75643120]
    %v1164 = vld.sshfl [vmem:[#allocation1 + $0x8] sm:$0xff pattern:$0x75643120]
    %v1166 = vld.sshfl [vmem:[#allocation1 + $0x10] sm:$0xff pattern:$0x75643120]
    %v1168 = vld.sshfl [vmem:[#allocation1 + $0x18] sm:$0xff pattern:$0x75643120]
    %v1170 = vld.sshfl [vmem:[#allocation1 + $0x20] sm:$0xff pattern:$0x75643120]
    %v1172 = vld.sshfl [vmem:[#allocation1 + $0x28] sm:$0xff pattern:$0x75643120]
    %v1174 = vld.sshfl [vmem:[#allocation1 + $0x30] sm:$0xff pattern:$0x75643120]
    %v1176 = vld.sshfl [vmem:[#allocation1 + $0x38] sm:$0xff pattern:$0x75643120]
    %1179 = vst [vmem:[#allocation1] ss:$2 sm:$0xff] %v1121
    %1181 = vst [vmem:[%s1130] ss:$2 sm:$0xff] %v1122
    %1183 = vst [vmem:[%s1133] ss:$2 sm:$0xff] %v1123
    %1185 = vst [vmem:[%s1136] ss:$2 sm:$0xff] %v1124
    %v1186 = vld.sshfl [vmem:[#allocation1] sm:$0xff pattern:$0x75643120]
    %v1188 = vld.sshfl [vmem:[#allocation1 + $0x8] sm:$0xff pattern:$0x75643120]
    %v1190 = vld.sshfl [vmem:[#allocation1 + $0x10] sm:$0xff pattern:$0x75643120]
    %v1192 = vld.sshfl [vmem:[#allocation1 + $0x18] sm:$0xff pattern:$0x75643120]
    %v1194 = vld.sshfl [vmem:[#allocation1 + $0x20] sm:$0xff pattern:$0x75643120]
    %v1196 = vld.sshfl [vmem:[#allocation1 + $0x28] sm:$0xff pattern:$0x75643120]
    %v1198 = vld.sshfl [vmem:[#allocation1 + $0x30] sm:$0xff pattern:$0x75643120]
    %v1200 = vld.sshfl [vmem:[#allocation1 + $0x38] sm:$0xff pattern:$0x75643120]
    %1203 = vst [vmem:[#allocation1] ss:$2 sm:$0xff] %v1125
    %1205 = vst [vmem:[%s1130] ss:$2 sm:$0xff] %v1126
    %v1206 = vld.sshfl [vmem:[#allocation1] sm:$0xff pattern:$0x75643120]
    %v1208 = vld.sshfl [vmem:[#allocation1 + $0x8] sm:$0xff pattern:$0x75643120]
    %v1210 = vld.sshfl [vmem:[#allocation1 + $0x10] sm:$0xff pattern:$0x75643120]
    %v1212 = vld.sshfl [vmem:[#allocation1 + $0x18] sm:$0xff pattern:$0x75643120]
    %1214 = vrot.lane.b32.xlu0 %v1138, 109
    %v1215 = vpop.permute.xlu0 %1214
    %1216 = vrot.lane.b32.xlu0 %v1140, 109
    %v1217 = vpop.permute.xlu0 %1216
    %1218 = vrot.lane.b32.xlu0 %v1142, 109
    %v1219 = vpop.permute.xlu0 %1218
    %1220 = vrot.lane.b32.xlu0 %v1144, 109
    %v1221 = vpop.permute.xlu0 %1220
    %1222 = vrot.lane.b32.xlu0 %v1146, 109
    %v1223 = vpop.permute.xlu0 %1222
    %1224 = vrot.lane.b32.xlu0 %v1148, 109
    %v1225 = vpop.permute.xlu0 %1224
    %1226 = vrot.lane.b32.xlu0 %v1150, 109
    %v1227 = vpop.permute.xlu0 %1226
    %1228 = vrot.lane.b32.xlu0 %v1152, 109
    %v1229 = vpop.permute.xlu0 %1228
    %1230 = vrot.lane.b32.xlu0 %v1162, 109
    %v1231 = vpop.permute.xlu0 %1230
    %1232 = vrot.lane.b32.xlu0 %v1164, 109
    %v1233 = vpop.permute.xlu0 %1232
    %1234 = vrot.lane.b32.xlu0 %v1166, 109
    %v1235 = vpop.permute.xlu0 %1234
    %1236 = vrot.lane.b32.xlu0 %v1168, 109
    %v1237 = vpop.permute.xlu0 %1236
    %1238 = vrot.lane.b32.xlu0 %v1170, 109
    %v1239 = vpop.permute.xlu0 %1238
    %1240 = vrot.lane.b32.xlu0 %v1172, 109
    %v1241 = vpop.permute.xlu0 %1240
    %1242 = vrot.lane.b32.xlu0 %v1174, 109
    %v1243 = vpop.permute.xlu0 %1242
    %1244 = vrot.lane.b32.xlu0 %v1176, 109
    %v1245 = vpop.permute.xlu0 %1244
    %1246 = vrot.lane.b32.xlu0 %v1186, 109
    %v1247 = vpop.permute.xlu0 %1246
    %1248 = vrot.lane.b32.xlu0 %v1188, 109
    %v1249 = vpop.permute.xlu0 %1248
    %1250 = vrot.lane.b32.xlu0 %v1190, 109
    %v1251 = vpop.permute.xlu0 %1250
    %1252 = vrot.lane.b32.xlu0 %v1192, 109
    %v1253 = vpop.permute.xlu0 %1252
    %1254 = vrot.lane.b32.xlu0 %v1194, 109
    %v1255 = vpop.permute.xlu0 %1254
    %1256 = vrot.lane.b32.xlu0 %v1196, 109
    %v1257 = vpop.permute.xlu0 %1256
    %1258 = vrot.lane.b32.xlu0 %v1198, 109
    %v1259 = vpop.permute.xlu0 %1258
    %1260 = vrot.lane.b32.xlu0 %v1200, 109
    %v1261 = vpop.permute.xlu0 %1260
    %1262 = vrot.lane.b32.xlu0 %v1206, 109
    %v1263 = vpop.permute.xlu0 %1262
    %1264 = vrot.lane.b32.xlu0 %v1208, 109
    %v1265 = vpop.permute.xlu0 %1264
    %1266 = vrot.lane.b32.xlu0 %v1210, 109
    %v1267 = vpop.permute.xlu0 %1266
    %1268 = vrot.lane.b32.xlu0 %v1212, 109
    %v1269 = vpop.permute.xlu0 %1268
    %v1270 = vrot.slane %v1215, 4
    %v1271 = vrot.slane %v1217, 4
    %v1272 = vrot.slane %v1219, 4
    %v1273 = vrot.slane %v1221, 4
    %v1274 = vrot.slane %v1223, 4
    %v1275 = vrot.slane %v1225, 4
    %v1276 = vrot.slane %v1227, 4
    %v1277 = vrot.slane %v1229, 4
    %v1278 = vrot.slane %v1231, 4
    %v1279 = vrot.slane %v1233, 4
    %v1280 = vrot.slane %v1235, 4
    %v1281 = vrot.slane %v1237, 4
    %v1282 = vrot.slane %v1239, 4
    %v1283 = vrot.slane %v1241, 4
    %v1284 = vrot.slane %v1243, 4
    %v1285 = vrot.slane %v1245, 4
    %v1286 = vrot.slane %v1247, 4
    %v1287 = vrot.slane %v1249, 4
    %v1288 = vrot.slane %v1251, 4
    %v1289 = vrot.slane %v1253, 4
    %v1290 = vrot.slane %v1255, 4
    %v1291 = vrot.slane %v1257, 4
    %v1292 = vrot.slane %v1259, 4
    %v1293 = vrot.slane %v1261, 4
    %v1294 = vrot.slane %v1263, 4
    %v1295 = vrot.slane %v1265, 4
    %v1296 = vrot.slane %v1267, 4
    %v1297 = vrot.slane %v1269, 4
    %v1298 = vsel %vm414, %v1270, %v1271
    %vm1299 = vcmask 891904
    %v1300 = vsel %vm1299, %v1215, %v1298
    %v1301 = vsel %vm414, %v1271, %v1272
    %v1302 = vsel %vm1299, %v1217, %v1301
    %v1303 = vsel %vm414, %v1272, %v1273
    %v1304 = vsel %vm1299, %v1219, %v1303
    %v1305 = vsel %vm414, %v1273, %v1274
    %v1306 = vsel %vm1299, %v1221, %v1305
    %v1307 = vsel %vm414, %v1274, %v1275
    %v1308 = vsel %vm1299, %v1223, %v1307
    %v1309 = vsel %vm414, %v1275, %v1276
    %v1310 = vsel %vm1299, %v1225, %v1309
    %v1311 = vsel %vm414, %v1276, %v1277
    %v1312 = vsel %vm1299, %v1227, %v1311
    %v1313 = vsel %vm414, %v1277, %v1278
    %v1314 = vsel %vm1299, %v1229, %v1313
    %v1315 = vsel %vm414, %v1278, %v1279
    %v1316 = vsel %vm1299, %v1231, %v1315
    %v1317 = vsel %vm414, %v1279, %v1280
    %v1318 = vsel %vm1299, %v1233, %v1317
    %v1319 = vsel %vm414, %v1280, %v1281
    %v1320 = vsel %vm1299, %v1235, %v1319
    %v1321 = vsel %vm414, %v1281, %v1282
    %v1322 = vsel %vm1299, %v1237, %v1321
    %v1323 = vsel %vm414, %v1282, %v1283
    %v1324 = vsel %vm1299, %v1239, %v1323
    %v1325 = vsel %vm414, %v1283, %v1284
    %v1326 = vsel %vm1299, %v1241, %v1325
    %v1327 = vsel %vm414, %v1284, %v1285
    %v1328 = vsel %vm1299, %v1243, %v1327
    %v1329 = vsel %vm414, %v1285, %v1286
    %v1330 = vsel %vm1299, %v1245, %v1329
    %v1331 = vsel %vm414, %v1286, %v1287
    %v1332 = vsel %vm1299, %v1247, %v1331
    %v1333 = vsel %vm414, %v1287, %v1288
    %v1334 = vsel %vm1299, %v1249, %v1333
    %v1335 = vsel %vm414, %v1288, %v1289
    %v1336 = vsel %vm1299, %v1251, %v1335
    %v1337 = vsel %vm414, %v1289, %v1290
    %v1338 = vsel %vm1299, %v1253, %v1337
    %v1339 = vsel %vm414, %v1290, %v1291
    %v1340 = vsel %vm1299, %v1255, %v1339
    %v1341 = vsel %vm414, %v1291, %v1292
    %v1342 = vsel %vm1299, %v1257, %v1341
    %v1343 = vsel %vm414, %v1292, %v1293
    %v1344 = vsel %vm1299, %v1259, %v1343
    %v1345 = vsel %vm414, %v1293, %v1294
    %v1346 = vsel %vm1299, %v1261, %v1345
    %v1347 = vsel %vm414, %v1294, %v1295
    %v1348 = vsel %vm1299, %v1263, %v1347
    %v1349 = vsel %vm414, %v1295, %v1296
    %v1350 = vsel %vm1299, %v1265, %v1349
    %v1351 = vsel %vm414, %v1296, %v1297
    %v1352 = vsel %vm1299, %v1267, %v1351
    %1380 = vst [vmem:[#allocation3 + $0x1b0] sm:$0x33] %v1300
    %1381 = vst [vmem:[#allocation3 + $0x1b8] sm:$0x33] %v1302
    %1382 = vst [vmem:[#allocation3 + $0x1c0] sm:$0x33] %v1304
    %1383 = vst [vmem:[#allocation3 + $0x1c8] sm:$0x33] %v1306
    %1384 = vst [vmem:[#allocation3 + $0x1d0] sm:$0x33] %v1308
    %1385 = vst [vmem:[#allocation3 + $0x1d8] sm:$0x33] %v1310
    %1386 = vst [vmem:[#allocation3 + $0x1e0] sm:$0x33] %v1312
    %1387 = vst [vmem:[#allocation3 + $0x1e8] sm:$0x33] %v1314
    %1388 = vst [vmem:[#allocation3 + $0x1f0] sm:$0x33] %v1316
    %1389 = vst [vmem:[#allocation3 + $0x1f8] sm:$0x33] %v1318
    %1390 = vst [vmem:[#allocation3 + $0x200] sm:$0x33] %v1320
    %1391 = vst [vmem:[#allocation3 + $0x208] sm:$0x33] %v1322
    %1392 = vst [vmem:[#allocation3 + $0x210] sm:$0x33] %v1324
    %1393 = vst [vmem:[#allocation3 + $0x218] sm:$0x33] %v1326
    %1394 = vst [vmem:[#allocation3 + $0x220] sm:$0x33] %v1328
    %1395 = vst [vmem:[#allocation3 + $0x228] sm:$0x33] %v1330
    %1396 = vst [vmem:[#allocation3 + $0x230] sm:$0x33] %v1332
    %1397 = vst [vmem:[#allocation3 + $0x238] sm:$0x33] %v1334
    %1398 = vst [vmem:[#allocation3 + $0x240] sm:$0x33] %v1336
    %1399 = vst [vmem:[#allocation3 + $0x248] sm:$0x33] %v1338
    %1400 = vst [vmem:[#allocation3 + $0x250] sm:$0x33] %v1340
    %1401 = vst [vmem:[#allocation3 + $0x258] sm:$0x33] %v1342
    %1402 = vst [vmem:[#allocation3 + $0x260] sm:$0x33] %v1344
    %1403 = vst [vmem:[#allocation3 + $0x268] sm:$0x33] %v1346
    %1404 = vst [vmem:[#allocation3 + $0x270] sm:$0x33] %v1348
    %1405 = vst [vmem:[#allocation3 + $0x278] sm:$0x33] %v1350
    %1406 = vst [vmem:[#allocation3 + $0x280] sm:$0x33] %v1352
    %v1407 = vld [vmem:[#allocation2] sm:$0xff]
    %v1408 = vld [vmem:[#allocation2 + $0x8] sm:$0xff]
    %v1409 = vld [vmem:[#allocation2 + $0x10] sm:$0xff]
    %v1410 = vld [vmem:[#allocation2 + $0x18] sm:$0xff]
    %v1411 = vld [vmem:[#allocation2 + $0x20] sm:$0xff]
    %v1412 = vld [vmem:[#allocation2 + $0x28] sm:$0xff]
    %v1413 = vld [vmem:[#allocation2 + $0x30] sm:$0xff]
    %v1414 = vld [vmem:[#allocation2 + $0x38] sm:$0xff]
    %v1415 = vld [vmem:[#allocation2 + $0x40] sm:$0xff]
    %v1416 = vld [vmem:[#allocation2 + $0x48] sm:$0xff]
    %v1417 = vld [vmem:[#allocation2 + $0x50] sm:$0xff]
    %v1418 = vld [vmem:[#allocation2 + $0x58] sm:$0xff]
    %v1419 = vld [vmem:[#allocation2 + $0x60] sm:$0xff]
    %v1420 = vld [vmem:[#allocation2 + $0x68] sm:$0x3f]
    %s1422 = scalar_lea.vmem [#allocation1], 1
    %1423 = vst [vmem:[%s1422] ss:$2 sm:$0xff] %v1407
    %s1425 = scalar_lea.vmem [#allocation1], 17
    %1426 = vst [vmem:[%s1425] ss:$2 sm:$0xff] %v1408
    %s1428 = scalar_lea.vmem [#allocation1], 33
    %1429 = vst [vmem:[%s1428] ss:$2 sm:$0xff] %v1409
    %s1431 = scalar_lea.vmem [#allocation1], 49
    %1432 = vst [vmem:[%s1431] ss:$2 sm:$0xff] %v1410
    %v1433 = vld.sshfl [vmem:[#allocation1] sm:$0xff pattern:$0x75643120]
    %v1435 = vld.sshfl [vmem:[#allocation1 + $0x8] sm:$0xff pattern:$0x75643120]
    %v1437 = vld.sshfl [vmem:[#allocation1 + $0x10] sm:$0xff pattern:$0x75643120]
    %v1439 = vld.sshfl [vmem:[#allocation1 + $0x18] sm:$0xff pattern:$0x75643120]
    %v1441 = vld.sshfl [vmem:[#allocation1 + $0x20] sm:$0xff pattern:$0x75643120]
    %v1443 = vld.sshfl [vmem:[#allocation1 + $0x28] sm:$0xff pattern:$0x75643120]
    %v1445 = vld.sshfl [vmem:[#allocation1 + $0x30] sm:$0xff pattern:$0x75643120]
    %v1447 = vld.sshfl [vmem:[#allocation1 + $0x38] sm:$0xff pattern:$0x75643120]
    %1450 = vst [vmem:[%s1422] ss:$2 sm:$0xff] %v1411
    %1452 = vst [vmem:[%s1425] ss:$2 sm:$0xff] %v1412
    %1454 = vst [vmem:[%s1428] ss:$2 sm:$0xff] %v1413
    %1456 = vst [vmem:[%s1431] ss:$2 sm:$0xff] %v1414
    %v1457 = vld.sshfl [vmem:[#allocation1] sm:$0xff pattern:$0x75643120]
    %v1459 = vld.sshfl [vmem:[#allocation1 + $0x8] sm:$0xff pattern:$0x75643120]
    %v1461 = vld.sshfl [vmem:[#allocation1 + $0x10] sm:$0xff pattern:$0x75643120]
    %v1463 = vld.sshfl [vmem:[#allocation1 + $0x18] sm:$0xff pattern:$0x75643120]
    %v1465 = vld.sshfl [vmem:[#allocation1 + $0x20] sm:$0xff pattern:$0x75643120]
    %v1467 = vld.sshfl [vmem:[#allocation1 + $0x28] sm:$0xff pattern:$0x75643120]
    %v1469 = vld.sshfl [vmem:[#allocation1 + $0x30] sm:$0xff pattern:$0x75643120]
    %v1471 = vld.sshfl [vmem:[#allocation1 + $0x38] sm:$0xff pattern:$0x75643120]
    %1474 = vst [vmem:[%s1422] ss:$2 sm:$0xff] %v1415
    %1476 = vst [vmem:[%s1425] ss:$2 sm:$0xff] %v1416
    %1478 = vst [vmem:[%s1428] ss:$2 sm:$0xff] %v1417
    %1480 = vst [vmem:[%s1431] ss:$2 sm:$0xff] %v1418
    %v1481 = vld.sshfl [vmem:[#allocation1] sm:$0xff pattern:$0x75643120]
    %v1483 = vld.sshfl [vmem:[#allocation1 + $0x8] sm:$0xff pattern:$0x75643120]
    %v1485 = vld.sshfl [vmem:[#allocation1 + $0x10] sm:$0xff pattern:$0x75643120]
    %v1487 = vld.sshfl [vmem:[#allocation1 + $0x18] sm:$0xff pattern:$0x75643120]
    %v1489 = vld.sshfl [vmem:[#allocation1 + $0x20] sm:$0xff pattern:$0x75643120]
    %v1491 = vld.sshfl [vmem:[#allocation1 + $0x28] sm:$0xff pattern:$0x75643120]
    %v1493 = vld.sshfl [vmem:[#allocation1 + $0x30] sm:$0xff pattern:$0x75643120]
    %v1495 = vld.sshfl [vmem:[#allocation1 + $0x38] sm:$0xff pattern:$0x75643120]
    %1498 = vst [vmem:[%s1422] ss:$2 sm:$0xff] %v1419
    %1500 = vst [vmem:[%s1425] ss:$2 sm:$0xff] %v1420
    %v1501 = vld.sshfl [vmem:[#allocation1] sm:$0xff pattern:$0x75643120]
    %v1503 = vld.sshfl [vmem:[#allocation1 + $0x8] sm:$0xff pattern:$0x75643120]
    %v1505 = vld.sshfl [vmem:[#allocation1 + $0x10] sm:$0xff pattern:$0x75643120]
    %v1507 = vld.sshfl [vmem:[#allocation1 + $0x18] sm:$0xff pattern:$0x75643120]
    %1509 = vrot.lane.b32.xlu0 %v1433, 108
    %v1510 = vpop.permute.xlu0 %1509
    %1511 = vrot.lane.b32.xlu0 %v1435, 108
    %v1512 = vpop.permute.xlu0 %1511
    %1513 = vrot.lane.b32.xlu0 %v1437, 108
    %v1514 = vpop.permute.xlu0 %1513
    %1515 = vrot.lane.b32.xlu0 %v1439, 108
    %v1516 = vpop.permute.xlu0 %1515
    %1517 = vrot.lane.b32.xlu0 %v1441, 108
    %v1518 = vpop.permute.xlu0 %1517
    %1519 = vrot.lane.b32.xlu0 %v1443, 108
    %v1520 = vpop.permute.xlu0 %1519
    %1521 = vrot.lane.b32.xlu0 %v1445, 108
    %v1522 = vpop.permute.xlu0 %1521
    %1523 = vrot.lane.b32.xlu0 %v1447, 108
    %v1524 = vpop.permute.xlu0 %1523
    %1525 = vrot.lane.b32.xlu0 %v1457, 108
    %v1526 = vpop.permute.xlu0 %1525
    %1527 = vrot.lane.b32.xlu0 %v1459, 108
    %v1528 = vpop.permute.xlu0 %1527
    %1529 = vrot.lane.b32.xlu0 %v1461, 108
    %v1530 = vpop.permute.xlu0 %1529
    %1531 = vrot.lane.b32.xlu0 %v1463, 108
    %v1532 = vpop.permute.xlu0 %1531
    %1533 = vrot.lane.b32.xlu0 %v1465, 108
    %v1534 = vpop.permute.xlu0 %1533
    %1535 = vrot.lane.b32.xlu0 %v1467, 108
    %v1536 = vpop.permute.xlu0 %1535
    %1537 = vrot.lane.b32.xlu0 %v1469, 108
    %v1538 = vpop.permute.xlu0 %1537
    %1539 = vrot.lane.b32.xlu0 %v1471, 108
    %v1540 = vpop.permute.xlu0 %1539
    %1541 = vrot.lane.b32.xlu0 %v1481, 108
    %v1542 = vpop.permute.xlu0 %1541
    %1543 = vrot.lane.b32.xlu0 %v1483, 108
    %v1544 = vpop.permute.xlu0 %1543
    %1545 = vrot.lane.b32.xlu0 %v1485, 108
    %v1546 = vpop.permute.xlu0 %1545
    %1547 = vrot.lane.b32.xlu0 %v1487, 108
    %v1548 = vpop.permute.xlu0 %1547
    %1549 = vrot.lane.b32.xlu0 %v1489, 108
    %v1550 = vpop.permute.xlu0 %1549
    %1551 = vrot.lane.b32.xlu0 %v1491, 108
    %v1552 = vpop.permute.xlu0 %1551
    %1553 = vrot.lane.b32.xlu0 %v1493, 108
    %v1554 = vpop.permute.xlu0 %1553
    %1555 = vrot.lane.b32.xlu0 %v1495, 108
    %v1556 = vpop.permute.xlu0 %1555
    %1557 = vrot.lane.b32.xlu0 %v1501, 108
    %v1558 = vpop.permute.xlu0 %1557
    %1559 = vrot.lane.b32.xlu0 %v1503, 108
    %v1560 = vpop.permute.xlu0 %1559
    %1561 = vrot.lane.b32.xlu0 %v1505, 108
    %v1562 = vpop.permute.xlu0 %1561
    %1563 = vrot.lane.b32.xlu0 %v1507, 108
    %v1564 = vpop.permute.xlu0 %1563
    %v1565 = vrot.slane %v1510, 4
    %v1566 = vrot.slane %v1512, 4
    %v1567 = vrot.slane %v1514, 4
    %v1568 = vrot.slane %v1516, 4
    %v1569 = vrot.slane %v1518, 4
    %v1570 = vrot.slane %v1520, 4
    %v1571 = vrot.slane %v1522, 4
    %v1572 = vrot.slane %v1524, 4
    %v1573 = vrot.slane %v1526, 4
    %v1574 = vrot.slane %v1528, 4
    %v1575 = vrot.slane %v1530, 4
    %v1576 = vrot.slane %v1532, 4
    %v1577 = vrot.slane %v1534, 4
    %v1578 = vrot.slane %v1536, 4
    %v1579 = vrot.slane %v1538, 4
    %v1580 = vrot.slane %v1540, 4
    %v1581 = vrot.slane %v1542, 4
    %v1582 = vrot.slane %v1544, 4
    %v1583 = vrot.slane %v1546, 4
    %v1584 = vrot.slane %v1548, 4
    %v1585 = vrot.slane %v1550, 4
    %v1586 = vrot.slane %v1552, 4
    %v1587 = vrot.slane %v1554, 4
    %v1588 = vrot.slane %v1556, 4
    %v1589 = vrot.slane %v1558, 4
    %v1590 = vrot.slane %v1560, 4
    %v1591 = vrot.slane %v1562, 4
    %v1592 = vrot.slane %v1564, 4
    %v1593 = vsel %vm414, %v1565, %v1566
    %vm1594 = vcmask 883712
    %v1595 = vsel %vm1594, %v1510, %v1593
    %v1596 = vsel %vm414, %v1566, %v1567
    %v1597 = vsel %vm1594, %v1512, %v1596
    %v1598 = vsel %vm414, %v1567, %v1568
    %v1599 = vsel %vm1594, %v1514, %v1598
    %v1600 = vsel %vm414, %v1568, %v1569
    %v1601 = vsel %vm1594, %v1516, %v1600
    %v1602 = vsel %vm414, %v1569, %v1570
    %v1603 = vsel %vm1594, %v1518, %v1602
    %v1604 = vsel %vm414, %v1570, %v1571
    %v1605 = vsel %vm1594, %v1520, %v1604
    %v1606 = vsel %vm414, %v1571, %v1572
    %v1607 = vsel %vm1594, %v1522, %v1606
    %v1608 = vsel %vm414, %v1572, %v1573
    %v1609 = vsel %vm1594, %v1524, %v1608
    %v1610 = vsel %vm414, %v1573, %v1574
    %v1611 = vsel %vm1594, %v1526, %v1610
    %v1612 = vsel %vm414, %v1574, %v1575
    %v1613 = vsel %vm1594, %v1528, %v1612
    %v1614 = vsel %vm414, %v1575, %v1576
    %v1615 = vsel %vm1594, %v1530, %v1614
    %v1616 = vsel %vm414, %v1576, %v1577
    %v1617 = vsel %vm1594, %v1532, %v1616
    %v1618 = vsel %vm414, %v1577, %v1578
    %v1619 = vsel %vm1594, %v1534, %v1618
    %v1620 = vsel %vm414, %v1578, %v1579
    %v1621 = vsel %vm1594, %v1536, %v1620
    %v1622 = vsel %vm414, %v1579, %v1580
    %v1623 = vsel %vm1594, %v1538, %v1622
    %v1624 = vsel %vm414, %v1580, %v1581
    %v1625 = vsel %vm1594, %v1540, %v1624
    %v1626 = vsel %vm414, %v1581, %v1582
    %v1627 = vsel %vm1594, %v1542, %v1626
    %v1628 = vsel %vm414, %v1582, %v1583
    %v1629 = vsel %vm1594, %v1544, %v1628
    %v1630 = vsel %vm414, %v1583, %v1584
    %v1631 = vsel %vm1594, %v1546, %v1630
    %v1632 = vsel %vm414, %v1584, %v1585
    %v1633 = vsel %vm1594, %v1548, %v1632
    %v1634 = vsel %vm414, %v1585, %v1586
    %v1635 = vsel %vm1594, %v1550, %v1634
    %v1636 = vsel %vm414, %v1586, %v1587
    %v1637 = vsel %vm1594, %v1552, %v1636
    %v1638 = vsel %vm414, %v1587, %v1588
    %v1639 = vsel %vm1594, %v1554, %v1638
    %v1640 = vsel %vm414, %v1588, %v1589
    %v1641 = vsel %vm1594, %v1556, %v1640
    %v1642 = vsel %vm414, %v1589, %v1590
    %v1643 = vsel %vm1594, %v1558, %v1642
    %v1644 = vsel %vm414, %v1590, %v1591
    %v1645 = vsel %vm1594, %v1560, %v1644
    %v1646 = vsel %vm414, %v1591, %v1592
    %v1647 = vsel %vm1594, %v1562, %v1646
    %1675 = vst [vmem:[#allocation3 + $0x1b0] sm:$0xcc] %v1595
    %1676 = vst [vmem:[#allocation3 + $0x1b8] sm:$0xcc] %v1597
    %1677 = vst [vmem:[#allocation3 + $0x1c0] sm:$0xcc] %v1599
    %1678 = vst [vmem:[#allocation3 + $0x1c8] sm:$0xcc] %v1601
    %1679 = vst [vmem:[#allocation3 + $0x1d0] sm:$0xcc] %v1603
    %1680 = vst [vmem:[#allocation3 + $0x1d8] sm:$0xcc] %v1605
    %1681 = vst [vmem:[#allocation3 + $0x1e0] sm:$0xcc] %v1607
    %1682 = vst [vmem:[#allocation3 + $0x1e8] sm:$0xcc] %v1609
    %1683 = vst [vmem:[#allocation3 + $0x1f0] sm:$0xcc] %v1611
    %1684 = vst [vmem:[#allocation3 + $0x1f8] sm:$0xcc] %v1613
    %1685 = vst [vmem:[#allocation3 + $0x200] sm:$0xcc] %v1615
    %1686 = vst [vmem:[#allocation3 + $0x208] sm:$0xcc] %v1617
    %1687 = vst [vmem:[#allocation3 + $0x210] sm:$0xcc] %v1619
    %1688 = vst [vmem:[#allocation3 + $0x218] sm:$0xcc] %v1621
    %1689 = vst [vmem:[#allocation3 + $0x220] sm:$0xcc] %v1623
    %1690 = vst [vmem:[#allocation3 + $0x228] sm:$0xcc] %v1625
    %1691 = vst [vmem:[#allocation3 + $0x230] sm:$0xcc] %v1627
    %1692 = vst [vmem:[#allocation3 + $0x238] sm:$0xcc] %v1629
    %1693 = vst [vmem:[#allocation3 + $0x240] sm:$0xcc] %v1631
    %1694 = vst [vmem:[#allocation3 + $0x248] sm:$0xcc] %v1633
    %1695 = vst [vmem:[#allocation3 + $0x250] sm:$0xcc] %v1635
    %1696 = vst [vmem:[#allocation3 + $0x258] sm:$0xcc] %v1637
    %1697 = vst [vmem:[#allocation3 + $0x260] sm:$0xcc] %v1639
    %1698 = vst [vmem:[#allocation3 + $0x268] sm:$0xcc] %v1641
    %1699 = vst [vmem:[#allocation3 + $0x270] sm:$0xcc] %v1643
    %1700 = vst [vmem:[#allocation3 + $0x278] sm:$0xcc] %v1645
    %1701 = vst [vmem:[#allocation3 + $0x280] sm:$0xcc] %v1647
    %v1702 = vld [vmem:[#allocation2] sm:$0xff]
    %v1703 = vld [vmem:[#allocation2 + $0x8] sm:$0xff]
    %v1704 = vld [vmem:[#allocation2 + $0x10] sm:$0xff]
    %v1705 = vld [vmem:[#allocation2 + $0x18] sm:$0xff]
    %v1706 = vld [vmem:[#allocation2 + $0x20] sm:$0xff]
    %v1707 = vld [vmem:[#allocation2 + $0x28] sm:$0xff]
    %v1708 = vld [vmem:[#allocation2 + $0x30] sm:$0xff]
    %v1709 = vld [vmem:[#allocation2 + $0x38] sm:$0xff]
    %v1710 = vld [vmem:[#allocation2 + $0x40] sm:$0xff]
    %v1711 = vld [vmem:[#allocation2 + $0x48] sm:$0xff]
    %v1712 = vld [vmem:[#allocation2 + $0x50] sm:$0xff]
    %v1713 = vld [vmem:[#allocation2 + $0x58] sm:$0xff]
    %v1714 = vld [vmem:[#allocation2 + $0x60] sm:$0xff]
    %v1715 = vld [vmem:[#allocation2 + $0x68] sm:$0x3f]
    %1717 = vst [vmem:[#allocation1] ss:$2 sm:$0xff] %v1702
    %s1719 = scalar_lea.vmem [#allocation1], 16
    %1720 = vst [vmem:[%s1719] ss:$2 sm:$0xff] %v1703
    %s1722 = scalar_lea.vmem [#allocation1], 32
    %1723 = vst [vmem:[%s1722] ss:$2 sm:$0xff] %v1704
    %s1725 = scalar_lea.vmem [#allocation1], 48
    %1726 = vst [vmem:[%s1725] ss:$2 sm:$0xff] %v1705
    %v1727 = vld.sshfl [vmem:[#allocation1] sm:$0xff pattern:$0x75643120]
    %v1729 = vld.sshfl [vmem:[#allocation1 + $0x8] sm:$0xff pattern:$0x75643120]
    %v1731 = vld.sshfl [vmem:[#allocation1 + $0x10] sm:$0xff pattern:$0x75643120]
    %v1733 = vld.sshfl [vmem:[#allocation1 + $0x18] sm:$0xff pattern:$0x75643120]
    %v1735 = vld.sshfl [vmem:[#allocation1 + $0x20] sm:$0xff pattern:$0x75643120]
    %v1737 = vld.sshfl [vmem:[#allocation1 + $0x28] sm:$0xff pattern:$0x75643120]
    %v1739 = vld.sshfl [vmem:[#allocation1 + $0x30] sm:$0xff pattern:$0x75643120]
    %v1741 = vld.sshfl [vmem:[#allocation1 + $0x38] sm:$0xff pattern:$0x75643120]
    %1744 = vst [vmem:[#allocation1] ss:$2 sm:$0xff] %v1706
    %1746 = vst [vmem:[%s1719] ss:$2 sm:$0xff] %v1707
    %1748 = vst [vmem:[%s1722] ss:$2 sm:$0xff] %v1708
    %1750 = vst [vmem:[%s1725] ss:$2 sm:$0xff] %v1709
    %v1751 = vld.sshfl [vmem:[#allocation1] sm:$0xff pattern:$0x75643120]
    %v1753 = vld.sshfl [vmem:[#allocation1 + $0x8] sm:$0xff pattern:$0x75643120]
    %v1755 = vld.sshfl [vmem:[#allocation1 + $0x10] sm:$0xff pattern:$0x75643120]
    %v1757 = vld.sshfl [vmem:[#allocation1 + $0x18] sm:$0xff pattern:$0x75643120]
    %v1759 = vld.sshfl [vmem:[#allocation1 + $0x20] sm:$0xff pattern:$0x75643120]
    %v1761 = vld.sshfl [vmem:[#allocation1 + $0x28] sm:$0xff pattern:$0x75643120]
    %v1763 = vld.sshfl [vmem:[#allocation1 + $0x30] sm:$0xff pattern:$0x75643120]
    %v1765 = vld.sshfl [vmem:[#allocation1 + $0x38] sm:$0xff pattern:$0x75643120]
    %1768 = vst [vmem:[#allocation1] ss:$2 sm:$0xff] %v1710
    %1770 = vst [vmem:[%s1719] ss:$2 sm:$0xff] %v1711
    %1772 = vst [vmem:[%s1722] ss:$2 sm:$0xff] %v1712
    %1774 = vst [vmem:[%s1725] ss:$2 sm:$0xff] %v1713
    %v1775 = vld.sshfl [vmem:[#allocation1] sm:$0xff pattern:$0x75643120]
    %v1777 = vld.sshfl [vmem:[#allocation1 + $0x8] sm:$0xff pattern:$0x75643120]
    %v1779 = vld.sshfl [vmem:[#allocation1 + $0x10] sm:$0xff pattern:$0x75643120]
    %v1781 = vld.sshfl [vmem:[#allocation1 + $0x18] sm:$0xff pattern:$0x75643120]
    %v1783 = vld.sshfl [vmem:[#allocation1 + $0x20] sm:$0xff pattern:$0x75643120]
    %v1785 = vld.sshfl [vmem:[#allocation1 + $0x28] sm:$0xff pattern:$0x75643120]
    %v1787 = vld.sshfl [vmem:[#allocation1 + $0x30] sm:$0xff pattern:$0x75643120]
    %v1789 = vld.sshfl [vmem:[#allocation1 + $0x38] sm:$0xff pattern:$0x75643120]
    %1792 = vst [vmem:[#allocation1] ss:$2 sm:$0xff] %v1714
    %1794 = vst [vmem:[%s1719] ss:$2 sm:$0xff] %v1715
    %v1795 = vld.sshfl [vmem:[#allocation1] sm:$0xff pattern:$0x75643120]
    %v1797 = vld.sshfl [vmem:[#allocation1 + $0x8] sm:$0xff pattern:$0x75643120]
    %v1799 = vld.sshfl [vmem:[#allocation1 + $0x10] sm:$0xff pattern:$0x75643120]
    %v1801 = vld.sshfl [vmem:[#allocation1 + $0x18] sm:$0xff pattern:$0x75643120]
    %1803 = vrot.lane.b32.xlu0 %v1727, 92
    %v1804 = vpop.permute.xlu0 %1803
    %1805 = vrot.lane.b32.xlu0 %v1729, 92
    %v1806 = vpop.permute.xlu0 %1805
    %1807 = vrot.lane.b32.xlu0 %v1731, 92
    %v1808 = vpop.permute.xlu0 %1807
    %1809 = vrot.lane.b32.xlu0 %v1733, 92
    %v1810 = vpop.permute.xlu0 %1809
    %1811 = vrot.lane.b32.xlu0 %v1735, 92
    %v1812 = vpop.permute.xlu0 %1811
    %1813 = vrot.lane.b32.xlu0 %v1737, 92
    %v1814 = vpop.permute.xlu0 %1813
    %1815 = vrot.lane.b32.xlu0 %v1739, 92
    %v1816 = vpop.permute.xlu0 %1815
    %1817 = vrot.lane.b32.xlu0 %v1741, 92
    %v1818 = vpop.permute.xlu0 %1817
    %1819 = vrot.lane.b32.xlu0 %v1751, 92
    %v1820 = vpop.permute.xlu0 %1819
    %1821 = vrot.lane.b32.xlu0 %v1753, 92
    %v1822 = vpop.permute.xlu0 %1821
    %1823 = vrot.lane.b32.xlu0 %v1755, 92
    %v1824 = vpop.permute.xlu0 %1823
    %1825 = vrot.lane.b32.xlu0 %v1757, 92
    %v1826 = vpop.permute.xlu0 %1825
    %1827 = vrot.lane.b32.xlu0 %v1759, 92
    %v1828 = vpop.permute.xlu0 %1827
    %1829 = vrot.lane.b32.xlu0 %v1761, 92
    %v1830 = vpop.permute.xlu0 %1829
    %1831 = vrot.lane.b32.xlu0 %v1763, 92
    %v1832 = vpop.permute.xlu0 %1831
    %1833 = vrot.lane.b32.xlu0 %v1765, 92
    %v1834 = vpop.permute.xlu0 %1833
    %1835 = vrot.lane.b32.xlu0 %v1775, 92
    %v1836 = vpop.permute.xlu0 %1835
    %1837 = vrot.lane.b32.xlu0 %v1777, 92
    %v1838 = vpop.permute.xlu0 %1837
    %1839 = vrot.lane.b32.xlu0 %v1779, 92
    %v1840 = vpop.permute.xlu0 %1839
    %1841 = vrot.lane.b32.xlu0 %v1781, 92
    %v1842 = vpop.permute.xlu0 %1841
    %1843 = vrot.lane.b32.xlu0 %v1783, 92
    %v1844 = vpop.permute.xlu0 %1843
    %1845 = vrot.lane.b32.xlu0 %v1785, 92
    %v1846 = vpop.permute.xlu0 %1845
    %1847 = vrot.lane.b32.xlu0 %v1787, 92
    %v1848 = vpop.permute.xlu0 %1847
    %1849 = vrot.lane.b32.xlu0 %v1789, 92
    %v1850 = vpop.permute.xlu0 %1849
    %1851 = vrot.lane.b32.xlu0 %v1795, 92
    %v1852 = vpop.permute.xlu0 %1851
    %1853 = vrot.lane.b32.xlu0 %v1797, 92
    %v1854 = vpop.permute.xlu0 %1853
    %1855 = vrot.lane.b32.xlu0 %v1799, 92
    %v1856 = vpop.permute.xlu0 %1855
    %1857 = vrot.lane.b32.xlu0 %v1801, 92
    %v1858 = vpop.permute.xlu0 %1857
    %v1859 = vrot.slane %v1804, 4
    %v1860 = vrot.slane %v1806, 4
    %v1861 = vrot.slane %v1808, 4
    %v1862 = vrot.slane %v1810, 4
    %v1863 = vrot.slane %v1812, 4
    %v1864 = vrot.slane %v1814, 4
    %v1865 = vrot.slane %v1816, 4
    %v1866 = vrot.slane %v1818, 4
    %v1867 = vrot.slane %v1820, 4
    %v1868 = vrot.slane %v1822, 4
    %v1869 = vrot.slane %v1824, 4
    %v1870 = vrot.slane %v1826, 4
    %v1871 = vrot.slane %v1828, 4
    %v1872 = vrot.slane %v1830, 4
    %v1873 = vrot.slane %v1832, 4
    %v1874 = vrot.slane %v1834, 4
    %v1875 = vrot.slane %v1836, 4
    %v1876 = vrot.slane %v1838, 4
    %v1877 = vrot.slane %v1840, 4
    %v1878 = vrot.slane %v1842, 4
    %v1879 = vrot.slane %v1844, 4
    %v1880 = vrot.slane %v1846, 4
    %v1881 = vrot.slane %v1848, 4
    %v1882 = vrot.slane %v1850, 4
    %v1883 = vrot.slane %v1852, 4
    %v1884 = vrot.slane %v1854, 4
    %v1885 = vrot.slane %v1856, 4
    %v1886 = vrot.slane %v1858, 4
    %v1887 = vsel %vm414, %v1859, %v1860
    %vm1888 = vcmask 752640
    %v1889 = vsel %vm1888, %v1804, %v1887
    %v1890 = vsel %vm414, %v1860, %v1861
    %v1891 = vsel %vm1888, %v1806, %v1890
    %v1892 = vsel %vm414, %v1861, %v1862
    %v1893 = vsel %vm1888, %v1808, %v1892
    %v1894 = vsel %vm414, %v1862, %v1863
    %v1895 = vsel %vm1888, %v1810, %v1894
    %v1896 = vsel %vm414, %v1863, %v1864
    %v1897 = vsel %vm1888, %v1812, %v1896
    %v1898 = vsel %vm414, %v1864, %v1865
    %v1899 = vsel %vm1888, %v1814, %v1898
    %v1900 = vsel %vm414, %v1865, %v1866
    %v1901 = vsel %vm1888, %v1816, %v1900
    %v1902 = vsel %vm414, %v1866, %v1867
    %v1903 = vsel %vm1888, %v1818, %v1902
    %v1904 = vsel %vm414, %v1867, %v1868
    %v1905 = vsel %vm1888, %v1820, %v1904
    %v1906 = vsel %vm414, %v1868, %v1869
    %v1907 = vsel %vm1888, %v1822, %v1906
    %v1908 = vsel %vm414, %v1869, %v1870
    %v1909 = vsel %vm1888, %v1824, %v1908
    %v1910 = vsel %vm414, %v1870, %v1871
    %v1911 = vsel %vm1888, %v1826, %v1910
    %v1912 = vsel %vm414, %v1871, %v1872
    %v1913 = vsel %vm1888, %v1828, %v1912
    %v1914 = vsel %vm414, %v1872, %v1873
    %v1915 = vsel %vm1888, %v1830, %v1914
    %v1916 = vsel %vm414, %v1873, %v1874
    %v1917 = vsel %vm1888, %v1832, %v1916
    %v1918 = vsel %vm414, %v1874, %v1875
    %v1919 = vsel %vm1888, %v1834, %v1918
    %v1920 = vsel %vm414, %v1875, %v1876
    %v1921 = vsel %vm1888, %v1836, %v1920
    %v1922 = vsel %vm414, %v1876, %v1877
    %v1923 = vsel %vm1888, %v1838, %v1922
    %v1924 = vsel %vm414, %v1877, %v1878
    %v1925 = vsel %vm1888, %v1840, %v1924
    %v1926 = vsel %vm414, %v1878, %v1879
    %v1927 = vsel %vm1888, %v1842, %v1926
    %v1928 = vsel %vm414, %v1879, %v1880
    %v1929 = vsel %vm1888, %v1844, %v1928
    %v1930 = vsel %vm414, %v1880, %v1881
    %v1931 = vsel %vm1888, %v1846, %v1930
    %v1932 = vsel %vm414, %v1881, %v1882
    %v1933 = vsel %vm1888, %v1848, %v1932
    %v1934 = vsel %vm414, %v1882, %v1883
    %v1935 = vsel %vm1888, %v1850, %v1934
    %v1936 = vsel %vm414, %v1883, %v1884
    %v1937 = vsel %vm1888, %v1852, %v1936
    %v1938 = vsel %vm414, %v1884, %v1885
    %v1939 = vsel %vm1888, %v1854, %v1938
    %v1940 = vsel %vm414, %v1885, %v1886
    %v1941 = vsel %vm1888, %v1856, %v1940
    %1969 = vst [vmem:[#allocation3 + $0x288] sm:$0x33] %v1889
    %1970 = vst [vmem:[#allocation3 + $0x290] sm:$0x33] %v1891
    %1971 = vst [vmem:[#allocation3 + $0x298] sm:$0x33] %v1893
    %1972 = vst [vmem:[#allocation3 + $0x2a0] sm:$0x33] %v1895
    %1973 = vst [vmem:[#allocation3 + $0x2a8] sm:$0x33] %v1897
    %1974 = vst [vmem:[#allocation3 + $0x2b0] sm:$0x33] %v1899
    %1975 = vst [vmem:[#allocation3 + $0x2b8] sm:$0x33] %v1901
    %1976 = vst [vmem:[#allocation3 + $0x2c0] sm:$0x33] %v1903
    %1977 = vst [vmem:[#allocation3 + $0x2c8] sm:$0x33] %v1905
    %1978 = vst [vmem:[#allocation3 + $0x2d0] sm:$0x33] %v1907
    %1979 = vst [vmem:[#allocation3 + $0x2d8] sm:$0x33] %v1909
    %1980 = vst [vmem:[#allocation3 + $0x2e0] sm:$0x33] %v1911
    %1981 = vst [vmem:[#allocation3 + $0x2e8] sm:$0x33] %v1913
    %1982 = vst [vmem:[#allocation3 + $0x2f0] sm:$0x33] %v1915
    %1983 = vst [vmem:[#allocation3 + $0x2f8] sm:$0x33] %v1917
    %1984 = vst [vmem:[#allocation3 + $0x300] sm:$0x33] %v1919
    %1985 = vst [vmem:[#allocation3 + $0x308] sm:$0x33] %v1921
    %1986 = vst [vmem:[#allocation3 + $0x310] sm:$0x33] %v1923
    %1987 = vst [vmem:[#allocation3 + $0x318] sm:$0x33] %v1925
    %1988 = vst [vmem:[#allocation3 + $0x320] sm:$0x33] %v1927
    %1989 = vst [vmem:[#allocation3 + $0x328] sm:$0x33] %v1929
    %1990 = vst [vmem:[#allocation3 + $0x330] sm:$0x33] %v1931
    %1991 = vst [vmem:[#allocation3 + $0x338] sm:$0x33] %v1933
    %1992 = vst [vmem:[#allocation3 + $0x340] sm:$0x33] %v1935
    %1993 = vst [vmem:[#allocation3 + $0x348] sm:$0x33] %v1937
    %1994 = vst [vmem:[#allocation3 + $0x350] sm:$0x33] %v1939
    %1995 = vst [vmem:[#allocation3 + $0x358] sm:$0x33] %v1941
    %v1996 = vld [vmem:[#allocation2] sm:$0xff]
    %v1997 = vld [vmem:[#allocation2 + $0x8] sm:$0xff]
    %v1998 = vld [vmem:[#allocation2 + $0x10] sm:$0xff]
    %v1999 = vld [vmem:[#allocation2 + $0x18] sm:$0xff]
    %v2000 = vld [vmem:[#allocation2 + $0x20] sm:$0xff]
    %v2001 = vld [vmem:[#allocation2 + $0x28] sm:$0xff]
    %v2002 = vld [vmem:[#allocation2 + $0x30] sm:$0xff]
    %v2003 = vld [vmem:[#allocation2 + $0x38] sm:$0xff]
    %v2004 = vld [vmem:[#allocation2 + $0x40] sm:$0xff]
    %v2005 = vld [vmem:[#allocation2 + $0x48] sm:$0xff]
    %v2006 = vld [vmem:[#allocation2 + $0x50] sm:$0xff]
    %v2007 = vld [vmem:[#allocation2 + $0x58] sm:$0xff]
    %v2008 = vld [vmem:[#allocation2 + $0x60] sm:$0xff]
    %v2009 = vld [vmem:[#allocation2 + $0x68] sm:$0x3f]
    %s2011 = scalar_lea.vmem [#allocation1], 1
    %2012 = vst [vmem:[%s2011] ss:$2 sm:$0xff] %v1996
    %s2014 = scalar_lea.vmem [#allocation1], 17
    %2015 = vst [vmem:[%s2014] ss:$2 sm:$0xff] %v1997
    %s2017 = scalar_lea.vmem [#allocation1], 33
    %2018 = vst [vmem:[%s2017] ss:$2 sm:$0xff] %v1998
    %s2020 = scalar_lea.vmem [#allocation1], 49
    %2021 = vst [vmem:[%s2020] ss:$2 sm:$0xff] %v1999
    %v2022 = vld.sshfl [vmem:[#allocation1] sm:$0xff pattern:$0x75643120]
    %v2024 = vld.sshfl [vmem:[#allocation1 + $0x8] sm:$0xff pattern:$0x75643120]
    %v2026 = vld.sshfl [vmem:[#allocation1 + $0x10] sm:$0xff pattern:$0x75643120]
    %v2028 = vld.sshfl [vmem:[#allocation1 + $0x18] sm:$0xff pattern:$0x75643120]
    %v2030 = vld.sshfl [vmem:[#allocation1 + $0x20] sm:$0xff pattern:$0x75643120]
    %v2032 = vld.sshfl [vmem:[#allocation1 + $0x28] sm:$0xff pattern:$0x75643120]
    %v2034 = vld.sshfl [vmem:[#allocation1 + $0x30] sm:$0xff pattern:$0x75643120]
    %v2036 = vld.sshfl [vmem:[#allocation1 + $0x38] sm:$0xff pattern:$0x75643120]
    %2039 = vst [vmem:[%s2011] ss:$2 sm:$0xff] %v2000
    %2041 = vst [vmem:[%s2014] ss:$2 sm:$0xff] %v2001
    %2043 = vst [vmem:[%s2017] ss:$2 sm:$0xff] %v2002
    %2045 = vst [vmem:[%s2020] ss:$2 sm:$0xff] %v2003
    %v2046 = vld.sshfl [vmem:[#allocation1] sm:$0xff pattern:$0x75643120]
    %v2048 = vld.sshfl [vmem:[#allocation1 + $0x8] sm:$0xff pattern:$0x75643120]
    %v2050 = vld.sshfl [vmem:[#allocation1 + $0x10] sm:$0xff pattern:$0x75643120]
    %v2052 = vld.sshfl [vmem:[#allocation1 + $0x18] sm:$0xff pattern:$0x75643120]
    %v2054 = vld.sshfl [vmem:[#allocation1 + $0x20] sm:$0xff pattern:$0x75643120]
    %v2056 = vld.sshfl [vmem:[#allocation1 + $0x28] sm:$0xff pattern:$0x75643120]
    %v2058 = vld.sshfl [vmem:[#allocation1 + $0x30] sm:$0xff pattern:$0x75643120]
    %v2060 = vld.sshfl [vmem:[#allocation1 + $0x38] sm:$0xff pattern:$0x75643120]
    %2063 = vst [vmem:[%s2011] ss:$2 sm:$0xff] %v2004
    %2065 = vst [vmem:[%s2014] ss:$2 sm:$0xff] %v2005
    %2067 = vst [vmem:[%s2017] ss:$2 sm:$0xff] %v2006
    %2069 = vst [vmem:[%s2020] ss:$2 sm:$0xff] %v2007
    %v2070 = vld.sshfl [vmem:[#allocation1] sm:$0xff pattern:$0x75643120]
    %v2072 = vld.sshfl [vmem:[#allocation1 + $0x8] sm:$0xff pattern:$0x75643120]
    %v2074 = vld.sshfl [vmem:[#allocation1 + $0x10] sm:$0xff pattern:$0x75643120]
    %v2076 = vld.sshfl [vmem:[#allocation1 + $0x18] sm:$0xff pattern:$0x75643120]
    %v2078 = vld.sshfl [vmem:[#allocation1 + $0x20] sm:$0xff pattern:$0x75643120]
    %v2080 = vld.sshfl [vmem:[#allocation1 + $0x28] sm:$0xff pattern:$0x75643120]
    %v2082 = vld.sshfl [vmem:[#allocation1 + $0x30] sm:$0xff pattern:$0x75643120]
    %v2084 = vld.sshfl [vmem:[#allocation1 + $0x38] sm:$0xff pattern:$0x75643120]
    %2087 = vst [vmem:[%s2011] ss:$2 sm:$0xff] %v2008
    %2089 = vst [vmem:[%s2014] ss:$2 sm:$0xff] %v2009
    %v2090 = vld.sshfl [vmem:[#allocation1] sm:$0xff pattern:$0x75643120]
    %v2092 = vld.sshfl [vmem:[#allocation1 + $0x8] sm:$0xff pattern:$0x75643120]
    %v2094 = vld.sshfl [vmem:[#allocation1 + $0x10] sm:$0xff pattern:$0x75643120]
    %v2096 = vld.sshfl [vmem:[#allocation1 + $0x18] sm:$0xff pattern:$0x75643120]
    %2098 = vrot.lane.b32.xlu0 %v2022, 91
    %v2099 = vpop.permute.xlu0 %2098
    %2100 = vrot.lane.b32.xlu0 %v2024, 91
    %v2101 = vpop.permute.xlu0 %2100
    %2102 = vrot.lane.b32.xlu0 %v2026, 91
    %v2103 = vpop.permute.xlu0 %2102
    %2104 = vrot.lane.b32.xlu0 %v2028, 91
    %v2105 = vpop.permute.xlu0 %2104
    %2106 = vrot.lane.b32.xlu0 %v2030, 91
    %v2107 = vpop.permute.xlu0 %2106
    %2108 = vrot.lane.b32.xlu0 %v2032, 91
    %v2109 = vpop.permute.xlu0 %2108
    %2110 = vrot.lane.b32.xlu0 %v2034, 91
    %v2111 = vpop.permute.xlu0 %2110
    %2112 = vrot.lane.b32.xlu0 %v2036, 91
    %v2113 = vpop.permute.xlu0 %2112
    %2114 = vrot.lane.b32.xlu0 %v2046, 91
    %v2115 = vpop.permute.xlu0 %2114
    %2116 = vrot.lane.b32.xlu0 %v2048, 91
    %v2117 = vpop.permute.xlu0 %2116
    %2118 = vrot.lane.b32.xlu0 %v2050, 91
    %v2119 = vpop.permute.xlu0 %2118
    %2120 = vrot.lane.b32.xlu0 %v2052, 91
    %v2121 = vpop.permute.xlu0 %2120
    %2122 = vrot.lane.b32.xlu0 %v2054, 91
    %v2123 = vpop.permute.xlu0 %2122
    %2124 = vrot.lane.b32.xlu0 %v2056, 91
    %v2125 = vpop.permute.xlu0 %2124
    %2126 = vrot.lane.b32.xlu0 %v2058, 91
    %v2127 = vpop.permute.xlu0 %2126
    %2128 = vrot.lane.b32.xlu0 %v2060, 91
    %v2129 = vpop.permute.xlu0 %2128
    %2130 = vrot.lane.b32.xlu0 %v2070, 91
    %v2131 = vpop.permute.xlu0 %2130
    %2132 = vrot.lane.b32.xlu0 %v2072, 91
    %v2133 = vpop.permute.xlu0 %2132
    %2134 = vrot.lane.b32.xlu0 %v2074, 91
    %v2135 = vpop.permute.xlu0 %2134
    %2136 = vrot.lane.b32.xlu0 %v2076, 91
    %v2137 = vpop.permute.xlu0 %2136
    %2138 = vrot.lane.b32.xlu0 %v2078, 91
    %v2139 = vpop.permute.xlu0 %2138
    %2140 = vrot.lane.b32.xlu0 %v2080, 91
    %v2141 = vpop.permute.xlu0 %2140
    %2142 = vrot.lane.b32.xlu0 %v2082, 91
    %v2143 = vpop.permute.xlu0 %2142
    %2144 = vrot.lane.b32.xlu0 %v2084, 91
    %v2145 = vpop.permute.xlu0 %2144
    %2146 = vrot.lane.b32.xlu0 %v2090, 91
    %v2147 = vpop.permute.xlu0 %2146
    %2148 = vrot.lane.b32.xlu0 %v2092, 91
    %v2149 = vpop.permute.xlu0 %2148
    %2150 = vrot.lane.b32.xlu0 %v2094, 91
    %v2151 = vpop.permute.xlu0 %2150
    %2152 = vrot.lane.b32.xlu0 %v2096, 91
    %v2153 = vpop.permute.xlu0 %2152
    %v2154 = vrot.slane %v2099, 4
    %v2155 = vrot.slane %v2101, 4
    %v2156 = vrot.slane %v2103, 4
    %v2157 = vrot.slane %v2105, 4
    %v2158 = vrot.slane %v2107, 4
    %v2159 = vrot.slane %v2109, 4
    %v2160 = vrot.slane %v2111, 4
    %v2161 = vrot.slane %v2113, 4
    %v2162 = vrot.slane %v2115, 4
    %v2163 = vrot.slane %v2117, 4
    %v2164 = vrot.slane %v2119, 4
    %v2165 = vrot.slane %v2121, 4
    %v2166 = vrot.slane %v2123, 4
    %v2167 = vrot.slane %v2125, 4
    %v2168 = vrot.slane %v2127, 4
    %v2169 = vrot.slane %v2129, 4
    %v2170 = vrot.slane %v2131, 4
    %v2171 = vrot.slane %v2133, 4
    %v2172 = vrot.slane %v2135, 4
    %v2173 = vrot.slane %v2137, 4
    %v2174 = vrot.slane %v2139, 4
    %v2175 = vrot.slane %v2141, 4
    %v2176 = vrot.slane %v2143, 4
    %v2177 = vrot.slane %v2145, 4
    %v2178 = vrot.slane %v2147, 4
    %v2179 = vrot.slane %v2149, 4
    %v2180 = vrot.slane %v2151, 4
    %v2181 = vrot.slane %v2153, 4
    %v2182 = vsel %vm414, %v2154, %v2155
    %vm2183 = vcmask 744448
    %v2184 = vsel %vm2183, %v2099, %v2182
    %v2185 = vsel %vm414, %v2155, %v2156
    %v2186 = vsel %vm2183, %v2101, %v2185
    %v2187 = vsel %vm414, %v2156, %v2157
    %v2188 = vsel %vm2183, %v2103, %v2187
    %v2189 = vsel %vm414, %v2157, %v2158
    %v2190 = vsel %vm2183, %v2105, %v2189
    %v2191 = vsel %vm414, %v2158, %v2159
    %v2192 = vsel %vm2183, %v2107, %v2191
    %v2193 = vsel %vm414, %v2159, %v2160
    %v2194 = vsel %vm2183, %v2109, %v2193
    %v2195 = vsel %vm414, %v2160, %v2161
    %v2196 = vsel %vm2183, %v2111, %v2195
    %v2197 = vsel %vm414, %v2161, %v2162
    %v2198 = vsel %vm2183, %v2113, %v2197
    %v2199 = vsel %vm414, %v2162, %v2163
    %v2200 = vsel %vm2183, %v2115, %v2199
    %v2201 = vsel %vm414, %v2163, %v2164
    %v2202 = vsel %vm2183, %v2117, %v2201
    %v2203 = vsel %vm414, %v2164, %v2165
    %v2204 = vsel %vm2183, %v2119, %v2203
    %v2205 = vsel %vm414, %v2165, %v2166
    %v2206 = vsel %vm2183, %v2121, %v2205
    %v2207 = vsel %vm414, %v2166, %v2167
    %v2208 = vsel %vm2183, %v2123, %v2207
    %v2209 = vsel %vm414, %v2167, %v2168
    %v2210 = vsel %vm2183, %v2125, %v2209
    %v2211 = vsel %vm414, %v2168, %v2169
    %v2212 = vsel %vm2183, %v2127, %v2211
    %v2213 = vsel %vm414, %v2169, %v2170
    %v2214 = vsel %vm2183, %v2129, %v2213
    %v2215 = vsel %vm414, %v2170, %v2171
    %v2216 = vsel %vm2183, %v2131, %v2215
    %v2217 = vsel %vm414, %v2171, %v2172
    %v2218 = vsel %vm2183, %v2133, %v2217
    %v2219 = vsel %vm414, %v2172, %v2173
    %v2220 = vsel %vm2183, %v2135, %v2219
    %v2221 = vsel %vm414, %v2173, %v2174
    %v2222 = vsel %vm2183, %v2137, %v2221
    %v2223 = vsel %vm414, %v2174, %v2175
    %v2224 = vsel %vm2183, %v2139, %v2223
    %v2225 = vsel %vm414, %v2175, %v2176
    %v2226 = vsel %vm2183, %v2141, %v2225
    %v2227 = vsel %vm414, %v2176, %v2177
    %v2228 = vsel %vm2183, %v2143, %v2227
    %v2229 = vsel %vm414, %v2177, %v2178
    %v2230 = vsel %vm2183, %v2145, %v2229
    %v2231 = vsel %vm414, %v2178, %v2179
    %v2232 = vsel %vm2183, %v2147, %v2231
    %v2233 = vsel %vm414, %v2179, %v2180
    %v2234 = vsel %vm2183, %v2149, %v2233
    %v2235 = vsel %vm414, %v2180, %v2181
    %v2236 = vsel %vm2183, %v2151, %v2235
    %2264 = vst [vmem:[#allocation3 + $0x288] sm:$0xcc] %v2184
    %2265 = vst [vmem:[#allocation3 + $0x290] sm:$0xcc] %v2186
    %2266 = vst [vmem:[#allocation3 + $0x298] sm:$0xcc] %v2188
    %2267 = vst [vmem:[#allocation3 + $0x2a0] sm:$0xcc] %v2190
    %2268 = vst [vmem:[#allocation3 + $0x2a8] sm:$0xcc] %v2192
    %2269 = vst [vmem:[#allocation3 + $0x2b0] sm:$0xcc] %v2194
    %2270 = vst [vmem:[#allocation3 + $0x2b8] sm:$0xcc] %v2196
    %2271 = vst [vmem:[#allocation3 + $0x2c0] sm:$0xcc] %v2198
    %2272 = vst [vmem:[#allocation3 + $0x2c8] sm:$0xcc] %v2200
    %2273 = vst [vmem:[#allocation3 + $0x2d0] sm:$0xcc] %v2202
    %2274 = vst [vmem:[#allocation3 + $0x2d8] sm:$0xcc] %v2204
    %2275 = vst [vmem:[#allocation3 + $0x2e0] sm:$0xcc] %v2206
    %2276 = vst [vmem:[#allocation3 + $0x2e8] sm:$0xcc] %v2208
    %2277 = vst [vmem:[#allocation3 + $0x2f0] sm:$0xcc] %v2210
    %2278 = vst [vmem:[#allocation3 + $0x2f8] sm:$0xcc] %v2212
    %2279 = vst [vmem:[#allocation3 + $0x300] sm:$0xcc] %v2214
    %2280 = vst [vmem:[#allocation3 + $0x308] sm:$0xcc] %v2216
    %2281 = vst [vmem:[#allocation3 + $0x310] sm:$0xcc] %v2218
    %2282 = vst [vmem:[#allocation3 + $0x318] sm:$0xcc] %v2220
    %2283 = vst [vmem:[#allocation3 + $0x320] sm:$0xcc] %v2222
    %2284 = vst [vmem:[#allocation3 + $0x328] sm:$0xcc] %v2224
    %2285 = vst [vmem:[#allocation3 + $0x330] sm:$0xcc] %v2226
    %2286 = vst [vmem:[#allocation3 + $0x338] sm:$0xcc] %v2228
    %2287 = vst [vmem:[#allocation3 + $0x340] sm:$0xcc] %v2230
    %2288 = vst [vmem:[#allocation3 + $0x348] sm:$0xcc] %v2232
    %2289 = vst [vmem:[#allocation3 + $0x350] sm:$0xcc] %v2234
    %2290 = vst [vmem:[#allocation3 + $0x358] sm:$0xcc] %v2236
    %v2291 = vld [vmem:[#allocation2] sm:$0xff]
    %v2292 = vld [vmem:[#allocation2 + $0x8] sm:$0xff]
    %v2293 = vld [vmem:[#allocation2 + $0x10] sm:$0xff]
    %v2294 = vld [vmem:[#allocation2 + $0x18] sm:$0xff]
    %v2295 = vld [vmem:[#allocation2 + $0x20] sm:$0xff]
    %v2296 = vld [vmem:[#allocation2 + $0x28] sm:$0xff]
    %v2297 = vld [vmem:[#allocation2 + $0x30] sm:$0xff]
    %v2298 = vld [vmem:[#allocation2 + $0x38] sm:$0xff]
    %v2299 = vld [vmem:[#allocation2 + $0x40] sm:$0xff]
    %v2300 = vld [vmem:[#allocation2 + $0x48] sm:$0xff]
    %v2301 = vld [vmem:[#allocation2 + $0x50] sm:$0xff]
    %v2302 = vld [vmem:[#allocation2 + $0x58] sm:$0xff]
    %v2303 = vld [vmem:[#allocation2 + $0x60] sm:$0xff]
    %v2304 = vld [vmem:[#allocation2 + $0x68] sm:$0x3f]
    %2306 = vst [vmem:[#allocation1] ss:$2 sm:$0xff] %v2291
    %s2308 = scalar_lea.vmem [#allocation1], 16
    %2309 = vst [vmem:[%s2308] ss:$2 sm:$0xff] %v2292
    %s2311 = scalar_lea.vmem [#allocation1], 32
    %2312 = vst [vmem:[%s2311] ss:$2 sm:$0xff] %v2293
    %s2314 = scalar_lea.vmem [#allocation1], 48
    %2315 = vst [vmem:[%s2314] ss:$2 sm:$0xff] %v2294
    %v2316 = vld.sshfl [vmem:[#allocation1] sm:$0xff pattern:$0x75643120]
    %v2318 = vld.sshfl [vmem:[#allocation1 + $0x8] sm:$0xff pattern:$0x75643120]
    %v2320 = vld.sshfl [vmem:[#allocation1 + $0x10] sm:$0xff pattern:$0x75643120]
    %v2322 = vld.sshfl [vmem:[#allocation1 + $0x18] sm:$0xff pattern:$0x75643120]
    %v2324 = vld.sshfl [vmem:[#allocation1 + $0x20] sm:$0xff pattern:$0x75643120]
    %v2326 = vld.sshfl [vmem:[#allocation1 + $0x28] sm:$0xff pattern:$0x75643120]
    %v2328 = vld.sshfl [vmem:[#allocation1 + $0x30] sm:$0xff pattern:$0x75643120]
    %v2330 = vld.sshfl [vmem:[#allocation1 + $0x38] sm:$0xff pattern:$0x75643120]
    %2333 = vst [vmem:[#allocation1] ss:$2 sm:$0xff] %v2295
    %2335 = vst [vmem:[%s2308] ss:$2 sm:$0xff] %v2296
    %2337 = vst [vmem:[%s2311] ss:$2 sm:$0xff] %v2297
    %2339 = vst [vmem:[%s2314] ss:$2 sm:$0xff] %v2298
    %v2340 = vld.sshfl [vmem:[#allocation1] sm:$0xff pattern:$0x75643120]
    %v2342 = vld.sshfl [vmem:[#allocation1 + $0x8] sm:$0xff pattern:$0x75643120]
    %v2344 = vld.sshfl [vmem:[#allocation1 + $0x10] sm:$0xff pattern:$0x75643120]
    %v2346 = vld.sshfl [vmem:[#allocation1 + $0x18] sm:$0xff pattern:$0x75643120]
    %v2348 = vld.sshfl [vmem:[#allocation1 + $0x20] sm:$0xff pattern:$0x75643120]
    %v2350 = vld.sshfl [vmem:[#allocation1 + $0x28] sm:$0xff pattern:$0x75643120]
    %v2352 = vld.sshfl [vmem:[#allocation1 + $0x30] sm:$0xff pattern:$0x75643120]
    %v2354 = vld.sshfl [vmem:[#allocation1 + $0x38] sm:$0xff pattern:$0x75643120]
    %2357 = vst [vmem:[#allocation1] ss:$2 sm:$0xff] %v2299
    %2359 = vst [vmem:[%s2308] ss:$2 sm:$0xff] %v2300
    %2361 = vst [vmem:[%s2311] ss:$2 sm:$0xff] %v2301
    %2363 = vst [vmem:[%s2314] ss:$2 sm:$0xff] %v2302
    %v2364 = vld.sshfl [vmem:[#allocation1] sm:$0xff pattern:$0x75643120]
    %v2366 = vld.sshfl [vmem:[#allocation1 + $0x8] sm:$0xff pattern:$0x75643120]
    %v2368 = vld.sshfl [vmem:[#allocation1 + $0x10] sm:$0xff pattern:$0x75643120]
    %v2370 = vld.sshfl [vmem:[#allocation1 + $0x18] sm:$0xff pattern:$0x75643120]
    %v2372 = vld.sshfl [vmem:[#allocation1 + $0x20] sm:$0xff pattern:$0x75643120]
    %v2374 = vld.sshfl [vmem:[#allocation1 + $0x28] sm:$0xff pattern:$0x75643120]
    %v2376 = vld.sshfl [vmem:[#allocation1 + $0x30] sm:$0xff pattern:$0x75643120]
    %v2378 = vld.sshfl [vmem:[#allocation1 + $0x38] sm:$0xff pattern:$0x75643120]
    %2381 = vst [vmem:[#allocation1] ss:$2 sm:$0xff] %v2303
    %2383 = vst [vmem:[%s2308] ss:$2 sm:$0xff] %v2304
    %v2384 = vld.sshfl [vmem:[#allocation1] sm:$0xff pattern:$0x75643120]
    %v2386 = vld.sshfl [vmem:[#allocation1 + $0x8] sm:$0xff pattern:$0x75643120]
    %v2388 = vld.sshfl [vmem:[#allocation1 + $0x10] sm:$0xff pattern:$0x75643120]
    %v2390 = vld.sshfl [vmem:[#allocation1 + $0x18] sm:$0xff pattern:$0x75643120]
    %2392 = vrot.lane.b32.xlu0 %v2316, 90
    %v2393 = vpop.permute.xlu0 %2392
    %2394 = vrot.lane.b32.xlu0 %v2318, 90
    %v2395 = vpop.permute.xlu0 %2394
    %2396 = vrot.lane.b32.xlu0 %v2320, 90
    %v2397 = vpop.permute.xlu0 %2396
    %2398 = vrot.lane.b32.xlu0 %v2322, 90
    %v2399 = vpop.permute.xlu0 %2398
    %2400 = vrot.lane.b32.xlu0 %v2324, 90
    %v2401 = vpop.permute.xlu0 %2400
    %2402 = vrot.lane.b32.xlu0 %v2326, 90
    %v2403 = vpop.permute.xlu0 %2402
    %2404 = vrot.lane.b32.xlu0 %v2328, 90
    %v2405 = vpop.permute.xlu0 %2404
    %2406 = vrot.lane.b32.xlu0 %v2330, 90
    %v2407 = vpop.permute.xlu0 %2406
    %2408 = vrot.lane.b32.xlu0 %v2340, 90
    %v2409 = vpop.permute.xlu0 %2408
    %2410 = vrot.lane.b32.xlu0 %v2342, 90
    %v2411 = vpop.permute.xlu0 %2410
    %2412 = vrot.lane.b32.xlu0 %v2344, 90
    %v2413 = vpop.permute.xlu0 %2412
    %2414 = vrot.lane.b32.xlu0 %v2346, 90
    %v2415 = vpop.permute.xlu0 %2414
    %2416 = vrot.lane.b32.xlu0 %v2348, 90
    %v2417 = vpop.permute.xlu0 %2416
    %2418 = vrot.lane.b32.xlu0 %v2350, 90
    %v2419 = vpop.permute.xlu0 %2418
    %2420 = vrot.lane.b32.xlu0 %v2352, 90
    %v2421 = vpop.permute.xlu0 %2420
    %2422 = vrot.lane.b32.xlu0 %v2354, 90
    %v2423 = vpop.permute.xlu0 %2422
    %2424 = vrot.lane.b32.xlu0 %v2364, 90
    %v2425 = vpop.permute.xlu0 %2424
    %2426 = vrot.lane.b32.xlu0 %v2366, 90
    %v2427 = vpop.permute.xlu0 %2426
    %2428 = vrot.lane.b32.xlu0 %v2368, 90
    %v2429 = vpop.permute.xlu0 %2428
    %2430 = vrot.lane.b32.xlu0 %v2370, 90
    %v2431 = vpop.permute.xlu0 %2430
    %2432 = vrot.lane.b32.xlu0 %v2372, 90
    %v2433 = vpop.permute.xlu0 %2432
    %2434 = vrot.lane.b32.xlu0 %v2374, 90
    %v2435 = vpop.permute.xlu0 %2434
    %2436 = vrot.lane.b32.xlu0 %v2376, 90
    %v2437 = vpop.permute.xlu0 %2436
    %2438 = vrot.lane.b32.xlu0 %v2378, 90
    %v2439 = vpop.permute.xlu0 %2438
    %2440 = vrot.lane.b32.xlu0 %v2384, 90
    %v2441 = vpop.permute.xlu0 %2440
    %2442 = vrot.lane.b32.xlu0 %v2386, 90
    %v2443 = vpop.permute.xlu0 %2442
    %2444 = vrot.lane.b32.xlu0 %v2388, 90
    %v2445 = vpop.permute.xlu0 %2444
    %2446 = vrot.lane.b32.xlu0 %v2390, 90
    %v2447 = vpop.permute.xlu0 %2446
    %v2448 = vrot.slane %v2393, 4
    %v2449 = vrot.slane %v2395, 4
    %v2450 = vrot.slane %v2397, 4
    %v2451 = vrot.slane %v2399, 4
    %v2452 = vrot.slane %v2401, 4
    %v2453 = vrot.slane %v2403, 4
    %v2454 = vrot.slane %v2405, 4
    %v2455 = vrot.slane %v2407, 4
    %v2456 = vrot.slane %v2409, 4
    %v2457 = vrot.slane %v2411, 4
    %v2458 = vrot.slane %v2413, 4
    %v2459 = vrot.slane %v2415, 4
    %v2460 = vrot.slane %v2417, 4
    %v2461 = vrot.slane %v2419, 4
    %v2462 = vrot.slane %v2421, 4
    %v2463 = vrot.slane %v2423, 4
    %v2464 = vrot.slane %v2425, 4
    %v2465 = vrot.slane %v2427, 4
    %v2466 = vrot.slane %v2429, 4
    %v2467 = vrot.slane %v2431, 4
    %v2468 = vrot.slane %v2433, 4
    %v2469 = vrot.slane %v2435, 4
    %v2470 = vrot.slane %v2437, 4
    %v2471 = vrot.slane %v2439, 4
    %v2472 = vrot.slane %v2441, 4
    %v2473 = vrot.slane %v2443, 4
    %v2474 = vrot.slane %v2445, 4
    %v2475 = vrot.slane %v2447, 4
    %v2476 = vsel %vm414, %v2448, %v2449
    %vm2477 = vcmask 736256
    %v2478 = vsel %vm2477, %v2393, %v2476
    %v2479 = vsel %vm414, %v2449, %v2450
    %v2480 = vsel %vm2477, %v2395, %v2479
    %v2481 = vsel %vm414, %v2450, %v2451
    %v2482 = vsel %vm2477, %v2397, %v2481
    %v2483 = vsel %vm414, %v2451, %v2452
    %v2484 = vsel %vm2477, %v2399, %v2483
    %v2485 = vsel %vm414, %v2452, %v2453
    %v2486 = vsel %vm2477, %v2401, %v2485
    %v2487 = vsel %vm414, %v2453, %v2454
    %v2488 = vsel %vm2477, %v2403, %v2487
    %v2489 = vsel %vm414, %v2454, %v2455
    %v2490 = vsel %vm2477, %v2405, %v2489
    %v2491 = vsel %vm414, %v2455, %v2456
    %v2492 = vsel %vm2477, %v2407, %v2491
    %v2493 = vsel %vm414, %v2456, %v2457
    %v2494 = vsel %vm2477, %v2409, %v2493
    %v2495 = vsel %vm414, %v2457, %v2458
    %v2496 = vsel %vm2477, %v2411, %v2495
    %v2497 = vsel %vm414, %v2458, %v2459
    %v2498 = vsel %vm2477, %v2413, %v2497
    %v2499 = vsel %vm414, %v2459, %v2460
    %v2500 = vsel %vm2477, %v2415, %v2499
    %v2501 = vsel %vm414, %v2460, %v2461
    %v2502 = vsel %vm2477, %v2417, %v2501
    %v2503 = vsel %vm414, %v2461, %v2462
    %v2504 = vsel %vm2477, %v2419, %v2503
    %v2505 = vsel %vm414, %v2462, %v2463
    %v2506 = vsel %vm2477, %v2421, %v2505
    %v2507 = vsel %vm414, %v2463, %v2464
    %v2508 = vsel %vm2477, %v2423, %v2507
    %v2509 = vsel %vm414, %v2464, %v2465
    %v2510 = vsel %vm2477, %v2425, %v2509
    %v2511 = vsel %vm414, %v2465, %v2466
    %v2512 = vsel %vm2477, %v2427, %v2511
    %v2513 = vsel %vm414, %v2466, %v2467
    %v2514 = vsel %vm2477, %v2429, %v2513
    %v2515 = vsel %vm414, %v2467, %v2468
    %v2516 = vsel %vm2477, %v2431, %v2515
    %v2517 = vsel %vm414, %v2468, %v2469
    %v2518 = vsel %vm2477, %v2433, %v2517
    %v2519 = vsel %vm414, %v2469, %v2470
    %v2520 = vsel %vm2477, %v2435, %v2519
    %v2521 = vsel %vm414, %v2470, %v2471
    %v2522 = vsel %vm2477, %v2437, %v2521
    %v2523 = vsel %vm414, %v2471, %v2472
    %v2524 = vsel %vm2477, %v2439, %v2523
    %v2525 = vsel %vm414, %v2472, %v2473
    %v2526 = vsel %vm2477, %v2441, %v2525
    %v2527 = vsel %vm414, %v2473, %v2474
    %v2528 = vsel %vm2477, %v2443, %v2527
    %v2529 = vsel %vm414, %v2474, %v2475
    %v2530 = vsel %vm2477, %v2445, %v2529
    %2558 = vst [vmem:[#allocation3 + $0x360] sm:$0x33] %v2478
    %2559 = vst [vmem:[#allocation3 + $0x368] sm:$0x33] %v2480
    %2560 = vst [vmem:[#allocation3 + $0x370] sm:$0x33] %v2482
    %2561 = vst [vmem:[#allocation3 + $0x378] sm:$0x33] %v2484
    %2562 = vst [vmem:[#allocation3 + $0x380] sm:$0x33] %v2486
    %2563 = vst [vmem:[#allocation3 + $0x388] sm:$0x33] %v2488
    %2564 = vst [vmem:[#allocation3 + $0x390] sm:$0x33] %v2490
    %2565 = vst [vmem:[#allocation3 + $0x398] sm:$0x33] %v2492
    %2566 = vst [vmem:[#allocation3 + $0x3a0] sm:$0x33] %v2494
    %2567 = vst [vmem:[#allocation3 + $0x3a8] sm:$0x33] %v2496
    %2568 = vst [vmem:[#allocation3 + $0x3b0] sm:$0x33] %v2498
    %2569 = vst [vmem:[#allocation3 + $0x3b8] sm:$0x33] %v2500
    %2570 = vst [vmem:[#allocation3 + $0x3c0] sm:$0x33] %v2502
    %2571 = vst [vmem:[#allocation3 + $0x3c8] sm:$0x33] %v2504
    %2572 = vst [vmem:[#allocation3 + $0x3d0] sm:$0x33] %v2506
    %2573 = vst [vmem:[#allocation3 + $0x3d8] sm:$0x33] %v2508
    %2574 = vst [vmem:[#allocation3 + $0x3e0] sm:$0x33] %v2510
    %2575 = vst [vmem:[#allocation3 + $0x3e8] sm:$0x33] %v2512
    %2576 = vst [vmem:[#allocation3 + $0x3f0] sm:$0x33] %v2514
    %2577 = vst [vmem:[#allocation3 + $0x3f8] sm:$0x33] %v2516
    %2578 = vst [vmem:[#allocation3 + $0x400] sm:$0x33] %v2518
    %2579 = vst [vmem:[#allocation3 + $0x408] sm:$0x33] %v2520
    %2580 = vst [vmem:[#allocation3 + $0x410] sm:$0x33] %v2522
    %2581 = vst [vmem:[#allocation3 + $0x418] sm:$0x33] %v2524
    %2582 = vst [vmem:[#allocation3 + $0x420] sm:$0x33] %v2526
    %2583 = vst [vmem:[#allocation3 + $0x428] sm:$0x33] %v2528
    %2584 = vst [vmem:[#allocation3 + $0x430] sm:$0x33] %v2530
    %v2585 = vld [vmem:[#allocation2 + $0x4] sm:$0xff]
    %v2586 = vld [vmem:[#allocation2 + $0xc] sm:$0xff]
    %v2587 = vld [vmem:[#allocation2 + $0x14] sm:$0xff]
    %v2588 = vld [vmem:[#allocation2 + $0x1c] sm:$0xff]
    %v2589 = vld [vmem:[#allocation2 + $0x24] sm:$0xff]
    %v2590 = vld [vmem:[#allocation2 + $0x2c] sm:$0xff]
    %v2591 = vld [vmem:[#allocation2 + $0x34] sm:$0xff]
    %v2592 = vld [vmem:[#allocation2 + $0x3c] sm:$0xff]
    %v2593 = vld [vmem:[#allocation2 + $0x44] sm:$0xff]
    %v2594 = vld [vmem:[#allocation2 + $0x4c] sm:$0xff]
    %v2595 = vld [vmem:[#allocation2 + $0x54] sm:$0xff]
    %v2596 = vld [vmem:[#allocation2 + $0x5c] sm:$0xff]
    %v2597 = vld [vmem:[#allocation2 + $0x64] sm:$0xff]
    %v2598 = vld [vmem:[#allocation2 + $0x6c] sm:$0x3f]
    %s2600 = scalar_lea.vmem [#allocation1], 1
    %2601 = vst [vmem:[%s2600] ss:$2 sm:$0xff] %v2585
    %s2603 = scalar_lea.vmem [#allocation1], 17
    %2604 = vst [vmem:[%s2603] ss:$2 sm:$0xff] %v2586
    %s2606 = scalar_lea.vmem [#allocation1], 33
    %2607 = vst [vmem:[%s2606] ss:$2 sm:$0xff] %v2587
    %s2609 = scalar_lea.vmem [#allocation1], 49
    %2610 = vst [vmem:[%s2609] ss:$2 sm:$0xff] %v2588
    %v2611 = vld.sshfl [vmem:[#allocation1] sm:$0xff pattern:$0x75643120]
    %v2613 = vld.sshfl [vmem:[#allocation1 + $0x8] sm:$0xff pattern:$0x75643120]
    %v2615 = vld.sshfl [vmem:[#allocation1 + $0x10] sm:$0xff pattern:$0x75643120]
    %v2617 = vld.sshfl [vmem:[#allocation1 + $0x18] sm:$0xff pattern:$0x75643120]
    %v2619 = vld.sshfl [vmem:[#allocation1 + $0x20] sm:$0xff pattern:$0x75643120]
    %v2621 = vld.sshfl [vmem:[#allocation1 + $0x28] sm:$0xff pattern:$0x75643120]
    %v2623 = vld.sshfl [vmem:[#allocation1 + $0x30] sm:$0xff pattern:$0x75643120]
    %v2625 = vld.sshfl [vmem:[#allocation1 + $0x38] sm:$0xff pattern:$0x75643120]
    %2628 = vst [vmem:[%s2600] ss:$2 sm:$0xff] %v2589
    %2630 = vst [vmem:[%s2603] ss:$2 sm:$0xff] %v2590
    %2632 = vst [vmem:[%s2606] ss:$2 sm:$0xff] %v2591
    %2634 = vst [vmem:[%s2609] ss:$2 sm:$0xff] %v2592
    %v2635 = vld.sshfl [vmem:[#allocation1] sm:$0xff pattern:$0x75643120]
    %v2637 = vld.sshfl [vmem:[#allocation1 + $0x8] sm:$0xff pattern:$0x75643120]
    %v2639 = vld.sshfl [vmem:[#allocation1 + $0x10] sm:$0xff pattern:$0x75643120]
    %v2641 = vld.sshfl [vmem:[#allocation1 + $0x18] sm:$0xff pattern:$0x75643120]
    %v2643 = vld.sshfl [vmem:[#allocation1 + $0x20] sm:$0xff pattern:$0x75643120]
    %v2645 = vld.sshfl [vmem:[#allocation1 + $0x28] sm:$0xff pattern:$0x75643120]
    %v2647 = vld.sshfl [vmem:[#allocation1 + $0x30] sm:$0xff pattern:$0x75643120]
    %v2649 = vld.sshfl [vmem:[#allocation1 + $0x38] sm:$0xff pattern:$0x75643120]
    %2652 = vst [vmem:[%s2600] ss:$2 sm:$0xff] %v2593
    %2654 = vst [vmem:[%s2603] ss:$2 sm:$0xff] %v2594
    %2656 = vst [vmem:[%s2606] ss:$2 sm:$0xff] %v2595
    %2658 = vst [vmem:[%s2609] ss:$2 sm:$0xff] %v2596
    %v2659 = vld.sshfl [vmem:[#allocation1] sm:$0xff pattern:$0x75643120]
    %v2661 = vld.sshfl [vmem:[#allocation1 + $0x8] sm:$0xff pattern:$0x75643120]
    %v2663 = vld.sshfl [vmem:[#allocation1 + $0x10] sm:$0xff pattern:$0x75643120]
    %v2665 = vld.sshfl [vmem:[#allocation1 + $0x18] sm:$0xff pattern:$0x75643120]
    %v2667 = vld.sshfl [vmem:[#allocation1 + $0x20] sm:$0xff pattern:$0x75643120]
    %v2669 = vld.sshfl [vmem:[#allocation1 + $0x28] sm:$0xff pattern:$0x75643120]
    %v2671 = vld.sshfl [vmem:[#allocation1 + $0x30] sm:$0xff pattern:$0x75643120]
    %v2673 = vld.sshfl [vmem:[#allocation1 + $0x38] sm:$0xff pattern:$0x75643120]
    %2676 = vst [vmem:[%s2600] ss:$2 sm:$0xff] %v2597
    %2678 = vst [vmem:[%s2603] ss:$2 sm:$0xff] %v2598
    %v2679 = vld.sshfl [vmem:[#allocation1] sm:$0xff pattern:$0x75643120]
    %v2681 = vld.sshfl [vmem:[#allocation1 + $0x8] sm:$0xff pattern:$0x75643120]
    %v2683 = vld.sshfl [vmem:[#allocation1 + $0x10] sm:$0xff pattern:$0x75643120]
    %v2685 = vld.sshfl [vmem:[#allocation1 + $0x18] sm:$0xff pattern:$0x75643120]
    %2687 = vrot.lane.b32.xlu0 %v2611, 60
    %v2688 = vpop.permute.xlu0 %2687
    %2689 = vrot.lane.b32.xlu0 %v2613, 60
    %v2690 = vpop.permute.xlu0 %2689
    %2691 = vrot.lane.b32.xlu0 %v2615, 60
    %v2692 = vpop.permute.xlu0 %2691
    %2693 = vrot.lane.b32.xlu0 %v2617, 60
    %v2694 = vpop.permute.xlu0 %2693
    %2695 = vrot.lane.b32.xlu0 %v2619, 60
    %v2696 = vpop.permute.xlu0 %2695
    %2697 = vrot.lane.b32.xlu0 %v2621, 60
    %v2698 = vpop.permute.xlu0 %2697
    %2699 = vrot.lane.b32.xlu0 %v2623, 60
    %v2700 = vpop.permute.xlu0 %2699
    %2701 = vrot.lane.b32.xlu0 %v2625, 60
    %v2702 = vpop.permute.xlu0 %2701
    %2703 = vrot.lane.b32.xlu0 %v2635, 60
    %v2704 = vpop.permute.xlu0 %2703
    %2705 = vrot.lane.b32.xlu0 %v2637, 60
    %v2706 = vpop.permute.xlu0 %2705
    %2707 = vrot.lane.b32.xlu0 %v2639, 60
    %v2708 = vpop.permute.xlu0 %2707
    %2709 = vrot.lane.b32.xlu0 %v2641, 60
    %v2710 = vpop.permute.xlu0 %2709
    %2711 = vrot.lane.b32.xlu0 %v2643, 60
    %v2712 = vpop.permute.xlu0 %2711
    %2713 = vrot.lane.b32.xlu0 %v2645, 60
    %v2714 = vpop.permute.xlu0 %2713
    %2715 = vrot.lane.b32.xlu0 %v2647, 60
    %v2716 = vpop.permute.xlu0 %2715
    %2717 = vrot.lane.b32.xlu0 %v2649, 60
    %v2718 = vpop.permute.xlu0 %2717
    %2719 = vrot.lane.b32.xlu0 %v2659, 60
    %v2720 = vpop.permute.xlu0 %2719
    %2721 = vrot.lane.b32.xlu0 %v2661, 60
    %v2722 = vpop.permute.xlu0 %2721
    %2723 = vrot.lane.b32.xlu0 %v2663, 60
    %v2724 = vpop.permute.xlu0 %2723
    %2725 = vrot.lane.b32.xlu0 %v2665, 60
    %v2726 = vpop.permute.xlu0 %2725
    %2727 = vrot.lane.b32.xlu0 %v2667, 60
    %v2728 = vpop.permute.xlu0 %2727
    %2729 = vrot.lane.b32.xlu0 %v2669, 60
    %v2730 = vpop.permute.xlu0 %2729
    %2731 = vrot.lane.b32.xlu0 %v2671, 60
    %v2732 = vpop.permute.xlu0 %2731
    %2733 = vrot.lane.b32.xlu0 %v2673, 60
    %v2734 = vpop.permute.xlu0 %2733
    %2735 = vrot.lane.b32.xlu0 %v2679, 60
    %v2736 = vpop.permute.xlu0 %2735
    %2737 = vrot.lane.b32.xlu0 %v2681, 60
    %v2738 = vpop.permute.xlu0 %2737
    %2739 = vrot.lane.b32.xlu0 %v2683, 60
    %v2740 = vpop.permute.xlu0 %2739
    %2741 = vrot.lane.b32.xlu0 %v2685, 60
    %v2742 = vpop.permute.xlu0 %2741
    %v2743 = vrot.slane %v2688, 4
    %v2744 = vrot.slane %v2690, 4
    %v2745 = vrot.slane %v2692, 4
    %v2746 = vrot.slane %v2694, 4
    %v2747 = vrot.slane %v2696, 4
    %v2748 = vrot.slane %v2698, 4
    %v2749 = vrot.slane %v2700, 4
    %v2750 = vrot.slane %v2702, 4
    %v2751 = vrot.slane %v2704, 4
    %v2752 = vrot.slane %v2706, 4
    %v2753 = vrot.slane %v2708, 4
    %v2754 = vrot.slane %v2710, 4
    %v2755 = vrot.slane %v2712, 4
    %v2756 = vrot.slane %v2714, 4
    %v2757 = vrot.slane %v2716, 4
    %v2758 = vrot.slane %v2718, 4
    %v2759 = vrot.slane %v2720, 4
    %v2760 = vrot.slane %v2722, 4
    %v2761 = vrot.slane %v2724, 4
    %v2762 = vrot.slane %v2726, 4
    %v2763 = vrot.slane %v2728, 4
    %v2764 = vrot.slane %v2730, 4
    %v2765 = vrot.slane %v2732, 4
    %v2766 = vrot.slane %v2734, 4
    %v2767 = vrot.slane %v2736, 4
    %v2768 = vrot.slane %v2738, 4
    %v2769 = vrot.slane %v2740, 4
    %v2770 = vrot.slane %v2742, 4
    %v2771 = vsel %vm414, %v2743, %v2744
    %vm2772 = vcmask 490496
    %v2773 = vsel %vm2772, %v2688, %v2771
    %v2774 = vsel %vm414, %v2744, %v2745
    %v2775 = vsel %vm2772, %v2690, %v2774
    %v2776 = vsel %vm414, %v2745, %v2746
    %v2777 = vsel %vm2772, %v2692, %v2776
    %v2778 = vsel %vm414, %v2746, %v2747
    %v2779 = vsel %vm2772, %v2694, %v2778
    %v2780 = vsel %vm414, %v2747, %v2748
    %v2781 = vsel %vm2772, %v2696, %v2780
    %v2782 = vsel %vm414, %v2748, %v2749
    %v2783 = vsel %vm2772, %v2698, %v2782
    %v2784 = vsel %vm414, %v2749, %v2750
    %v2785 = vsel %vm2772, %v2700, %v2784
    %v2786 = vsel %vm414, %v2750, %v2751
    %v2787 = vsel %vm2772, %v2702, %v2786
    %v2788 = vsel %vm414, %v2751, %v2752
    %v2789 = vsel %vm2772, %v2704, %v2788
    %v2790 = vsel %vm414, %v2752, %v2753
    %v2791 = vsel %vm2772, %v2706, %v2790
    %v2792 = vsel %vm414, %v2753, %v2754
    %v2793 = vsel %vm2772, %v2708, %v2792
    %v2794 = vsel %vm414, %v2754, %v2755
    %v2795 = vsel %vm2772, %v2710, %v2794
    %v2796 = vsel %vm414, %v2755, %v2756
    %v2797 = vsel %vm2772, %v2712, %v2796
    %v2798 = vsel %vm414, %v2756, %v2757
    %v2799 = vsel %vm2772, %v2714, %v2798
    %v2800 = vsel %vm414, %v2757, %v2758
    %v2801 = vsel %vm2772, %v2716, %v2800
    %v2802 = vsel %vm414, %v2758, %v2759
    %v2803 = vsel %vm2772, %v2718, %v2802
    %v2804 = vsel %vm414, %v2759, %v2760
    %v2805 = vsel %vm2772, %v2720, %v2804
    %v2806 = vsel %vm414, %v2760, %v2761
    %v2807 = vsel %vm2772, %v2722, %v2806
    %v2808 = vsel %vm414, %v2761, %v2762
    %v2809 = vsel %vm2772, %v2724, %v2808
    %v2810 = vsel %vm414, %v2762, %v2763
    %v2811 = vsel %vm2772, %v2726, %v2810
    %v2812 = vsel %vm414, %v2763, %v2764
    %v2813 = vsel %vm2772, %v2728, %v2812
    %v2814 = vsel %vm414, %v2764, %v2765
    %v2815 = vsel %vm2772, %v2730, %v2814
    %v2816 = vsel %vm414, %v2765, %v2766
    %v2817 = vsel %vm2772, %v2732, %v2816
    %v2818 = vsel %vm414, %v2766, %v2767
    %v2819 = vsel %vm2772, %v2734, %v2818
    %v2820 = vsel %vm414, %v2767, %v2768
    %v2821 = vsel %vm2772, %v2736, %v2820
    %v2822 = vsel %vm414, %v2768, %v2769
    %v2823 = vsel %vm2772, %v2738, %v2822
    %v2824 = vsel %vm414, %v2769, %v2770
    %v2825 = vsel %vm2772, %v2740, %v2824
    %2853 = vst [vmem:[#allocation3 + $0x360] sm:$0xcc] %v2773
    %2854 = vst [vmem:[#allocation3 + $0x368] sm:$0xcc] %v2775
    %2855 = vst [vmem:[#allocation3 + $0x370] sm:$0xcc] %v2777
    %2856 = vst [vmem:[#allocation3 + $0x378] sm:$0xcc] %v2779
    %2857 = vst [vmem:[#allocation3 + $0x380] sm:$0xcc] %v2781
    %2858 = vst [vmem:[#allocation3 + $0x388] sm:$0xcc] %v2783
    %2859 = vst [vmem:[#allocation3 + $0x390] sm:$0xcc] %v2785
    %2860 = vst [vmem:[#allocation3 + $0x398] sm:$0xcc] %v2787
    %2861 = vst [vmem:[#allocation3 + $0x3a0] sm:$0xcc] %v2789
    %2862 = vst [vmem:[#allocation3 + $0x3a8] sm:$0xcc] %v2791
    %2863 = vst [vmem:[#allocation3 + $0x3b0] sm:$0xcc] %v2793
    %2864 = vst [vmem:[#allocation3 + $0x3b8] sm:$0xcc] %v2795
    %2865 = vst [vmem:[#allocation3 + $0x3c0] sm:$0xcc] %v2797
    %2866 = vst [vmem:[#allocation3 + $0x3c8] sm:$0xcc] %v2799
    %2867 = vst [vmem:[#allocation3 + $0x3d0] sm:$0xcc] %v2801
    %2868 = vst [vmem:[#allocation3 + $0x3d8] sm:$0xcc] %v2803
    %2869 = vst [vmem:[#allocation3 + $0x3e0] sm:$0xcc] %v2805
    %2870 = vst [vmem:[#allocation3 + $0x3e8] sm:$0xcc] %v2807
    %2871 = vst [vmem:[#allocation3 + $0x3f0] sm:$0xcc] %v2809
    %2872 = vst [vmem:[#allocation3 + $0x3f8] sm:$0xcc] %v2811
    %2873 = vst [vmem:[#allocation3 + $0x400] sm:$0xcc] %v2813
    %2874 = vst [vmem:[#allocation3 + $0x408] sm:$0xcc] %v2815
    %2875 = vst [vmem:[#allocation3 + $0x410] sm:$0xcc] %v2817
    %2876 = vst [vmem:[#allocation3 + $0x418] sm:$0xcc] %v2819
    %2877 = vst [vmem:[#allocation3 + $0x420] sm:$0xcc] %v2821
    %2878 = vst [vmem:[#allocation3 + $0x428] sm:$0xcc] %v2823
    %2879 = vst [vmem:[#allocation3 + $0x430] sm:$0xcc] %v2825
    %v2880 = vld [vmem:[#allocation2 + $0x4] sm:$0xff]
    %v2881 = vld [vmem:[#allocation2 + $0xc] sm:$0xff]
    %v2882 = vld [vmem:[#allocation2 + $0x14] sm:$0xff]
    %v2883 = vld [vmem:[#allocation2 + $0x1c] sm:$0xff]
    %v2884 = vld [vmem:[#allocation2 + $0x24] sm:$0xff]
    %v2885 = vld [vmem:[#allocation2 + $0x2c] sm:$0xff]
    %v2886 = vld [vmem:[#allocation2 + $0x34] sm:$0xff]
    %v2887 = vld [vmem:[#allocation2 + $0x3c] sm:$0xff]
    %v2888 = vld [vmem:[#allocation2 + $0x44] sm:$0xff]
    %v2889 = vld [vmem:[#allocation2 + $0x4c] sm:$0xff]
    %v2890 = vld [vmem:[#allocation2 + $0x54] sm:$0xff]
    %v2891 = vld [vmem:[#allocation2 + $0x5c] sm:$0xff]
    %v2892 = vld [vmem:[#allocation2 + $0x64] sm:$0xff]
    %v2893 = vld [vmem:[#allocation2 + $0x6c] sm:$0x3f]
    %2895 = vst [vmem:[#allocation1] ss:$2 sm:$0xff] %v2880
    %s2897 = scalar_lea.vmem [#allocation1], 16
    %2898 = vst [vmem:[%s2897] ss:$2 sm:$0xff] %v2881
    %s2900 = scalar_lea.vmem [#allocation1], 32
    %2901 = vst [vmem:[%s2900] ss:$2 sm:$0xff] %v2882
    %s2903 = scalar_lea.vmem [#allocation1], 48
    %2904 = vst [vmem:[%s2903] ss:$2 sm:$0xff] %v2883
    %v2905 = vld.sshfl [vmem:[#allocation1] sm:$0xff pattern:$0x75643120]
    %v2907 = vld.sshfl [vmem:[#allocation1 + $0x8] sm:$0xff pattern:$0x75643120]
    %v2909 = vld.sshfl [vmem:[#allocation1 + $0x10] sm:$0xff pattern:$0x75643120]
    %v2911 = vld.sshfl [vmem:[#allocation1 + $0x18] sm:$0xff pattern:$0x75643120]
    %v2913 = vld.sshfl [vmem:[#allocation1 + $0x20] sm:$0xff pattern:$0x75643120]
    %v2915 = vld.sshfl [vmem:[#allocation1 + $0x28] sm:$0xff pattern:$0x75643120]
    %v2917 = vld.sshfl [vmem:[#allocation1 + $0x30] sm:$0xff pattern:$0x75643120]
    %v2919 = vld.sshfl [vmem:[#allocation1 + $0x38] sm:$0xff pattern:$0x75643120]
    %2922 = vst [vmem:[#allocation1] ss:$2 sm:$0xff] %v2884
    %2924 = vst [vmem:[%s2897] ss:$2 sm:$0xff] %v2885
    %2926 = vst [vmem:[%s2900] ss:$2 sm:$0xff] %v2886
    %2928 = vst [vmem:[%s2903] ss:$2 sm:$0xff] %v2887
    %v2929 = vld.sshfl [vmem:[#allocation1] sm:$0xff pattern:$0x75643120]
    %v2931 = vld.sshfl [vmem:[#allocation1 + $0x8] sm:$0xff pattern:$0x75643120]
    %v2933 = vld.sshfl [vmem:[#allocation1 + $0x10] sm:$0xff pattern:$0x75643120]
    %v2935 = vld.sshfl [vmem:[#allocation1 + $0x18] sm:$0xff pattern:$0x75643120]
    %v2937 = vld.sshfl [vmem:[#allocation1 + $0x20] sm:$0xff pattern:$0x75643120]
    %v2939 = vld.sshfl [vmem:[#allocation1 + $0x28] sm:$0xff pattern:$0x75643120]
    %v2941 = vld.sshfl [vmem:[#allocation1 + $0x30] sm:$0xff pattern:$0x75643120]
    %v2943 = vld.sshfl [vmem:[#allocation1 + $0x38] sm:$0xff pattern:$0x75643120]
    %2946 = vst [vmem:[#allocation1] ss:$2 sm:$0xff] %v2888
    %2948 = vst [vmem:[%s2897] ss:$2 sm:$0xff] %v2889
    %2950 = vst [vmem:[%s2900] ss:$2 sm:$0xff] %v2890
    %2952 = vst [vmem:[%s2903] ss:$2 sm:$0xff] %v2891
    %v2953 = vld.sshfl [vmem:[#allocation1] sm:$0xff pattern:$0x75643120]
    %v2955 = vld.sshfl [vmem:[#allocation1 + $0x8] sm:$0xff pattern:$0x75643120]
    %v2957 = vld.sshfl [vmem:[#allocation1 + $0x10] sm:$0xff pattern:$0x75643120]
    %v2959 = vld.sshfl [vmem:[#allocation1 + $0x18] sm:$0xff pattern:$0x75643120]
    %v2961 = vld.sshfl [vmem:[#allocation1 + $0x20] sm:$0xff pattern:$0x75643120]
    %v2963 = vld.sshfl [vmem:[#allocation1 + $0x28] sm:$0xff pattern:$0x75643120]
    %v2965 = vld.sshfl [vmem:[#allocation1 + $0x30] sm:$0xff pattern:$0x75643120]
    %v2967 = vld.sshfl [vmem:[#allocation1 + $0x38] sm:$0xff pattern:$0x75643120]
    %2970 = vst [vmem:[#allocation1] ss:$2 sm:$0xff] %v2892
    %2972 = vst [vmem:[%s2897] ss:$2 sm:$0xff] %v2893
    %v2973 = vld.sshfl [vmem:[#allocation1] sm:$0xff pattern:$0x75643120]
    %v2975 = vld.sshfl [vmem:[#allocation1 + $0x8] sm:$0xff pattern:$0x75643120]
    %v2977 = vld.sshfl [vmem:[#allocation1 + $0x10] sm:$0xff pattern:$0x75643120]
    %v2979 = vld.sshfl [vmem:[#allocation1 + $0x18] sm:$0xff pattern:$0x75643120]
    %2981 = vrot.lane.b32.xlu0 %v2905, 59
    %v2982 = vpop.permute.xlu0 %2981
    %2983 = vrot.lane.b32.xlu0 %v2907, 59
    %v2984 = vpop.permute.xlu0 %2983
    %2985 = vrot.lane.b32.xlu0 %v2909, 59
    %v2986 = vpop.permute.xlu0 %2985
    %2987 = vrot.lane.b32.xlu0 %v2911, 59
    %v2988 = vpop.permute.xlu0 %2987
    %2989 = vrot.lane.b32.xlu0 %v2913, 59
    %v2990 = vpop.permute.xlu0 %2989
    %2991 = vrot.lane.b32.xlu0 %v2915, 59
    %v2992 = vpop.permute.xlu0 %2991
    %2993 = vrot.lane.b32.xlu0 %v2917, 59
    %v2994 = vpop.permute.xlu0 %2993
    %2995 = vrot.lane.b32.xlu0 %v2919, 59
    %v2996 = vpop.permute.xlu0 %2995
    %2997 = vrot.lane.b32.xlu0 %v2929, 59
    %v2998 = vpop.permute.xlu0 %2997
    %2999 = vrot.lane.b32.xlu0 %v2931, 59
    %v3000 = vpop.permute.xlu0 %2999
    %3001 = vrot.lane.b32.xlu0 %v2933, 59
    %v3002 = vpop.permute.xlu0 %3001
    %3003 = vrot.lane.b32.xlu0 %v2935, 59
    %v3004 = vpop.permute.xlu0 %3003
    %3005 = vrot.lane.b32.xlu0 %v2937, 59
    %v3006 = vpop.permute.xlu0 %3005
    %3007 = vrot.lane.b32.xlu0 %v2939, 59
    %v3008 = vpop.permute.xlu0 %3007
    %3009 = vrot.lane.b32.xlu0 %v2941, 59
    %v3010 = vpop.permute.xlu0 %3009
    %3011 = vrot.lane.b32.xlu0 %v2943, 59
    %v3012 = vpop.permute.xlu0 %3011
    %3013 = vrot.lane.b32.xlu0 %v2953, 59
    %v3014 = vpop.permute.xlu0 %3013
    %3015 = vrot.lane.b32.xlu0 %v2955, 59
    %v3016 = vpop.permute.xlu0 %3015
    %3017 = vrot.lane.b32.xlu0 %v2957, 59
    %v3018 = vpop.permute.xlu0 %3017
    %3019 = vrot.lane.b32.xlu0 %v2959, 59
    %v3020 = vpop.permute.xlu0 %3019
    %3021 = vrot.lane.b32.xlu0 %v2961, 59
    %v3022 = vpop.permute.xlu0 %3021
    %3023 = vrot.lane.b32.xlu0 %v2963, 59
    %v3024 = vpop.permute.xlu0 %3023
    %3025 = vrot.lane.b32.xlu0 %v2965, 59
    %v3026 = vpop.permute.xlu0 %3025
    %3027 = vrot.lane.b32.xlu0 %v2967, 59
    %v3028 = vpop.permute.xlu0 %3027
    %3029 = vrot.lane.b32.xlu0 %v2973, 59
    %v3030 = vpop.permute.xlu0 %3029
    %3031 = vrot.lane.b32.xlu0 %v2975, 59
    %v3032 = vpop.permute.xlu0 %3031
    %3033 = vrot.lane.b32.xlu0 %v2977, 59
    %v3034 = vpop.permute.xlu0 %3033
    %3035 = vrot.lane.b32.xlu0 %v2979, 59
    %v3036 = vpop.permute.xlu0 %3035
    %v3037 = vrot.slane %v2982, 4
    %v3038 = vrot.slane %v2984, 4
    %v3039 = vrot.slane %v2986, 4
    %v3040 = vrot.slane %v2988, 4
    %v3041 = vrot.slane %v2990, 4
    %v3042 = vrot.slane %v2992, 4
    %v3043 = vrot.slane %v2994, 4
    %v3044 = vrot.slane %v2996, 4
    %v3045 = vrot.slane %v2998, 4
    %v3046 = vrot.slane %v3000, 4
    %v3047 = vrot.slane %v3002, 4
    %v3048 = vrot.slane %v3004, 4
    %v3049 = vrot.slane %v3006, 4
    %v3050 = vrot.slane %v3008, 4
    %v3051 = vrot.slane %v3010, 4
    %v3052 = vrot.slane %v3012, 4
    %v3053 = vrot.slane %v3014, 4
    %v3054 = vrot.slane %v3016, 4
    %v3055 = vrot.slane %v3018, 4
    %v3056 = vrot.slane %v3020, 4
    %v3057 = vrot.slane %v3022, 4
    %v3058 = vrot.slane %v3024, 4
    %v3059 = vrot.slane %v3026, 4
    %v3060 = vrot.slane %v3028, 4
    %v3061 = vrot.slane %v3030, 4
    %v3062 = vrot.slane %v3032, 4
    %v3063 = vrot.slane %v3034, 4
    %v3064 = vrot.slane %v3036, 4
    %v3065 = vsel %vm414, %v3037, %v3038
    %vm3066 = vcmask 482304
    %v3067 = vsel %vm3066, %v2982, %v3065
    %v3068 = vsel %vm414, %v3038, %v3039
    %v3069 = vsel %vm3066, %v2984, %v3068
    %v3070 = vsel %vm414, %v3039, %v3040
    %v3071 = vsel %vm3066, %v2986, %v3070
    %v3072 = vsel %vm414, %v3040, %v3041
    %v3073 = vsel %vm3066, %v2988, %v3072
    %v3074 = vsel %vm414, %v3041, %v3042
    %v3075 = vsel %vm3066, %v2990, %v3074
    %v3076 = vsel %vm414, %v3042, %v3043
    %v3077 = vsel %vm3066, %v2992, %v3076
    %v3078 = vsel %vm414, %v3043, %v3044
    %v3079 = vsel %vm3066, %v2994, %v3078
    %v3080 = vsel %vm414, %v3044, %v3045
    %v3081 = vsel %vm3066, %v2996, %v3080
    %v3082 = vsel %vm414, %v3045, %v3046
    %v3083 = vsel %vm3066, %v2998, %v3082
    %v3084 = vsel %vm414, %v3046, %v3047
    %v3085 = vsel %vm3066, %v3000, %v3084
    %v3086 = vsel %vm414, %v3047, %v3048
    %v3087 = vsel %vm3066, %v3002, %v3086
    %v3088 = vsel %vm414, %v3048, %v3049
    %v3089 = vsel %vm3066, %v3004, %v3088
    %v3090 = vsel %vm414, %v3049, %v3050
    %v3091 = vsel %vm3066, %v3006, %v3090
    %v3092 = vsel %vm414, %v3050, %v3051
    %v3093 = vsel %vm3066, %v3008, %v3092
    %v3094 = vsel %vm414, %v3051, %v3052
    %v3095 = vsel %vm3066, %v3010, %v3094
    %v3096 = vsel %vm414, %v3052, %v3053
    %v3097 = vsel %vm3066, %v3012, %v3096
    %v3098 = vsel %vm414, %v3053, %v3054
    %v3099 = vsel %vm3066, %v3014, %v3098
    %v3100 = vsel %vm414, %v3054, %v3055
    %v3101 = vsel %vm3066, %v3016, %v3100
    %v3102 = vsel %vm414, %v3055, %v3056
    %v3103 = vsel %vm3066, %v3018, %v3102
    %v3104 = vsel %vm414, %v3056, %v3057
    %v3105 = vsel %vm3066, %v3020, %v3104
    %v3106 = vsel %vm414, %v3057, %v3058
    %v3107 = vsel %vm3066, %v3022, %v3106
    %v3108 = vsel %vm414, %v3058, %v3059
    %v3109 = vsel %vm3066, %v3024, %v3108
    %v3110 = vsel %vm414, %v3059, %v3060
    %v3111 = vsel %vm3066, %v3026, %v3110
    %v3112 = vsel %vm414, %v3060, %v3061
    %v3113 = vsel %vm3066, %v3028, %v3112
    %v3114 = vsel %vm414, %v3061, %v3062
    %v3115 = vsel %vm3066, %v3030, %v3114
    %v3116 = vsel %vm414, %v3062, %v3063
    %v3117 = vsel %vm3066, %v3032, %v3116
    %v3118 = vsel %vm414, %v3063, %v3064
    %v3119 = vsel %vm3066, %v3034, %v3118
    %3147 = vst [vmem:[#allocation3 + $0x438] sm:$0x33] %v3067
    %3148 = vst [vmem:[#allocation3 + $0x440] sm:$0x33] %v3069
    %3149 = vst [vmem:[#allocation3 + $0x448] sm:$0x33] %v3071
    %3150 = vst [vmem:[#allocation3 + $0x450] sm:$0x33] %v3073
    %3151 = vst [vmem:[#allocation3 + $0x458] sm:$0x33] %v3075
    %3152 = vst [vmem:[#allocation3 + $0x460] sm:$0x33] %v3077
    %3153 = vst [vmem:[#allocation3 + $0x468] sm:$0x33] %v3079
    %3154 = vst [vmem:[#allocation3 + $0x470] sm:$0x33] %v3081
    %3155 = vst [vmem:[#allocation3 + $0x478] sm:$0x33] %v3083
    %3156 = vst [vmem:[#allocation3 + $0x480] sm:$0x33] %v3085
    %3157 = vst [vmem:[#allocation3 + $0x488] sm:$0x33] %v3087
    %3158 = vst [vmem:[#allocation3 + $0x490] sm:$0x33] %v3089
    %3159 = vst [vmem:[#allocation3 + $0x498] sm:$0x33] %v3091
    %3160 = vst [vmem:[#allocation3 + $0x4a0] sm:$0x33] %v3093
    %3161 = vst [vmem:[#allocation3 + $0x4a8] sm:$0x33] %v3095
    %3162 = vst [vmem:[#allocation3 + $0x4b0] sm:$0x33] %v3097
    %3163 = vst [vmem:[#allocation3 + $0x4b8] sm:$0x33] %v3099
    %3164 = vst [vmem:[#allocation3 + $0x4c0] sm:$0x33] %v3101
    %3165 = vst [vmem:[#allocation3 + $0x4c8] sm:$0x33] %v3103
    %3166 = vst [vmem:[#allocation3 + $0x4d0] sm:$0x33] %v3105
    %3167 = vst [vmem:[#allocation3 + $0x4d8] sm:$0x33] %v3107
    %3168 = vst [vmem:[#allocation3 + $0x4e0] sm:$0x33] %v3109
    %3169 = vst [vmem:[#allocation3 + $0x4e8] sm:$0x33] %v3111
    %3170 = vst [vmem:[#allocation3 + $0x4f0] sm:$0x33] %v3113
    %3171 = vst [vmem:[#allocation3 + $0x4f8] sm:$0x33] %v3115
    %3172 = vst [vmem:[#allocation3 + $0x500] sm:$0x33] %v3117
    %3173 = vst [vmem:[#allocation3 + $0x508] sm:$0x33] %v3119
    %v3174 = vld [vmem:[#allocation2 + $0x4] sm:$0xff]
    %v3175 = vld [vmem:[#allocation2 + $0xc] sm:$0xff]
    %v3176 = vld [vmem:[#allocation2 + $0x14] sm:$0xff]
    %v3177 = vld [vmem:[#allocation2 + $0x1c] sm:$0xff]
    %v3178 = vld [vmem:[#allocation2 + $0x24] sm:$0xff]
    %v3179 = vld [vmem:[#allocation2 + $0x2c] sm:$0xff]
    %v3180 = vld [vmem:[#allocation2 + $0x34] sm:$0xff]
    %v3181 = vld [vmem:[#allocation2 + $0x3c] sm:$0xff]
    %v3182 = vld [vmem:[#allocation2 + $0x44] sm:$0xff]
    %v3183 = vld [vmem:[#allocation2 + $0x4c] sm:$0xff]
    %v3184 = vld [vmem:[#allocation2 + $0x54] sm:$0xff]
    %v3185 = vld [vmem:[#allocation2 + $0x5c] sm:$0xff]
    %v3186 = vld [vmem:[#allocation2 + $0x64] sm:$0xff]
    %v3187 = vld [vmem:[#allocation2 + $0x6c] sm:$0x3f]
    %s3189 = scalar_lea.vmem [#allocation1], 1
    %3190 = vst [vmem:[%s3189] ss:$2 sm:$0xff] %v3174
    %s3192 = scalar_lea.vmem [#allocation1], 17
    %3193 = vst [vmem:[%s3192] ss:$2 sm:$0xff] %v3175
    %s3195 = scalar_lea.vmem [#allocation1], 33
    %3196 = vst [vmem:[%s3195] ss:$2 sm:$0xff] %v3176
    %s3198 = scalar_lea.vmem [#allocation1], 49
    %3199 = vst [vmem:[%s3198] ss:$2 sm:$0xff] %v3177
    %v3200 = vld.sshfl [vmem:[#allocation1] sm:$0xff pattern:$0x75643120]
    %v3202 = vld.sshfl [vmem:[#allocation1 + $0x8] sm:$0xff pattern:$0x75643120]
    %v3204 = vld.sshfl [vmem:[#allocation1 + $0x10] sm:$0xff pattern:$0x75643120]
    %v3206 = vld.sshfl [vmem:[#allocation1 + $0x18] sm:$0xff pattern:$0x75643120]
    %v3208 = vld.sshfl [vmem:[#allocation1 + $0x20] sm:$0xff pattern:$0x75643120]
    %v3210 = vld.sshfl [vmem:[#allocation1 + $0x28] sm:$0xff pattern:$0x75643120]
    %v3212 = vld.sshfl [vmem:[#allocation1 + $0x30] sm:$0xff pattern:$0x75643120]
    %v3214 = vld.sshfl [vmem:[#allocation1 + $0x38] sm:$0xff pattern:$0x75643120]
    %3217 = vst [vmem:[%s3189] ss:$2 sm:$0xff] %v3178
    %3219 = vst [vmem:[%s3192] ss:$2 sm:$0xff] %v3179
    %3221 = vst [vmem:[%s3195] ss:$2 sm:$0xff] %v3180
    %3223 = vst [vmem:[%s3198] ss:$2 sm:$0xff] %v3181
    %v3224 = vld.sshfl [vmem:[#allocation1] sm:$0xff pattern:$0x75643120]
    %v3226 = vld.sshfl [vmem:[#allocation1 + $0x8] sm:$0xff pattern:$0x75643120]
    %v3228 = vld.sshfl [vmem:[#allocation1 + $0x10] sm:$0xff pattern:$0x75643120]
    %v3230 = vld.sshfl [vmem:[#allocation1 + $0x18] sm:$0xff pattern:$0x75643120]
    %v3232 = vld.sshfl [vmem:[#allocation1 + $0x20] sm:$0xff pattern:$0x75643120]
    %v3234 = vld.sshfl [vmem:[#allocation1 + $0x28] sm:$0xff pattern:$0x75643120]
    %v3236 = vld.sshfl [vmem:[#allocation1 + $0x30] sm:$0xff pattern:$0x75643120]
    %v3238 = vld.sshfl [vmem:[#allocation1 + $0x38] sm:$0xff pattern:$0x75643120]
    %3241 = vst [vmem:[%s3189] ss:$2 sm:$0xff] %v3182
    %3243 = vst [vmem:[%s3192] ss:$2 sm:$0xff] %v3183
    %3245 = vst [vmem:[%s3195] ss:$2 sm:$0xff] %v3184
    %3247 = vst [vmem:[%s3198] ss:$2 sm:$0xff] %v3185
    %v3248 = vld.sshfl [vmem:[#allocation1] sm:$0xff pattern:$0x75643120]
    %v3250 = vld.sshfl [vmem:[#allocation1 + $0x8] sm:$0xff pattern:$0x75643120]
    %v3252 = vld.sshfl [vmem:[#allocation1 + $0x10] sm:$0xff pattern:$0x75643120]
    %v3254 = vld.sshfl [vmem:[#allocation1 + $0x18] sm:$0xff pattern:$0x75643120]
    %v3256 = vld.sshfl [vmem:[#allocation1 + $0x20] sm:$0xff pattern:$0x75643120]
    %v3258 = vld.sshfl [vmem:[#allocation1 + $0x28] sm:$0xff pattern:$0x75643120]
    %v3260 = vld.sshfl [vmem:[#allocation1 + $0x30] sm:$0xff pattern:$0x75643120]
    %v3262 = vld.sshfl [vmem:[#allocation1 + $0x38] sm:$0xff pattern:$0x75643120]
    %3265 = vst [vmem:[%s3189] ss:$2 sm:$0xff] %v3186
    %3267 = vst [vmem:[%s3192] ss:$2 sm:$0xff] %v3187
    %v3268 = vld.sshfl [vmem:[#allocation1] sm:$0xff pattern:$0x75643120]
    %v3270 = vld.sshfl [vmem:[#allocation1 + $0x8] sm:$0xff pattern:$0x75643120]
    %v3272 = vld.sshfl [vmem:[#allocation1 + $0x10] sm:$0xff pattern:$0x75643120]
    %v3274 = vld.sshfl [vmem:[#allocation1 + $0x18] sm:$0xff pattern:$0x75643120]
    %3276 = vrot.lane.b32.xlu0 %v3200, 58
    %v3277 = vpop.permute.xlu0 %3276
    %3278 = vrot.lane.b32.xlu0 %v3202, 58
    %v3279 = vpop.permute.xlu0 %3278
    %3280 = vrot.lane.b32.xlu0 %v3204, 58
    %v3281 = vpop.permute.xlu0 %3280
    %3282 = vrot.lane.b32.xlu0 %v3206, 58
    %v3283 = vpop.permute.xlu0 %3282
    %3284 = vrot.lane.b32.xlu0 %v3208, 58
    %v3285 = vpop.permute.xlu0 %3284
    %3286 = vrot.lane.b32.xlu0 %v3210, 58
    %v3287 = vpop.permute.xlu0 %3286
    %3288 = vrot.lane.b32.xlu0 %v3212, 58
    %v3289 = vpop.permute.xlu0 %3288
    %3290 = vrot.lane.b32.xlu0 %v3214, 58
    %v3291 = vpop.permute.xlu0 %3290
    %3292 = vrot.lane.b32.xlu0 %v3224, 58
    %v3293 = vpop.permute.xlu0 %3292
    %3294 = vrot.lane.b32.xlu0 %v3226, 58
    %v3295 = vpop.permute.xlu0 %3294
    %3296 = vrot.lane.b32.xlu0 %v3228, 58
    %v3297 = vpop.permute.xlu0 %3296
    %3298 = vrot.lane.b32.xlu0 %v3230, 58
    %v3299 = vpop.permute.xlu0 %3298
    %3300 = vrot.lane.b32.xlu0 %v3232, 58
    %v3301 = vpop.permute.xlu0 %3300
    %3302 = vrot.lane.b32.xlu0 %v3234, 58
    %v3303 = vpop.permute.xlu0 %3302
    %3304 = vrot.lane.b32.xlu0 %v3236, 58
    %v3305 = vpop.permute.xlu0 %3304
    %3306 = vrot.lane.b32.xlu0 %v3238, 58
    %v3307 = vpop.permute.xlu0 %3306
    %3308 = vrot.lane.b32.xlu0 %v3248, 58
    %v3309 = vpop.permute.xlu0 %3308
    %3310 = vrot.lane.b32.xlu0 %v3250, 58
    %v3311 = vpop.permute.xlu0 %3310
    %3312 = vrot.lane.b32.xlu0 %v3252, 58
    %v3313 = vpop.permute.xlu0 %3312
    %3314 = vrot.lane.b32.xlu0 %v3254, 58
    %v3315 = vpop.permute.xlu0 %3314
    %3316 = vrot.lane.b32.xlu0 %v3256, 58
    %v3317 = vpop.permute.xlu0 %3316
    %3318 = vrot.lane.b32.xlu0 %v3258, 58
    %v3319 = vpop.permute.xlu0 %3318
    %3320 = vrot.lane.b32.xlu0 %v3260, 58
    %v3321 = vpop.permute.xlu0 %3320
    %3322 = vrot.lane.b32.xlu0 %v3262, 58
    %v3323 = vpop.permute.xlu0 %3322
    %3324 = vrot.lane.b32.xlu0 %v3268, 58
    %v3325 = vpop.permute.xlu0 %3324
    %3326 = vrot.lane.b32.xlu0 %v3270, 58
    %v3327 = vpop.permute.xlu0 %3326
    %3328 = vrot.lane.b32.xlu0 %v3272, 58
    %v3329 = vpop.permute.xlu0 %3328
    %3330 = vrot.lane.b32.xlu0 %v3274, 58
    %v3331 = vpop.permute.xlu0 %3330
    %v3332 = vrot.slane %v3277, 4
    %v3333 = vrot.slane %v3279, 4
    %v3334 = vrot.slane %v3281, 4
    %v3335 = vrot.slane %v3283, 4
    %v3336 = vrot.slane %v3285, 4
    %v3337 = vrot.slane %v3287, 4
    %v3338 = vrot.slane %v3289, 4
    %v3339 = vrot.slane %v3291, 4
    %v3340 = vrot.slane %v3293, 4
    %v3341 = vrot.slane %v3295, 4
    %v3342 = vrot.slane %v3297, 4
    %v3343 = vrot.slane %v3299, 4
    %v3344 = vrot.slane %v3301, 4
    %v3345 = vrot.slane %v3303, 4
    %v3346 = vrot.slane %v3305, 4
    %v3347 = vrot.slane %v3307, 4
    %v3348 = vrot.slane %v3309, 4
    %v3349 = vrot.slane %v3311, 4
    %v3350 = vrot.slane %v3313, 4
    %v3351 = vrot.slane %v3315, 4
    %v3352 = vrot.slane %v3317, 4
    %v3353 = vrot.slane %v3319, 4
    %v3354 = vrot.slane %v3321, 4
    %v3355 = vrot.slane %v3323, 4
    %v3356 = vrot.slane %v3325, 4
    %v3357 = vrot.slane %v3327, 4
    %v3358 = vrot.slane %v3329, 4
    %v3359 = vrot.slane %v3331, 4
    %v3360 = vsel %vm414, %v3332, %v3333
    %vm3361 = vcmask 474112
    %v3362 = vsel %vm3361, %v3277, %v3360
    %v3363 = vsel %vm414, %v3333, %v3334
    %v3364 = vsel %vm3361, %v3279, %v3363
    %v3365 = vsel %vm414, %v3334, %v3335
    %v3366 = vsel %vm3361, %v3281, %v3365
    %v3367 = vsel %vm414, %v3335, %v3336
    %v3368 = vsel %vm3361, %v3283, %v3367
    %v3369 = vsel %vm414, %v3336, %v3337
    %v3370 = vsel %vm3361, %v3285, %v3369
    %v3371 = vsel %vm414, %v3337, %v3338
    %v3372 = vsel %vm3361, %v3287, %v3371
    %v3373 = vsel %vm414, %v3338, %v3339
    %v3374 = vsel %vm3361, %v3289, %v3373
    %v3375 = vsel %vm414, %v3339, %v3340
    %v3376 = vsel %vm3361, %v3291, %v3375
    %v3377 = vsel %vm414, %v3340, %v3341
    %v3378 = vsel %vm3361, %v3293, %v3377
    %v3379 = vsel %vm414, %v3341, %v3342
    %v3380 = vsel %vm3361, %v3295, %v3379
    %v3381 = vsel %vm414, %v3342, %v3343
    %v3382 = vsel %vm3361, %v3297, %v3381
    %v3383 = vsel %vm414, %v3343, %v3344
    %v3384 = vsel %vm3361, %v3299, %v3383
    %v3385 = vsel %vm414, %v3344, %v3345
    %v3386 = vsel %vm3361, %v3301, %v3385
    %v3387 = vsel %vm414, %v3345, %v3346
    %v3388 = vsel %vm3361, %v3303, %v3387
    %v3389 = vsel %vm414, %v3346, %v3347
    %v3390 = vsel %vm3361, %v3305, %v3389
    %v3391 = vsel %vm414, %v3347, %v3348
    %v3392 = vsel %vm3361, %v3307, %v3391
    %v3393 = vsel %vm414, %v3348, %v3349
    %v3394 = vsel %vm3361, %v3309, %v3393
    %v3395 = vsel %vm414, %v3349, %v3350
    %v3396 = vsel %vm3361, %v3311, %v3395
    %v3397 = vsel %vm414, %v3350, %v3351
    %v3398 = vsel %vm3361, %v3313, %v3397
    %v3399 = vsel %vm414, %v3351, %v3352
    %v3400 = vsel %vm3361, %v3315, %v3399
    %v3401 = vsel %vm414, %v3352, %v3353
    %v3402 = vsel %vm3361, %v3317, %v3401
    %v3403 = vsel %vm414, %v3353, %v3354
    %v3404 = vsel %vm3361, %v3319, %v3403
    %v3405 = vsel %vm414, %v3354, %v3355
    %v3406 = vsel %vm3361, %v3321, %v3405
    %v3407 = vsel %vm414, %v3355, %v3356
    %v3408 = vsel %vm3361, %v3323, %v3407
    %v3409 = vsel %vm414, %v3356, %v3357
    %v3410 = vsel %vm3361, %v3325, %v3409
    %v3411 = vsel %vm414, %v3357, %v3358
    %v3412 = vsel %vm3361, %v3327, %v3411
    %v3413 = vsel %vm414, %v3358, %v3359
    %v3414 = vsel %vm3361, %v3329, %v3413
    %3442 = vst [vmem:[#allocation3 + $0x438] sm:$0xcc] %v3362
    %3443 = vst [vmem:[#allocation3 + $0x440] sm:$0xcc] %v3364
    %3444 = vst [vmem:[#allocation3 + $0x448] sm:$0xcc] %v3366
    %3445 = vst [vmem:[#allocation3 + $0x450] sm:$0xcc] %v3368
    %3446 = vst [vmem:[#allocation3 + $0x458] sm:$0xcc] %v3370
    %3447 = vst [vmem:[#allocation3 + $0x460] sm:$0xcc] %v3372
    %3448 = vst [vmem:[#allocation3 + $0x468] sm:$0xcc] %v3374
    %3449 = vst [vmem:[#allocation3 + $0x470] sm:$0xcc] %v3376
    %3450 = vst [vmem:[#allocation3 + $0x478] sm:$0xcc] %v3378
    %3451 = vst [vmem:[#allocation3 + $0x480] sm:$0xcc] %v3380
    %3452 = vst [vmem:[#allocation3 + $0x488] sm:$0xcc] %v3382
    %3453 = vst [vmem:[#allocation3 + $0x490] sm:$0xcc] %v3384
    %3454 = vst [vmem:[#allocation3 + $0x498] sm:$0xcc] %v3386
    %3455 = vst [vmem:[#allocation3 + $0x4a0] sm:$0xcc] %v3388
    %3456 = vst [vmem:[#allocation3 + $0x4a8] sm:$0xcc] %v3390
    %3457 = vst [vmem:[#allocation3 + $0x4b0] sm:$0xcc] %v3392
    %3458 = vst [vmem:[#allocation3 + $0x4b8] sm:$0xcc] %v3394
    %3459 = vst [vmem:[#allocation3 + $0x4c0] sm:$0xcc] %v3396
    %3460 = vst [vmem:[#allocation3 + $0x4c8] sm:$0xcc] %v3398
    %3461 = vst [vmem:[#allocation3 + $0x4d0] sm:$0xcc] %v3400
    %3462 = vst [vmem:[#allocation3 + $0x4d8] sm:$0xcc] %v3402
    %3463 = vst [vmem:[#allocation3 + $0x4e0] sm:$0xcc] %v3404
    %3464 = vst [vmem:[#allocation3 + $0x4e8] sm:$0xcc] %v3406
    %3465 = vst [vmem:[#allocation3 + $0x4f0] sm:$0xcc] %v3408
    %3466 = vst [vmem:[#allocation3 + $0x4f8] sm:$0xcc] %v3410
    %3467 = vst [vmem:[#allocation3 + $0x500] sm:$0xcc] %v3412
    %3468 = vst [vmem:[#allocation3 + $0x508] sm:$0xcc] %v3414
    %v3469 = vld [vmem:[#allocation2 + $0x4] sm:$0xff]
    %v3470 = vld [vmem:[#allocation2 + $0xc] sm:$0xff]
    %v3471 = vld [vmem:[#allocation2 + $0x14] sm:$0xff]
    %v3472 = vld [vmem:[#allocation2 + $0x1c] sm:$0xff]
    %v3473 = vld [vmem:[#allocation2 + $0x24] sm:$0xff]
    %v3474 = vld [vmem:[#allocation2 + $0x2c] sm:$0xff]
    %v3475 = vld [vmem:[#allocation2 + $0x34] sm:$0xff]
    %v3476 = vld [vmem:[#allocation2 + $0x3c] sm:$0xff]
    %v3477 = vld [vmem:[#allocation2 + $0x44] sm:$0xff]
    %v3478 = vld [vmem:[#allocation2 + $0x4c] sm:$0xff]
    %v3479 = vld [vmem:[#allocation2 + $0x54] sm:$0xff]
    %v3480 = vld [vmem:[#allocation2 + $0x5c] sm:$0xff]
    %v3481 = vld [vmem:[#allocation2 + $0x64] sm:$0xff]
    %v3482 = vld [vmem:[#allocation2 + $0x6c] sm:$0x3f]
    %3484 = vst [vmem:[#allocation1] ss:$2 sm:$0xff] %v3469
    %s3486 = scalar_lea.vmem [#allocation1], 16
    %3487 = vst [vmem:[%s3486] ss:$2 sm:$0xff] %v3470
    %s3489 = scalar_lea.vmem [#allocation1], 32
    %3490 = vst [vmem:[%s3489] ss:$2 sm:$0xff] %v3471
    %s3492 = scalar_lea.vmem [#allocation1], 48
    %3493 = vst [vmem:[%s3492] ss:$2 sm:$0xff] %v3472
    %v3494 = vld.sshfl [vmem:[#allocation1] sm:$0xff pattern:$0x75643120]
    %v3496 = vld.sshfl [vmem:[#allocation1 + $0x8] sm:$0xff pattern:$0x75643120]
    %v3498 = vld.sshfl [vmem:[#allocation1 + $0x10] sm:$0xff pattern:$0x75643120]
    %v3500 = vld.sshfl [vmem:[#allocation1 + $0x18] sm:$0xff pattern:$0x75643120]
    %v3502 = vld.sshfl [vmem:[#allocation1 + $0x20] sm:$0xff pattern:$0x75643120]
    %v3504 = vld.sshfl [vmem:[#allocation1 + $0x28] sm:$0xff pattern:$0x75643120]
    %v3506 = vld.sshfl [vmem:[#allocation1 + $0x30] sm:$0xff pattern:$0x75643120]
    %v3508 = vld.sshfl [vmem:[#allocation1 + $0x38] sm:$0xff pattern:$0x75643120]
    %3511 = vst [vmem:[#allocation1] ss:$2 sm:$0xff] %v3473
    %3513 = vst [vmem:[%s3486] ss:$2 sm:$0xff] %v3474
    %3515 = vst [vmem:[%s3489] ss:$2 sm:$0xff] %v3475
    %3517 = vst [vmem:[%s3492] ss:$2 sm:$0xff] %v3476
    %v3518 = vld.sshfl [vmem:[#allocation1] sm:$0xff pattern:$0x75643120]
    %v3520 = vld.sshfl [vmem:[#allocation1 + $0x8] sm:$0xff pattern:$0x75643120]
    %v3522 = vld.sshfl [vmem:[#allocation1 + $0x10] sm:$0xff pattern:$0x75643120]
    %v3524 = vld.sshfl [vmem:[#allocation1 + $0x18] sm:$0xff pattern:$0x75643120]
    %v3526 = vld.sshfl [vmem:[#allocation1 + $0x20] sm:$0xff pattern:$0x75643120]
    %v3528 = vld.sshfl [vmem:[#allocation1 + $0x28] sm:$0xff pattern:$0x75643120]
    %v3530 = vld.sshfl [vmem:[#allocation1 + $0x30] sm:$0xff pattern:$0x75643120]
    %v3532 = vld.sshfl [vmem:[#allocation1 + $0x38] sm:$0xff pattern:$0x75643120]
    %3535 = vst [vmem:[#allocation1] ss:$2 sm:$0xff] %v3477
    %3537 = vst [vmem:[%s3486] ss:$2 sm:$0xff] %v3478
    %3539 = vst [vmem:[%s3489] ss:$2 sm:$0xff] %v3479
    %3541 = vst [vmem:[%s3492] ss:$2 sm:$0xff] %v3480
    %v3542 = vld.sshfl [vmem:[#allocation1] sm:$0xff pattern:$0x75643120]
    %v3544 = vld.sshfl [vmem:[#allocation1 + $0x8] sm:$0xff pattern:$0x75643120]
    %v3546 = vld.sshfl [vmem:[#allocation1 + $0x10] sm:$0xff pattern:$0x75643120]
    %v3548 = vld.sshfl [vmem:[#allocation1 + $0x18] sm:$0xff pattern:$0x75643120]
    %v3550 = vld.sshfl [vmem:[#allocation1 + $0x20] sm:$0xff pattern:$0x75643120]
    %v3552 = vld.sshfl [vmem:[#allocation1 + $0x28] sm:$0xff pattern:$0x75643120]
    %v3554 = vld.sshfl [vmem:[#allocation1 + $0x30] sm:$0xff pattern:$0x75643120]
    %v3556 = vld.sshfl [vmem:[#allocation1 + $0x38] sm:$0xff pattern:$0x75643120]
    %3559 = vst [vmem:[#allocation1] ss:$2 sm:$0xff] %v3481
    %3561 = vst [vmem:[%s3486] ss:$2 sm:$0xff] %v3482
    %v3562 = vld.sshfl [vmem:[#allocation1] sm:$0xff pattern:$0x75643120]
    %v3564 = vld.sshfl [vmem:[#allocation1 + $0x8] sm:$0xff pattern:$0x75643120]
    %v3566 = vld.sshfl [vmem:[#allocation1 + $0x10] sm:$0xff pattern:$0x75643120]
    %v3568 = vld.sshfl [vmem:[#allocation1 + $0x18] sm:$0xff pattern:$0x75643120]
    %3570 = vrot.lane.b32.xlu0 %v3494, 42
    %v3571 = vpop.permute.xlu0 %3570
    %3572 = vrot.lane.b32.xlu0 %v3496, 42
    %v3573 = vpop.permute.xlu0 %3572
    %3574 = vrot.lane.b32.xlu0 %v3498, 42
    %v3575 = vpop.permute.xlu0 %3574
    %3576 = vrot.lane.b32.xlu0 %v3500, 42
    %v3577 = vpop.permute.xlu0 %3576
    %3578 = vrot.lane.b32.xlu0 %v3502, 42
    %v3579 = vpop.permute.xlu0 %3578
    %3580 = vrot.lane.b32.xlu0 %v3504, 42
    %v3581 = vpop.permute.xlu0 %3580
    %3582 = vrot.lane.b32.xlu0 %v3506, 42
    %v3583 = vpop.permute.xlu0 %3582
    %3584 = vrot.lane.b32.xlu0 %v3508, 42
    %v3585 = vpop.permute.xlu0 %3584
    %3586 = vrot.lane.b32.xlu0 %v3518, 42
    %v3587 = vpop.permute.xlu0 %3586
    %3588 = vrot.lane.b32.xlu0 %v3520, 42
    %v3589 = vpop.permute.xlu0 %3588
    %3590 = vrot.lane.b32.xlu0 %v3522, 42
    %v3591 = vpop.permute.xlu0 %3590
    %3592 = vrot.lane.b32.xlu0 %v3524, 42
    %v3593 = vpop.permute.xlu0 %3592
    %3594 = vrot.lane.b32.xlu0 %v3526, 42
    %v3595 = vpop.permute.xlu0 %3594
    %3596 = vrot.lane.b32.xlu0 %v3528, 42
    %v3597 = vpop.permute.xlu0 %3596
    %3598 = vrot.lane.b32.xlu0 %v3530, 42
    %v3599 = vpop.permute.xlu0 %3598
    %3600 = vrot.lane.b32.xlu0 %v3532, 42
    %v3601 = vpop.permute.xlu0 %3600
    %3602 = vrot.lane.b32.xlu0 %v3542, 42
    %v3603 = vpop.permute.xlu0 %3602
    %3604 = vrot.lane.b32.xlu0 %v3544, 42
    %v3605 = vpop.permute.xlu0 %3604
    %3606 = vrot.lane.b32.xlu0 %v3546, 42
    %v3607 = vpop.permute.xlu0 %3606
    %3608 = vrot.lane.b32.xlu0 %v3548, 42
    %v3609 = vpop.permute.xlu0 %3608
    %3610 = vrot.lane.b32.xlu0 %v3550, 42
    %v3611 = vpop.permute.xlu0 %3610
    %3612 = vrot.lane.b32.xlu0 %v3552, 42
    %v3613 = vpop.permute.xlu0 %3612
    %3614 = vrot.lane.b32.xlu0 %v3554, 42
    %v3615 = vpop.permute.xlu0 %3614
    %3616 = vrot.lane.b32.xlu0 %v3556, 42
    %v3617 = vpop.permute.xlu0 %3616
    %3618 = vrot.lane.b32.xlu0 %v3562, 42
    %v3619 = vpop.permute.xlu0 %3618
    %3620 = vrot.lane.b32.xlu0 %v3564, 42
    %v3621 = vpop.permute.xlu0 %3620
    %3622 = vrot.lane.b32.xlu0 %v3566, 42
    %v3623 = vpop.permute.xlu0 %3622
    %3624 = vrot.lane.b32.xlu0 %v3568, 42
    %v3625 = vpop.permute.xlu0 %3624
    %v3626 = vrot.slane %v3571, 4
    %v3627 = vrot.slane %v3573, 4
    %v3628 = vrot.slane %v3575, 4
    %v3629 = vrot.slane %v3577, 4
    %v3630 = vrot.slane %v3579, 4
    %v3631 = vrot.slane %v3581, 4
    %v3632 = vrot.slane %v3583, 4
    %v3633 = vrot.slane %v3585, 4
    %v3634 = vrot.slane %v3587, 4
    %v3635 = vrot.slane %v3589, 4
    %v3636 = vrot.slane %v3591, 4
    %v3637 = vrot.slane %v3593, 4
    %v3638 = vrot.slane %v3595, 4
    %v3639 = vrot.slane %v3597, 4
    %v3640 = vrot.slane %v3599, 4
    %v3641 = vrot.slane %v3601, 4
    %v3642 = vrot.slane %v3603, 4
    %v3643 = vrot.slane %v3605, 4
    %v3644 = vrot.slane %v3607, 4
    %v3645 = vrot.slane %v3609, 4
    %v3646 = vrot.slane %v3611, 4
    %v3647 = vrot.slane %v3613, 4
    %v3648 = vrot.slane %v3615, 4
    %v3649 = vrot.slane %v3617, 4
    %v3650 = vrot.slane %v3619, 4
    %v3651 = vrot.slane %v3621, 4
    %v3652 = vrot.slane %v3623, 4
    %v3653 = vrot.slane %v3625, 4
    %v3654 = vsel %vm414, %v3626, %v3627
    %vm3655 = vcmask 343040
    %v3656 = vsel %vm3655, %v3571, %v3654
    %v3657 = vsel %vm414, %v3627, %v3628
    %v3658 = vsel %vm3655, %v3573, %v3657
    %v3659 = vsel %vm414, %v3628, %v3629
    %v3660 = vsel %vm3655, %v3575, %v3659
    %v3661 = vsel %vm414, %v3629, %v3630
    %v3662 = vsel %vm3655, %v3577, %v3661
    %v3663 = vsel %vm414, %v3630, %v3631
    %v3664 = vsel %vm3655, %v3579, %v3663
    %v3665 = vsel %vm414, %v3631, %v3632
    %v3666 = vsel %vm3655, %v3581, %v3665
    %v3667 = vsel %vm414, %v3632, %v3633
    %v3668 = vsel %vm3655, %v3583, %v3667
    %v3669 = vsel %vm414, %v3633, %v3634
    %v3670 = vsel %vm3655, %v3585, %v3669
    %v3671 = vsel %vm414, %v3634, %v3635
    %v3672 = vsel %vm3655, %v3587, %v3671
    %v3673 = vsel %vm414, %v3635, %v3636
    %v3674 = vsel %vm3655, %v3589, %v3673
    %v3675 = vsel %vm414, %v3636, %v3637
    %v3676 = vsel %vm3655, %v3591, %v3675
    %v3677 = vsel %vm414, %v3637, %v3638
    %v3678 = vsel %vm3655, %v3593, %v3677
    %v3679 = vsel %vm414, %v3638, %v3639
    %v3680 = vsel %vm3655, %v3595, %v3679
    %v3681 = vsel %vm414, %v3639, %v3640
    %v3682 = vsel %vm3655, %v3597, %v3681
    %v3683 = vsel %vm414, %v3640, %v3641
    %v3684 = vsel %vm3655, %v3599, %v3683
    %v3685 = vsel %vm414, %v3641, %v3642
    %v3686 = vsel %vm3655, %v3601, %v3685
    %v3687 = vsel %vm414, %v3642, %v3643
    %v3688 = vsel %vm3655, %v3603, %v3687
    %v3689 = vsel %vm414, %v3643, %v3644
    %v3690 = vsel %vm3655, %v3605, %v3689
    %v3691 = vsel %vm414, %v3644, %v3645
    %v3692 = vsel %vm3655, %v3607, %v3691
    %v3693 = vsel %vm414, %v3645, %v3646
    %v3694 = vsel %vm3655, %v3609, %v3693
    %v3695 = vsel %vm414, %v3646, %v3647
    %v3696 = vsel %vm3655, %v3611, %v3695
    %v3697 = vsel %vm414, %v3647, %v3648
    %v3698 = vsel %vm3655, %v3613, %v3697
    %v3699 = vsel %vm414, %v3648, %v3649
    %v3700 = vsel %vm3655, %v3615, %v3699
    %v3701 = vsel %vm414, %v3649, %v3650
    %v3702 = vsel %vm3655, %v3617, %v3701
    %v3703 = vsel %vm414, %v3650, %v3651
    %v3704 = vsel %vm3655, %v3619, %v3703
    %v3705 = vsel %vm414, %v3651, %v3652
    %v3706 = vsel %vm3655, %v3621, %v3705
    %v3707 = vsel %vm414, %v3652, %v3653
    %v3708 = vsel %vm3655, %v3623, %v3707
    %3736 = vst [vmem:[#allocation3 + $0x510] sm:$0x33] %v3656
    %3737 = vst [vmem:[#allocation3 + $0x518] sm:$0x33] %v3658
    %3738 = vst [vmem:[#allocation3 + $0x520] sm:$0x33] %v3660
    %3739 = vst [vmem:[#allocation3 + $0x528] sm:$0x33] %v3662
    %3740 = vst [vmem:[#allocation3 + $0x530] sm:$0x33] %v3664
    %3741 = vst [vmem:[#allocation3 + $0x538] sm:$0x33] %v3666
    %3742 = vst [vmem:[#allocation3 + $0x540] sm:$0x33] %v3668
    %3743 = vst [vmem:[#allocation3 + $0x548] sm:$0x33] %v3670
    %3744 = vst [vmem:[#allocation3 + $0x550] sm:$0x33] %v3672
    %3745 = vst [vmem:[#allocation3 + $0x558] sm:$0x33] %v3674
    %3746 = vst [vmem:[#allocation3 + $0x560] sm:$0x33] %v3676
    %3747 = vst [vmem:[#allocation3 + $0x568] sm:$0x33] %v3678
    %3748 = vst [vmem:[#allocation3 + $0x570] sm:$0x33] %v3680
    %3749 = vst [vmem:[#allocation3 + $0x578] sm:$0x33] %v3682
    %3750 = vst [vmem:[#allocation3 + $0x580] sm:$0x33] %v3684
    %3751 = vst [vmem:[#allocation3 + $0x588] sm:$0x33] %v3686
    %3752 = vst [vmem:[#allocation3 + $0x590] sm:$0x33] %v3688
    %3753 = vst [vmem:[#allocation3 + $0x598] sm:$0x33] %v3690
    %3754 = vst [vmem:[#allocation3 + $0x5a0] sm:$0x33] %v3692
    %3755 = vst [vmem:[#allocation3 + $0x5a8] sm:$0x33] %v3694
    %3756 = vst [vmem:[#allocation3 + $0x5b0] sm:$0x33] %v3696
    %3757 = vst [vmem:[#allocation3 + $0x5b8] sm:$0x33] %v3698
    %3758 = vst [vmem:[#allocation3 + $0x5c0] sm:$0x33] %v3700
    %3759 = vst [vmem:[#allocation3 + $0x5c8] sm:$0x33] %v3702
    %3760 = vst [vmem:[#allocation3 + $0x5d0] sm:$0x33] %v3704
    %3761 = vst [vmem:[#allocation3 + $0x5d8] sm:$0x33] %v3706
    %3762 = vst [vmem:[#allocation3 + $0x5e0] sm:$0x33] %v3708
    %v3763 = vld [vmem:[#allocation2 + $0x4] sm:$0xff]
    %v3764 = vld [vmem:[#allocation2 + $0xc] sm:$0xff]
    %v3765 = vld [vmem:[#allocation2 + $0x14] sm:$0xff]
    %v3766 = vld [vmem:[#allocation2 + $0x1c] sm:$0xff]
    %v3767 = vld [vmem:[#allocation2 + $0x24] sm:$0xff]
    %v3768 = vld [vmem:[#allocation2 + $0x2c] sm:$0xff]
    %v3769 = vld [vmem:[#allocation2 + $0x34] sm:$0xff]
    %v3770 = vld [vmem:[#allocation2 + $0x3c] sm:$0xff]
    %v3771 = vld [vmem:[#allocation2 + $0x44] sm:$0xff]
    %v3772 = vld [vmem:[#allocation2 + $0x4c] sm:$0xff]
    %v3773 = vld [vmem:[#allocation2 + $0x54] sm:$0xff]
    %v3774 = vld [vmem:[#allocation2 + $0x5c] sm:$0xff]
    %v3775 = vld [vmem:[#allocation2 + $0x64] sm:$0xff]
    %v3776 = vld [vmem:[#allocation2 + $0x6c] sm:$0x3f]
    %s3778 = scalar_lea.vmem [#allocation1], 1
    %3779 = vst [vmem:[%s3778] ss:$2 sm:$0xff] %v3763
    %s3781 = scalar_lea.vmem [#allocation1], 17
    %3782 = vst [vmem:[%s3781] ss:$2 sm:$0xff] %v3764
    %s3784 = scalar_lea.vmem [#allocation1], 33
    %3785 = vst [vmem:[%s3784] ss:$2 sm:$0xff] %v3765
    %s3787 = scalar_lea.vmem [#allocation1], 49
    %3788 = vst [vmem:[%s3787] ss:$2 sm:$0xff] %v3766
    %v3789 = vld.sshfl [vmem:[#allocation1] sm:$0xff pattern:$0x75643120]
    %v3791 = vld.sshfl [vmem:[#allocation1 + $0x8] sm:$0xff pattern:$0x75643120]
    %v3793 = vld.sshfl [vmem:[#allocation1 + $0x10] sm:$0xff pattern:$0x75643120]
    %v3795 = vld.sshfl [vmem:[#allocation1 + $0x18] sm:$0xff pattern:$0x75643120]
    %v3797 = vld.sshfl [vmem:[#allocation1 + $0x20] sm:$0xff pattern:$0x75643120]
    %v3799 = vld.sshfl [vmem:[#allocation1 + $0x28] sm:$0xff pattern:$0x75643120]
    %v3801 = vld.sshfl [vmem:[#allocation1 + $0x30] sm:$0xff pattern:$0x75643120]
    %v3803 = vld.sshfl [vmem:[#allocation1 + $0x38] sm:$0xff pattern:$0x75643120]
    %3806 = vst [vmem:[%s3778] ss:$2 sm:$0xff] %v3767
    %3808 = vst [vmem:[%s3781] ss:$2 sm:$0xff] %v3768
    %3810 = vst [vmem:[%s3784] ss:$2 sm:$0xff] %v3769
    %3812 = vst [vmem:[%s3787] ss:$2 sm:$0xff] %v3770
    %v3813 = vld.sshfl [vmem:[#allocation1] sm:$0xff pattern:$0x75643120]
    %v3815 = vld.sshfl [vmem:[#allocation1 + $0x8] sm:$0xff pattern:$0x75643120]
    %v3817 = vld.sshfl [vmem:[#allocation1 + $0x10] sm:$0xff pattern:$0x75643120]
    %v3819 = vld.sshfl [vmem:[#allocation1 + $0x18] sm:$0xff pattern:$0x75643120]
    %v3821 = vld.sshfl [vmem:[#allocation1 + $0x20] sm:$0xff pattern:$0x75643120]
    %v3823 = vld.sshfl [vmem:[#allocation1 + $0x28] sm:$0xff pattern:$0x75643120]
    %v3825 = vld.sshfl [vmem:[#allocation1 + $0x30] sm:$0xff pattern:$0x75643120]
    %v3827 = vld.sshfl [vmem:[#allocation1 + $0x38] sm:$0xff pattern:$0x75643120]
    %3830 = vst [vmem:[%s3778] ss:$2 sm:$0xff] %v3771
    %3832 = vst [vmem:[%s3781] ss:$2 sm:$0xff] %v3772
    %3834 = vst [vmem:[%s3784] ss:$2 sm:$0xff] %v3773
    %3836 = vst [vmem:[%s3787] ss:$2 sm:$0xff] %v3774
    %v3837 = vld.sshfl [vmem:[#allocation1] sm:$0xff pattern:$0x75643120]
    %v3839 = vld.sshfl [vmem:[#allocation1 + $0x8] sm:$0xff pattern:$0x75643120]
    %v3841 = vld.sshfl [vmem:[#allocation1 + $0x10] sm:$0xff pattern:$0x75643120]
    %v3843 = vld.sshfl [vmem:[#allocation1 + $0x18] sm:$0xff pattern:$0x75643120]
    %v3845 = vld.sshfl [vmem:[#allocation1 + $0x20] sm:$0xff pattern:$0x75643120]
    %v3847 = vld.sshfl [vmem:[#allocation1 + $0x28] sm:$0xff pattern:$0x75643120]
    %v3849 = vld.sshfl [vmem:[#allocation1 + $0x30] sm:$0xff pattern:$0x75643120]
    %v3851 = vld.sshfl [vmem:[#allocation1 + $0x38] sm:$0xff pattern:$0x75643120]
    %3854 = vst [vmem:[%s3778] ss:$2 sm:$0xff] %v3775
    %3856 = vst [vmem:[%s3781] ss:$2 sm:$0xff] %v3776
    %v3857 = vld.sshfl [vmem:[#allocation1] sm:$0xff pattern:$0x75643120]
    %v3859 = vld.sshfl [vmem:[#allocation1 + $0x8] sm:$0xff pattern:$0x75643120]
    %v3861 = vld.sshfl [vmem:[#allocation1 + $0x10] sm:$0xff pattern:$0x75643120]
    %v3863 = vld.sshfl [vmem:[#allocation1 + $0x18] sm:$0xff pattern:$0x75643120]
    %3865 = vrot.lane.b32.xlu0 %v3789, 41
    %v3866 = vpop.permute.xlu0 %3865
    %3867 = vrot.lane.b32.xlu0 %v3791, 41
    %v3868 = vpop.permute.xlu0 %3867
    %3869 = vrot.lane.b32.xlu0 %v3793, 41
    %v3870 = vpop.permute.xlu0 %3869
    %3871 = vrot.lane.b32.xlu0 %v3795, 41
    %v3872 = vpop.permute.xlu0 %3871
    %3873 = vrot.lane.b32.xlu0 %v3797, 41
    %v3874 = vpop.permute.xlu0 %3873
    %3875 = vrot.lane.b32.xlu0 %v3799, 41
    %v3876 = vpop.permute.xlu0 %3875
    %3877 = vrot.lane.b32.xlu0 %v3801, 41
    %v3878 = vpop.permute.xlu0 %3877
    %3879 = vrot.lane.b32.xlu0 %v3803, 41
    %v3880 = vpop.permute.xlu0 %3879
    %3881 = vrot.lane.b32.xlu0 %v3813, 41
    %v3882 = vpop.permute.xlu0 %3881
    %3883 = vrot.lane.b32.xlu0 %v3815, 41
    %v3884 = vpop.permute.xlu0 %3883
    %3885 = vrot.lane.b32.xlu0 %v3817, 41
    %v3886 = vpop.permute.xlu0 %3885
    %3887 = vrot.lane.b32.xlu0 %v3819, 41
    %v3888 = vpop.permute.xlu0 %3887
    %3889 = vrot.lane.b32.xlu0 %v3821, 41
    %v3890 = vpop.permute.xlu0 %3889
    %3891 = vrot.lane.b32.xlu0 %v3823, 41
    %v3892 = vpop.permute.xlu0 %3891
    %3893 = vrot.lane.b32.xlu0 %v3825, 41
    %v3894 = vpop.permute.xlu0 %3893
    %3895 = vrot.lane.b32.xlu0 %v3827, 41
    %v3896 = vpop.permute.xlu0 %3895
    %3897 = vrot.lane.b32.xlu0 %v3837, 41
    %v3898 = vpop.permute.xlu0 %3897
    %3899 = vrot.lane.b32.xlu0 %v3839, 41
    %v3900 = vpop.permute.xlu0 %3899
    %3901 = vrot.lane.b32.xlu0 %v3841, 41
    %v3902 = vpop.permute.xlu0 %3901
    %3903 = vrot.lane.b32.xlu0 %v3843, 41
    %v3904 = vpop.permute.xlu0 %3903
    %3905 = vrot.lane.b32.xlu0 %v3845, 41
    %v3906 = vpop.permute.xlu0 %3905
    %3907 = vrot.lane.b32.xlu0 %v3847, 41
    %v3908 = vpop.permute.xlu0 %3907
    %3909 = vrot.lane.b32.xlu0 %v3849, 41
    %v3910 = vpop.permute.xlu0 %3909
    %3911 = vrot.lane.b32.xlu0 %v3851, 41
    %v3912 = vpop.permute.xlu0 %3911
    %3913 = vrot.lane.b32.xlu0 %v3857, 41
    %v3914 = vpop.permute.xlu0 %3913
    %3915 = vrot.lane.b32.xlu0 %v3859, 41
    %v3916 = vpop.permute.xlu0 %3915
    %3917 = vrot.lane.b32.xlu0 %v3861, 41
    %v3918 = vpop.permute.xlu0 %3917
    %3919 = vrot.lane.b32.xlu0 %v3863, 41
    %v3920 = vpop.permute.xlu0 %3919
    %v3921 = vrot.slane %v3866, 4
    %v3922 = vrot.slane %v3868, 4
    %v3923 = vrot.slane %v3870, 4
    %v3924 = vrot.slane %v3872, 4
    %v3925 = vrot.slane %v3874, 4
    %v3926 = vrot.slane %v3876, 4
    %v3927 = vrot.slane %v3878, 4
    %v3928 = vrot.slane %v3880, 4
    %v3929 = vrot.slane %v3882, 4
    %v3930 = vrot.slane %v3884, 4
    %v3931 = vrot.slane %v3886, 4
    %v3932 = vrot.slane %v3888, 4
    %v3933 = vrot.slane %v3890, 4
    %v3934 = vrot.slane %v3892, 4
    %v3935 = vrot.slane %v3894, 4
    %v3936 = vrot.slane %v3896, 4
    %v3937 = vrot.slane %v3898, 4
    %v3938 = vrot.slane %v3900, 4
    %v3939 = vrot.slane %v3902, 4
    %v3940 = vrot.slane %v3904, 4
    %v3941 = vrot.slane %v3906, 4
    %v3942 = vrot.slane %v3908, 4
    %v3943 = vrot.slane %v3910, 4
    %v3944 = vrot.slane %v3912, 4
    %v3945 = vrot.slane %v3914, 4
    %v3946 = vrot.slane %v3916, 4
    %v3947 = vrot.slane %v3918, 4
    %v3948 = vrot.slane %v3920, 4
    %v3949 = vsel %vm414, %v3921, %v3922
    %vm3950 = vcmask 334848
    %v3951 = vsel %vm3950, %v3866, %v3949
    %v3952 = vsel %vm414, %v3922, %v3923
    %v3953 = vsel %vm3950, %v3868, %v3952
    %v3954 = vsel %vm414, %v3923, %v3924
    %v3955 = vsel %vm3950, %v3870, %v3954
    %v3956 = vsel %vm414, %v3924, %v3925
    %v3957 = vsel %vm3950, %v3872, %v3956
    %v3958 = vsel %vm414, %v3925, %v3926
    %v3959 = vsel %vm3950, %v3874, %v3958
    %v3960 = vsel %vm414, %v3926, %v3927
    %v3961 = vsel %vm3950, %v3876, %v3960
    %v3962 = vsel %vm414, %v3927, %v3928
    %v3963 = vsel %vm3950, %v3878, %v3962
    %v3964 = vsel %vm414, %v3928, %v3929
    %v3965 = vsel %vm3950, %v3880, %v3964
    %v3966 = vsel %vm414, %v3929, %v3930
    %v3967 = vsel %vm3950, %v3882, %v3966
    %v3968 = vsel %vm414, %v3930, %v3931
    %v3969 = vsel %vm3950, %v3884, %v3968
    %v3970 = vsel %vm414, %v3931, %v3932
    %v3971 = vsel %vm3950, %v3886, %v3970
    %v3972 = vsel %vm414, %v3932, %v3933
    %v3973 = vsel %vm3950, %v3888, %v3972
    %v3974 = vsel %vm414, %v3933, %v3934
    %v3975 = vsel %vm3950, %v3890, %v3974
    %v3976 = vsel %vm414, %v3934, %v3935
    %v3977 = vsel %vm3950, %v3892, %v3976
    %v3978 = vsel %vm414, %v3935, %v3936
    %v3979 = vsel %vm3950, %v3894, %v3978
    %v3980 = vsel %vm414, %v3936, %v3937
    %v3981 = vsel %vm3950, %v3896, %v3980
    %v3982 = vsel %vm414, %v3937, %v3938
    %v3983 = vsel %vm3950, %v3898, %v3982
    %v3984 = vsel %vm414, %v3938, %v3939
    %v3985 = vsel %vm3950, %v3900, %v3984
    %v3986 = vsel %vm414, %v3939, %v3940
    %v3987 = vsel %vm3950, %v3902, %v3986
    %v3988 = vsel %vm414, %v3940, %v3941
    %v3989 = vsel %vm3950, %v3904, %v3988
    %v3990 = vsel %vm414, %v3941, %v3942
    %v3991 = vsel %vm3950, %v3906, %v3990
    %v3992 = vsel %vm414, %v3942, %v3943
    %v3993 = vsel %vm3950, %v3908, %v3992
    %v3994 = vsel %vm414, %v3943, %v3944
    %v3995 = vsel %vm3950, %v3910, %v3994
    %v3996 = vsel %vm414, %v3944, %v3945
    %v3997 = vsel %vm3950, %v3912, %v3996
    %v3998 = vsel %vm414, %v3945, %v3946
    %v3999 = vsel %vm3950, %v3914, %v3998
    %v4000 = vsel %vm414, %v3946, %v3947
    %v4001 = vsel %vm3950, %v3916, %v4000
    %v4002 = vsel %vm414, %v3947, %v3948
    %v4003 = vsel %vm3950, %v3918, %v4002
    %4031 = vst [vmem:[#allocation3 + $0x510] sm:$0xcc] %v3951
    %4032 = vst [vmem:[#allocation3 + $0x518] sm:$0xcc] %v3953
    %4033 = vst [vmem:[#allocation3 + $0x520] sm:$0xcc] %v3955
    %4034 = vst [vmem:[#allocation3 + $0x528] sm:$0xcc] %v3957
    %4035 = vst [vmem:[#allocation3 + $0x530] sm:$0xcc] %v3959
    %4036 = vst [vmem:[#allocation3 + $0x538] sm:$0xcc] %v3961
    %4037 = vst [vmem:[#allocation3 + $0x540] sm:$0xcc] %v3963
    %4038 = vst [vmem:[#allocation3 + $0x548] sm:$0xcc] %v3965
    %4039 = vst [vmem:[#allocation3 + $0x550] sm:$0xcc] %v3967
    %4040 = vst [vmem:[#allocation3 + $0x558] sm:$0xcc] %v3969
    %4041 = vst [vmem:[#allocation3 + $0x560] sm:$0xcc] %v3971
    %4042 = vst [vmem:[#allocation3 + $0x568] sm:$0xcc] %v3973
    %4043 = vst [vmem:[#allocation3 + $0x570] sm:$0xcc] %v3975
    %4044 = vst [vmem:[#allocation3 + $0x578] sm:$0xcc] %v3977
    %4045 = vst [vmem:[#allocation3 + $0x580] sm:$0xcc] %v3979
    %4046 = vst [vmem:[#allocation3 + $0x588] sm:$0xcc] %v3981
    %4047 = vst [vmem:[#allocation3 + $0x590] sm:$0xcc] %v3983
    %4048 = vst [vmem:[#allocation3 + $0x598] sm:$0xcc] %v3985
    %4049 = vst [vmem:[#allocation3 + $0x5a0] sm:$0xcc] %v3987
    %4050 = vst [vmem:[#allocation3 + $0x5a8] sm:$0xcc] %v3989
    %4051 = vst [vmem:[#allocation3 + $0x5b0] sm:$0xcc] %v3991
    %4052 = vst [vmem:[#allocation3 + $0x5b8] sm:$0xcc] %v3993
    %4053 = vst [vmem:[#allocation3 + $0x5c0] sm:$0xcc] %v3995
    %4054 = vst [vmem:[#allocation3 + $0x5c8] sm:$0xcc] %v3997
    %4055 = vst [vmem:[#allocation3 + $0x5d0] sm:$0xcc] %v3999
    %4056 = vst [vmem:[#allocation3 + $0x5d8] sm:$0xcc] %v4001
    %4057 = vst [vmem:[#allocation3 + $0x5e0] sm:$0xcc] %v4003
    %v4058 = vld [vmem:[#allocation2 + $0x4] sm:$0xff]
    %v4059 = vld [vmem:[#allocation2 + $0xc] sm:$0xff]
    %v4060 = vld [vmem:[#allocation2 + $0x14] sm:$0xff]
    %v4061 = vld [vmem:[#allocation2 + $0x1c] sm:$0xff]
    %v4062 = vld [vmem:[#allocation2 + $0x24] sm:$0xff]
    %v4063 = vld [vmem:[#allocation2 + $0x2c] sm:$0xff]
    %v4064 = vld [vmem:[#allocation2 + $0x34] sm:$0xff]
    %v4065 = vld [vmem:[#allocation2 + $0x3c] sm:$0xff]
    %v4066 = vld [vmem:[#allocation2 + $0x44] sm:$0xff]
    %v4067 = vld [vmem:[#allocation2 + $0x4c] sm:$0xff]
    %v4068 = vld [vmem:[#allocation2 + $0x54] sm:$0xff]
    %v4069 = vld [vmem:[#allocation2 + $0x5c] sm:$0xff]
    %v4070 = vld [vmem:[#allocation2 + $0x64] sm:$0xff]
    %v4071 = vld [vmem:[#allocation2 + $0x6c] sm:$0x3f]
    %4073 = vst [vmem:[#allocation1] ss:$2 sm:$0xff] %v4058
    %s4075 = scalar_lea.vmem [#allocation1], 16
    %4076 = vst [vmem:[%s4075] ss:$2 sm:$0xff] %v4059
    %s4078 = scalar_lea.vmem [#allocation1], 32
    %4079 = vst [vmem:[%s4078] ss:$2 sm:$0xff] %v4060
    %s4081 = scalar_lea.vmem [#allocation1], 48
    %4082 = vst [vmem:[%s4081] ss:$2 sm:$0xff] %v4061
    %v4083 = vld.sshfl [vmem:[#allocation1] sm:$0xff pattern:$0x75643120]
    %v4085 = vld.sshfl [vmem:[#allocation1 + $0x8] sm:$0xff pattern:$0x75643120]
    %v4087 = vld.sshfl [vmem:[#allocation1 + $0x10] sm:$0xff pattern:$0x75643120]
    %v4089 = vld.sshfl [vmem:[#allocation1 + $0x18] sm:$0xff pattern:$0x75643120]
    %v4091 = vld.sshfl [vmem:[#allocation1 + $0x20] sm:$0xff pattern:$0x75643120]
    %v4093 = vld.sshfl [vmem:[#allocation1 + $0x28] sm:$0xff pattern:$0x75643120]
    %v4095 = vld.sshfl [vmem:[#allocation1 + $0x30] sm:$0xff pattern:$0x75643120]
    %v4097 = vld.sshfl [vmem:[#allocation1 + $0x38] sm:$0xff pattern:$0x75643120]
    %4100 = vst [vmem:[#allocation1] ss:$2 sm:$0xff] %v4062
    %4102 = vst [vmem:[%s4075] ss:$2 sm:$0xff] %v4063
    %4104 = vst [vmem:[%s4078] ss:$2 sm:$0xff] %v4064
    %4106 = vst [vmem:[%s4081] ss:$2 sm:$0xff] %v4065
    %v4107 = vld.sshfl [vmem:[#allocation1] sm:$0xff pattern:$0x75643120]
    %v4109 = vld.sshfl [vmem:[#allocation1 + $0x8] sm:$0xff pattern:$0x75643120]
    %v4111 = vld.sshfl [vmem:[#allocation1 + $0x10] sm:$0xff pattern:$0x75643120]
    %v4113 = vld.sshfl [vmem:[#allocation1 + $0x18] sm:$0xff pattern:$0x75643120]
    %v4115 = vld.sshfl [vmem:[#allocation1 + $0x20] sm:$0xff pattern:$0x75643120]
    %v4117 = vld.sshfl [vmem:[#allocation1 + $0x28] sm:$0xff pattern:$0x75643120]
    %v4119 = vld.sshfl [vmem:[#allocation1 + $0x30] sm:$0xff pattern:$0x75643120]
    %v4121 = vld.sshfl [vmem:[#allocation1 + $0x38] sm:$0xff pattern:$0x75643120]
    %4124 = vst [vmem:[#allocation1] ss:$2 sm:$0xff] %v4066
    %4126 = vst [vmem:[%s4075] ss:$2 sm:$0xff] %v4067
    %4128 = vst [vmem:[%s4078] ss:$2 sm:$0xff] %v4068
    %4130 = vst [vmem:[%s4081] ss:$2 sm:$0xff] %v4069
    %v4131 = vld.sshfl [vmem:[#allocation1] sm:$0xff pattern:$0x75643120]
    %v4133 = vld.sshfl [vmem:[#allocation1 + $0x8] sm:$0xff pattern:$0x75643120]
    %v4135 = vld.sshfl [vmem:[#allocation1 + $0x10] sm:$0xff pattern:$0x75643120]
    %v4137 = vld.sshfl [vmem:[#allocation1 + $0x18] sm:$0xff pattern:$0x75643120]
    %v4139 = vld.sshfl [vmem:[#allocation1 + $0x20] sm:$0xff pattern:$0x75643120]
    %v4141 = vld.sshfl [vmem:[#allocation1 + $0x28] sm:$0xff pattern:$0x75643120]
    %v4143 = vld.sshfl [vmem:[#allocation1 + $0x30] sm:$0xff pattern:$0x75643120]
    %v4145 = vld.sshfl [vmem:[#allocation1 + $0x38] sm:$0xff pattern:$0x75643120]
    %4148 = vst [vmem:[#allocation1] ss:$2 sm:$0xff] %v4070
    %4150 = vst [vmem:[%s4075] ss:$2 sm:$0xff] %v4071
    %v4151 = vld.sshfl [vmem:[#allocation1] sm:$0xff pattern:$0x75643120]
    %v4153 = vld.sshfl [vmem:[#allocation1 + $0x8] sm:$0xff pattern:$0x75643120]
    %v4155 = vld.sshfl [vmem:[#allocation1 + $0x10] sm:$0xff pattern:$0x75643120]
    %v4157 = vld.sshfl [vmem:[#allocation1 + $0x18] sm:$0xff pattern:$0x75643120]
    %4159 = vrot.lane.b32.xlu0 %v4083, 40
    %v4160 = vpop.permute.xlu0 %4159
    %4161 = vrot.lane.b32.xlu0 %v4085, 40
    %v4162 = vpop.permute.xlu0 %4161
    %4163 = vrot.lane.b32.xlu0 %v4087, 40
    %v4164 = vpop.permute.xlu0 %4163
    %4165 = vrot.lane.b32.xlu0 %v4089, 40
    %v4166 = vpop.permute.xlu0 %4165
    %4167 = vrot.lane.b32.xlu0 %v4091, 40
    %v4168 = vpop.permute.xlu0 %4167
    %4169 = vrot.lane.b32.xlu0 %v4093, 40
    %v4170 = vpop.permute.xlu0 %4169
    %4171 = vrot.lane.b32.xlu0 %v4095, 40
    %v4172 = vpop.permute.xlu0 %4171
    %4173 = vrot.lane.b32.xlu0 %v4097, 40
    %v4174 = vpop.permute.xlu0 %4173
    %4175 = vrot.lane.b32.xlu0 %v4107, 40
    %v4176 = vpop.permute.xlu0 %4175
    %4177 = vrot.lane.b32.xlu0 %v4109, 40
    %v4178 = vpop.permute.xlu0 %4177
    %4179 = vrot.lane.b32.xlu0 %v4111, 40
    %v4180 = vpop.permute.xlu0 %4179
    %4181 = vrot.lane.b32.xlu0 %v4113, 40
    %v4182 = vpop.permute.xlu0 %4181
    %4183 = vrot.lane.b32.xlu0 %v4115, 40
    %v4184 = vpop.permute.xlu0 %4183
    %4185 = vrot.lane.b32.xlu0 %v4117, 40
    %v4186 = vpop.permute.xlu0 %4185
    %4187 = vrot.lane.b32.xlu0 %v4119, 40
    %v4188 = vpop.permute.xlu0 %4187
    %4189 = vrot.lane.b32.xlu0 %v4121, 40
    %v4190 = vpop.permute.xlu0 %4189
    %4191 = vrot.lane.b32.xlu0 %v4131, 40
    %v4192 = vpop.permute.xlu0 %4191
    %4193 = vrot.lane.b32.xlu0 %v4133, 40
    %v4194 = vpop.permute.xlu0 %4193
    %4195 = vrot.lane.b32.xlu0 %v4135, 40
    %v4196 = vpop.permute.xlu0 %4195
    %4197 = vrot.lane.b32.xlu0 %v4137, 40
    %v4198 = vpop.permute.xlu0 %4197
    %4199 = vrot.lane.b32.xlu0 %v4139, 40
    %v4200 = vpop.permute.xlu0 %4199
    %4201 = vrot.lane.b32.xlu0 %v4141, 40
    %v4202 = vpop.permute.xlu0 %4201
    %4203 = vrot.lane.b32.xlu0 %v4143, 40
    %v4204 = vpop.permute.xlu0 %4203
    %4205 = vrot.lane.b32.xlu0 %v4145, 40
    %v4206 = vpop.permute.xlu0 %4205
    %4207 = vrot.lane.b32.xlu0 %v4151, 40
    %v4208 = vpop.permute.xlu0 %4207
    %4209 = vrot.lane.b32.xlu0 %v4153, 40
    %v4210 = vpop.permute.xlu0 %4209
    %4211 = vrot.lane.b32.xlu0 %v4155, 40
    %v4212 = vpop.permute.xlu0 %4211
    %4213 = vrot.lane.b32.xlu0 %v4157, 40
    %v4214 = vpop.permute.xlu0 %4213
    %v4215 = vrot.slane %v4160, 4
    %v4216 = vrot.slane %v4162, 4
    %v4217 = vrot.slane %v4164, 4
    %v4218 = vrot.slane %v4166, 4
    %v4219 = vrot.slane %v4168, 4
    %v4220 = vrot.slane %v4170, 4
    %v4221 = vrot.slane %v4172, 4
    %v4222 = vrot.slane %v4174, 4
    %v4223 = vrot.slane %v4176, 4
    %v4224 = vrot.slane %v4178, 4
    %v4225 = vrot.slane %v4180, 4
    %v4226 = vrot.slane %v4182, 4
    %v4227 = vrot.slane %v4184, 4
    %v4228 = vrot.slane %v4186, 4
    %v4229 = vrot.slane %v4188, 4
    %v4230 = vrot.slane %v4190, 4
    %v4231 = vrot.slane %v4192, 4
    %v4232 = vrot.slane %v4194, 4
    %v4233 = vrot.slane %v4196, 4
    %v4234 = vrot.slane %v4198, 4
    %v4235 = vrot.slane %v4200, 4
    %v4236 = vrot.slane %v4202, 4
    %v4237 = vrot.slane %v4204, 4
    %v4238 = vrot.slane %v4206, 4
    %v4239 = vrot.slane %v4208, 4
    %v4240 = vrot.slane %v4210, 4
    %v4241 = vrot.slane %v4212, 4
    %v4242 = vrot.slane %v4214, 4
    %v4243 = vsel %vm414, %v4215, %v4216
    %vm4244 = vcmask 326656
    %v4245 = vsel %vm4244, %v4160, %v4243
    %v4246 = vsel %vm414, %v4216, %v4217
    %v4247 = vsel %vm4244, %v4162, %v4246
    %v4248 = vsel %vm414, %v4217, %v4218
    %v4249 = vsel %vm4244, %v4164, %v4248
    %v4250 = vsel %vm414, %v4218, %v4219
    %v4251 = vsel %vm4244, %v4166, %v4250
    %v4252 = vsel %vm414, %v4219, %v4220
    %v4253 = vsel %vm4244, %v4168, %v4252
    %v4254 = vsel %vm414, %v4220, %v4221
    %v4255 = vsel %vm4244, %v4170, %v4254
    %v4256 = vsel %vm414, %v4221, %v4222
    %v4257 = vsel %vm4244, %v4172, %v4256
    %v4258 = vsel %vm414, %v4222, %v4223
    %v4259 = vsel %vm4244, %v4174, %v4258
    %v4260 = vsel %vm414, %v4223, %v4224
    %v4261 = vsel %vm4244, %v4176, %v4260
    %v4262 = vsel %vm414, %v4224, %v4225
    %v4263 = vsel %vm4244, %v4178, %v4262
    %v4264 = vsel %vm414, %v4225, %v4226
    %v4265 = vsel %vm4244, %v4180, %v4264
    %v4266 = vsel %vm414, %v4226, %v4227
    %v4267 = vsel %vm4244, %v4182, %v4266
    %v4268 = vsel %vm414, %v4227, %v4228
    %v4269 = vsel %vm4244, %v4184, %v4268
    %v4270 = vsel %vm414, %v4228, %v4229
    %v4271 = vsel %vm4244, %v4186, %v4270
    %v4272 = vsel %vm414, %v4229, %v4230
    %v4273 = vsel %vm4244, %v4188, %v4272
    %v4274 = vsel %vm414, %v4230, %v4231
    %v4275 = vsel %vm4244, %v4190, %v4274
    %v4276 = vsel %vm414, %v4231, %v4232
    %v4277 = vsel %vm4244, %v4192, %v4276
    %v4278 = vsel %vm414, %v4232, %v4233
    %v4279 = vsel %vm4244, %v4194, %v4278
    %v4280 = vsel %vm414, %v4233, %v4234
    %v4281 = vsel %vm4244, %v4196, %v4280
    %v4282 = vsel %vm414, %v4234, %v4235
    %v4283 = vsel %vm4244, %v4198, %v4282
    %v4284 = vsel %vm414, %v4235, %v4236
    %v4285 = vsel %vm4244, %v4200, %v4284
    %v4286 = vsel %vm414, %v4236, %v4237
    %v4287 = vsel %vm4244, %v4202, %v4286
    %v4288 = vsel %vm414, %v4237, %v4238
    %v4289 = vsel %vm4244, %v4204, %v4288
    %v4290 = vsel %vm414, %v4238, %v4239
    %v4291 = vsel %vm4244, %v4206, %v4290
    %v4292 = vsel %vm414, %v4239, %v4240
    %v4293 = vsel %vm4244, %v4208, %v4292
    %v4294 = vsel %vm414, %v4240, %v4241
    %v4295 = vsel %vm4244, %v4210, %v4294
    %v4296 = vsel %vm414, %v4241, %v4242
    %v4297 = vsel %vm4244, %v4212, %v4296
    %4325 = vst [vmem:[#allocation3 + $0x5e8] sm:$0x33] %v4245
    %4326 = vst [vmem:[#allocation3 + $0x5f0] sm:$0x33] %v4247
    %4327 = vst [vmem:[#allocation3 + $0x5f8] sm:$0x33] %v4249
    %4328 = vst [vmem:[#allocation3 + $0x600] sm:$0x33] %v4251
    %4329 = vst [vmem:[#allocation3 + $0x608] sm:$0x33] %v4253
    %4330 = vst [vmem:[#allocation3 + $0x610] sm:$0x33] %v4255
    %4331 = vst [vmem:[#allocation3 + $0x618] sm:$0x33] %v4257
    %4332 = vst [vmem:[#allocation3 + $0x620] sm:$0x33] %v4259
    %4333 = vst [vmem:[#allocation3 + $0x628] sm:$0x33] %v4261
    %4334 = vst [vmem:[#allocation3 + $0x630] sm:$0x33] %v4263
    %4335 = vst [vmem:[#allocation3 + $0x638] sm:$0x33] %v4265
    %4336 = vst [vmem:[#allocation3 + $0x640] sm:$0x33] %v4267
    %4337 = vst [vmem:[#allocation3 + $0x648] sm:$0x33] %v4269
    %4338 = vst [vmem:[#allocation3 + $0x650] sm:$0x33] %v4271
    %4339 = vst [vmem:[#allocation3 + $0x658] sm:$0x33] %v4273
    %4340 = vst [vmem:[#allocation3 + $0x660] sm:$0x33] %v4275
    %4341 = vst [vmem:[#allocation3 + $0x668] sm:$0x33] %v4277
    %4342 = vst [vmem:[#allocation3 + $0x670] sm:$0x33] %v4279
    %4343 = vst [vmem:[#allocation3 + $0x678] sm:$0x33] %v4281
    %4344 = vst [vmem:[#allocation3 + $0x680] sm:$0x33] %v4283
    %4345 = vst [vmem:[#allocation3 + $0x688] sm:$0x33] %v4285
    %4346 = vst [vmem:[#allocation3 + $0x690] sm:$0x33] %v4287
    %4347 = vst [vmem:[#allocation3 + $0x698] sm:$0x33] %v4289
    %4348 = vst [vmem:[#allocation3 + $0x6a0] sm:$0x33] %v4291
    %4349 = vst [vmem:[#allocation3 + $0x6a8] sm:$0x33] %v4293
    %4350 = vst [vmem:[#allocation3 + $0x6b0] sm:$0x33] %v4295
    %4351 = vst [vmem:[#allocation3 + $0x6b8] sm:$0x33] %v4297
    %v4352 = vld [vmem:[#allocation2 + $0x4] sm:$0xff]
    %v4353 = vld [vmem:[#allocation2 + $0xc] sm:$0xff]
    %v4354 = vld [vmem:[#allocation2 + $0x14] sm:$0xff]
    %v4355 = vld [vmem:[#allocation2 + $0x1c] sm:$0xff]
    %v4356 = vld [vmem:[#allocation2 + $0x24] sm:$0xff]
    %v4357 = vld [vmem:[#allocation2 + $0x2c] sm:$0xff]
    %v4358 = vld [vmem:[#allocation2 + $0x34] sm:$0xff]
    %v4359 = vld [vmem:[#allocation2 + $0x3c] sm:$0xff]
    %v4360 = vld [vmem:[#allocation2 + $0x44] sm:$0xff]
    %v4361 = vld [vmem:[#allocation2 + $0x4c] sm:$0xff]
    %v4362 = vld [vmem:[#allocation2 + $0x54] sm:$0xff]
    %v4363 = vld [vmem:[#allocation2 + $0x5c] sm:$0xff]
    %v4364 = vld [vmem:[#allocation2 + $0x64] sm:$0xff]
    %v4365 = vld [vmem:[#allocation2 + $0x6c] sm:$0x3f]
    %s4367 = scalar_lea.vmem [#allocation1], 1
    %4368 = vst [vmem:[%s4367] ss:$2 sm:$0xff] %v4352
    %s4370 = scalar_lea.vmem [#allocation1], 17
    %4371 = vst [vmem:[%s4370] ss:$2 sm:$0xff] %v4353
    %s4373 = scalar_lea.vmem [#allocation1], 33
    %4374 = vst [vmem:[%s4373] ss:$2 sm:$0xff] %v4354
    %s4376 = scalar_lea.vmem [#allocation1], 49
    %4377 = vst [vmem:[%s4376] ss:$2 sm:$0xff] %v4355
    %v4378 = vld.sshfl [vmem:[#allocation1] sm:$0xff pattern:$0x75643120]
    %v4380 = vld.sshfl [vmem:[#allocation1 + $0x8] sm:$0xff pattern:$0x75643120]
    %v4382 = vld.sshfl [vmem:[#allocation1 + $0x10] sm:$0xff pattern:$0x75643120]
    %v4384 = vld.sshfl [vmem:[#allocation1 + $0x18] sm:$0xff pattern:$0x75643120]
    %v4386 = vld.sshfl [vmem:[#allocation1 + $0x20] sm:$0xff pattern:$0x75643120]
    %v4388 = vld.sshfl [vmem:[#allocation1 + $0x28] sm:$0xff pattern:$0x75643120]
    %v4390 = vld.sshfl [vmem:[#allocation1 + $0x30] sm:$0xff pattern:$0x75643120]
    %v4392 = vld.sshfl [vmem:[#allocation1 + $0x38] sm:$0xff pattern:$0x75643120]
    %4395 = vst [vmem:[%s4367] ss:$2 sm:$0xff] %v4356
    %4397 = vst [vmem:[%s4370] ss:$2 sm:$0xff] %v4357
    %4399 = vst [vmem:[%s4373] ss:$2 sm:$0xff] %v4358
    %4401 = vst [vmem:[%s4376] ss:$2 sm:$0xff] %v4359
    %v4402 = vld.sshfl [vmem:[#allocation1] sm:$0xff pattern:$0x75643120]
    %v4404 = vld.sshfl [vmem:[#allocation1 + $0x8] sm:$0xff pattern:$0x75643120]
    %v4406 = vld.sshfl [vmem:[#allocation1 + $0x10] sm:$0xff pattern:$0x75643120]
    %v4408 = vld.sshfl [vmem:[#allocation1 + $0x18] sm:$0xff pattern:$0x75643120]
    %v4410 = vld.sshfl [vmem:[#allocation1 + $0x20] sm:$0xff pattern:$0x75643120]
    %v4412 = vld.sshfl [vmem:[#allocation1 + $0x28] sm:$0xff pattern:$0x75643120]
    %v4414 = vld.sshfl [vmem:[#allocation1 + $0x30] sm:$0xff pattern:$0x75643120]
    %v4416 = vld.sshfl [vmem:[#allocation1 + $0x38] sm:$0xff pattern:$0x75643120]
    %4419 = vst [vmem:[%s4367] ss:$2 sm:$0xff] %v4360
    %4421 = vst [vmem:[%s4370] ss:$2 sm:$0xff] %v4361
    %4423 = vst [vmem:[%s4373] ss:$2 sm:$0xff] %v4362
    %4425 = vst [vmem:[%s4376] ss:$2 sm:$0xff] %v4363
    %v4426 = vld.sshfl [vmem:[#allocation1] sm:$0xff pattern:$0x75643120]
    %v4428 = vld.sshfl [vmem:[#allocation1 + $0x8] sm:$0xff pattern:$0x75643120]
    %v4430 = vld.sshfl [vmem:[#allocation1 + $0x10] sm:$0xff pattern:$0x75643120]
    %v4432 = vld.sshfl [vmem:[#allocation1 + $0x18] sm:$0xff pattern:$0x75643120]
    %v4434 = vld.sshfl [vmem:[#allocation1 + $0x20] sm:$0xff pattern:$0x75643120]
    %v4436 = vld.sshfl [vmem:[#allocation1 + $0x28] sm:$0xff pattern:$0x75643120]
    %v4438 = vld.sshfl [vmem:[#allocation1 + $0x30] sm:$0xff pattern:$0x75643120]
    %v4440 = vld.sshfl [vmem:[#allocation1 + $0x38] sm:$0xff pattern:$0x75643120]
    %4443 = vst [vmem:[%s4367] ss:$2 sm:$0xff] %v4364
    %4445 = vst [vmem:[%s4370] ss:$2 sm:$0xff] %v4365
    %v4446 = vld.sshfl [vmem:[#allocation1] sm:$0xff pattern:$0x75643120]
    %v4448 = vld.sshfl [vmem:[#allocation1 + $0x8] sm:$0xff pattern:$0x75643120]
    %v4450 = vld.sshfl [vmem:[#allocation1 + $0x10] sm:$0xff pattern:$0x75643120]
    %v4452 = vld.sshfl [vmem:[#allocation1 + $0x18] sm:$0xff pattern:$0x75643120]
    %4454 = vrot.lane.b32.xlu0 %v4378, 24
    %v4455 = vpop.permute.xlu0 %4454
    %4456 = vrot.lane.b32.xlu0 %v4380, 24
    %v4457 = vpop.permute.xlu0 %4456
    %4458 = vrot.lane.b32.xlu0 %v4382, 24
    %v4459 = vpop.permute.xlu0 %4458
    %4460 = vrot.lane.b32.xlu0 %v4384, 24
    %v4461 = vpop.permute.xlu0 %4460
    %4462 = vrot.lane.b32.xlu0 %v4386, 24
    %v4463 = vpop.permute.xlu0 %4462
    %4464 = vrot.lane.b32.xlu0 %v4388, 24
    %v4465 = vpop.permute.xlu0 %4464
    %4466 = vrot.lane.b32.xlu0 %v4390, 24
    %v4467 = vpop.permute.xlu0 %4466
    %4468 = vrot.lane.b32.xlu0 %v4392, 24
    %v4469 = vpop.permute.xlu0 %4468
    %4470 = vrot.lane.b32.xlu0 %v4402, 24
    %v4471 = vpop.permute.xlu0 %4470
    %4472 = vrot.lane.b32.xlu0 %v4404, 24
    %v4473 = vpop.permute.xlu0 %4472
    %4474 = vrot.lane.b32.xlu0 %v4406, 24
    %v4475 = vpop.permute.xlu0 %4474
    %4476 = vrot.lane.b32.xlu0 %v4408, 24
    %v4477 = vpop.permute.xlu0 %4476
    %4478 = vrot.lane.b32.xlu0 %v4410, 24
    %v4479 = vpop.permute.xlu0 %4478
    %4480 = vrot.lane.b32.xlu0 %v4412, 24
    %v4481 = vpop.permute.xlu0 %4480
    %4482 = vrot.lane.b32.xlu0 %v4414, 24
    %v4483 = vpop.permute.xlu0 %4482
    %4484 = vrot.lane.b32.xlu0 %v4416, 24
    %v4485 = vpop.permute.xlu0 %4484
    %4486 = vrot.lane.b32.xlu0 %v4426, 24
    %v4487 = vpop.permute.xlu0 %4486
    %4488 = vrot.lane.b32.xlu0 %v4428, 24
    %v4489 = vpop.permute.xlu0 %4488
    %4490 = vrot.lane.b32.xlu0 %v4430, 24
    %v4491 = vpop.permute.xlu0 %4490
    %4492 = vrot.lane.b32.xlu0 %v4432, 24
    %v4493 = vpop.permute.xlu0 %4492
    %4494 = vrot.lane.b32.xlu0 %v4434, 24
    %v4495 = vpop.permute.xlu0 %4494
    %4496 = vrot.lane.b32.xlu0 %v4436, 24
    %v4497 = vpop.permute.xlu0 %4496
    %4498 = vrot.lane.b32.xlu0 %v4438, 24
    %v4499 = vpop.permute.xlu0 %4498
    %4500 = vrot.lane.b32.xlu0 %v4440, 24
    %v4501 = vpop.permute.xlu0 %4500
    %4502 = vrot.lane.b32.xlu0 %v4446, 24
    %v4503 = vpop.permute.xlu0 %4502
    %4504 = vrot.lane.b32.xlu0 %v4448, 24
    %v4505 = vpop.permute.xlu0 %4504
    %4506 = vrot.lane.b32.xlu0 %v4450, 24
    %v4507 = vpop.permute.xlu0 %4506
    %4508 = vrot.lane.b32.xlu0 %v4452, 24
    %v4509 = vpop.permute.xlu0 %4508
    %v4510 = vrot.slane %v4455, 4
    %v4511 = vrot.slane %v4457, 4
    %v4512 = vrot.slane %v4459, 4
    %v4513 = vrot.slane %v4461, 4
    %v4514 = vrot.slane %v4463, 4
    %v4515 = vrot.slane %v4465, 4
    %v4516 = vrot.slane %v4467, 4
    %v4517 = vrot.slane %v4469, 4
    %v4518 = vrot.slane %v4471, 4
    %v4519 = vrot.slane %v4473, 4
    %v4520 = vrot.slane %v4475, 4
    %v4521 = vrot.slane %v4477, 4
    %v4522 = vrot.slane %v4479, 4
    %v4523 = vrot.slane %v4481, 4
    %v4524 = vrot.slane %v4483, 4
    %v4525 = vrot.slane %v4485, 4
    %v4526 = vrot.slane %v4487, 4
    %v4527 = vrot.slane %v4489, 4
    %v4528 = vrot.slane %v4491, 4
    %v4529 = vrot.slane %v4493, 4
    %v4530 = vrot.slane %v4495, 4
    %v4531 = vrot.slane %v4497, 4
    %v4532 = vrot.slane %v4499, 4
    %v4533 = vrot.slane %v4501, 4
    %v4534 = vrot.slane %v4503, 4
    %v4535 = vrot.slane %v4505, 4
    %v4536 = vrot.slane %v4507, 4
    %v4537 = vrot.slane %v4509, 4
    %v4538 = vsel %vm414, %v4510, %v4511
    %vm4539 = vcmask 195584
    %v4540 = vsel %vm4539, %v4455, %v4538
    %v4541 = vsel %vm414, %v4511, %v4512
    %v4542 = vsel %vm4539, %v4457, %v4541
    %v4543 = vsel %vm414, %v4512, %v4513
    %v4544 = vsel %vm4539, %v4459, %v4543
    %v4545 = vsel %vm414, %v4513, %v4514
    %v4546 = vsel %vm4539, %v4461, %v4545
    %v4547 = vsel %vm414, %v4514, %v4515
    %v4548 = vsel %vm4539, %v4463, %v4547
    %v4549 = vsel %vm414, %v4515, %v4516
    %v4550 = vsel %vm4539, %v4465, %v4549
    %v4551 = vsel %vm414, %v4516, %v4517
    %v4552 = vsel %vm4539, %v4467, %v4551
    %v4553 = vsel %vm414, %v4517, %v4518
    %v4554 = vsel %vm4539, %v4469, %v4553
    %v4555 = vsel %vm414, %v4518, %v4519
    %v4556 = vsel %vm4539, %v4471, %v4555
    %v4557 = vsel %vm414, %v4519, %v4520
    %v4558 = vsel %vm4539, %v4473, %v4557
    %v4559 = vsel %vm414, %v4520, %v4521
    %v4560 = vsel %vm4539, %v4475, %v4559
    %v4561 = vsel %vm414, %v4521, %v4522
    %v4562 = vsel %vm4539, %v4477, %v4561
    %v4563 = vsel %vm414, %v4522, %v4523
    %v4564 = vsel %vm4539, %v4479, %v4563
    %v4565 = vsel %vm414, %v4523, %v4524
    %v4566 = vsel %vm4539, %v4481, %v4565
    %v4567 = vsel %vm414, %v4524, %v4525
    %v4568 = vsel %vm4539, %v4483, %v4567
    %v4569 = vsel %vm414, %v4525, %v4526
    %v4570 = vsel %vm4539, %v4485, %v4569
    %v4571 = vsel %vm414, %v4526, %v4527
    %v4572 = vsel %vm4539, %v4487, %v4571
    %v4573 = vsel %vm414, %v4527, %v4528
    %v4574 = vsel %vm4539, %v4489, %v4573
    %v4575 = vsel %vm414, %v4528, %v4529
    %v4576 = vsel %vm4539, %v4491, %v4575
    %v4577 = vsel %vm414, %v4529, %v4530
    %v4578 = vsel %vm4539, %v4493, %v4577
    %v4579 = vsel %vm414, %v4530, %v4531
    %v4580 = vsel %vm4539, %v4495, %v4579
    %v4581 = vsel %vm414, %v4531, %v4532
    %v4582 = vsel %vm4539, %v4497, %v4581
    %v4583 = vsel %vm414, %v4532, %v4533
    %v4584 = vsel %vm4539, %v4499, %v4583
    %v4585 = vsel %vm414, %v4533, %v4534
    %v4586 = vsel %vm4539, %v4501, %v4585
    %v4587 = vsel %vm414, %v4534, %v4535
    %v4588 = vsel %vm4539, %v4503, %v4587
    %v4589 = vsel %vm414, %v4535, %v4536
    %v4590 = vsel %vm4539, %v4505, %v4589
    %v4591 = vsel %vm414, %v4536, %v4537
    %v4592 = vsel %vm4539, %v4507, %v4591
    %4620 = vst [vmem:[#allocation3 + $0x5e8] sm:$0xcc] %v4540
    %4621 = vst [vmem:[#allocation3 + $0x5f0] sm:$0xcc] %v4542
    %4622 = vst [vmem:[#allocation3 + $0x5f8] sm:$0xcc] %v4544
    %4623 = vst [vmem:[#allocation3 + $0x600] sm:$0xcc] %v4546
    %4624 = vst [vmem:[#allocation3 + $0x608] sm:$0xcc] %v4548
    %4625 = vst [vmem:[#allocation3 + $0x610] sm:$0xcc] %v4550
    %4626 = vst [vmem:[#allocation3 + $0x618] sm:$0xcc] %v4552
    %4627 = vst [vmem:[#allocation3 + $0x620] sm:$0xcc] %v4554
    %4628 = vst [vmem:[#allocation3 + $0x628] sm:$0xcc] %v4556
    %4629 = vst [vmem:[#allocation3 + $0x630] sm:$0xcc] %v4558
    %4630 = vst [vmem:[#allocation3 + $0x638] sm:$0xcc] %v4560
    %4631 = vst [vmem:[#allocation3 + $0x640] sm:$0xcc] %v4562
    %4632 = vst [vmem:[#allocation3 + $0x648] sm:$0xcc] %v4564
    %4633 = vst [vmem:[#allocation3 + $0x650] sm:$0xcc] %v4566
    %4634 = vst [vmem:[#allocation3 + $0x658] sm:$0xcc] %v4568
    %4635 = vst [vmem:[#allocation3 + $0x660] sm:$0xcc] %v4570
    %4636 = vst [vmem:[#allocation3 + $0x668] sm:$0xcc] %v4572
    %4637 = vst [vmem:[#allocation3 + $0x670] sm:$0xcc] %v4574
    %4638 = vst [vmem:[#allocation3 + $0x678] sm:$0xcc] %v4576
    %4639 = vst [vmem:[#allocation3 + $0x680] sm:$0xcc] %v4578
    %4640 = vst [vmem:[#allocation3 + $0x688] sm:$0xcc] %v4580
    %4641 = vst [vmem:[#allocation3 + $0x690] sm:$0xcc] %v4582
    %4642 = vst [vmem:[#allocation3 + $0x698] sm:$0xcc] %v4584
    %4643 = vst [vmem:[#allocation3 + $0x6a0] sm:$0xcc] %v4586
    %4644 = vst [vmem:[#allocation3 + $0x6a8] sm:$0xcc] %v4588
    %4645 = vst [vmem:[#allocation3 + $0x6b0] sm:$0xcc] %v4590
    %4646 = vst [vmem:[#allocation3 + $0x6b8] sm:$0xcc] %v4592
    %v4647 = vld [vmem:[#allocation2 + $0x4] sm:$0xff]
    %v4648 = vld [vmem:[#allocation2 + $0xc] sm:$0xff]
    %v4649 = vld [vmem:[#allocation2 + $0x14] sm:$0xff]
    %v4650 = vld [vmem:[#allocation2 + $0x1c] sm:$0xff]
    %v4651 = vld [vmem:[#allocation2 + $0x24] sm:$0xff]
    %v4652 = vld [vmem:[#allocation2 + $0x2c] sm:$0xff]
    %v4653 = vld [vmem:[#allocation2 + $0x34] sm:$0xff]
    %v4654 = vld [vmem:[#allocation2 + $0x3c] sm:$0xff]
    %v4655 = vld [vmem:[#allocation2 + $0x44] sm:$0xff]
    %v4656 = vld [vmem:[#allocation2 + $0x4c] sm:$0xff]
    %v4657 = vld [vmem:[#allocation2 + $0x54] sm:$0xff]
    %v4658 = vld [vmem:[#allocation2 + $0x5c] sm:$0xff]
    %v4659 = vld [vmem:[#allocation2 + $0x64] sm:$0xff]
    %v4660 = vld [vmem:[#allocation2 + $0x6c] sm:$0x3f]
    %4662 = vst [vmem:[#allocation1] ss:$2 sm:$0xff] %v4647
    %s4664 = scalar_lea.vmem [#allocation1], 16
    %4665 = vst [vmem:[%s4664] ss:$2 sm:$0xff] %v4648
    %s4667 = scalar_lea.vmem [#allocation1], 32
    %4668 = vst [vmem:[%s4667] ss:$2 sm:$0xff] %v4649
    %s4670 = scalar_lea.vmem [#allocation1], 48
    %4671 = vst [vmem:[%s4670] ss:$2 sm:$0xff] %v4650
    %v4672 = vld.sshfl [vmem:[#allocation1] sm:$0xff pattern:$0x75643120]
    %v4674 = vld.sshfl [vmem:[#allocation1 + $0x8] sm:$0xff pattern:$0x75643120]
    %v4676 = vld.sshfl [vmem:[#allocation1 + $0x10] sm:$0xff pattern:$0x75643120]
    %v4678 = vld.sshfl [vmem:[#allocation1 + $0x18] sm:$0xff pattern:$0x75643120]
    %v4680 = vld.sshfl [vmem:[#allocation1 + $0x20] sm:$0xff pattern:$0x75643120]
    %v4682 = vld.sshfl [vmem:[#allocation1 + $0x28] sm:$0xff pattern:$0x75643120]
    %v4684 = vld.sshfl [vmem:[#allocation1 + $0x30] sm:$0xff pattern:$0x75643120]
    %v4686 = vld.sshfl [vmem:[#allocation1 + $0x38] sm:$0xff pattern:$0x75643120]
    %4689 = vst [vmem:[#allocation1] ss:$2 sm:$0xff] %v4651
    %4691 = vst [vmem:[%s4664] ss:$2 sm:$0xff] %v4652
    %4693 = vst [vmem:[%s4667] ss:$2 sm:$0xff] %v4653
    %4695 = vst [vmem:[%s4670] ss:$2 sm:$0xff] %v4654
    %v4696 = vld.sshfl [vmem:[#allocation1] sm:$0xff pattern:$0x75643120]
    %v4698 = vld.sshfl [vmem:[#allocation1 + $0x8] sm:$0xff pattern:$0x75643120]
    %v4700 = vld.sshfl [vmem:[#allocation1 + $0x10] sm:$0xff pattern:$0x75643120]
    %v4702 = vld.sshfl [vmem:[#allocation1 + $0x18] sm:$0xff pattern:$0x75643120]
    %v4704 = vld.sshfl [vmem:[#allocation1 + $0x20] sm:$0xff pattern:$0x75643120]
    %v4706 = vld.sshfl [vmem:[#allocation1 + $0x28] sm:$0xff pattern:$0x75643120]
    %v4708 = vld.sshfl [vmem:[#allocation1 + $0x30] sm:$0xff pattern:$0x75643120]
    %v4710 = vld.sshfl [vmem:[#allocation1 + $0x38] sm:$0xff pattern:$0x75643120]
    %4713 = vst [vmem:[#allocation1] ss:$2 sm:$0xff] %v4655
    %4715 = vst [vmem:[%s4664] ss:$2 sm:$0xff] %v4656
    %4717 = vst [vmem:[%s4667] ss:$2 sm:$0xff] %v4657
    %4719 = vst [vmem:[%s4670] ss:$2 sm:$0xff] %v4658
    %v4720 = vld.sshfl [vmem:[#allocation1] sm:$0xff pattern:$0x75643120]
    %v4722 = vld.sshfl [vmem:[#allocation1 + $0x8] sm:$0xff pattern:$0x75643120]
    %v4724 = vld.sshfl [vmem:[#allocation1 + $0x10] sm:$0xff pattern:$0x75643120]
    %v4726 = vld.sshfl [vmem:[#allocation1 + $0x18] sm:$0xff pattern:$0x75643120]
    %v4728 = vld.sshfl [vmem:[#allocation1 + $0x20] sm:$0xff pattern:$0x75643120]
    %v4730 = vld.sshfl [vmem:[#allocation1 + $0x28] sm:$0xff pattern:$0x75643120]
    %v4732 = vld.sshfl [vmem:[#allocation1 + $0x30] sm:$0xff pattern:$0x75643120]
    %v4734 = vld.sshfl [vmem:[#allocation1 + $0x38] sm:$0xff pattern:$0x75643120]
    %4737 = vst [vmem:[#allocation1] ss:$2 sm:$0xff] %v4659
    %4739 = vst [vmem:[%s4664] ss:$2 sm:$0xff] %v4660
    %v4740 = vld.sshfl [vmem:[#allocation1] sm:$0xff pattern:$0x75643120]
    %v4742 = vld.sshfl [vmem:[#allocation1 + $0x8] sm:$0xff pattern:$0x75643120]
    %v4744 = vld.sshfl [vmem:[#allocation1 + $0x10] sm:$0xff pattern:$0x75643120]
    %v4746 = vld.sshfl [vmem:[#allocation1 + $0x18] sm:$0xff pattern:$0x75643120]
    %4748 = vrot.lane.b32.xlu0 %v4672, 23
    %v4749 = vpop.permute.xlu0 %4748
    %4750 = vrot.lane.b32.xlu0 %v4674, 23
    %v4751 = vpop.permute.xlu0 %4750
    %4752 = vrot.lane.b32.xlu0 %v4676, 23
    %v4753 = vpop.permute.xlu0 %4752
    %4754 = vrot.lane.b32.xlu0 %v4678, 23
    %v4755 = vpop.permute.xlu0 %4754
    %4756 = vrot.lane.b32.xlu0 %v4680, 23
    %v4757 = vpop.permute.xlu0 %4756
    %4758 = vrot.lane.b32.xlu0 %v4682, 23
    %v4759 = vpop.permute.xlu0 %4758
    %4760 = vrot.lane.b32.xlu0 %v4684, 23
    %v4761 = vpop.permute.xlu0 %4760
    %4762 = vrot.lane.b32.xlu0 %v4686, 23
    %v4763 = vpop.permute.xlu0 %4762
    %4764 = vrot.lane.b32.xlu0 %v4696, 23
    %v4765 = vpop.permute.xlu0 %4764
    %4766 = vrot.lane.b32.xlu0 %v4698, 23
    %v4767 = vpop.permute.xlu0 %4766
    %4768 = vrot.lane.b32.xlu0 %v4700, 23
    %v4769 = vpop.permute.xlu0 %4768
    %4770 = vrot.lane.b32.xlu0 %v4702, 23
    %v4771 = vpop.permute.xlu0 %4770
    %4772 = vrot.lane.b32.xlu0 %v4704, 23
    %v4773 = vpop.permute.xlu0 %4772
    %4774 = vrot.lane.b32.xlu0 %v4706, 23
    %v4775 = vpop.permute.xlu0 %4774
    %4776 = vrot.lane.b32.xlu0 %v4708, 23
    %v4777 = vpop.permute.xlu0 %4776
    %4778 = vrot.lane.b32.xlu0 %v4710, 23
    %v4779 = vpop.permute.xlu0 %4778
    %4780 = vrot.lane.b32.xlu0 %v4720, 23
    %v4781 = vpop.permute.xlu0 %4780
    %4782 = vrot.lane.b32.xlu0 %v4722, 23
    %v4783 = vpop.permute.xlu0 %4782
    %4784 = vrot.lane.b32.xlu0 %v4724, 23
    %v4785 = vpop.permute.xlu0 %4784
    %4786 = vrot.lane.b32.xlu0 %v4726, 23
    %v4787 = vpop.permute.xlu0 %4786
    %4788 = vrot.lane.b32.xlu0 %v4728, 23
    %v4789 = vpop.permute.xlu0 %4788
    %4790 = vrot.lane.b32.xlu0 %v4730, 23
    %v4791 = vpop.permute.xlu0 %4790
    %4792 = vrot.lane.b32.xlu0 %v4732, 23
    %v4793 = vpop.permute.xlu0 %4792
    %4794 = vrot.lane.b32.xlu0 %v4734, 23
    %v4795 = vpop.permute.xlu0 %4794
    %4796 = vrot.lane.b32.xlu0 %v4740, 23
    %v4797 = vpop.permute.xlu0 %4796
    %4798 = vrot.lane.b32.xlu0 %v4742, 23
    %v4799 = vpop.permute.xlu0 %4798
    %4800 = vrot.lane.b32.xlu0 %v4744, 23
    %v4801 = vpop.permute.xlu0 %4800
    %4802 = vrot.lane.b32.xlu0 %v4746, 23
    %v4803 = vpop.permute.xlu0 %4802
    %v4804 = vrot.slane %v4749, 4
    %v4805 = vrot.slane %v4751, 4
    %v4806 = vrot.slane %v4753, 4
    %v4807 = vrot.slane %v4755, 4
    %v4808 = vrot.slane %v4757, 4
    %v4809 = vrot.slane %v4759, 4
    %v4810 = vrot.slane %v4761, 4
    %v4811 = vrot.slane %v4763, 4
    %v4812 = vrot.slane %v4765, 4
    %v4813 = vrot.slane %v4767, 4
    %v4814 = vrot.slane %v4769, 4
    %v4815 = vrot.slane %v4771, 4
    %v4816 = vrot.slane %v4773, 4
    %v4817 = vrot.slane %v4775, 4
    %v4818 = vrot.slane %v4777, 4
    %v4819 = vrot.slane %v4779, 4
    %v4820 = vrot.slane %v4781, 4
    %v4821 = vrot.slane %v4783, 4
    %v4822 = vrot.slane %v4785, 4
    %v4823 = vrot.slane %v4787, 4
    %v4824 = vrot.slane %v4789, 4
    %v4825 = vrot.slane %v4791, 4
    %v4826 = vrot.slane %v4793, 4
    %v4827 = vrot.slane %v4795, 4
    %v4828 = vrot.slane %v4797, 4
    %v4829 = vrot.slane %v4799, 4
    %v4830 = vrot.slane %v4801, 4
    %v4831 = vrot.slane %v4803, 4
    %v4832 = vsel %vm414, %v4804, %v4805
    %vm4833 = vcmask 187392
    %v4834 = vsel %vm4833, %v4749, %v4832
    %v4835 = vsel %vm414, %v4805, %v4806
    %v4836 = vsel %vm4833, %v4751, %v4835
    %v4837 = vsel %vm414, %v4806, %v4807
    %v4838 = vsel %vm4833, %v4753, %v4837
    %v4839 = vsel %vm414, %v4807, %v4808
    %v4840 = vsel %vm4833, %v4755, %v4839
    %v4841 = vsel %vm414, %v4808, %v4809
    %v4842 = vsel %vm4833, %v4757, %v4841
    %v4843 = vsel %vm414, %v4809, %v4810
    %v4844 = vsel %vm4833, %v4759, %v4843
    %v4845 = vsel %vm414, %v4810, %v4811
    %v4846 = vsel %vm4833, %v4761, %v4845
    %v4847 = vsel %vm414, %v4811, %v4812
    %v4848 = vsel %vm4833, %v4763, %v4847
    %v4849 = vsel %vm414, %v4812, %v4813
    %v4850 = vsel %vm4833, %v4765, %v4849
    %v4851 = vsel %vm414, %v4813, %v4814
    %v4852 = vsel %vm4833, %v4767, %v4851
    %v4853 = vsel %vm414, %v4814, %v4815
    %v4854 = vsel %vm4833, %v4769, %v4853
    %v4855 = vsel %vm414, %v4815, %v4816
    %v4856 = vsel %vm4833, %v4771, %v4855
    %v4857 = vsel %vm414, %v4816, %v4817
    %v4858 = vsel %vm4833, %v4773, %v4857
    %v4859 = vsel %vm414, %v4817, %v4818
    %v4860 = vsel %vm4833, %v4775, %v4859
    %v4861 = vsel %vm414, %v4818, %v4819
    %v4862 = vsel %vm4833, %v4777, %v4861
    %v4863 = vsel %vm414, %v4819, %v4820
    %v4864 = vsel %vm4833, %v4779, %v4863
    %v4865 = vsel %vm414, %v4820, %v4821
    %v4866 = vsel %vm4833, %v4781, %v4865
    %v4867 = vsel %vm414, %v4821, %v4822
    %v4868 = vsel %vm4833, %v4783, %v4867
    %v4869 = vsel %vm414, %v4822, %v4823
    %v4870 = vsel %vm4833, %v4785, %v4869
    %v4871 = vsel %vm414, %v4823, %v4824
    %v4872 = vsel %vm4833, %v4787, %v4871
    %v4873 = vsel %vm414, %v4824, %v4825
    %v4874 = vsel %vm4833, %v4789, %v4873
    %v4875 = vsel %vm414, %v4825, %v4826
    %v4876 = vsel %vm4833, %v4791, %v4875
    %v4877 = vsel %vm414, %v4826, %v4827
    %v4878 = vsel %vm4833, %v4793, %v4877
    %v4879 = vsel %vm414, %v4827, %v4828
    %v4880 = vsel %vm4833, %v4795, %v4879
    %v4881 = vsel %vm414, %v4828, %v4829
    %v4882 = vsel %vm4833, %v4797, %v4881
    %v4883 = vsel %vm414, %v4829, %v4830
    %v4884 = vsel %vm4833, %v4799, %v4883
    %v4885 = vsel %vm414, %v4830, %v4831
    %v4886 = vsel %vm4833, %v4801, %v4885
    %4914 = vst [vmem:[#allocation3 + $0x6c0] sm:$0x33] %v4834
    %4915 = vst [vmem:[#allocation3 + $0x6c8] sm:$0x33] %v4836
    %4916 = vst [vmem:[#allocation3 + $0x6d0] sm:$0x33] %v4838
    %4917 = vst [vmem:[#allocation3 + $0x6d8] sm:$0x33] %v4840
    %4918 = vst [vmem:[#allocation3 + $0x6e0] sm:$0x33] %v4842
    %4919 = vst [vmem:[#allocation3 + $0x6e8] sm:$0x33] %v4844
    %4920 = vst [vmem:[#allocation3 + $0x6f0] sm:$0x33] %v4846
    %4921 = vst [vmem:[#allocation3 + $0x6f8] sm:$0x33] %v4848
    %4922 = vst [vmem:[#allocation3 + $0x700] sm:$0x33] %v4850
    %4923 = vst [vmem:[#allocation3 + $0x708] sm:$0x33] %v4852
    %4924 = vst [vmem:[#allocation3 + $0x710] sm:$0x33] %v4854
    %4925 = vst [vmem:[#allocation3 + $0x718] sm:$0x33] %v4856
    %4926 = vst [vmem:[#allocation3 + $0x720] sm:$0x33] %v4858
    %4927 = vst [vmem:[#allocation3 + $0x728] sm:$0x33] %v4860
    %4928 = vst [vmem:[#allocation3 + $0x730] sm:$0x33] %v4862
    %4929 = vst [vmem:[#allocation3 + $0x738] sm:$0x33] %v4864
    %4930 = vst [vmem:[#allocation3 + $0x740] sm:$0x33] %v4866
    %4931 = vst [vmem:[#allocation3 + $0x748] sm:$0x33] %v4868
    %4932 = vst [vmem:[#allocation3 + $0x750] sm:$0x33] %v4870
    %4933 = vst [vmem:[#allocation3 + $0x758] sm:$0x33] %v4872
    %4934 = vst [vmem:[#allocation3 + $0x760] sm:$0x33] %v4874
    %4935 = vst [vmem:[#allocation3 + $0x768] sm:$0x33] %v4876
    %4936 = vst [vmem:[#allocation3 + $0x770] sm:$0x33] %v4878
    %4937 = vst [vmem:[#allocation3 + $0x778] sm:$0x33] %v4880
    %4938 = vst [vmem:[#allocation3 + $0x780] sm:$0x33] %v4882
    %4939 = vst [vmem:[#allocation3 + $0x788] sm:$0x33] %v4884
    %4940 = vst [vmem:[#allocation3 + $0x790] sm:$0x33] %v4886
    %v4941 = vld [vmem:[#allocation2 + $0x4] sm:$0xff]
    %v4942 = vld [vmem:[#allocation2 + $0xc] sm:$0xff]
    %v4943 = vld [vmem:[#allocation2 + $0x14] sm:$0xff]
    %v4944 = vld [vmem:[#allocation2 + $0x1c] sm:$0xff]
    %v4945 = vld [vmem:[#allocation2 + $0x24] sm:$0xff]
    %v4946 = vld [vmem:[#allocation2 + $0x2c] sm:$0xff]
    %v4947 = vld [vmem:[#allocation2 + $0x34] sm:$0xff]
    %v4948 = vld [vmem:[#allocation2 + $0x3c] sm:$0xff]
    %v4949 = vld [vmem:[#allocation2 + $0x44] sm:$0xff]
    %v4950 = vld [vmem:[#allocation2 + $0x4c] sm:$0xff]
    %v4951 = vld [vmem:[#allocation2 + $0x54] sm:$0xff]
    %v4952 = vld [vmem:[#allocation2 + $0x5c] sm:$0xff]
    %v4953 = vld [vmem:[#allocation2 + $0x64] sm:$0xff]
    %v4954 = vld [vmem:[#allocation2 + $0x6c] sm:$0x3f]
    %s4956 = scalar_lea.vmem [#allocation1], 1
    %4957 = vst [vmem:[%s4956] ss:$2 sm:$0xff] %v4941
    %s4959 = scalar_lea.vmem [#allocation1], 17
    %4960 = vst [vmem:[%s4959] ss:$2 sm:$0xff] %v4942
    %s4962 = scalar_lea.vmem [#allocation1], 33
    %4963 = vst [vmem:[%s4962] ss:$2 sm:$0xff] %v4943
    %s4965 = scalar_lea.vmem [#allocation1], 49
    %4966 = vst [vmem:[%s4965] ss:$2 sm:$0xff] %v4944
    %v4967 = vld.sshfl [vmem:[#allocation1] sm:$0xff pattern:$0x75643120]
    %v4969 = vld.sshfl [vmem:[#allocation1 + $0x8] sm:$0xff pattern:$0x75643120]
    %v4971 = vld.sshfl [vmem:[#allocation1 + $0x10] sm:$0xff pattern:$0x75643120]
    %v4973 = vld.sshfl [vmem:[#allocation1 + $0x18] sm:$0xff pattern:$0x75643120]
    %v4975 = vld.sshfl [vmem:[#allocation1 + $0x20] sm:$0xff pattern:$0x75643120]
    %v4977 = vld.sshfl [vmem:[#allocation1 + $0x28] sm:$0xff pattern:$0x75643120]
    %v4979 = vld.sshfl [vmem:[#allocation1 + $0x30] sm:$0xff pattern:$0x75643120]
    %v4981 = vld.sshfl [vmem:[#allocation1 + $0x38] sm:$0xff pattern:$0x75643120]
    %4984 = vst [vmem:[%s4956] ss:$2 sm:$0xff] %v4945
    %4986 = vst [vmem:[%s4959] ss:$2 sm:$0xff] %v4946
    %4988 = vst [vmem:[%s4962] ss:$2 sm:$0xff] %v4947
    %4990 = vst [vmem:[%s4965] ss:$2 sm:$0xff] %v4948
    %v4991 = vld.sshfl [vmem:[#allocation1] sm:$0xff pattern:$0x75643120]
    %v4993 = vld.sshfl [vmem:[#allocation1 + $0x8] sm:$0xff pattern:$0x75643120]
    %v4995 = vld.sshfl [vmem:[#allocation1 + $0x10] sm:$0xff pattern:$0x75643120]
    %v4997 = vld.sshfl [vmem:[#allocation1 + $0x18] sm:$0xff pattern:$0x75643120]
    %v4999 = vld.sshfl [vmem:[#allocation1 + $0x20] sm:$0xff pattern:$0x75643120]
    %v5001 = vld.sshfl [vmem:[#allocation1 + $0x28] sm:$0xff pattern:$0x75643120]
    %v5003 = vld.sshfl [vmem:[#allocation1 + $0x30] sm:$0xff pattern:$0x75643120]
    %v5005 = vld.sshfl [vmem:[#allocation1 + $0x38] sm:$0xff pattern:$0x75643120]
    %5008 = vst [vmem:[%s4956] ss:$2 sm:$0xff] %v4949
    %5010 = vst [vmem:[%s4959] ss:$2 sm:$0xff] %v4950
    %5012 = vst [vmem:[%s4962] ss:$2 sm:$0xff] %v4951
    %5014 = vst [vmem:[%s4965] ss:$2 sm:$0xff] %v4952
    %v5015 = vld.sshfl [vmem:[#allocation1] sm:$0xff pattern:$0x75643120]
    %v5017 = vld.sshfl [vmem:[#allocation1 + $0x8] sm:$0xff pattern:$0x75643120]
    %v5019 = vld.sshfl [vmem:[#allocation1 + $0x10] sm:$0xff pattern:$0x75643120]
    %v5021 = vld.sshfl [vmem:[#allocation1 + $0x18] sm:$0xff pattern:$0x75643120]
    %v5023 = vld.sshfl [vmem:[#allocation1 + $0x20] sm:$0xff pattern:$0x75643120]
    %v5025 = vld.sshfl [vmem:[#allocation1 + $0x28] sm:$0xff pattern:$0x75643120]
    %v5027 = vld.sshfl [vmem:[#allocation1 + $0x30] sm:$0xff pattern:$0x75643120]
    %v5029 = vld.sshfl [vmem:[#allocation1 + $0x38] sm:$0xff pattern:$0x75643120]
    %5032 = vst [vmem:[%s4956] ss:$2 sm:$0xff] %v4953
    %5034 = vst [vmem:[%s4959] ss:$2 sm:$0xff] %v4954
    %v5035 = vld.sshfl [vmem:[#allocation1] sm:$0xff pattern:$0x75643120]
    %v5037 = vld.sshfl [vmem:[#allocation1 + $0x8] sm:$0xff pattern:$0x75643120]
    %v5039 = vld.sshfl [vmem:[#allocation1 + $0x10] sm:$0xff pattern:$0x75643120]
    %v5041 = vld.sshfl [vmem:[#allocation1 + $0x18] sm:$0xff pattern:$0x75643120]
    %5043 = vrot.lane.b32.xlu0 %v4967, 22
    %v5044 = vpop.permute.xlu0 %5043
    %5045 = vrot.lane.b32.xlu0 %v4969, 22
    %v5046 = vpop.permute.xlu0 %5045
    %5047 = vrot.lane.b32.xlu0 %v4971, 22
    %v5048 = vpop.permute.xlu0 %5047
    %5049 = vrot.lane.b32.xlu0 %v4973, 22
    %v5050 = vpop.permute.xlu0 %5049
    %5051 = vrot.lane.b32.xlu0 %v4975, 22
    %v5052 = vpop.permute.xlu0 %5051
    %5053 = vrot.lane.b32.xlu0 %v4977, 22
    %v5054 = vpop.permute.xlu0 %5053
    %5055 = vrot.lane.b32.xlu0 %v4979, 22
    %v5056 = vpop.permute.xlu0 %5055
    %5057 = vrot.lane.b32.xlu0 %v4981, 22
    %v5058 = vpop.permute.xlu0 %5057
    %5059 = vrot.lane.b32.xlu0 %v4991, 22
    %v5060 = vpop.permute.xlu0 %5059
    %5061 = vrot.lane.b32.xlu0 %v4993, 22
    %v5062 = vpop.permute.xlu0 %5061
    %5063 = vrot.lane.b32.xlu0 %v4995, 22
    %v5064 = vpop.permute.xlu0 %5063
    %5065 = vrot.lane.b32.xlu0 %v4997, 22
    %v5066 = vpop.permute.xlu0 %5065
    %5067 = vrot.lane.b32.xlu0 %v4999, 22
    %v5068 = vpop.permute.xlu0 %5067
    %5069 = vrot.lane.b32.xlu0 %v5001, 22
    %v5070 = vpop.permute.xlu0 %5069
    %5071 = vrot.lane.b32.xlu0 %v5003, 22
    %v5072 = vpop.permute.xlu0 %5071
    %5073 = vrot.lane.b32.xlu0 %v5005, 22
    %v5074 = vpop.permute.xlu0 %5073
    %5075 = vrot.lane.b32.xlu0 %v5015, 22
    %v5076 = vpop.permute.xlu0 %5075
    %5077 = vrot.lane.b32.xlu0 %v5017, 22
    %v5078 = vpop.permute.xlu0 %5077
    %5079 = vrot.lane.b32.xlu0 %v5019, 22
    %v5080 = vpop.permute.xlu0 %5079
    %5081 = vrot.lane.b32.xlu0 %v5021, 22
    %v5082 = vpop.permute.xlu0 %5081
    %5083 = vrot.lane.b32.xlu0 %v5023, 22
    %v5084 = vpop.permute.xlu0 %5083
    %5085 = vrot.lane.b32.xlu0 %v5025, 22
    %v5086 = vpop.permute.xlu0 %5085
    %5087 = vrot.lane.b32.xlu0 %v5027, 22
    %v5088 = vpop.permute.xlu0 %5087
    %5089 = vrot.lane.b32.xlu0 %v5029, 22
    %v5090 = vpop.permute.xlu0 %5089
    %5091 = vrot.lane.b32.xlu0 %v5035, 22
    %v5092 = vpop.permute.xlu0 %5091
    %5093 = vrot.lane.b32.xlu0 %v5037, 22
    %v5094 = vpop.permute.xlu0 %5093
    %5095 = vrot.lane.b32.xlu0 %v5039, 22
    %v5096 = vpop.permute.xlu0 %5095
    %5097 = vrot.lane.b32.xlu0 %v5041, 22
    %v5098 = vpop.permute.xlu0 %5097
    %v5099 = vrot.slane %v5044, 4
    %v5100 = vrot.slane %v5046, 4
    %v5101 = vrot.slane %v5048, 4
    %v5102 = vrot.slane %v5050, 4
    %v5103 = vrot.slane %v5052, 4
    %v5104 = vrot.slane %v5054, 4
    %v5105 = vrot.slane %v5056, 4
    %v5106 = vrot.slane %v5058, 4
    %v5107 = vrot.slane %v5060, 4
    %v5108 = vrot.slane %v5062, 4
    %v5109 = vrot.slane %v5064, 4
    %v5110 = vrot.slane %v5066, 4
    %v5111 = vrot.slane %v5068, 4
    %v5112 = vrot.slane %v5070, 4
    %v5113 = vrot.slane %v5072, 4
    %v5114 = vrot.slane %v5074, 4
    %v5115 = vrot.slane %v5076, 4
    %v5116 = vrot.slane %v5078, 4
    %v5117 = vrot.slane %v5080, 4
    %v5118 = vrot.slane %v5082, 4
    %v5119 = vrot.slane %v5084, 4
    %v5120 = vrot.slane %v5086, 4
    %v5121 = vrot.slane %v5088, 4
    %v5122 = vrot.slane %v5090, 4
    %v5123 = vrot.slane %v5092, 4
    %v5124 = vrot.slane %v5094, 4
    %v5125 = vrot.slane %v5096, 4
    %v5126 = vrot.slane %v5098, 4
    %v5127 = vsel %vm414, %v5099, %v5100
    %vm5128 = vcmask 179200
    %v5129 = vsel %vm5128, %v5044, %v5127
    %v5130 = vsel %vm414, %v5100, %v5101
    %v5131 = vsel %vm5128, %v5046, %v5130
    %v5132 = vsel %vm414, %v5101, %v5102
    %v5133 = vsel %vm5128, %v5048, %v5132
    %v5134 = vsel %vm414, %v5102, %v5103
    %v5135 = vsel %vm5128, %v5050, %v5134
    %v5136 = vsel %vm414, %v5103, %v5104
    %v5137 = vsel %vm5128, %v5052, %v5136
    %v5138 = vsel %vm414, %v5104, %v5105
    %v5139 = vsel %vm5128, %v5054, %v5138
    %v5140 = vsel %vm414, %v5105, %v5106
    %v5141 = vsel %vm5128, %v5056, %v5140
    %v5142 = vsel %vm414, %v5106, %v5107
    %v5143 = vsel %vm5128, %v5058, %v5142
    %v5144 = vsel %vm414, %v5107, %v5108
    %v5145 = vsel %vm5128, %v5060, %v5144
    %v5146 = vsel %vm414, %v5108, %v5109
    %v5147 = vsel %vm5128, %v5062, %v5146
    %v5148 = vsel %vm414, %v5109, %v5110
    %v5149 = vsel %vm5128, %v5064, %v5148
    %v5150 = vsel %vm414, %v5110, %v5111
    %v5151 = vsel %vm5128, %v5066, %v5150
    %v5152 = vsel %vm414, %v5111, %v5112
    %v5153 = vsel %vm5128, %v5068, %v5152
    %v5154 = vsel %vm414, %v5112, %v5113
    %v5155 = vsel %vm5128, %v5070, %v5154
    %v5156 = vsel %vm414, %v5113, %v5114
    %v5157 = vsel %vm5128, %v5072, %v5156
    %v5158 = vsel %vm414, %v5114, %v5115
    %v5159 = vsel %vm5128, %v5074, %v5158
    %v5160 = vsel %vm414, %v5115, %v5116
    %v5161 = vsel %vm5128, %v5076, %v5160
    %v5162 = vsel %vm414, %v5116, %v5117
    %v5163 = vsel %vm5128, %v5078, %v5162
    %v5164 = vsel %vm414, %v5117, %v5118
    %v5165 = vsel %vm5128, %v5080, %v5164
    %v5166 = vsel %vm414, %v5118, %v5119
    %v5167 = vsel %vm5128, %v5082, %v5166
    %v5168 = vsel %vm414, %v5119, %v5120
    %v5169 = vsel %vm5128, %v5084, %v5168
    %v5170 = vsel %vm414, %v5120, %v5121
    %v5171 = vsel %vm5128, %v5086, %v5170
    %v5172 = vsel %vm414, %v5121, %v5122
    %v5173 = vsel %vm5128, %v5088, %v5172
    %v5174 = vsel %vm414, %v5122, %v5123
    %v5175 = vsel %vm5128, %v5090, %v5174
    %v5176 = vsel %vm414, %v5123, %v5124
    %v5177 = vsel %vm5128, %v5092, %v5176
    %v5178 = vsel %vm414, %v5124, %v5125
    %v5179 = vsel %vm5128, %v5094, %v5178
    %v5180 = vsel %vm414, %v5125, %v5126
    %v5181 = vsel %vm5128, %v5096, %v5180
    %5209 = vst [vmem:[#allocation3 + $0x6c0] sm:$0xcc] %v5129
    %5210 = vst [vmem:[#allocation3 + $0x6c8] sm:$0xcc] %v5131
    %5211 = vst [vmem:[#allocation3 + $0x6d0] sm:$0xcc] %v5133
    %5212 = vst [vmem:[#allocation3 + $0x6d8] sm:$0xcc] %v5135
    %5213 = vst [vmem:[#allocation3 + $0x6e0] sm:$0xcc] %v5137
    %5214 = vst [vmem:[#allocation3 + $0x6e8] sm:$0xcc] %v5139
    %5215 = vst [vmem:[#allocation3 + $0x6f0] sm:$0xcc] %v5141
    %5216 = vst [vmem:[#allocation3 + $0x6f8] sm:$0xcc] %v5143
    %5217 = vst [vmem:[#allocation3 + $0x700] sm:$0xcc] %v5145
    %5218 = vst [vmem:[#allocation3 + $0x708] sm:$0xcc] %v5147
    %5219 = vst [vmem:[#allocation3 + $0x710] sm:$0xcc] %v5149
    %5220 = vst [vmem:[#allocation3 + $0x718] sm:$0xcc] %v5151
    %5221 = vst [vmem:[#allocation3 + $0x720] sm:$0xcc] %v5153
    %5222 = vst [vmem:[#allocation3 + $0x728] sm:$0xcc] %v5155
    %5223 = vst [vmem:[#allocation3 + $0x730] sm:$0xcc] %v5157
    %5224 = vst [vmem:[#allocation3 + $0x738] sm:$0xcc] %v5159
    %5225 = vst [vmem:[#allocation3 + $0x740] sm:$0xcc] %v5161
    %5226 = vst [vmem:[#allocation3 + $0x748] sm:$0xcc] %v5163
    %5227 = vst [vmem:[#allocation3 + $0x750] sm:$0xcc] %v5165
    %5228 = vst [vmem:[#allocation3 + $0x758] sm:$0xcc] %v5167
    %5229 = vst [vmem:[#allocation3 + $0x760] sm:$0xcc] %v5169
    %5230 = vst [vmem:[#allocation3 + $0x768] sm:$0xcc] %v5171
    %5231 = vst [vmem:[#allocation3 + $0x770] sm:$0xcc] %v5173
    %5232 = vst [vmem:[#allocation3 + $0x778] sm:$0xcc] %v5175
    %5233 = vst [vmem:[#allocation3 + $0x780] sm:$0xcc] %v5177
    %5234 = vst [vmem:[#allocation3 + $0x788] sm:$0xcc] %v5179
    %5235 = vst [vmem:[#allocation3 + $0x790] sm:$0xcc] %v5181
    %v5236 = vld [vmem:[#allocation2 + $0xa] sm:$0xff]
    %v5237 = vld [vmem:[#allocation2 + $0x12] sm:$0xff]
    %v5238 = vld [vmem:[#allocation2 + $0x1a] sm:$0xff]
    %v5239 = vld [vmem:[#allocation2 + $0x22] sm:$0xff]
    %v5240 = vld [vmem:[#allocation2 + $0x2a] sm:$0xff]
    %v5241 = vld [vmem:[#allocation2 + $0x32] sm:$0xff]
    %v5242 = vld [vmem:[#allocation2 + $0x3a] sm:$0xff]
    %v5243 = vld [vmem:[#allocation2 + $0x42] sm:$0xff]
    %v5244 = vld [vmem:[#allocation2 + $0x4a] sm:$0xff]
    %v5245 = vld [vmem:[#allocation2 + $0x52] sm:$0xff]
    %v5246 = vld [vmem:[#allocation2 + $0x5a] sm:$0xff]
    %v5247 = vld [vmem:[#allocation2 + $0x62] sm:$0xff]
    %v5248 = vld [vmem:[#allocation2 + $0x6a] sm:$0xff]
    %v5249 = vld [vmem:[#allocation2 + $0x72] sm:$0x3f]
    %5251 = vst [vmem:[#allocation1] ss:$2 sm:$0xff] %v5236
    %s5253 = scalar_lea.vmem [#allocation1], 16
    %5254 = vst [vmem:[%s5253] ss:$2 sm:$0xff] %v5237
    %s5256 = scalar_lea.vmem [#allocation1], 32
    %5257 = vst [vmem:[%s5256] ss:$2 sm:$0xff] %v5238
    %s5259 = scalar_lea.vmem [#allocation1], 48
    %5260 = vst [vmem:[%s5259] ss:$2 sm:$0xff] %v5239
    %v5261 = vld.sshfl [vmem:[#allocation1] sm:$0xff pattern:$0x75643120]
    %v5263 = vld.sshfl [vmem:[#allocation1 + $0x8] sm:$0xff pattern:$0x75643120]
    %v5265 = vld.sshfl [vmem:[#allocation1 + $0x10] sm:$0xff pattern:$0x75643120]
    %v5267 = vld.sshfl [vmem:[#allocation1 + $0x18] sm:$0xff pattern:$0x75643120]
    %v5269 = vld.sshfl [vmem:[#allocation1 + $0x20] sm:$0xff pattern:$0x75643120]
    %v5271 = vld.sshfl [vmem:[#allocation1 + $0x28] sm:$0xff pattern:$0x75643120]
    %v5273 = vld.sshfl [vmem:[#allocation1 + $0x30] sm:$0xff pattern:$0x75643120]
    %v5275 = vld.sshfl [vmem:[#allocation1 + $0x38] sm:$0xff pattern:$0x75643120]
    %5278 = vst [vmem:[#allocation1] ss:$2 sm:$0xff] %v5240
    %5280 = vst [vmem:[%s5253] ss:$2 sm:$0xff] %v5241
    %5282 = vst [vmem:[%s5256] ss:$2 sm:$0xff] %v5242
    %5284 = vst [vmem:[%s5259] ss:$2 sm:$0xff] %v5243
    %v5285 = vld.sshfl [vmem:[#allocation1] sm:$0xff pattern:$0x75643120]
    %v5287 = vld.sshfl [vmem:[#allocation1 + $0x8] sm:$0xff pattern:$0x75643120]
    %v5289 = vld.sshfl [vmem:[#allocation1 + $0x10] sm:$0xff pattern:$0x75643120]
    %v5291 = vld.sshfl [vmem:[#allocation1 + $0x18] sm:$0xff pattern:$0x75643120]
    %v5293 = vld.sshfl [vmem:[#allocation1 + $0x20] sm:$0xff pattern:$0x75643120]
    %v5295 = vld.sshfl [vmem:[#allocation1 + $0x28] sm:$0xff pattern:$0x75643120]
    %v5297 = vld.sshfl [vmem:[#allocation1 + $0x30] sm:$0xff pattern:$0x75643120]
    %v5299 = vld.sshfl [vmem:[#allocation1 + $0x38] sm:$0xff pattern:$0x75643120]
    %5302 = vst [vmem:[#allocation1] ss:$2 sm:$0xff] %v5244
    %5304 = vst [vmem:[%s5253] ss:$2 sm:$0xff] %v5245
    %5306 = vst [vmem:[%s5256] ss:$2 sm:$0xff] %v5246
    %5308 = vst [vmem:[%s5259] ss:$2 sm:$0xff] %v5247
    %v5309 = vld.sshfl [vmem:[#allocation1] sm:$0xff pattern:$0x75643120]
    %v5311 = vld.sshfl [vmem:[#allocation1 + $0x8] sm:$0xff pattern:$0x75643120]
    %v5313 = vld.sshfl [vmem:[#allocation1 + $0x10] sm:$0xff pattern:$0x75643120]
    %v5315 = vld.sshfl [vmem:[#allocation1 + $0x18] sm:$0xff pattern:$0x75643120]
    %v5317 = vld.sshfl [vmem:[#allocation1 + $0x20] sm:$0xff pattern:$0x75643120]
    %v5319 = vld.sshfl [vmem:[#allocation1 + $0x28] sm:$0xff pattern:$0x75643120]
    %v5321 = vld.sshfl [vmem:[#allocation1 + $0x30] sm:$0xff pattern:$0x75643120]
    %v5323 = vld.sshfl [vmem:[#allocation1 + $0x38] sm:$0xff pattern:$0x75643120]
    %5326 = vst [vmem:[#allocation1] ss:$2 sm:$0xff] %v5248
    %5328 = vst [vmem:[%s5253] ss:$2 sm:$0xff] %v5249
    %v5329 = vld.sshfl [vmem:[#allocation1] sm:$0xff pattern:$0x75643120]
    %v5331 = vld.sshfl [vmem:[#allocation1 + $0x8] sm:$0xff pattern:$0x75643120]
    %v5333 = vld.sshfl [vmem:[#allocation1 + $0x10] sm:$0xff pattern:$0x75643120]
    %v5335 = vld.sshfl [vmem:[#allocation1 + $0x18] sm:$0xff pattern:$0x75643120]
    %5337 = vrot.lane.b32.xlu0 %v5261, 120
    %v5338 = vpop.permute.xlu0 %5337
    %5339 = vrot.lane.b32.xlu0 %v5263, 120
    %v5340 = vpop.permute.xlu0 %5339
    %5341 = vrot.lane.b32.xlu0 %v5265, 120
    %v5342 = vpop.permute.xlu0 %5341
    %5343 = vrot.lane.b32.xlu0 %v5267, 120
    %v5344 = vpop.permute.xlu0 %5343
    %5345 = vrot.lane.b32.xlu0 %v5269, 120
    %v5346 = vpop.permute.xlu0 %5345
    %5347 = vrot.lane.b32.xlu0 %v5271, 120
    %v5348 = vpop.permute.xlu0 %5347
    %5349 = vrot.lane.b32.xlu0 %v5273, 120
    %v5350 = vpop.permute.xlu0 %5349
    %5351 = vrot.lane.b32.xlu0 %v5275, 120
    %v5352 = vpop.permute.xlu0 %5351
    %5353 = vrot.lane.b32.xlu0 %v5285, 120
    %v5354 = vpop.permute.xlu0 %5353
    %5355 = vrot.lane.b32.xlu0 %v5287, 120
    %v5356 = vpop.permute.xlu0 %5355
    %5357 = vrot.lane.b32.xlu0 %v5289, 120
    %v5358 = vpop.permute.xlu0 %5357
    %5359 = vrot.lane.b32.xlu0 %v5291, 120
    %v5360 = vpop.permute.xlu0 %5359
    %5361 = vrot.lane.b32.xlu0 %v5293, 120
    %v5362 = vpop.permute.xlu0 %5361
    %5363 = vrot.lane.b32.xlu0 %v5295, 120
    %v5364 = vpop.permute.xlu0 %5363
    %5365 = vrot.lane.b32.xlu0 %v5297, 120
    %v5366 = vpop.permute.xlu0 %5365
    %5367 = vrot.lane.b32.xlu0 %v5299, 120
    %v5368 = vpop.permute.xlu0 %5367
    %5369 = vrot.lane.b32.xlu0 %v5309, 120
    %v5370 = vpop.permute.xlu0 %5369
    %5371 = vrot.lane.b32.xlu0 %v5311, 120
    %v5372 = vpop.permute.xlu0 %5371
    %5373 = vrot.lane.b32.xlu0 %v5313, 120
    %v5374 = vpop.permute.xlu0 %5373
    %5375 = vrot.lane.b32.xlu0 %v5315, 120
    %v5376 = vpop.permute.xlu0 %5375
    %5377 = vrot.lane.b32.xlu0 %v5317, 120
    %v5378 = vpop.permute.xlu0 %5377
    %5379 = vrot.lane.b32.xlu0 %v5319, 120
    %v5380 = vpop.permute.xlu0 %5379
    %5381 = vrot.lane.b32.xlu0 %v5321, 120
    %v5382 = vpop.permute.xlu0 %5381
    %5383 = vrot.lane.b32.xlu0 %v5323, 120
    %v5384 = vpop.permute.xlu0 %5383
    %5385 = vrot.lane.b32.xlu0 %v5329, 120
    %v5386 = vpop.permute.xlu0 %5385
    %5387 = vrot.lane.b32.xlu0 %v5331, 120
    %v5388 = vpop.permute.xlu0 %5387
    %5389 = vrot.lane.b32.xlu0 %v5333, 120
    %v5390 = vpop.permute.xlu0 %5389
    %5391 = vrot.lane.b32.xlu0 %v5335, 120
    %v5392 = vpop.permute.xlu0 %5391
    %v5393 = vrot.slane %v5338, 4
    %v5394 = vrot.slane %v5340, 4
    %v5395 = vrot.slane %v5342, 4
    %v5396 = vrot.slane %v5344, 4
    %v5397 = vrot.slane %v5346, 4
    %v5398 = vrot.slane %v5348, 4
    %v5399 = vrot.slane %v5350, 4
    %v5400 = vrot.slane %v5352, 4
    %v5401 = vrot.slane %v5354, 4
    %v5402 = vrot.slane %v5356, 4
    %v5403 = vrot.slane %v5358, 4
    %v5404 = vrot.slane %v5360, 4
    %v5405 = vrot.slane %v5362, 4
    %v5406 = vrot.slane %v5364, 4
    %v5407 = vrot.slane %v5366, 4
    %v5408 = vrot.slane %v5368, 4
    %v5409 = vrot.slane %v5370, 4
    %v5410 = vrot.slane %v5372, 4
    %v5411 = vrot.slane %v5374, 4
    %v5412 = vrot.slane %v5376, 4
    %v5413 = vrot.slane %v5378, 4
    %v5414 = vrot.slane %v5380, 4
    %v5415 = vrot.slane %v5382, 4
    %v5416 = vrot.slane %v5384, 4
    %v5417 = vrot.slane %v5386, 4
    %v5418 = vrot.slane %v5388, 4
    %v5419 = vrot.slane %v5390, 4
    %v5420 = vrot.slane %v5392, 4
    %v5421 = vsel %vm414, %v5393, %v5394
    %vm5422 = vcmask 982016
    %v5423 = vsel %vm5422, %v5338, %v5421
    %v5424 = vsel %vm414, %v5394, %v5395
    %v5425 = vsel %vm5422, %v5340, %v5424
    %v5426 = vsel %vm414, %v5395, %v5396
    %v5427 = vsel %vm5422, %v5342, %v5426
    %v5428 = vsel %vm414, %v5396, %v5397
    %v5429 = vsel %vm5422, %v5344, %v5428
    %v5430 = vsel %vm414, %v5397, %v5398
    %v5431 = vsel %vm5422, %v5346, %v5430
    %v5432 = vsel %vm414, %v5398, %v5399
    %v5433 = vsel %vm5422, %v5348, %v5432
    %v5434 = vsel %vm414, %v5399, %v5400
    %v5435 = vsel %vm5422, %v5350, %v5434
    %v5436 = vsel %vm414, %v5400, %v5401
    %v5437 = vsel %vm5422, %v5352, %v5436
    %v5438 = vsel %vm414, %v5401, %v5402
    %v5439 = vsel %vm5422, %v5354, %v5438
    %v5440 = vsel %vm414, %v5402, %v5403
    %v5441 = vsel %vm5422, %v5356, %v5440
    %v5442 = vsel %vm414, %v5403, %v5404
    %v5443 = vsel %vm5422, %v5358, %v5442
    %v5444 = vsel %vm414, %v5404, %v5405
    %v5445 = vsel %vm5422, %v5360, %v5444
    %v5446 = vsel %vm414, %v5405, %v5406
    %v5447 = vsel %vm5422, %v5362, %v5446
    %v5448 = vsel %vm414, %v5406, %v5407
    %v5449 = vsel %vm5422, %v5364, %v5448
    %v5450 = vsel %vm414, %v5407, %v5408
    %v5451 = vsel %vm5422, %v5366, %v5450
    %v5452 = vsel %vm414, %v5408, %v5409
    %v5453 = vsel %vm5422, %v5368, %v5452
    %v5454 = vsel %vm414, %v5409, %v5410
    %v5455 = vsel %vm5422, %v5370, %v5454
    %v5456 = vsel %vm414, %v5410, %v5411
    %v5457 = vsel %vm5422, %v5372, %v5456
    %v5458 = vsel %vm414, %v5411, %v5412
    %v5459 = vsel %vm5422, %v5374, %v5458
    %v5460 = vsel %vm414, %v5412, %v5413
    %v5461 = vsel %vm5422, %v5376, %v5460
    %v5462 = vsel %vm414, %v5413, %v5414
    %v5463 = vsel %vm5422, %v5378, %v5462
    %v5464 = vsel %vm414, %v5414, %v5415
    %v5465 = vsel %vm5422, %v5380, %v5464
    %v5466 = vsel %vm414, %v5415, %v5416
    %v5467 = vsel %vm5422, %v5382, %v5466
    %v5468 = vsel %vm414, %v5416, %v5417
    %v5469 = vsel %vm5422, %v5384, %v5468
    %v5470 = vsel %vm414, %v5417, %v5418
    %v5471 = vsel %vm5422, %v5386, %v5470
    %v5472 = vsel %vm414, %v5418, %v5419
    %v5473 = vsel %vm5422, %v5388, %v5472
    %v5474 = vsel %vm414, %v5419, %v5420
    %v5475 = vsel %vm5422, %v5390, %v5474
    %5503 = vst [vmem:[#allocation3 + $0x798] sm:$0x33] %v5423
    %5504 = vst [vmem:[#allocation3 + $0x7a0] sm:$0x33] %v5425
    %5505 = vst [vmem:[#allocation3 + $0x7a8] sm:$0x33] %v5427
    %5506 = vst [vmem:[#allocation3 + $0x7b0] sm:$0x33] %v5429
    %5507 = vst [vmem:[#allocation3 + $0x7b8] sm:$0x33] %v5431
    %5508 = vst [vmem:[#allocation3 + $0x7c0] sm:$0x33] %v5433
    %5509 = vst [vmem:[#allocation3 + $0x7c8] sm:$0x33] %v5435
    %5510 = vst [vmem:[#allocation3 + $0x7d0] sm:$0x33] %v5437
    %5511 = vst [vmem:[#allocation3 + $0x7d8] sm:$0x33] %v5439
    %5512 = vst [vmem:[#allocation3 + $0x7e0] sm:$0x33] %v5441
    %5513 = vst [vmem:[#allocation3 + $0x7e8] sm:$0x33] %v5443
    %5514 = vst [vmem:[#allocation3 + $0x7f0] sm:$0x33] %v5445
    %5515 = vst [vmem:[#allocation3 + $0x7f8] sm:$0x33] %v5447
    %5516 = vst [vmem:[#allocation3 + $0x800] sm:$0x33] %v5449
    %5517 = vst [vmem:[#allocation3 + $0x808] sm:$0x33] %v5451
    %5518 = vst [vmem:[#allocation3 + $0x810] sm:$0x33] %v5453
    %5519 = vst [vmem:[#allocation3 + $0x818] sm:$0x33] %v5455
    %5520 = vst [vmem:[#allocation3 + $0x820] sm:$0x33] %v5457
    %5521 = vst [vmem:[#allocation3 + $0x828] sm:$0x33] %v5459
    %5522 = vst [vmem:[#allocation3 + $0x830] sm:$0x33] %v5461
    %5523 = vst [vmem:[#allocation3 + $0x838] sm:$0x33] %v5463
    %5524 = vst [vmem:[#allocation3 + $0x840] sm:$0x33] %v5465
    %5525 = vst [vmem:[#allocation3 + $0x848] sm:$0x33] %v5467
    %5526 = vst [vmem:[#allocation3 + $0x850] sm:$0x33] %v5469
    %5527 = vst [vmem:[#allocation3 + $0x858] sm:$0x33] %v5471
    %5528 = vst [vmem:[#allocation3 + $0x860] sm:$0x33] %v5473
    %5529 = vst [vmem:[#allocation3 + $0x868] sm:$0x33] %v5475
    %v5530 = vld [vmem:[#allocation2 + $0xa] sm:$0xff]
    %v5531 = vld [vmem:[#allocation2 + $0x12] sm:$0xff]
    %v5532 = vld [vmem:[#allocation2 + $0x1a] sm:$0xff]
    %v5533 = vld [vmem:[#allocation2 + $0x22] sm:$0xff]
    %v5534 = vld [vmem:[#allocation2 + $0x2a] sm:$0xff]
    %v5535 = vld [vmem:[#allocation2 + $0x32] sm:$0xff]
    %v5536 = vld [vmem:[#allocation2 + $0x3a] sm:$0xff]
    %v5537 = vld [vmem:[#allocation2 + $0x42] sm:$0xff]
    %v5538 = vld [vmem:[#allocation2 + $0x4a] sm:$0xff]
    %v5539 = vld [vmem:[#allocation2 + $0x52] sm:$0xff]
    %v5540 = vld [vmem:[#allocation2 + $0x5a] sm:$0xff]
    %v5541 = vld [vmem:[#allocation2 + $0x62] sm:$0xff]
    %v5542 = vld [vmem:[#allocation2 + $0x6a] sm:$0xff]
    %v5543 = vld [vmem:[#allocation2 + $0x72] sm:$0x3f]
    %s5545 = scalar_lea.vmem [#allocation1], 1
    %5546 = vst [vmem:[%s5545] ss:$2 sm:$0xff] %v5530
    %s5548 = scalar_lea.vmem [#allocation1], 17
    %5549 = vst [vmem:[%s5548] ss:$2 sm:$0xff] %v5531
    %s5551 = scalar_lea.vmem [#allocation1], 33
    %5552 = vst [vmem:[%s5551] ss:$2 sm:$0xff] %v5532
    %s5554 = scalar_lea.vmem [#allocation1], 49
    %5555 = vst [vmem:[%s5554] ss:$2 sm:$0xff] %v5533
    %v5556 = vld.sshfl [vmem:[#allocation1] sm:$0xff pattern:$0x75643120]
    %v5558 = vld.sshfl [vmem:[#allocation1 + $0x8] sm:$0xff pattern:$0x75643120]
    %v5560 = vld.sshfl [vmem:[#allocation1 + $0x10] sm:$0xff pattern:$0x75643120]
    %v5562 = vld.sshfl [vmem:[#allocation1 + $0x18] sm:$0xff pattern:$0x75643120]
    %v5564 = vld.sshfl [vmem:[#allocation1 + $0x20] sm:$0xff pattern:$0x75643120]
    %v5566 = vld.sshfl [vmem:[#allocation1 + $0x28] sm:$0xff pattern:$0x75643120]
    %v5568 = vld.sshfl [vmem:[#allocation1 + $0x30] sm:$0xff pattern:$0x75643120]
    %v5570 = vld.sshfl [vmem:[#allocation1 + $0x38] sm:$0xff pattern:$0x75643120]
    %5573 = vst [vmem:[%s5545] ss:$2 sm:$0xff] %v5534
    %5575 = vst [vmem:[%s5548] ss:$2 sm:$0xff] %v5535
    %5577 = vst [vmem:[%s5551] ss:$2 sm:$0xff] %v5536
    %5579 = vst [vmem:[%s5554] ss:$2 sm:$0xff] %v5537
    %v5580 = vld.sshfl [vmem:[#allocation1] sm:$0xff pattern:$0x75643120]
    %v5582 = vld.sshfl [vmem:[#allocation1 + $0x8] sm:$0xff pattern:$0x75643120]
    %v5584 = vld.sshfl [vmem:[#allocation1 + $0x10] sm:$0xff pattern:$0x75643120]
    %v5586 = vld.sshfl [vmem:[#allocation1 + $0x18] sm:$0xff pattern:$0x75643120]
    %v5588 = vld.sshfl [vmem:[#allocation1 + $0x20] sm:$0xff pattern:$0x75643120]
    %v5590 = vld.sshfl [vmem:[#allocation1 + $0x28] sm:$0xff pattern:$0x75643120]
    %v5592 = vld.sshfl [vmem:[#allocation1 + $0x30] sm:$0xff pattern:$0x75643120]
    %v5594 = vld.sshfl [vmem:[#allocation1 + $0x38] sm:$0xff pattern:$0x75643120]
    %5597 = vst [vmem:[%s5545] ss:$2 sm:$0xff] %v5538
    %5599 = vst [vmem:[%s5548] ss:$2 sm:$0xff] %v5539
    %5601 = vst [vmem:[%s5551] ss:$2 sm:$0xff] %v5540
    %5603 = vst [vmem:[%s5554] ss:$2 sm:$0xff] %v5541
    %v5604 = vld.sshfl [vmem:[#allocation1] sm:$0xff pattern:$0x75643120]
    %v5606 = vld.sshfl [vmem:[#allocation1 + $0x8] sm:$0xff pattern:$0x75643120]
    %v5608 = vld.sshfl [vmem:[#allocation1 + $0x10] sm:$0xff pattern:$0x75643120]
    %v5610 = vld.sshfl [vmem:[#allocation1 + $0x18] sm:$0xff pattern:$0x75643120]
    %v5612 = vld.sshfl [vmem:[#allocation1 + $0x20] sm:$0xff pattern:$0x75643120]
    %v5614 = vld.sshfl [vmem:[#allocation1 + $0x28] sm:$0xff pattern:$0x75643120]
    %v5616 = vld.sshfl [vmem:[#allocation1 + $0x30] sm:$0xff pattern:$0x75643120]
    %v5618 = vld.sshfl [vmem:[#allocation1 + $0x38] sm:$0xff pattern:$0x75643120]
    %5621 = vst [vmem:[%s5545] ss:$2 sm:$0xff] %v5542
    %5623 = vst [vmem:[%s5548] ss:$2 sm:$0xff] %v5543
    %v5624 = vld.sshfl [vmem:[#allocation1] sm:$0xff pattern:$0x75643120]
    %v5626 = vld.sshfl [vmem:[#allocation1 + $0x8] sm:$0xff pattern:$0x75643120]
    %v5628 = vld.sshfl [vmem:[#allocation1 + $0x10] sm:$0xff pattern:$0x75643120]
    %v5630 = vld.sshfl [vmem:[#allocation1 + $0x18] sm:$0xff pattern:$0x75643120]
    %5632 = vrot.lane.b32.xlu0 %v5556, 119
    %v5633 = vpop.permute.xlu0 %5632
    %5634 = vrot.lane.b32.xlu0 %v5558, 119
    %v5635 = vpop.permute.xlu0 %5634
    %5636 = vrot.lane.b32.xlu0 %v5560, 119
    %v5637 = vpop.permute.xlu0 %5636
    %5638 = vrot.lane.b32.xlu0 %v5562, 119
    %v5639 = vpop.permute.xlu0 %5638
    %5640 = vrot.lane.b32.xlu0 %v5564, 119
    %v5641 = vpop.permute.xlu0 %5640
    %5642 = vrot.lane.b32.xlu0 %v5566, 119
    %v5643 = vpop.permute.xlu0 %5642
    %5644 = vrot.lane.b32.xlu0 %v5568, 119
    %v5645 = vpop.permute.xlu0 %5644
    %5646 = vrot.lane.b32.xlu0 %v5570, 119
    %v5647 = vpop.permute.xlu0 %5646
    %5648 = vrot.lane.b32.xlu0 %v5580, 119
    %v5649 = vpop.permute.xlu0 %5648
    %5650 = vrot.lane.b32.xlu0 %v5582, 119
    %v5651 = vpop.permute.xlu0 %5650
    %5652 = vrot.lane.b32.xlu0 %v5584, 119
    %v5653 = vpop.permute.xlu0 %5652
    %5654 = vrot.lane.b32.xlu0 %v5586, 119
    %v5655 = vpop.permute.xlu0 %5654
    %5656 = vrot.lane.b32.xlu0 %v5588, 119
    %v5657 = vpop.permute.xlu0 %5656
    %5658 = vrot.lane.b32.xlu0 %v5590, 119
    %v5659 = vpop.permute.xlu0 %5658
    %5660 = vrot.lane.b32.xlu0 %v5592, 119
    %v5661 = vpop.permute.xlu0 %5660
    %5662 = vrot.lane.b32.xlu0 %v5594, 119
    %v5663 = vpop.permute.xlu0 %5662
    %5664 = vrot.lane.b32.xlu0 %v5604, 119
    %v5665 = vpop.permute.xlu0 %5664
    %5666 = vrot.lane.b32.xlu0 %v5606, 119
    %v5667 = vpop.permute.xlu0 %5666
    %5668 = vrot.lane.b32.xlu0 %v5608, 119
    %v5669 = vpop.permute.xlu0 %5668
    %5670 = vrot.lane.b32.xlu0 %v5610, 119
    %v5671 = vpop.permute.xlu0 %5670
    %5672 = vrot.lane.b32.xlu0 %v5612, 119
    %v5673 = vpop.permute.xlu0 %5672
    %5674 = vrot.lane.b32.xlu0 %v5614, 119
    %v5675 = vpop.permute.xlu0 %5674
    %5676 = vrot.lane.b32.xlu0 %v5616, 119
    %v5677 = vpop.permute.xlu0 %5676
    %5678 = vrot.lane.b32.xlu0 %v5618, 119
    %v5679 = vpop.permute.xlu0 %5678
    %5680 = vrot.lane.b32.xlu0 %v5624, 119
    %v5681 = vpop.permute.xlu0 %5680
    %5682 = vrot.lane.b32.xlu0 %v5626, 119
    %v5683 = vpop.permute.xlu0 %5682
    %5684 = vrot.lane.b32.xlu0 %v5628, 119
    %v5685 = vpop.permute.xlu0 %5684
    %5686 = vrot.lane.b32.xlu0 %v5630, 119
    %v5687 = vpop.permute.xlu0 %5686
    %v5688 = vrot.slane %v5633, 4
    %v5689 = vrot.slane %v5635, 4
    %v5690 = vrot.slane %v5637, 4
    %v5691 = vrot.slane %v5639, 4
    %v5692 = vrot.slane %v5641, 4
    %v5693 = vrot.slane %v5643, 4
    %v5694 = vrot.slane %v5645, 4
    %v5695 = vrot.slane %v5647, 4
    %v5696 = vrot.slane %v5649, 4
    %v5697 = vrot.slane %v5651, 4
    %v5698 = vrot.slane %v5653, 4
    %v5699 = vrot.slane %v5655, 4
    %v5700 = vrot.slane %v5657, 4
    %v5701 = vrot.slane %v5659, 4
    %v5702 = vrot.slane %v5661, 4
    %v5703 = vrot.slane %v5663, 4
    %v5704 = vrot.slane %v5665, 4
    %v5705 = vrot.slane %v5667, 4
    %v5706 = vrot.slane %v5669, 4
    %v5707 = vrot.slane %v5671, 4
    %v5708 = vrot.slane %v5673, 4
    %v5709 = vrot.slane %v5675, 4
    %v5710 = vrot.slane %v5677, 4
    %v5711 = vrot.slane %v5679, 4
    %v5712 = vrot.slane %v5681, 4
    %v5713 = vrot.slane %v5683, 4
    %v5714 = vrot.slane %v5685, 4
    %v5715 = vrot.slane %v5687, 4
    %v5716 = vsel %vm414, %v5688, %v5689
    %vm5717 = vcmask 973824
    %v5718 = vsel %vm5717, %v5633, %v5716
    %v5719 = vsel %vm414, %v5689, %v5690
    %v5720 = vsel %vm5717, %v5635, %v5719
    %v5721 = vsel %vm414, %v5690, %v5691
    %v5722 = vsel %vm5717, %v5637, %v5721
    %v5723 = vsel %vm414, %v5691, %v5692
    %v5724 = vsel %vm5717, %v5639, %v5723
    %v5725 = vsel %vm414, %v5692, %v5693
    %v5726 = vsel %vm5717, %v5641, %v5725
    %v5727 = vsel %vm414, %v5693, %v5694
    %v5728 = vsel %vm5717, %v5643, %v5727
    %v5729 = vsel %vm414, %v5694, %v5695
    %v5730 = vsel %vm5717, %v5645, %v5729
    %v5731 = vsel %vm414, %v5695, %v5696
    %v5732 = vsel %vm5717, %v5647, %v5731
    %v5733 = vsel %vm414, %v5696, %v5697
    %v5734 = vsel %vm5717, %v5649, %v5733
    %v5735 = vsel %vm414, %v5697, %v5698
    %v5736 = vsel %vm5717, %v5651, %v5735
    %v5737 = vsel %vm414, %v5698, %v5699
    %v5738 = vsel %vm5717, %v5653, %v5737
    %v5739 = vsel %vm414, %v5699, %v5700
    %v5740 = vsel %vm5717, %v5655, %v5739
    %v5741 = vsel %vm414, %v5700, %v5701
    %v5742 = vsel %vm5717, %v5657, %v5741
    %v5743 = vsel %vm414, %v5701, %v5702
    %v5744 = vsel %vm5717, %v5659, %v5743
    %v5745 = vsel %vm414, %v5702, %v5703
    %v5746 = vsel %vm5717, %v5661, %v5745
    %v5747 = vsel %vm414, %v5703, %v5704
    %v5748 = vsel %vm5717, %v5663, %v5747
    %v5749 = vsel %vm414, %v5704, %v5705
    %v5750 = vsel %vm5717, %v5665, %v5749
    %v5751 = vsel %vm414, %v5705, %v5706
    %v5752 = vsel %vm5717, %v5667, %v5751
    %v5753 = vsel %vm414, %v5706, %v5707
    %v5754 = vsel %vm5717, %v5669, %v5753
    %v5755 = vsel %vm414, %v5707, %v5708
    %v5756 = vsel %vm5717, %v5671, %v5755
    %v5757 = vsel %vm414, %v5708, %v5709
    %v5758 = vsel %vm5717, %v5673, %v5757
    %v5759 = vsel %vm414, %v5709, %v5710
    %v5760 = vsel %vm5717, %v5675, %v5759
    %v5761 = vsel %vm414, %v5710, %v5711
    %v5762 = vsel %vm5717, %v5677, %v5761
    %v5763 = vsel %vm414, %v5711, %v5712
    %v5764 = vsel %vm5717, %v5679, %v5763
    %v5765 = vsel %vm414, %v5712, %v5713
    %v5766 = vsel %vm5717, %v5681, %v5765
    %v5767 = vsel %vm414, %v5713, %v5714
    %v5768 = vsel %vm5717, %v5683, %v5767
    %v5769 = vsel %vm414, %v5714, %v5715
    %v5770 = vsel %vm5717, %v5685, %v5769
    %5798 = vst [vmem:[#allocation3 + $0x798] sm:$0xcc] %v5718
    %5799 = vst [vmem:[#allocation3 + $0x7a0] sm:$0xcc] %v5720
    %5800 = vst [vmem:[#allocation3 + $0x7a8] sm:$0xcc] %v5722
    %5801 = vst [vmem:[#allocation3 + $0x7b0] sm:$0xcc] %v5724
    %5802 = vst [vmem:[#allocation3 + $0x7b8] sm:$0xcc] %v5726
    %5803 = vst [vmem:[#allocation3 + $0x7c0] sm:$0xcc] %v5728
    %5804 = vst [vmem:[#allocation3 + $0x7c8] sm:$0xcc] %v5730
    %5805 = vst [vmem:[#allocation3 + $0x7d0] sm:$0xcc] %v5732
    %5806 = vst [vmem:[#allocation3 + $0x7d8] sm:$0xcc] %v5734
    %5807 = vst [vmem:[#allocation3 + $0x7e0] sm:$0xcc] %v5736
    %5808 = vst [vmem:[#allocation3 + $0x7e8] sm:$0xcc] %v5738
    %5809 = vst [vmem:[#allocation3 + $0x7f0] sm:$0xcc] %v5740
    %5810 = vst [vmem:[#allocation3 + $0x7f8] sm:$0xcc] %v5742
    %5811 = vst [vmem:[#allocation3 + $0x800] sm:$0xcc] %v5744
    %5812 = vst [vmem:[#allocation3 + $0x808] sm:$0xcc] %v5746
    %5813 = vst [vmem:[#allocation3 + $0x810] sm:$0xcc] %v5748
    %5814 = vst [vmem:[#allocation3 + $0x818] sm:$0xcc] %v5750
    %5815 = vst [vmem:[#allocation3 + $0x820] sm:$0xcc] %v5752
    %5816 = vst [vmem:[#allocation3 + $0x828] sm:$0xcc] %v5754
    %5817 = vst [vmem:[#allocation3 + $0x830] sm:$0xcc] %v5756
    %5818 = vst [vmem:[#allocation3 + $0x838] sm:$0xcc] %v5758
    %5819 = vst [vmem:[#allocation3 + $0x840] sm:$0xcc] %v5760
    %5820 = vst [vmem:[#allocation3 + $0x848] sm:$0xcc] %v5762
    %5821 = vst [vmem:[#allocation3 + $0x850] sm:$0xcc] %v5764
    %5822 = vst [vmem:[#allocation3 + $0x858] sm:$0xcc] %v5766
    %5823 = vst [vmem:[#allocation3 + $0x860] sm:$0xcc] %v5768
    %5824 = vst [vmem:[#allocation3 + $0x868] sm:$0xcc] %v5770
    %v5825 = vld [vmem:[#allocation2 + $0xa] sm:$0xff]
    %v5826 = vld [vmem:[#allocation2 + $0x12] sm:$0xff]
    %v5827 = vld [vmem:[#allocation2 + $0x1a] sm:$0xff]
    %v5828 = vld [vmem:[#allocation2 + $0x22] sm:$0xff]
    %v5829 = vld [vmem:[#allocation2 + $0x2a] sm:$0xff]
    %v5830 = vld [vmem:[#allocation2 + $0x32] sm:$0xff]
    %v5831 = vld [vmem:[#allocation2 + $0x3a] sm:$0xff]
    %v5832 = vld [vmem:[#allocation2 + $0x42] sm:$0xff]
    %v5833 = vld [vmem:[#allocation2 + $0x4a] sm:$0xff]
    %v5834 = vld [vmem:[#allocation2 + $0x52] sm:$0xff]
    %v5835 = vld [vmem:[#allocation2 + $0x5a] sm:$0xff]
    %v5836 = vld [vmem:[#allocation2 + $0x62] sm:$0xff]
    %v5837 = vld [vmem:[#allocation2 + $0x6a] sm:$0xff]
    %v5838 = vld [vmem:[#allocation2 + $0x72] sm:$0x3f]
    %5840 = vst [vmem:[#allocation1] ss:$2 sm:$0xff] %v5825
    %s5842 = scalar_lea.vmem [#allocation1], 16
    %5843 = vst [vmem:[%s5842] ss:$2 sm:$0xff] %v5826
    %s5845 = scalar_lea.vmem [#allocation1], 32
    %5846 = vst [vmem:[%s5845] ss:$2 sm:$0xff] %v5827
    %s5848 = scalar_lea.vmem [#allocation1], 48
    %5849 = vst [vmem:[%s5848] ss:$2 sm:$0xff] %v5828
    %v5850 = vld.sshfl [vmem:[#allocation1] sm:$0xff pattern:$0x75643120]
    %v5852 = vld.sshfl [vmem:[#allocation1 + $0x8] sm:$0xff pattern:$0x75643120]
    %v5854 = vld.sshfl [vmem:[#allocation1 + $0x10] sm:$0xff pattern:$0x75643120]
    %v5856 = vld.sshfl [vmem:[#allocation1 + $0x18] sm:$0xff pattern:$0x75643120]
    %v5858 = vld.sshfl [vmem:[#allocation1 + $0x20] sm:$0xff pattern:$0x75643120]
    %v5860 = vld.sshfl [vmem:[#allocation1 + $0x28] sm:$0xff pattern:$0x75643120]
    %v5862 = vld.sshfl [vmem:[#allocation1 + $0x30] sm:$0xff pattern:$0x75643120]
    %v5864 = vld.sshfl [vmem:[#allocation1 + $0x38] sm:$0xff pattern:$0x75643120]
    %5867 = vst [vmem:[#allocation1] ss:$2 sm:$0xff] %v5829
    %5869 = vst [vmem:[%s5842] ss:$2 sm:$0xff] %v5830
    %5871 = vst [vmem:[%s5845] ss:$2 sm:$0xff] %v5831
    %5873 = vst [vmem:[%s5848] ss:$2 sm:$0xff] %v5832
    %v5874 = vld.sshfl [vmem:[#allocation1] sm:$0xff pattern:$0x75643120]
    %v5876 = vld.sshfl [vmem:[#allocation1 + $0x8] sm:$0xff pattern:$0x75643120]
    %v5878 = vld.sshfl [vmem:[#allocation1 + $0x10] sm:$0xff pattern:$0x75643120]
    %v5880 = vld.sshfl [vmem:[#allocation1 + $0x18] sm:$0xff pattern:$0x75643120]
    %v5882 = vld.sshfl [vmem:[#allocation1 + $0x20] sm:$0xff pattern:$0x75643120]
    %v5884 = vld.sshfl [vmem:[#allocation1 + $0x28] sm:$0xff pattern:$0x75643120]
    %v5886 = vld.sshfl [vmem:[#allocation1 + $0x30] sm:$0xff pattern:$0x75643120]
    %v5888 = vld.sshfl [vmem:[#allocation1 + $0x38] sm:$0xff pattern:$0x75643120]
    %5891 = vst [vmem:[#allocation1] ss:$2 sm:$0xff] %v5833
    %5893 = vst [vmem:[%s5842] ss:$2 sm:$0xff] %v5834
    %5895 = vst [vmem:[%s5845] ss:$2 sm:$0xff] %v5835
    %5897 = vst [vmem:[%s5848] ss:$2 sm:$0xff] %v5836
    %v5898 = vld.sshfl [vmem:[#allocation1] sm:$0xff pattern:$0x75643120]
    %v5900 = vld.sshfl [vmem:[#allocation1 + $0x8] sm:$0xff pattern:$0x75643120]
    %v5902 = vld.sshfl [vmem:[#allocation1 + $0x10] sm:$0xff pattern:$0x75643120]
    %v5904 = vld.sshfl [vmem:[#allocation1 + $0x18] sm:$0xff pattern:$0x75643120]
    %v5906 = vld.sshfl [vmem:[#allocation1 + $0x20] sm:$0xff pattern:$0x75643120]
    %v5908 = vld.sshfl [vmem:[#allocation1 + $0x28] sm:$0xff pattern:$0x75643120]
    %v5910 = vld.sshfl [vmem:[#allocation1 + $0x30] sm:$0xff pattern:$0x75643120]
    %v5912 = vld.sshfl [vmem:[#allocation1 + $0x38] sm:$0xff pattern:$0x75643120]
    %5915 = vst [vmem:[#allocation1] ss:$2 sm:$0xff] %v5837
    %5917 = vst [vmem:[%s5842] ss:$2 sm:$0xff] %v5838
    %v5918 = vld.sshfl [vmem:[#allocation1] sm:$0xff pattern:$0x75643120]
    %v5920 = vld.sshfl [vmem:[#allocation1 + $0x8] sm:$0xff pattern:$0x75643120]
    %v5922 = vld.sshfl [vmem:[#allocation1 + $0x10] sm:$0xff pattern:$0x75643120]
    %v5924 = vld.sshfl [vmem:[#allocation1 + $0x18] sm:$0xff pattern:$0x75643120]
    %5926 = vrot.lane.b32.xlu0 %v5850, 118
    %v5927 = vpop.permute.xlu0 %5926
    %5928 = vrot.lane.b32.xlu0 %v5852, 118
    %v5929 = vpop.permute.xlu0 %5928
    %5930 = vrot.lane.b32.xlu0 %v5854, 118
    %v5931 = vpop.permute.xlu0 %5930
    %5932 = vrot.lane.b32.xlu0 %v5856, 118
    %v5933 = vpop.permute.xlu0 %5932
    %5934 = vrot.lane.b32.xlu0 %v5858, 118
    %v5935 = vpop.permute.xlu0 %5934
    %5936 = vrot.lane.b32.xlu0 %v5860, 118
    %v5937 = vpop.permute.xlu0 %5936
    %5938 = vrot.lane.b32.xlu0 %v5862, 118
    %v5939 = vpop.permute.xlu0 %5938
    %5940 = vrot.lane.b32.xlu0 %v5864, 118
    %v5941 = vpop.permute.xlu0 %5940
    %5942 = vrot.lane.b32.xlu0 %v5874, 118
    %v5943 = vpop.permute.xlu0 %5942
    %5944 = vrot.lane.b32.xlu0 %v5876, 118
    %v5945 = vpop.permute.xlu0 %5944
    %5946 = vrot.lane.b32.xlu0 %v5878, 118
    %v5947 = vpop.permute.xlu0 %5946
    %5948 = vrot.lane.b32.xlu0 %v5880, 118
    %v5949 = vpop.permute.xlu0 %5948
    %5950 = vrot.lane.b32.xlu0 %v5882, 118
    %v5951 = vpop.permute.xlu0 %5950
    %5952 = vrot.lane.b32.xlu0 %v5884, 118
    %v5953 = vpop.permute.xlu0 %5952
    %5954 = vrot.lane.b32.xlu0 %v5886, 118
    %v5955 = vpop.permute.xlu0 %5954
    %5956 = vrot.lane.b32.xlu0 %v5888, 118
    %v5957 = vpop.permute.xlu0 %5956
    %5958 = vrot.lane.b32.xlu0 %v5898, 118
    %v5959 = vpop.permute.xlu0 %5958
    %5960 = vrot.lane.b32.xlu0 %v5900, 118
    %v5961 = vpop.permute.xlu0 %5960
    %5962 = vrot.lane.b32.xlu0 %v5902, 118
    %v5963 = vpop.permute.xlu0 %5962
    %5964 = vrot.lane.b32.xlu0 %v5904, 118
    %v5965 = vpop.permute.xlu0 %5964
    %5966 = vrot.lane.b32.xlu0 %v5906, 118
    %v5967 = vpop.permute.xlu0 %5966
    %5968 = vrot.lane.b32.xlu0 %v5908, 118
    %v5969 = vpop.permute.xlu0 %5968
    %5970 = vrot.lane.b32.xlu0 %v5910, 118
    %v5971 = vpop.permute.xlu0 %5970
    %5972 = vrot.lane.b32.xlu0 %v5912, 118
    %v5973 = vpop.permute.xlu0 %5972
    %5974 = vrot.lane.b32.xlu0 %v5918, 118
    %v5975 = vpop.permute.xlu0 %5974
    %5976 = vrot.lane.b32.xlu0 %v5920, 118
    %v5977 = vpop.permute.xlu0 %5976
    %5978 = vrot.lane.b32.xlu0 %v5922, 118
    %v5979 = vpop.permute.xlu0 %5978
    %5980 = vrot.lane.b32.xlu0 %v5924, 118
    %v5981 = vpop.permute.xlu0 %5980
    %v5982 = vrot.slane %v5927, 4
    %v5983 = vrot.slane %v5929, 4
    %v5984 = vrot.slane %v5931, 4
    %v5985 = vrot.slane %v5933, 4
    %v5986 = vrot.slane %v5935, 4
    %v5987 = vrot.slane %v5937, 4
    %v5988 = vrot.slane %v5939, 4
    %v5989 = vrot.slane %v5941, 4
    %v5990 = vrot.slane %v5943, 4
    %v5991 = vrot.slane %v5945, 4
    %v5992 = vrot.slane %v5947, 4
    %v5993 = vrot.slane %v5949, 4
    %v5994 = vrot.slane %v5951, 4
    %v5995 = vrot.slane %v5953, 4
    %v5996 = vrot.slane %v5955, 4
    %v5997 = vrot.slane %v5957, 4
    %v5998 = vrot.slane %v5959, 4
    %v5999 = vrot.slane %v5961, 4
    %v6000 = vrot.slane %v5963, 4
    %v6001 = vrot.slane %v5965, 4
    %v6002 = vrot.slane %v5967, 4
    %v6003 = vrot.slane %v5969, 4
    %v6004 = vrot.slane %v5971, 4
    %v6005 = vrot.slane %v5973, 4
    %v6006 = vrot.slane %v5975, 4
    %v6007 = vrot.slane %v5977, 4
    %v6008 = vrot.slane %v5979, 4
    %v6009 = vrot.slane %v5981, 4
    %v6010 = vsel %vm414, %v5982, %v5983
    %vm6011 = vcmask 965632
    %v6012 = vsel %vm6011, %v5927, %v6010
    %v6013 = vsel %vm414, %v5983, %v5984
    %v6014 = vsel %vm6011, %v5929, %v6013
    %v6015 = vsel %vm414, %v5984, %v5985
    %v6016 = vsel %vm6011, %v5931, %v6015
    %v6017 = vsel %vm414, %v5985, %v5986
    %v6018 = vsel %vm6011, %v5933, %v6017
    %v6019 = vsel %vm414, %v5986, %v5987
    %v6020 = vsel %vm6011, %v5935, %v6019
    %v6021 = vsel %vm414, %v5987, %v5988
    %v6022 = vsel %vm6011, %v5937, %v6021
    %v6023 = vsel %vm414, %v5988, %v5989
    %v6024 = vsel %vm6011, %v5939, %v6023
    %v6025 = vsel %vm414, %v5989, %v5990
    %v6026 = vsel %vm6011, %v5941, %v6025
    %v6027 = vsel %vm414, %v5990, %v5991
    %v6028 = vsel %vm6011, %v5943, %v6027
    %v6029 = vsel %vm414, %v5991, %v5992
    %v6030 = vsel %vm6011, %v5945, %v6029
    %v6031 = vsel %vm414, %v5992, %v5993
    %v6032 = vsel %vm6011, %v5947, %v6031
    %v6033 = vsel %vm414, %v5993, %v5994
    %v6034 = vsel %vm6011, %v5949, %v6033
    %v6035 = vsel %vm414, %v5994, %v5995
    %v6036 = vsel %vm6011, %v5951, %v6035
    %v6037 = vsel %vm414, %v5995, %v5996
    %v6038 = vsel %vm6011, %v5953, %v6037
    %v6039 = vsel %vm414, %v5996, %v5997
    %v6040 = vsel %vm6011, %v5955, %v6039
    %v6041 = vsel %vm414, %v5997, %v5998
    %v6042 = vsel %vm6011, %v5957, %v6041
    %v6043 = vsel %vm414, %v5998, %v5999
    %v6044 = vsel %vm6011, %v5959, %v6043
    %v6045 = vsel %vm414, %v5999, %v6000
    %v6046 = vsel %vm6011, %v5961, %v6045
    %v6047 = vsel %vm414, %v6000, %v6001
    %v6048 = vsel %vm6011, %v5963, %v6047
    %v6049 = vsel %vm414, %v6001, %v6002
    %v6050 = vsel %vm6011, %v5965, %v6049
    %v6051 = vsel %vm414, %v6002, %v6003
    %v6052 = vsel %vm6011, %v5967, %v6051
    %v6053 = vsel %vm414, %v6003, %v6004
    %v6054 = vsel %vm6011, %v5969, %v6053
    %v6055 = vsel %vm414, %v6004, %v6005
    %v6056 = vsel %vm6011, %v5971, %v6055
    %v6057 = vsel %vm414, %v6005, %v6006
    %v6058 = vsel %vm6011, %v5973, %v6057
    %v6059 = vsel %vm414, %v6006, %v6007
    %v6060 = vsel %vm6011, %v5975, %v6059
    %v6061 = vsel %vm414, %v6007, %v6008
    %v6062 = vsel %vm6011, %v5977, %v6061
    %v6063 = vsel %vm414, %v6008, %v6009
    %v6064 = vsel %vm6011, %v5979, %v6063
    %6092 = vst [vmem:[#allocation3 + $0x870] sm:$0x33] %v6012
    %6093 = vst [vmem:[#allocation3 + $0x878] sm:$0x33] %v6014
    %6094 = vst [vmem:[#allocation3 + $0x880] sm:$0x33] %v6016
    %6095 = vst [vmem:[#allocation3 + $0x888] sm:$0x33] %v6018
    %6096 = vst [vmem:[#allocation3 + $0x890] sm:$0x33] %v6020
    %6097 = vst [vmem:[#allocation3 + $0x898] sm:$0x33] %v6022
    %6098 = vst [vmem:[#allocation3 + $0x8a0] sm:$0x33] %v6024
    %6099 = vst [vmem:[#allocation3 + $0x8a8] sm:$0x33] %v6026
    %6100 = vst [vmem:[#allocation3 + $0x8b0] sm:$0x33] %v6028
    %6101 = vst [vmem:[#allocation3 + $0x8b8] sm:$0x33] %v6030
    %6102 = vst [vmem:[#allocation3 + $0x8c0] sm:$0x33] %v6032
    %6103 = vst [vmem:[#allocation3 + $0x8c8] sm:$0x33] %v6034
    %6104 = vst [vmem:[#allocation3 + $0x8d0] sm:$0x33] %v6036
    %6105 = vst [vmem:[#allocation3 + $0x8d8] sm:$0x33] %v6038
    %6106 = vst [vmem:[#allocation3 + $0x8e0] sm:$0x33] %v6040
    %6107 = vst [vmem:[#allocation3 + $0x8e8] sm:$0x33] %v6042
    %6108 = vst [vmem:[#allocation3 + $0x8f0] sm:$0x33] %v6044
    %6109 = vst [vmem:[#allocation3 + $0x8f8] sm:$0x33] %v6046
    %6110 = vst [vmem:[#allocation3 + $0x900] sm:$0x33] %v6048
    %6111 = vst [vmem:[#allocation3 + $0x908] sm:$0x33] %v6050
    %6112 = vst [vmem:[#allocation3 + $0x910] sm:$0x33] %v6052
    %6113 = vst [vmem:[#allocation3 + $0x918] sm:$0x33] %v6054
    %6114 = vst [vmem:[#allocation3 + $0x920] sm:$0x33] %v6056
    %6115 = vst [vmem:[#allocation3 + $0x928] sm:$0x33] %v6058
    %6116 = vst [vmem:[#allocation3 + $0x930] sm:$0x33] %v6060
    %6117 = vst [vmem:[#allocation3 + $0x938] sm:$0x33] %v6062
    %6118 = vst [vmem:[#allocation3 + $0x940] sm:$0x33] %v6064
    %v6119 = vld [vmem:[#allocation2 + $0xa] sm:$0xff]
    %v6120 = vld [vmem:[#allocation2 + $0x12] sm:$0xff]
    %v6121 = vld [vmem:[#allocation2 + $0x1a] sm:$0xff]
    %v6122 = vld [vmem:[#allocation2 + $0x22] sm:$0xff]
    %v6123 = vld [vmem:[#allocation2 + $0x2a] sm:$0xff]
    %v6124 = vld [vmem:[#allocation2 + $0x32] sm:$0xff]
    %v6125 = vld [vmem:[#allocation2 + $0x3a] sm:$0xff]
    %v6126 = vld [vmem:[#allocation2 + $0x42] sm:$0xff]
    %v6127 = vld [vmem:[#allocation2 + $0x4a] sm:$0xff]
    %v6128 = vld [vmem:[#allocation2 + $0x52] sm:$0xff]
    %v6129 = vld [vmem:[#allocation2 + $0x5a] sm:$0xff]
    %v6130 = vld [vmem:[#allocation2 + $0x62] sm:$0xff]
    %v6131 = vld [vmem:[#allocation2 + $0x6a] sm:$0xff]
    %v6132 = vld [vmem:[#allocation2 + $0x72] sm:$0x3f]
    %s6134 = scalar_lea.vmem [#allocation1], 1
    %6135 = vst [vmem:[%s6134] ss:$2 sm:$0xff] %v6119
    %s6137 = scalar_lea.vmem [#allocation1], 17
    %6138 = vst [vmem:[%s6137] ss:$2 sm:$0xff] %v6120
    %s6140 = scalar_lea.vmem [#allocation1], 33
    %6141 = vst [vmem:[%s6140] ss:$2 sm:$0xff] %v6121
    %s6143 = scalar_lea.vmem [#allocation1], 49
    %6144 = vst [vmem:[%s6143] ss:$2 sm:$0xff] %v6122
    %v6145 = vld.sshfl [vmem:[#allocation1] sm:$0xff pattern:$0x75643120]
    %v6147 = vld.sshfl [vmem:[#allocation1 + $0x8] sm:$0xff pattern:$0x75643120]
    %v6149 = vld.sshfl [vmem:[#allocation1 + $0x10] sm:$0xff pattern:$0x75643120]
    %v6151 = vld.sshfl [vmem:[#allocation1 + $0x18] sm:$0xff pattern:$0x75643120]
    %v6153 = vld.sshfl [vmem:[#allocation1 + $0x20] sm:$0xff pattern:$0x75643120]
    %v6155 = vld.sshfl [vmem:[#allocation1 + $0x28] sm:$0xff pattern:$0x75643120]
    %v6157 = vld.sshfl [vmem:[#allocation1 + $0x30] sm:$0xff pattern:$0x75643120]
    %v6159 = vld.sshfl [vmem:[#allocation1 + $0x38] sm:$0xff pattern:$0x75643120]
    %6162 = vst [vmem:[%s6134] ss:$2 sm:$0xff] %v6123
    %6164 = vst [vmem:[%s6137] ss:$2 sm:$0xff] %v6124
    %6166 = vst [vmem:[%s6140] ss:$2 sm:$0xff] %v6125
    %6168 = vst [vmem:[%s6143] ss:$2 sm:$0xff] %v6126
    %v6169 = vld.sshfl [vmem:[#allocation1] sm:$0xff pattern:$0x75643120]
    %v6171 = vld.sshfl [vmem:[#allocation1 + $0x8] sm:$0xff pattern:$0x75643120]
    %v6173 = vld.sshfl [vmem:[#allocation1 + $0x10] sm:$0xff pattern:$0x75643120]
    %v6175 = vld.sshfl [vmem:[#allocation1 + $0x18] sm:$0xff pattern:$0x75643120]
    %v6177 = vld.sshfl [vmem:[#allocation1 + $0x20] sm:$0xff pattern:$0x75643120]
    %v6179 = vld.sshfl [vmem:[#allocation1 + $0x28] sm:$0xff pattern:$0x75643120]
    %v6181 = vld.sshfl [vmem:[#allocation1 + $0x30] sm:$0xff pattern:$0x75643120]
    %v6183 = vld.sshfl [vmem:[#allocation1 + $0x38] sm:$0xff pattern:$0x75643120]
    %6186 = vst [vmem:[%s6134] ss:$2 sm:$0xff] %v6127
    %6188 = vst [vmem:[%s6137] ss:$2 sm:$0xff] %v6128
    %6190 = vst [vmem:[%s6140] ss:$2 sm:$0xff] %v6129
    %6192 = vst [vmem:[%s6143] ss:$2 sm:$0xff] %v6130
    %v6193 = vld.sshfl [vmem:[#allocation1] sm:$0xff pattern:$0x75643120]
    %v6195 = vld.sshfl [vmem:[#allocation1 + $0x8] sm:$0xff pattern:$0x75643120]
    %v6197 = vld.sshfl [vmem:[#allocation1 + $0x10] sm:$0xff pattern:$0x75643120]
    %v6199 = vld.sshfl [vmem:[#allocation1 + $0x18] sm:$0xff pattern:$0x75643120]
    %v6201 = vld.sshfl [vmem:[#allocation1 + $0x20] sm:$0xff pattern:$0x75643120]
    %v6203 = vld.sshfl [vmem:[#allocation1 + $0x28] sm:$0xff pattern:$0x75643120]
    %v6205 = vld.sshfl [vmem:[#allocation1 + $0x30] sm:$0xff pattern:$0x75643120]
    %v6207 = vld.sshfl [vmem:[#allocation1 + $0x38] sm:$0xff pattern:$0x75643120]
    %6210 = vst [vmem:[%s6134] ss:$2 sm:$0xff] %v6131
    %6212 = vst [vmem:[%s6137] ss:$2 sm:$0xff] %v6132
    %v6213 = vld.sshfl [vmem:[#allocation1] sm:$0xff pattern:$0x75643120]
    %v6215 = vld.sshfl [vmem:[#allocation1 + $0x8] sm:$0xff pattern:$0x75643120]
    %v6217 = vld.sshfl [vmem:[#allocation1 + $0x10] sm:$0xff pattern:$0x75643120]
    %v6219 = vld.sshfl [vmem:[#allocation1 + $0x18] sm:$0xff pattern:$0x75643120]
    %6221 = vrot.lane.b32.xlu0 %v6145, 102
    %v6222 = vpop.permute.xlu0 %6221
    %6223 = vrot.lane.b32.xlu0 %v6147, 102
    %v6224 = vpop.permute.xlu0 %6223
    %6225 = vrot.lane.b32.xlu0 %v6149, 102
    %v6226 = vpop.permute.xlu0 %6225
    %6227 = vrot.lane.b32.xlu0 %v6151, 102
    %v6228 = vpop.permute.xlu0 %6227
    %6229 = vrot.lane.b32.xlu0 %v6153, 102
    %v6230 = vpop.permute.xlu0 %6229
    %6231 = vrot.lane.b32.xlu0 %v6155, 102
    %v6232 = vpop.permute.xlu0 %6231
    %6233 = vrot.lane.b32.xlu0 %v6157, 102
    %v6234 = vpop.permute.xlu0 %6233
    %6235 = vrot.lane.b32.xlu0 %v6159, 102
    %v6236 = vpop.permute.xlu0 %6235
    %6237 = vrot.lane.b32.xlu0 %v6169, 102
    %v6238 = vpop.permute.xlu0 %6237
    %6239 = vrot.lane.b32.xlu0 %v6171, 102
    %v6240 = vpop.permute.xlu0 %6239
    %6241 = vrot.lane.b32.xlu0 %v6173, 102
    %v6242 = vpop.permute.xlu0 %6241
    %6243 = vrot.lane.b32.xlu0 %v6175, 102
    %v6244 = vpop.permute.xlu0 %6243
    %6245 = vrot.lane.b32.xlu0 %v6177, 102
    %v6246 = vpop.permute.xlu0 %6245
    %6247 = vrot.lane.b32.xlu0 %v6179, 102
    %v6248 = vpop.permute.xlu0 %6247
    %6249 = vrot.lane.b32.xlu0 %v6181, 102
    %v6250 = vpop.permute.xlu0 %6249
    %6251 = vrot.lane.b32.xlu0 %v6183, 102
    %v6252 = vpop.permute.xlu0 %6251
    %6253 = vrot.lane.b32.xlu0 %v6193, 102
    %v6254 = vpop.permute.xlu0 %6253
    %6255 = vrot.lane.b32.xlu0 %v6195, 102
    %v6256 = vpop.permute.xlu0 %6255
    %6257 = vrot.lane.b32.xlu0 %v6197, 102
    %v6258 = vpop.permute.xlu0 %6257
    %6259 = vrot.lane.b32.xlu0 %v6199, 102
    %v6260 = vpop.permute.xlu0 %6259
    %6261 = vrot.lane.b32.xlu0 %v6201, 102
    %v6262 = vpop.permute.xlu0 %6261
    %6263 = vrot.lane.b32.xlu0 %v6203, 102
    %v6264 = vpop.permute.xlu0 %6263
    %6265 = vrot.lane.b32.xlu0 %v6205, 102
    %v6266 = vpop.permute.xlu0 %6265
    %6267 = vrot.lane.b32.xlu0 %v6207, 102
    %v6268 = vpop.permute.xlu0 %6267
    %6269 = vrot.lane.b32.xlu0 %v6213, 102
    %v6270 = vpop.permute.xlu0 %6269
    %6271 = vrot.lane.b32.xlu0 %v6215, 102
    %v6272 = vpop.permute.xlu0 %6271
    %6273 = vrot.lane.b32.xlu0 %v6217, 102
    %v6274 = vpop.permute.xlu0 %6273
    %6275 = vrot.lane.b32.xlu0 %v6219, 102
    %v6276 = vpop.permute.xlu0 %6275
    %v6277 = vrot.slane %v6222, 4
    %v6278 = vrot.slane %v6224, 4
    %v6279 = vrot.slane %v6226, 4
    %v6280 = vrot.slane %v6228, 4
    %v6281 = vrot.slane %v6230, 4
    %v6282 = vrot.slane %v6232, 4
    %v6283 = vrot.slane %v6234, 4
    %v6284 = vrot.slane %v6236, 4
    %v6285 = vrot.slane %v6238, 4
    %v6286 = vrot.slane %v6240, 4
    %v6287 = vrot.slane %v6242, 4
    %v6288 = vrot.slane %v6244, 4
    %v6289 = vrot.slane %v6246, 4
    %v6290 = vrot.slane %v6248, 4
    %v6291 = vrot.slane %v6250, 4
    %v6292 = vrot.slane %v6252, 4
    %v6293 = vrot.slane %v6254, 4
    %v6294 = vrot.slane %v6256, 4
    %v6295 = vrot.slane %v6258, 4
    %v6296 = vrot.slane %v6260, 4
    %v6297 = vrot.slane %v6262, 4
    %v6298 = vrot.slane %v6264, 4
    %v6299 = vrot.slane %v6266, 4
    %v6300 = vrot.slane %v6268, 4
    %v6301 = vrot.slane %v6270, 4
    %v6302 = vrot.slane %v6272, 4
    %v6303 = vrot.slane %v6274, 4
    %v6304 = vrot.slane %v6276, 4
    %v6305 = vsel %vm414, %v6277, %v6278
    %vm6306 = vcmask 834560
    %v6307 = vsel %vm6306, %v6222, %v6305
    %v6308 = vsel %vm414, %v6278, %v6279
    %v6309 = vsel %vm6306, %v6224, %v6308
    %v6310 = vsel %vm414, %v6279, %v6280
    %v6311 = vsel %vm6306, %v6226, %v6310
    %v6312 = vsel %vm414, %v6280, %v6281
    %v6313 = vsel %vm6306, %v6228, %v6312
    %v6314 = vsel %vm414, %v6281, %v6282
    %v6315 = vsel %vm6306, %v6230, %v6314
    %v6316 = vsel %vm414, %v6282, %v6283
    %v6317 = vsel %vm6306, %v6232, %v6316
    %v6318 = vsel %vm414, %v6283, %v6284
    %v6319 = vsel %vm6306, %v6234, %v6318
    %v6320 = vsel %vm414, %v6284, %v6285
    %v6321 = vsel %vm6306, %v6236, %v6320
    %v6322 = vsel %vm414, %v6285, %v6286
    %v6323 = vsel %vm6306, %v6238, %v6322
    %v6324 = vsel %vm414, %v6286, %v6287
    %v6325 = vsel %vm6306, %v6240, %v6324
    %v6326 = vsel %vm414, %v6287, %v6288
    %v6327 = vsel %vm6306, %v6242, %v6326
    %v6328 = vsel %vm414, %v6288, %v6289
    %v6329 = vsel %vm6306, %v6244, %v6328
    %v6330 = vsel %vm414, %v6289, %v6290
    %v6331 = vsel %vm6306, %v6246, %v6330
    %v6332 = vsel %vm414, %v6290, %v6291
    %v6333 = vsel %vm6306, %v6248, %v6332
    %v6334 = vsel %vm414, %v6291, %v6292
    %v6335 = vsel %vm6306, %v6250, %v6334
    %v6336 = vsel %vm414, %v6292, %v6293
    %v6337 = vsel %vm6306, %v6252, %v6336
    %v6338 = vsel %vm414, %v6293, %v6294
    %v6339 = vsel %vm6306, %v6254, %v6338
    %v6340 = vsel %vm414, %v6294, %v6295
    %v6341 = vsel %vm6306, %v6256, %v6340
    %v6342 = vsel %vm414, %v6295, %v6296
    %v6343 = vsel %vm6306, %v6258, %v6342
    %v6344 = vsel %vm414, %v6296, %v6297
    %v6345 = vsel %vm6306, %v6260, %v6344
    %v6346 = vsel %vm414, %v6297, %v6298
    %v6347 = vsel %vm6306, %v6262, %v6346
    %v6348 = vsel %vm414, %v6298, %v6299
    %v6349 = vsel %vm6306, %v6264, %v6348
    %v6350 = vsel %vm414, %v6299, %v6300
    %v6351 = vsel %vm6306, %v6266, %v6350
    %v6352 = vsel %vm414, %v6300, %v6301
    %v6353 = vsel %vm6306, %v6268, %v6352
    %v6354 = vsel %vm414, %v6301, %v6302
    %v6355 = vsel %vm6306, %v6270, %v6354
    %v6356 = vsel %vm414, %v6302, %v6303
    %v6357 = vsel %vm6306, %v6272, %v6356
    %v6358 = vsel %vm414, %v6303, %v6304
    %v6359 = vsel %vm6306, %v6274, %v6358
    %6387 = vst [vmem:[#allocation3 + $0x870] sm:$0xcc] %v6307
    %6388 = vst [vmem:[#allocation3 + $0x878] sm:$0xcc] %v6309
    %6389 = vst [vmem:[#allocation3 + $0x880] sm:$0xcc] %v6311
    %6390 = vst [vmem:[#allocation3 + $0x888] sm:$0xcc] %v6313
    %6391 = vst [vmem:[#allocation3 + $0x890] sm:$0xcc] %v6315
    %6392 = vst [vmem:[#allocation3 + $0x898] sm:$0xcc] %v6317
    %6393 = vst [vmem:[#allocation3 + $0x8a0] sm:$0xcc] %v6319
    %6394 = vst [vmem:[#allocation3 + $0x8a8] sm:$0xcc] %v6321
    %6395 = vst [vmem:[#allocation3 + $0x8b0] sm:$0xcc] %v6323
    %6396 = vst [vmem:[#allocation3 + $0x8b8] sm:$0xcc] %v6325
    %6397 = vst [vmem:[#allocation3 + $0x8c0] sm:$0xcc] %v6327
    %6398 = vst [vmem:[#allocation3 + $0x8c8] sm:$0xcc] %v6329
    %6399 = vst [vmem:[#allocation3 + $0x8d0] sm:$0xcc] %v6331
    %6400 = vst [vmem:[#allocation3 + $0x8d8] sm:$0xcc] %v6333
    %6401 = vst [vmem:[#allocation3 + $0x8e0] sm:$0xcc] %v6335
    %6402 = vst [vmem:[#allocation3 + $0x8e8] sm:$0xcc] %v6337
    %6403 = vst [vmem:[#allocation3 + $0x8f0] sm:$0xcc] %v6339
    %6404 = vst [vmem:[#allocation3 + $0x8f8] sm:$0xcc] %v6341
    %6405 = vst [vmem:[#allocation3 + $0x900] sm:$0xcc] %v6343
    %6406 = vst [vmem:[#allocation3 + $0x908] sm:$0xcc] %v6345
    %6407 = vst [vmem:[#allocation3 + $0x910] sm:$0xcc] %v6347
    %6408 = vst [vmem:[#allocation3 + $0x918] sm:$0xcc] %v6349
    %6409 = vst [vmem:[#allocation3 + $0x920] sm:$0xcc] %v6351
    %6410 = vst [vmem:[#allocation3 + $0x928] sm:$0xcc] %v6353
    %6411 = vst [vmem:[#allocation3 + $0x930] sm:$0xcc] %v6355
    %6412 = vst [vmem:[#allocation3 + $0x938] sm:$0xcc] %v6357
    %6413 = vst [vmem:[#allocation3 + $0x940] sm:$0xcc] %v6359
    %v6414 = vld [vmem:[#allocation2 + $0xa] sm:$0xff]
    %v6415 = vld [vmem:[#allocation2 + $0x12] sm:$0xff]
    %v6416 = vld [vmem:[#allocation2 + $0x1a] sm:$0xff]
    %v6417 = vld [vmem:[#allocation2 + $0x22] sm:$0xff]
    %v6418 = vld [vmem:[#allocation2 + $0x2a] sm:$0xff]
    %v6419 = vld [vmem:[#allocation2 + $0x32] sm:$0xff]
    %v6420 = vld [vmem:[#allocation2 + $0x3a] sm:$0xff]
    %v6421 = vld [vmem:[#allocation2 + $0x42] sm:$0xff]
    %v6422 = vld [vmem:[#allocation2 + $0x4a] sm:$0xff]
    %v6423 = vld [vmem:[#allocation2 + $0x52] sm:$0xff]
    %v6424 = vld [vmem:[#allocation2 + $0x5a] sm:$0xff]
    %v6425 = vld [vmem:[#allocation2 + $0x62] sm:$0xff]
    %v6426 = vld [vmem:[#allocation2 + $0x6a] sm:$0xff]
    %v6427 = vld [vmem:[#allocation2 + $0x72] sm:$0x3f]
    %6429 = vst [vmem:[#allocation1] ss:$2 sm:$0xff] %v6414
    %s6431 = scalar_lea.vmem [#allocation1], 16
    %6432 = vst [vmem:[%s6431] ss:$2 sm:$0xff] %v6415
    %s6434 = scalar_lea.vmem [#allocation1], 32
    %6435 = vst [vmem:[%s6434] ss:$2 sm:$0xff] %v6416
    %s6437 = scalar_lea.vmem [#allocation1], 48
    %6438 = vst [vmem:[%s6437] ss:$2 sm:$0xff] %v6417
    %v6439 = vld.sshfl [vmem:[#allocation1] sm:$0xff pattern:$0x75643120]
    %v6441 = vld.sshfl [vmem:[#allocation1 + $0x8] sm:$0xff pattern:$0x75643120]
    %v6443 = vld.sshfl [vmem:[#allocation1 + $0x10] sm:$0xff pattern:$0x75643120]
    %v6445 = vld.sshfl [vmem:[#allocation1 + $0x18] sm:$0xff pattern:$0x75643120]
    %v6447 = vld.sshfl [vmem:[#allocation1 + $0x20] sm:$0xff pattern:$0x75643120]
    %v6449 = vld.sshfl [vmem:[#allocation1 + $0x28] sm:$0xff pattern:$0x75643120]
    %v6451 = vld.sshfl [vmem:[#allocation1 + $0x30] sm:$0xff pattern:$0x75643120]
    %v6453 = vld.sshfl [vmem:[#allocation1 + $0x38] sm:$0xff pattern:$0x75643120]
    %6456 = vst [vmem:[#allocation1] ss:$2 sm:$0xff] %v6418
    %6458 = vst [vmem:[%s6431] ss:$2 sm:$0xff] %v6419
    %6460 = vst [vmem:[%s6434] ss:$2 sm:$0xff] %v6420
    %6462 = vst [vmem:[%s6437] ss:$2 sm:$0xff] %v6421
    %v6463 = vld.sshfl [vmem:[#allocation1] sm:$0xff pattern:$0x75643120]
    %v6465 = vld.sshfl [vmem:[#allocation1 + $0x8] sm:$0xff pattern:$0x75643120]
    %v6467 = vld.sshfl [vmem:[#allocation1 + $0x10] sm:$0xff pattern:$0x75643120]
    %v6469 = vld.sshfl [vmem:[#allocation1 + $0x18] sm:$0xff pattern:$0x75643120]
    %v6471 = vld.sshfl [vmem:[#allocation1 + $0x20] sm:$0xff pattern:$0x75643120]
    %v6473 = vld.sshfl [vmem:[#allocation1 + $0x28] sm:$0xff pattern:$0x75643120]
    %v6475 = vld.sshfl [vmem:[#allocation1 + $0x30] sm:$0xff pattern:$0x75643120]
    %v6477 = vld.sshfl [vmem:[#allocation1 + $0x38] sm:$0xff pattern:$0x75643120]
    %6480 = vst [vmem:[#allocation1] ss:$2 sm:$0xff] %v6422
    %6482 = vst [vmem:[%s6431] ss:$2 sm:$0xff] %v6423
    %6484 = vst [vmem:[%s6434] ss:$2 sm:$0xff] %v6424
    %6486 = vst [vmem:[%s6437] ss:$2 sm:$0xff] %v6425
    %v6487 = vld.sshfl [vmem:[#allocation1] sm:$0xff pattern:$0x75643120]
    %v6489 = vld.sshfl [vmem:[#allocation1 + $0x8] sm:$0xff pattern:$0x75643120]
    %v6491 = vld.sshfl [vmem:[#allocation1 + $0x10] sm:$0xff pattern:$0x75643120]
    %v6493 = vld.sshfl [vmem:[#allocation1 + $0x18] sm:$0xff pattern:$0x75643120]
    %v6495 = vld.sshfl [vmem:[#allocation1 + $0x20] sm:$0xff pattern:$0x75643120]
    %v6497 = vld.sshfl [vmem:[#allocation1 + $0x28] sm:$0xff pattern:$0x75643120]
    %v6499 = vld.sshfl [vmem:[#allocation1 + $0x30] sm:$0xff pattern:$0x75643120]
    %v6501 = vld.sshfl [vmem:[#allocation1 + $0x38] sm:$0xff pattern:$0x75643120]
    %6504 = vst [vmem:[#allocation1] ss:$2 sm:$0xff] %v6426
    %6506 = vst [vmem:[%s6431] ss:$2 sm:$0xff] %v6427
    %v6507 = vld.sshfl [vmem:[#allocation1] sm:$0xff pattern:$0x75643120]
    %v6509 = vld.sshfl [vmem:[#allocation1 + $0x8] sm:$0xff pattern:$0x75643120]
    %v6511 = vld.sshfl [vmem:[#allocation1 + $0x10] sm:$0xff pattern:$0x75643120]
    %v6513 = vld.sshfl [vmem:[#allocation1 + $0x18] sm:$0xff pattern:$0x75643120]
    %6515 = vrot.lane.b32.xlu0 %v6439, 101
    %v6516 = vpop.permute.xlu0 %6515
    %6517 = vrot.lane.b32.xlu0 %v6441, 101
    %v6518 = vpop.permute.xlu0 %6517
    %6519 = vrot.lane.b32.xlu0 %v6443, 101
    %v6520 = vpop.permute.xlu0 %6519
    %6521 = vrot.lane.b32.xlu0 %v6445, 101
    %v6522 = vpop.permute.xlu0 %6521
    %6523 = vrot.lane.b32.xlu0 %v6447, 101
    %v6524 = vpop.permute.xlu0 %6523
    %6525 = vrot.lane.b32.xlu0 %v6449, 101
    %v6526 = vpop.permute.xlu0 %6525
    %6527 = vrot.lane.b32.xlu0 %v6451, 101
    %v6528 = vpop.permute.xlu0 %6527
    %6529 = vrot.lane.b32.xlu0 %v6453, 101
    %v6530 = vpop.permute.xlu0 %6529
    %6531 = vrot.lane.b32.xlu0 %v6463, 101
    %v6532 = vpop.permute.xlu0 %6531
    %6533 = vrot.lane.b32.xlu0 %v6465, 101
    %v6534 = vpop.permute.xlu0 %6533
    %6535 = vrot.lane.b32.xlu0 %v6467, 101
    %v6536 = vpop.permute.xlu0 %6535
    %6537 = vrot.lane.b32.xlu0 %v6469, 101
    %v6538 = vpop.permute.xlu0 %6537
    %6539 = vrot.lane.b32.xlu0 %v6471, 101
    %v6540 = vpop.permute.xlu0 %6539
    %6541 = vrot.lane.b32.xlu0 %v6473, 101
    %v6542 = vpop.permute.xlu0 %6541
    %6543 = vrot.lane.b32.xlu0 %v6475, 101
    %v6544 = vpop.permute.xlu0 %6543
    %6545 = vrot.lane.b32.xlu0 %v6477, 101
    %v6546 = vpop.permute.xlu0 %6545
    %6547 = vrot.lane.b32.xlu0 %v6487, 101
    %v6548 = vpop.permute.xlu0 %6547
    %6549 = vrot.lane.b32.xlu0 %v6489, 101
    %v6550 = vpop.permute.xlu0 %6549
    %6551 = vrot.lane.b32.xlu0 %v6491, 101
    %v6552 = vpop.permute.xlu0 %6551
    %6553 = vrot.lane.b32.xlu0 %v6493, 101
    %v6554 = vpop.permute.xlu0 %6553
    %6555 = vrot.lane.b32.xlu0 %v6495, 101
    %v6556 = vpop.permute.xlu0 %6555
    %6557 = vrot.lane.b32.xlu0 %v6497, 101
    %v6558 = vpop.permute.xlu0 %6557
    %6559 = vrot.lane.b32.xlu0 %v6499, 101
    %v6560 = vpop.permute.xlu0 %6559
    %6561 = vrot.lane.b32.xlu0 %v6501, 101
    %v6562 = vpop.permute.xlu0 %6561
    %6563 = vrot.lane.b32.xlu0 %v6507, 101
    %v6564 = vpop.permute.xlu0 %6563
    %6565 = vrot.lane.b32.xlu0 %v6509, 101
    %v6566 = vpop.permute.xlu0 %6565
    %6567 = vrot.lane.b32.xlu0 %v6511, 101
    %v6568 = vpop.permute.xlu0 %6567
    %6569 = vrot.lane.b32.xlu0 %v6513, 101
    %v6570 = vpop.permute.xlu0 %6569
    %v6571 = vrot.slane %v6516, 4
    %v6572 = vrot.slane %v6518, 4
    %v6573 = vrot.slane %v6520, 4
    %v6574 = vrot.slane %v6522, 4
    %v6575 = vrot.slane %v6524, 4
    %v6576 = vrot.slane %v6526, 4
    %v6577 = vrot.slane %v6528, 4
    %v6578 = vrot.slane %v6530, 4
    %v6579 = vrot.slane %v6532, 4
    %v6580 = vrot.slane %v6534, 4
    %v6581 = vrot.slane %v6536, 4
    %v6582 = vrot.slane %v6538, 4
    %v6583 = vrot.slane %v6540, 4
    %v6584 = vrot.slane %v6542, 4
    %v6585 = vrot.slane %v6544, 4
    %v6586 = vrot.slane %v6546, 4
    %v6587 = vrot.slane %v6548, 4
    %v6588 = vrot.slane %v6550, 4
    %v6589 = vrot.slane %v6552, 4
    %v6590 = vrot.slane %v6554, 4
    %v6591 = vrot.slane %v6556, 4
    %v6592 = vrot.slane %v6558, 4
    %v6593 = vrot.slane %v6560, 4
    %v6594 = vrot.slane %v6562, 4
    %v6595 = vrot.slane %v6564, 4
    %v6596 = vrot.slane %v6566, 4
    %v6597 = vrot.slane %v6568, 4
    %v6598 = vrot.slane %v6570, 4
    %v6599 = vsel %vm414, %v6571, %v6572
    %vm6600 = vcmask 826368
    %v6601 = vsel %vm6600, %v6516, %v6599
    %v6602 = vsel %vm414, %v6572, %v6573
    %v6603 = vsel %vm6600, %v6518, %v6602
    %v6604 = vsel %vm414, %v6573, %v6574
    %v6605 = vsel %vm6600, %v6520, %v6604
    %v6606 = vsel %vm414, %v6574, %v6575
    %v6607 = vsel %vm6600, %v6522, %v6606
    %v6608 = vsel %vm414, %v6575, %v6576
    %v6609 = vsel %vm6600, %v6524, %v6608
    %v6610 = vsel %vm414, %v6576, %v6577
    %v6611 = vsel %vm6600, %v6526, %v6610
    %v6612 = vsel %vm414, %v6577, %v6578
    %v6613 = vsel %vm6600, %v6528, %v6612
    %v6614 = vsel %vm414, %v6578, %v6579
    %v6615 = vsel %vm6600, %v6530, %v6614
    %v6616 = vsel %vm414, %v6579, %v6580
    %v6617 = vsel %vm6600, %v6532, %v6616
    %v6618 = vsel %vm414, %v6580, %v6581
    %v6619 = vsel %vm6600, %v6534, %v6618
    %v6620 = vsel %vm414, %v6581, %v6582
    %v6621 = vsel %vm6600, %v6536, %v6620
    %v6622 = vsel %vm414, %v6582, %v6583
    %v6623 = vsel %vm6600, %v6538, %v6622
    %v6624 = vsel %vm414, %v6583, %v6584
    %v6625 = vsel %vm6600, %v6540, %v6624
    %v6626 = vsel %vm414, %v6584, %v6585
    %v6627 = vsel %vm6600, %v6542, %v6626
    %v6628 = vsel %vm414, %v6585, %v6586
    %v6629 = vsel %vm6600, %v6544, %v6628
    %v6630 = vsel %vm414, %v6586, %v6587
    %v6631 = vsel %vm6600, %v6546, %v6630
    %v6632 = vsel %vm414, %v6587, %v6588
    %v6633 = vsel %vm6600, %v6548, %v6632
    %v6634 = vsel %vm414, %v6588, %v6589
    %v6635 = vsel %vm6600, %v6550, %v6634
    %v6636 = vsel %vm414, %v6589, %v6590
    %v6637 = vsel %vm6600, %v6552, %v6636
    %v6638 = vsel %vm414, %v6590, %v6591
    %v6639 = vsel %vm6600, %v6554, %v6638
    %v6640 = vsel %vm414, %v6591, %v6592
    %v6641 = vsel %vm6600, %v6556, %v6640
    %v6642 = vsel %vm414, %v6592, %v6593
    %v6643 = vsel %vm6600, %v6558, %v6642
    %v6644 = vsel %vm414, %v6593, %v6594
    %v6645 = vsel %vm6600, %v6560, %v6644
    %v6646 = vsel %vm414, %v6594, %v6595
    %v6647 = vsel %vm6600, %v6562, %v6646
    %v6648 = vsel %vm414, %v6595, %v6596
    %v6649 = vsel %vm6600, %v6564, %v6648
    %v6650 = vsel %vm414, %v6596, %v6597
    %v6651 = vsel %vm6600, %v6566, %v6650
    %v6652 = vsel %vm414, %v6597, %v6598
    %v6653 = vsel %vm6600, %v6568, %v6652
    %6681 = vst [vmem:[#allocation3 + $0x948] sm:$0x33] %v6601
    %6682 = vst [vmem:[#allocation3 + $0x950] sm:$0x33] %v6603
    %6683 = vst [vmem:[#allocation3 + $0x958] sm:$0x33] %v6605
    %6684 = vst [vmem:[#allocation3 + $0x960] sm:$0x33] %v6607
    %6685 = vst [vmem:[#allocation3 + $0x968] sm:$0x33] %v6609
    %6686 = vst [vmem:[#allocation3 + $0x970] sm:$0x33] %v6611
    %6687 = vst [vmem:[#allocation3 + $0x978] sm:$0x33] %v6613
    %6688 = vst [vmem:[#allocation3 + $0x980] sm:$0x33] %v6615
    %6689 = vst [vmem:[#allocation3 + $0x988] sm:$0x33] %v6617
    %6690 = vst [vmem:[#allocation3 + $0x990] sm:$0x33] %v6619
    %6691 = vst [vmem:[#allocation3 + $0x998] sm:$0x33] %v6621
    %6692 = vst [vmem:[#allocation3 + $0x9a0] sm:$0x33] %v6623
    %6693 = vst [vmem:[#allocation3 + $0x9a8] sm:$0x33] %v6625
    %6694 = vst [vmem:[#allocation3 + $0x9b0] sm:$0x33] %v6627
    %6695 = vst [vmem:[#allocation3 + $0x9b8] sm:$0x33] %v6629
    %6696 = vst [vmem:[#allocation3 + $0x9c0] sm:$0x33] %v6631
    %6697 = vst [vmem:[#allocation3 + $0x9c8] sm:$0x33] %v6633
    %6698 = vst [vmem:[#allocation3 + $0x9d0] sm:$0x33] %v6635
    %6699 = vst [vmem:[#allocation3 + $0x9d8] sm:$0x33] %v6637
    %6700 = vst [vmem:[#allocation3 + $0x9e0] sm:$0x33] %v6639
    %6701 = vst [vmem:[#allocation3 + $0x9e8] sm:$0x33] %v6641
    %6702 = vst [vmem:[#allocation3 + $0x9f0] sm:$0x33] %v6643
    %6703 = vst [vmem:[#allocation3 + $0x9f8] sm:$0x33] %v6645
    %6704 = vst [vmem:[#allocation3 + $0xa00] sm:$0x33] %v6647
    %6705 = vst [vmem:[#allocation3 + $0xa08] sm:$0x33] %v6649
    %6706 = vst [vmem:[#allocation3 + $0xa10] sm:$0x33] %v6651
    %6707 = vst [vmem:[#allocation3 + $0xa18] sm:$0x33] %v6653
    %v6708 = vld [vmem:[#allocation2 + $0xa] sm:$0xff]
    %v6709 = vld [vmem:[#allocation2 + $0x12] sm:$0xff]
    %v6710 = vld [vmem:[#allocation2 + $0x1a] sm:$0xff]
    %v6711 = vld [vmem:[#allocation2 + $0x22] sm:$0xff]
    %v6712 = vld [vmem:[#allocation2 + $0x2a] sm:$0xff]
    %v6713 = vld [vmem:[#allocation2 + $0x32] sm:$0xff]
    %v6714 = vld [vmem:[#allocation2 + $0x3a] sm:$0xff]
    %v6715 = vld [vmem:[#allocation2 + $0x42] sm:$0xff]
    %v6716 = vld [vmem:[#allocation2 + $0x4a] sm:$0xff]
    %v6717 = vld [vmem:[#allocation2 + $0x52] sm:$0xff]
    %v6718 = vld [vmem:[#allocation2 + $0x5a] sm:$0xff]
    %v6719 = vld [vmem:[#allocation2 + $0x62] sm:$0xff]
    %v6720 = vld [vmem:[#allocation2 + $0x6a] sm:$0xff]
    %v6721 = vld [vmem:[#allocation2 + $0x72] sm:$0x3f]
    %s6723 = scalar_lea.vmem [#allocation1], 1
    %6724 = vst [vmem:[%s6723] ss:$2 sm:$0xff] %v6708
    %s6726 = scalar_lea.vmem [#allocation1], 17
    %6727 = vst [vmem:[%s6726] ss:$2 sm:$0xff] %v6709
    %s6729 = scalar_lea.vmem [#allocation1], 33
    %6730 = vst [vmem:[%s6729] ss:$2 sm:$0xff] %v6710
    %s6732 = scalar_lea.vmem [#allocation1], 49
    %6733 = vst [vmem:[%s6732] ss:$2 sm:$0xff] %v6711
    %v6734 = vld.sshfl [vmem:[#allocation1] sm:$0xff pattern:$0x75643120]
    %v6736 = vld.sshfl [vmem:[#allocation1 + $0x8] sm:$0xff pattern:$0x75643120]
    %v6738 = vld.sshfl [vmem:[#allocation1 + $0x10] sm:$0xff pattern:$0x75643120]
    %v6740 = vld.sshfl [vmem:[#allocation1 + $0x18] sm:$0xff pattern:$0x75643120]
    %v6742 = vld.sshfl [vmem:[#allocation1 + $0x20] sm:$0xff pattern:$0x75643120]
    %v6744 = vld.sshfl [vmem:[#allocation1 + $0x28] sm:$0xff pattern:$0x75643120]
    %v6746 = vld.sshfl [vmem:[#allocation1 + $0x30] sm:$0xff pattern:$0x75643120]
    %v6748 = vld.sshfl [vmem:[#allocation1 + $0x38] sm:$0xff pattern:$0x75643120]
    %6751 = vst [vmem:[%s6723] ss:$2 sm:$0xff] %v6712
    %6753 = vst [vmem:[%s6726] ss:$2 sm:$0xff] %v6713
    %6755 = vst [vmem:[%s6729] ss:$2 sm:$0xff] %v6714
    %6757 = vst [vmem:[%s6732] ss:$2 sm:$0xff] %v6715
    %v6758 = vld.sshfl [vmem:[#allocation1] sm:$0xff pattern:$0x75643120]
    %v6760 = vld.sshfl [vmem:[#allocation1 + $0x8] sm:$0xff pattern:$0x75643120]
    %v6762 = vld.sshfl [vmem:[#allocation1 + $0x10] sm:$0xff pattern:$0x75643120]
    %v6764 = vld.sshfl [vmem:[#allocation1 + $0x18] sm:$0xff pattern:$0x75643120]
    %v6766 = vld.sshfl [vmem:[#allocation1 + $0x20] sm:$0xff pattern:$0x75643120]
    %v6768 = vld.sshfl [vmem:[#allocation1 + $0x28] sm:$0xff pattern:$0x75643120]
    %v6770 = vld.sshfl [vmem:[#allocation1 + $0x30] sm:$0xff pattern:$0x75643120]
    %v6772 = vld.sshfl [vmem:[#allocation1 + $0x38] sm:$0xff pattern:$0x75643120]
    %6775 = vst [vmem:[%s6723] ss:$2 sm:$0xff] %v6716
    %6777 = vst [vmem:[%s6726] ss:$2 sm:$0xff] %v6717
    %6779 = vst [vmem:[%s6729] ss:$2 sm:$0xff] %v6718
    %6781 = vst [vmem:[%s6732] ss:$2 sm:$0xff] %v6719
    %v6782 = vld.sshfl [vmem:[#allocation1] sm:$0xff pattern:$0x75643120]
    %v6784 = vld.sshfl [vmem:[#allocation1 + $0x8] sm:$0xff pattern:$0x75643120]
    %v6786 = vld.sshfl [vmem:[#allocation1 + $0x10] sm:$0xff pattern:$0x75643120]
    %v6788 = vld.sshfl [vmem:[#allocation1 + $0x18] sm:$0xff pattern:$0x75643120]
    %v6790 = vld.sshfl [vmem:[#allocation1 + $0x20] sm:$0xff pattern:$0x75643120]
    %v6792 = vld.sshfl [vmem:[#allocation1 + $0x28] sm:$0xff pattern:$0x75643120]
    %v6794 = vld.sshfl [vmem:[#allocation1 + $0x30] sm:$0xff pattern:$0x75643120]
    %v6796 = vld.sshfl [vmem:[#allocation1 + $0x38] sm:$0xff pattern:$0x75643120]
    %6799 = vst [vmem:[%s6723] ss:$2 sm:$0xff] %v6720
    %6801 = vst [vmem:[%s6726] ss:$2 sm:$0xff] %v6721
    %v6802 = vld.sshfl [vmem:[#allocation1] sm:$0xff pattern:$0x75643120]
    %v6804 = vld.sshfl [vmem:[#allocation1 + $0x8] sm:$0xff pattern:$0x75643120]
    %v6806 = vld.sshfl [vmem:[#allocation1 + $0x10] sm:$0xff pattern:$0x75643120]
    %v6808 = vld.sshfl [vmem:[#allocation1 + $0x18] sm:$0xff pattern:$0x75643120]
    %6810 = vrot.lane.b32.xlu0 %v6734, 100
    %v6811 = vpop.permute.xlu0 %6810
    %6812 = vrot.lane.b32.xlu0 %v6736, 100
    %v6813 = vpop.permute.xlu0 %6812
    %6814 = vrot.lane.b32.xlu0 %v6738, 100
    %v6815 = vpop.permute.xlu0 %6814
    %6816 = vrot.lane.b32.xlu0 %v6740, 100
    %v6817 = vpop.permute.xlu0 %6816
    %6818 = vrot.lane.b32.xlu0 %v6742, 100
    %v6819 = vpop.permute.xlu0 %6818
    %6820 = vrot.lane.b32.xlu0 %v6744, 100
    %v6821 = vpop.permute.xlu0 %6820
    %6822 = vrot.lane.b32.xlu0 %v6746, 100
    %v6823 = vpop.permute.xlu0 %6822
    %6824 = vrot.lane.b32.xlu0 %v6748, 100
    %v6825 = vpop.permute.xlu0 %6824
    %6826 = vrot.lane.b32.xlu0 %v6758, 100
    %v6827 = vpop.permute.xlu0 %6826
    %6828 = vrot.lane.b32.xlu0 %v6760, 100
    %v6829 = vpop.permute.xlu0 %6828
    %6830 = vrot.lane.b32.xlu0 %v6762, 100
    %v6831 = vpop.permute.xlu0 %6830
    %6832 = vrot.lane.b32.xlu0 %v6764, 100
    %v6833 = vpop.permute.xlu0 %6832
    %6834 = vrot.lane.b32.xlu0 %v6766, 100
    %v6835 = vpop.permute.xlu0 %6834
    %6836 = vrot.lane.b32.xlu0 %v6768, 100
    %v6837 = vpop.permute.xlu0 %6836
    %6838 = vrot.lane.b32.xlu0 %v6770, 100
    %v6839 = vpop.permute.xlu0 %6838
    %6840 = vrot.lane.b32.xlu0 %v6772, 100
    %v6841 = vpop.permute.xlu0 %6840
    %6842 = vrot.lane.b32.xlu0 %v6782, 100
    %v6843 = vpop.permute.xlu0 %6842
    %6844 = vrot.lane.b32.xlu0 %v6784, 100
    %v6845 = vpop.permute.xlu0 %6844
    %6846 = vrot.lane.b32.xlu0 %v6786, 100
    %v6847 = vpop.permute.xlu0 %6846
    %6848 = vrot.lane.b32.xlu0 %v6788, 100
    %v6849 = vpop.permute.xlu0 %6848
    %6850 = vrot.lane.b32.xlu0 %v6790, 100
    %v6851 = vpop.permute.xlu0 %6850
    %6852 = vrot.lane.b32.xlu0 %v6792, 100
    %v6853 = vpop.permute.xlu0 %6852
    %6854 = vrot.lane.b32.xlu0 %v6794, 100
    %v6855 = vpop.permute.xlu0 %6854
    %6856 = vrot.lane.b32.xlu0 %v6796, 100
    %v6857 = vpop.permute.xlu0 %6856
    %6858 = vrot.lane.b32.xlu0 %v6802, 100
    %v6859 = vpop.permute.xlu0 %6858
    %6860 = vrot.lane.b32.xlu0 %v6804, 100
    %v6861 = vpop.permute.xlu0 %6860
    %6862 = vrot.lane.b32.xlu0 %v6806, 100
    %v6863 = vpop.permute.xlu0 %6862
    %6864 = vrot.lane.b32.xlu0 %v6808, 100
    %v6865 = vpop.permute.xlu0 %6864
    %v6866 = vrot.slane %v6811, 4
    %v6867 = vrot.slane %v6813, 4
    %v6868 = vrot.slane %v6815, 4
    %v6869 = vrot.slane %v6817, 4
    %v6870 = vrot.slane %v6819, 4
    %v6871 = vrot.slane %v6821, 4
    %v6872 = vrot.slane %v6823, 4
    %v6873 = vrot.slane %v6825, 4
    %v6874 = vrot.slane %v6827, 4
    %v6875 = vrot.slane %v6829, 4
    %v6876 = vrot.slane %v6831, 4
    %v6877 = vrot.slane %v6833, 4
    %v6878 = vrot.slane %v6835, 4
    %v6879 = vrot.slane %v6837, 4
    %v6880 = vrot.slane %v6839, 4
    %v6881 = vrot.slane %v6841, 4
    %v6882 = vrot.slane %v6843, 4
    %v6883 = vrot.slane %v6845, 4
    %v6884 = vrot.slane %v6847, 4
    %v6885 = vrot.slane %v6849, 4
    %v6886 = vrot.slane %v6851, 4
    %v6887 = vrot.slane %v6853, 4
    %v6888 = vrot.slane %v6855, 4
    %v6889 = vrot.slane %v6857, 4
    %v6890 = vrot.slane %v6859, 4
    %v6891 = vrot.slane %v6861, 4
    %v6892 = vrot.slane %v6863, 4
    %v6893 = vrot.slane %v6865, 4
    %v6894 = vsel %vm414, %v6866, %v6867
    %vm6895 = vcmask 818176
    %v6896 = vsel %vm6895, %v6811, %v6894
    %v6897 = vsel %vm414, %v6867, %v6868
    %v6898 = vsel %vm6895, %v6813, %v6897
    %v6899 = vsel %vm414, %v6868, %v6869
    %v6900 = vsel %vm6895, %v6815, %v6899
    %v6901 = vsel %vm414, %v6869, %v6870
    %v6902 = vsel %vm6895, %v6817, %v6901
    %v6903 = vsel %vm414, %v6870, %v6871
    %v6904 = vsel %vm6895, %v6819, %v6903
    %v6905 = vsel %vm414, %v6871, %v6872
    %v6906 = vsel %vm6895, %v6821, %v6905
    %v6907 = vsel %vm414, %v6872, %v6873
    %v6908 = vsel %vm6895, %v6823, %v6907
    %v6909 = vsel %vm414, %v6873, %v6874
    %v6910 = vsel %vm6895, %v6825, %v6909
    %v6911 = vsel %vm414, %v6874, %v6875
    %v6912 = vsel %vm6895, %v6827, %v6911
    %v6913 = vsel %vm414, %v6875, %v6876
    %v6914 = vsel %vm6895, %v6829, %v6913
    %v6915 = vsel %vm414, %v6876, %v6877
    %v6916 = vsel %vm6895, %v6831, %v6915
    %v6917 = vsel %vm414, %v6877, %v6878
    %v6918 = vsel %vm6895, %v6833, %v6917
    %v6919 = vsel %vm414, %v6878, %v6879
    %v6920 = vsel %vm6895, %v6835, %v6919
    %v6921 = vsel %vm414, %v6879, %v6880
    %v6922 = vsel %vm6895, %v6837, %v6921
    %v6923 = vsel %vm414, %v6880, %v6881
    %v6924 = vsel %vm6895, %v6839, %v6923
    %v6925 = vsel %vm414, %v6881, %v6882
    %v6926 = vsel %vm6895, %v6841, %v6925
    %v6927 = vsel %vm414, %v6882, %v6883
    %v6928 = vsel %vm6895, %v6843, %v6927
    %v6929 = vsel %vm414, %v6883, %v6884
    %v6930 = vsel %vm6895, %v6845, %v6929
    %v6931 = vsel %vm414, %v6884, %v6885
    %v6932 = vsel %vm6895, %v6847, %v6931
    %v6933 = vsel %vm414, %v6885, %v6886
    %v6934 = vsel %vm6895, %v6849, %v6933
    %v6935 = vsel %vm414, %v6886, %v6887
    %v6936 = vsel %vm6895, %v6851, %v6935
    %v6937 = vsel %vm414, %v6887, %v6888
    %v6938 = vsel %vm6895, %v6853, %v6937
    %v6939 = vsel %vm414, %v6888, %v6889
    %v6940 = vsel %vm6895, %v6855, %v6939
    %v6941 = vsel %vm414, %v6889, %v6890
    %v6942 = vsel %vm6895, %v6857, %v6941
    %v6943 = vsel %vm414, %v6890, %v6891
    %v6944 = vsel %vm6895, %v6859, %v6943
    %v6945 = vsel %vm414, %v6891, %v6892
    %v6946 = vsel %vm6895, %v6861, %v6945
    %v6947 = vsel %vm414, %v6892, %v6893
    %v6948 = vsel %vm6895, %v6863, %v6947
    %6976 = vst [vmem:[#allocation3 + $0x948] sm:$0xcc] %v6896
    %6977 = vst [vmem:[#allocation3 + $0x950] sm:$0xcc] %v6898
    %6978 = vst [vmem:[#allocation3 + $0x958] sm:$0xcc] %v6900
    %6979 = vst [vmem:[#allocation3 + $0x960] sm:$0xcc] %v6902
    %6980 = vst [vmem:[#allocation3 + $0x968] sm:$0xcc] %v6904
    %6981 = vst [vmem:[#allocation3 + $0x970] sm:$0xcc] %v6906
    %6982 = vst [vmem:[#allocation3 + $0x978] sm:$0xcc] %v6908
    %6983 = vst [vmem:[#allocation3 + $0x980] sm:$0xcc] %v6910
    %6984 = vst [vmem:[#allocation3 + $0x988] sm:$0xcc] %v6912
    %6985 = vst [vmem:[#allocation3 + $0x990] sm:$0xcc] %v6914
    %6986 = vst [vmem:[#allocation3 + $0x998] sm:$0xcc] %v6916
    %6987 = vst [vmem:[#allocation3 + $0x9a0] sm:$0xcc] %v6918
    %6988 = vst [vmem:[#allocation3 + $0x9a8] sm:$0xcc] %v6920
    %6989 = vst [vmem:[#allocation3 + $0x9b0] sm:$0xcc] %v6922
    %6990 = vst [vmem:[#allocation3 + $0x9b8] sm:$0xcc] %v6924
    %6991 = vst [vmem:[#allocation3 + $0x9c0] sm:$0xcc] %v6926
    %6992 = vst [vmem:[#allocation3 + $0x9c8] sm:$0xcc] %v6928
    %6993 = vst [vmem:[#allocation3 + $0x9d0] sm:$0xcc] %v6930
    %6994 = vst [vmem:[#allocation3 + $0x9d8] sm:$0xcc] %v6932
    %6995 = vst [vmem:[#allocation3 + $0x9e0] sm:$0xcc] %v6934
    %6996 = vst [vmem:[#allocation3 + $0x9e8] sm:$0xcc] %v6936
    %6997 = vst [vmem:[#allocation3 + $0x9f0] sm:$0xcc] %v6938
    %6998 = vst [vmem:[#allocation3 + $0x9f8] sm:$0xcc] %v6940
    %6999 = vst [vmem:[#allocation3 + $0xa00] sm:$0xcc] %v6942
    %7000 = vst [vmem:[#allocation3 + $0xa08] sm:$0xcc] %v6944
    %7001 = vst [vmem:[#allocation3 + $0xa10] sm:$0xcc] %v6946
    %7002 = vst [vmem:[#allocation3 + $0xa18] sm:$0xcc] %v6948
    %v7003 = vld [vmem:[#allocation2 + $0xa] sm:$0xff]
    %v7004 = vld [vmem:[#allocation2 + $0x12] sm:$0xff]
    %v7005 = vld [vmem:[#allocation2 + $0x1a] sm:$0xff]
    %v7006 = vld [vmem:[#allocation2 + $0x22] sm:$0xff]
    %v7007 = vld [vmem:[#allocation2 + $0x2a] sm:$0xff]
    %v7008 = vld [vmem:[#allocation2 + $0x32] sm:$0xff]
    %v7009 = vld [vmem:[#allocation2 + $0x3a] sm:$0xff]
    %v7010 = vld [vmem:[#allocation2 + $0x42] sm:$0xff]
    %v7011 = vld [vmem:[#allocation2 + $0x4a] sm:$0xff]
    %v7012 = vld [vmem:[#allocation2 + $0x52] sm:$0xff]
    %v7013 = vld [vmem:[#allocation2 + $0x5a] sm:$0xff]
    %v7014 = vld [vmem:[#allocation2 + $0x62] sm:$0xff]
    %v7015 = vld [vmem:[#allocation2 + $0x6a] sm:$0xff]
    %v7016 = vld [vmem:[#allocation2 + $0x72] sm:$0x3f]
    %7018 = vst [vmem:[#allocation1] ss:$2 sm:$0xff] %v7003
    %s7020 = scalar_lea.vmem [#allocation1], 16
    %7021 = vst [vmem:[%s7020] ss:$2 sm:$0xff] %v7004
    %s7023 = scalar_lea.vmem [#allocation1], 32
    %7024 = vst [vmem:[%s7023] ss:$2 sm:$0xff] %v7005
    %s7026 = scalar_lea.vmem [#allocation1], 48
    %7027 = vst [vmem:[%s7026] ss:$2 sm:$0xff] %v7006
    %v7028 = vld.sshfl [vmem:[#allocation1] sm:$0xff pattern:$0x75643120]
    %v7030 = vld.sshfl [vmem:[#allocation1 + $0x8] sm:$0xff pattern:$0x75643120]
    %v7032 = vld.sshfl [vmem:[#allocation1 + $0x10] sm:$0xff pattern:$0x75643120]
    %v7034 = vld.sshfl [vmem:[#allocation1 + $0x18] sm:$0xff pattern:$0x75643120]
    %v7036 = vld.sshfl [vmem:[#allocation1 + $0x20] sm:$0xff pattern:$0x75643120]
    %v7038 = vld.sshfl [vmem:[#allocation1 + $0x28] sm:$0xff pattern:$0x75643120]
    %v7040 = vld.sshfl [vmem:[#allocation1 + $0x30] sm:$0xff pattern:$0x75643120]
    %v7042 = vld.sshfl [vmem:[#allocation1 + $0x38] sm:$0xff pattern:$0x75643120]
    %7045 = vst [vmem:[#allocation1] ss:$2 sm:$0xff] %v7007
    %7047 = vst [vmem:[%s7020] ss:$2 sm:$0xff] %v7008
    %7049 = vst [vmem:[%s7023] ss:$2 sm:$0xff] %v7009
    %7051 = vst [vmem:[%s7026] ss:$2 sm:$0xff] %v7010
    %v7052 = vld.sshfl [vmem:[#allocation1] sm:$0xff pattern:$0x75643120]
    %v7054 = vld.sshfl [vmem:[#allocation1 + $0x8] sm:$0xff pattern:$0x75643120]
    %v7056 = vld.sshfl [vmem:[#allocation1 + $0x10] sm:$0xff pattern:$0x75643120]
    %v7058 = vld.sshfl [vmem:[#allocation1 + $0x18] sm:$0xff pattern:$0x75643120]
    %v7060 = vld.sshfl [vmem:[#allocation1 + $0x20] sm:$0xff pattern:$0x75643120]
    %v7062 = vld.sshfl [vmem:[#allocation1 + $0x28] sm:$0xff pattern:$0x75643120]
    %v7064 = vld.sshfl [vmem:[#allocation1 + $0x30] sm:$0xff pattern:$0x75643120]
    %v7066 = vld.sshfl [vmem:[#allocation1 + $0x38] sm:$0xff pattern:$0x75643120]
    %7069 = vst [vmem:[#allocation1] ss:$2 sm:$0xff] %v7011
    %7071 = vst [vmem:[%s7020] ss:$2 sm:$0xff] %v7012
    %7073 = vst [vmem:[%s7023] ss:$2 sm:$0xff] %v7013
    %7075 = vst [vmem:[%s7026] ss:$2 sm:$0xff] %v7014
    %v7076 = vld.sshfl [vmem:[#allocation1] sm:$0xff pattern:$0x75643120]
    %v7078 = vld.sshfl [vmem:[#allocation1 + $0x8] sm:$0xff pattern:$0x75643120]
    %v7080 = vld.sshfl [vmem:[#allocation1 + $0x10] sm:$0xff pattern:$0x75643120]
    %v7082 = vld.sshfl [vmem:[#allocation1 + $0x18] sm:$0xff pattern:$0x75643120]
    %v7084 = vld.sshfl [vmem:[#allocation1 + $0x20] sm:$0xff pattern:$0x75643120]
    %v7086 = vld.sshfl [vmem:[#allocation1 + $0x28] sm:$0xff pattern:$0x75643120]
    %v7088 = vld.sshfl [vmem:[#allocation1 + $0x30] sm:$0xff pattern:$0x75643120]
    %v7090 = vld.sshfl [vmem:[#allocation1 + $0x38] sm:$0xff pattern:$0x75643120]
    %7093 = vst [vmem:[#allocation1] ss:$2 sm:$0xff] %v7015
    %7095 = vst [vmem:[%s7020] ss:$2 sm:$0xff] %v7016
    %v7096 = vld.sshfl [vmem:[#allocation1] sm:$0xff pattern:$0x75643120]
    %v7098 = vld.sshfl [vmem:[#allocation1 + $0x8] sm:$0xff pattern:$0x75643120]
    %v7100 = vld.sshfl [vmem:[#allocation1 + $0x10] sm:$0xff pattern:$0x75643120]
    %v7102 = vld.sshfl [vmem:[#allocation1 + $0x18] sm:$0xff pattern:$0x75643120]
    %7104 = vrot.lane.b32.xlu0 %v7028, 84
    %v7105 = vpop.permute.xlu0 %7104
    %7106 = vrot.lane.b32.xlu0 %v7030, 84
    %v7107 = vpop.permute.xlu0 %7106
    %7108 = vrot.lane.b32.xlu0 %v7032, 84
    %v7109 = vpop.permute.xlu0 %7108
    %7110 = vrot.lane.b32.xlu0 %v7034, 84
    %v7111 = vpop.permute.xlu0 %7110
    %7112 = vrot.lane.b32.xlu0 %v7036, 84
    %v7113 = vpop.permute.xlu0 %7112
    %7114 = vrot.lane.b32.xlu0 %v7038, 84
    %v7115 = vpop.permute.xlu0 %7114
    %7116 = vrot.lane.b32.xlu0 %v7040, 84
    %v7117 = vpop.permute.xlu0 %7116
    %7118 = vrot.lane.b32.xlu0 %v7042, 84
    %v7119 = vpop.permute.xlu0 %7118
    %7120 = vrot.lane.b32.xlu0 %v7052, 84
    %v7121 = vpop.permute.xlu0 %7120
    %7122 = vrot.lane.b32.xlu0 %v7054, 84
    %v7123 = vpop.permute.xlu0 %7122
    %7124 = vrot.lane.b32.xlu0 %v7056, 84
    %v7125 = vpop.permute.xlu0 %7124
    %7126 = vrot.lane.b32.xlu0 %v7058, 84
    %v7127 = vpop.permute.xlu0 %7126
    %7128 = vrot.lane.b32.xlu0 %v7060, 84
    %v7129 = vpop.permute.xlu0 %7128
    %7130 = vrot.lane.b32.xlu0 %v7062, 84
    %v7131 = vpop.permute.xlu0 %7130
    %7132 = vrot.lane.b32.xlu0 %v7064, 84
    %v7133 = vpop.permute.xlu0 %7132
    %7134 = vrot.lane.b32.xlu0 %v7066, 84
    %v7135 = vpop.permute.xlu0 %7134
    %7136 = vrot.lane.b32.xlu0 %v7076, 84
    %v7137 = vpop.permute.xlu0 %7136
    %7138 = vrot.lane.b32.xlu0 %v7078, 84
    %v7139 = vpop.permute.xlu0 %7138
    %7140 = vrot.lane.b32.xlu0 %v7080, 84
    %v7141 = vpop.permute.xlu0 %7140
    %7142 = vrot.lane.b32.xlu0 %v7082, 84
    %v7143 = vpop.permute.xlu0 %7142
    %7144 = vrot.lane.b32.xlu0 %v7084, 84
    %v7145 = vpop.permute.xlu0 %7144
    %7146 = vrot.lane.b32.xlu0 %v7086, 84
    %v7147 = vpop.permute.xlu0 %7146
    %7148 = vrot.lane.b32.xlu0 %v7088, 84
    %v7149 = vpop.permute.xlu0 %7148
    %7150 = vrot.lane.b32.xlu0 %v7090, 84
    %v7151 = vpop.permute.xlu0 %7150
    %7152 = vrot.lane.b32.xlu0 %v7096, 84
    %v7153 = vpop.permute.xlu0 %7152
    %7154 = vrot.lane.b32.xlu0 %v7098, 84
    %v7155 = vpop.permute.xlu0 %7154
    %7156 = vrot.lane.b32.xlu0 %v7100, 84
    %v7157 = vpop.permute.xlu0 %7156
    %7158 = vrot.lane.b32.xlu0 %v7102, 84
    %v7159 = vpop.permute.xlu0 %7158
    %v7160 = vrot.slane %v7105, 4
    %v7161 = vrot.slane %v7107, 4
    %v7162 = vrot.slane %v7109, 4
    %v7163 = vrot.slane %v7111, 4
    %v7164 = vrot.slane %v7113, 4
    %v7165 = vrot.slane %v7115, 4
    %v7166 = vrot.slane %v7117, 4
    %v7167 = vrot.slane %v7119, 4
    %v7168 = vrot.slane %v7121, 4
    %v7169 = vrot.slane %v7123, 4
    %v7170 = vrot.slane %v7125, 4
    %v7171 = vrot.slane %v7127, 4
    %v7172 = vrot.slane %v7129, 4
    %v7173 = vrot.slane %v7131, 4
    %v7174 = vrot.slane %v7133, 4
    %v7175 = vrot.slane %v7135, 4
    %v7176 = vrot.slane %v7137, 4
    %v7177 = vrot.slane %v7139, 4
    %v7178 = vrot.slane %v7141, 4
    %v7179 = vrot.slane %v7143, 4
    %v7180 = vrot.slane %v7145, 4
    %v7181 = vrot.slane %v7147, 4
    %v7182 = vrot.slane %v7149, 4
    %v7183 = vrot.slane %v7151, 4
    %v7184 = vrot.slane %v7153, 4
    %v7185 = vrot.slane %v7155, 4
    %v7186 = vrot.slane %v7157, 4
    %v7187 = vrot.slane %v7159, 4
    %v7188 = vsel %vm414, %v7160, %v7161
    %vm7189 = vcmask 687104
    %v7190 = vsel %vm7189, %v7105, %v7188
    %v7191 = vsel %vm414, %v7161, %v7162
    %v7192 = vsel %vm7189, %v7107, %v7191
    %v7193 = vsel %vm414, %v7162, %v7163
    %v7194 = vsel %vm7189, %v7109, %v7193
    %v7195 = vsel %vm414, %v7163, %v7164
    %v7196 = vsel %vm7189, %v7111, %v7195
    %v7197 = vsel %vm414, %v7164, %v7165
    %v7198 = vsel %vm7189, %v7113, %v7197
    %v7199 = vsel %vm414, %v7165, %v7166
    %v7200 = vsel %vm7189, %v7115, %v7199
    %v7201 = vsel %vm414, %v7166, %v7167
    %v7202 = vsel %vm7189, %v7117, %v7201
    %v7203 = vsel %vm414, %v7167, %v7168
    %v7204 = vsel %vm7189, %v7119, %v7203
    %v7205 = vsel %vm414, %v7168, %v7169
    %v7206 = vsel %vm7189, %v7121, %v7205
    %v7207 = vsel %vm414, %v7169, %v7170
    %v7208 = vsel %vm7189, %v7123, %v7207
    %v7209 = vsel %vm414, %v7170, %v7171
    %v7210 = vsel %vm7189, %v7125, %v7209
    %v7211 = vsel %vm414, %v7171, %v7172
    %v7212 = vsel %vm7189, %v7127, %v7211
    %v7213 = vsel %vm414, %v7172, %v7173
    %v7214 = vsel %vm7189, %v7129, %v7213
    %v7215 = vsel %vm414, %v7173, %v7174
    %v7216 = vsel %vm7189, %v7131, %v7215
    %v7217 = vsel %vm414, %v7174, %v7175
    %v7218 = vsel %vm7189, %v7133, %v7217
    %v7219 = vsel %vm414, %v7175, %v7176
    %v7220 = vsel %vm7189, %v7135, %v7219
    %v7221 = vsel %vm414, %v7176, %v7177
    %v7222 = vsel %vm7189, %v7137, %v7221
    %v7223 = vsel %vm414, %v7177, %v7178
    %v7224 = vsel %vm7189, %v7139, %v7223
    %v7225 = vsel %vm414, %v7178, %v7179
    %v7226 = vsel %vm7189, %v7141, %v7225
    %v7227 = vsel %vm414, %v7179, %v7180
    %v7228 = vsel %vm7189, %v7143, %v7227
    %v7229 = vsel %vm414, %v7180, %v7181
    %v7230 = vsel %vm7189, %v7145, %v7229
    %v7231 = vsel %vm414, %v7181, %v7182
    %v7232 = vsel %vm7189, %v7147, %v7231
    %v7233 = vsel %vm414, %v7182, %v7183
    %v7234 = vsel %vm7189, %v7149, %v7233
    %v7235 = vsel %vm414, %v7183, %v7184
    %v7236 = vsel %vm7189, %v7151, %v7235
    %v7237 = vsel %vm414, %v7184, %v7185
    %v7238 = vsel %vm7189, %v7153, %v7237
    %v7239 = vsel %vm414, %v7185, %v7186
    %v7240 = vsel %vm7189, %v7155, %v7239
    %v7241 = vsel %vm414, %v7186, %v7187
    %v7242 = vsel %vm7189, %v7157, %v7241
    %7270 = vst [vmem:[#allocation3 + $0xa20] sm:$0x33] %v7190
    %7271 = vst [vmem:[#allocation3 + $0xa28] sm:$0x33] %v7192
    %7272 = vst [vmem:[#allocation3 + $0xa30] sm:$0x33] %v7194
    %7273 = vst [vmem:[#allocation3 + $0xa38] sm:$0x33] %v7196
    %7274 = vst [vmem:[#allocation3 + $0xa40] sm:$0x33] %v7198
    %7275 = vst [vmem:[#allocation3 + $0xa48] sm:$0x33] %v7200
    %7276 = vst [vmem:[#allocation3 + $0xa50] sm:$0x33] %v7202
    %7277 = vst [vmem:[#allocation3 + $0xa58] sm:$0x33] %v7204
    %7278 = vst [vmem:[#allocation3 + $0xa60] sm:$0x33] %v7206
    %7279 = vst [vmem:[#allocation3 + $0xa68] sm:$0x33] %v7208
    %7280 = vst [vmem:[#allocation3 + $0xa70] sm:$0x33] %v7210
    %7281 = vst [vmem:[#allocation3 + $0xa78] sm:$0x33] %v7212
    %7282 = vst [vmem:[#allocation3 + $0xa80] sm:$0x33] %v7214
    %7283 = vst [vmem:[#allocation3 + $0xa88] sm:$0x33] %v7216
    %7284 = vst [vmem:[#allocation3 + $0xa90] sm:$0x33] %v7218
    %7285 = vst [vmem:[#allocation3 + $0xa98] sm:$0x33] %v7220
    %7286 = vst [vmem:[#allocation3 + $0xaa0] sm:$0x33] %v7222
    %7287 = vst [vmem:[#allocation3 + $0xaa8] sm:$0x33] %v7224
    %7288 = vst [vmem:[#allocation3 + $0xab0] sm:$0x33] %v7226
    %7289 = vst [vmem:[#allocation3 + $0xab8] sm:$0x33] %v7228
    %7290 = vst [vmem:[#allocation3 + $0xac0] sm:$0x33] %v7230
    %7291 = vst [vmem:[#allocation3 + $0xac8] sm:$0x33] %v7232
    %7292 = vst [vmem:[#allocation3 + $0xad0] sm:$0x33] %v7234
    %7293 = vst [vmem:[#allocation3 + $0xad8] sm:$0x33] %v7236
    %7294 = vst [vmem:[#allocation3 + $0xae0] sm:$0x33] %v7238
    %7295 = vst [vmem:[#allocation3 + $0xae8] sm:$0x33] %v7240
    %7296 = vst [vmem:[#allocation3 + $0xaf0] sm:$0x33] %v7242
    %v7297 = vld [vmem:[#allocation2 + $0xa] sm:$0xff]
    %v7298 = vld [vmem:[#allocation2 + $0x12] sm:$0xff]
    %v7299 = vld [vmem:[#allocation2 + $0x1a] sm:$0xff]
    %v7300 = vld [vmem:[#allocation2 + $0x22] sm:$0xff]
    %v7301 = vld [vmem:[#allocation2 + $0x2a] sm:$0xff]
    %v7302 = vld [vmem:[#allocation2 + $0x32] sm:$0xff]
    %v7303 = vld [vmem:[#allocation2 + $0x3a] sm:$0xff]
    %v7304 = vld [vmem:[#allocation2 + $0x42] sm:$0xff]
    %v7305 = vld [vmem:[#allocation2 + $0x4a] sm:$0xff]
    %v7306 = vld [vmem:[#allocation2 + $0x52] sm:$0xff]
    %v7307 = vld [vmem:[#allocation2 + $0x5a] sm:$0xff]
    %v7308 = vld [vmem:[#allocation2 + $0x62] sm:$0xff]
    %v7309 = vld [vmem:[#allocation2 + $0x6a] sm:$0xff]
    %v7310 = vld [vmem:[#allocation2 + $0x72] sm:$0x3f]
    %s7312 = scalar_lea.vmem [#allocation1], 1
    %7313 = vst [vmem:[%s7312] ss:$2 sm:$0xff] %v7297
    %s7315 = scalar_lea.vmem [#allocation1], 17
    %7316 = vst [vmem:[%s7315] ss:$2 sm:$0xff] %v7298
    %s7318 = scalar_lea.vmem [#allocation1], 33
    %7319 = vst [vmem:[%s7318] ss:$2 sm:$0xff] %v7299
    %s7321 = scalar_lea.vmem [#allocation1], 49
    %7322 = vst [vmem:[%s7321] ss:$2 sm:$0xff] %v7300
    %v7323 = vld.sshfl [vmem:[#allocation1] sm:$0xff pattern:$0x75643120]
    %v7325 = vld.sshfl [vmem:[#allocation1 + $0x8] sm:$0xff pattern:$0x75643120]
    %v7327 = vld.sshfl [vmem:[#allocation1 + $0x10] sm:$0xff pattern:$0x75643120]
    %v7329 = vld.sshfl [vmem:[#allocation1 + $0x18] sm:$0xff pattern:$0x75643120]
    %v7331 = vld.sshfl [vmem:[#allocation1 + $0x20] sm:$0xff pattern:$0x75643120]
    %v7333 = vld.sshfl [vmem:[#allocation1 + $0x28] sm:$0xff pattern:$0x75643120]
    %v7335 = vld.sshfl [vmem:[#allocation1 + $0x30] sm:$0xff pattern:$0x75643120]
    %v7337 = vld.sshfl [vmem:[#allocation1 + $0x38] sm:$0xff pattern:$0x75643120]
    %7340 = vst [vmem:[%s7312] ss:$2 sm:$0xff] %v7301
    %7342 = vst [vmem:[%s7315] ss:$2 sm:$0xff] %v7302
    %7344 = vst [vmem:[%s7318] ss:$2 sm:$0xff] %v7303
    %7346 = vst [vmem:[%s7321] ss:$2 sm:$0xff] %v7304
    %v7347 = vld.sshfl [vmem:[#allocation1] sm:$0xff pattern:$0x75643120]
    %v7349 = vld.sshfl [vmem:[#allocation1 + $0x8] sm:$0xff pattern:$0x75643120]
    %v7351 = vld.sshfl [vmem:[#allocation1 + $0x10] sm:$0xff pattern:$0x75643120]
    %v7353 = vld.sshfl [vmem:[#allocation1 + $0x18] sm:$0xff pattern:$0x75643120]
    %v7355 = vld.sshfl [vmem:[#allocation1 + $0x20] sm:$0xff pattern:$0x75643120]
    %v7357 = vld.sshfl [vmem:[#allocation1 + $0x28] sm:$0xff pattern:$0x75643120]
    %v7359 = vld.sshfl [vmem:[#allocation1 + $0x30] sm:$0xff pattern:$0x75643120]
    %v7361 = vld.sshfl [vmem:[#allocation1 + $0x38] sm:$0xff pattern:$0x75643120]
    %7364 = vst [vmem:[%s7312] ss:$2 sm:$0xff] %v7305
    %7366 = vst [vmem:[%s7315] ss:$2 sm:$0xff] %v7306
    %7368 = vst [vmem:[%s7318] ss:$2 sm:$0xff] %v7307
    %7370 = vst [vmem:[%s7321] ss:$2 sm:$0xff] %v7308
    %v7371 = vld.sshfl [vmem:[#allocation1] sm:$0xff pattern:$0x75643120]
    %v7373 = vld.sshfl [vmem:[#allocation1 + $0x8] sm:$0xff pattern:$0x75643120]
    %v7375 = vld.sshfl [vmem:[#allocation1 + $0x10] sm:$0xff pattern:$0x75643120]
    %v7377 = vld.sshfl [vmem:[#allocation1 + $0x18] sm:$0xff pattern:$0x75643120]
    %v7379 = vld.sshfl [vmem:[#allocation1 + $0x20] sm:$0xff pattern:$0x75643120]
    %v7381 = vld.sshfl [vmem:[#allocation1 + $0x28] sm:$0xff pattern:$0x75643120]
    %v7383 = vld.sshfl [vmem:[#allocation1 + $0x30] sm:$0xff pattern:$0x75643120]
    %v7385 = vld.sshfl [vmem:[#allocation1 + $0x38] sm:$0xff pattern:$0x75643120]
    %7388 = vst [vmem:[%s7312] ss:$2 sm:$0xff] %v7309
    %7390 = vst [vmem:[%s7315] ss:$2 sm:$0xff] %v7310
    %v7391 = vld.sshfl [vmem:[#allocation1] sm:$0xff pattern:$0x75643120]
    %v7393 = vld.sshfl [vmem:[#allocation1 + $0x8] sm:$0xff pattern:$0x75643120]
    %v7395 = vld.sshfl [vmem:[#allocation1 + $0x10] sm:$0xff pattern:$0x75643120]
    %v7397 = vld.sshfl [vmem:[#allocation1 + $0x18] sm:$0xff pattern:$0x75643120]
    %7399 = vrot.lane.b32.xlu0 %v7323, 83
    %v7400 = vpop.permute.xlu0 %7399
    %7401 = vrot.lane.b32.xlu0 %v7325, 83
    %v7402 = vpop.permute.xlu0 %7401
    %7403 = vrot.lane.b32.xlu0 %v7327, 83
    %v7404 = vpop.permute.xlu0 %7403
    %7405 = vrot.lane.b32.xlu0 %v7329, 83
    %v7406 = vpop.permute.xlu0 %7405
    %7407 = vrot.lane.b32.xlu0 %v7331, 83
    %v7408 = vpop.permute.xlu0 %7407
    %7409 = vrot.lane.b32.xlu0 %v7333, 83
    %v7410 = vpop.permute.xlu0 %7409
    %7411 = vrot.lane.b32.xlu0 %v7335, 83
    %v7412 = vpop.permute.xlu0 %7411
    %7413 = vrot.lane.b32.xlu0 %v7337, 83
    %v7414 = vpop.permute.xlu0 %7413
    %7415 = vrot.lane.b32.xlu0 %v7347, 83
    %v7416 = vpop.permute.xlu0 %7415
    %7417 = vrot.lane.b32.xlu0 %v7349, 83
    %v7418 = vpop.permute.xlu0 %7417
    %7419 = vrot.lane.b32.xlu0 %v7351, 83
    %v7420 = vpop.permute.xlu0 %7419
    %7421 = vrot.lane.b32.xlu0 %v7353, 83
    %v7422 = vpop.permute.xlu0 %7421
    %7423 = vrot.lane.b32.xlu0 %v7355, 83
    %v7424 = vpop.permute.xlu0 %7423
    %7425 = vrot.lane.b32.xlu0 %v7357, 83
    %v7426 = vpop.permute.xlu0 %7425
    %7427 = vrot.lane.b32.xlu0 %v7359, 83
    %v7428 = vpop.permute.xlu0 %7427
    %7429 = vrot.lane.b32.xlu0 %v7361, 83
    %v7430 = vpop.permute.xlu0 %7429
    %7431 = vrot.lane.b32.xlu0 %v7371, 83
    %v7432 = vpop.permute.xlu0 %7431
    %7433 = vrot.lane.b32.xlu0 %v7373, 83
    %v7434 = vpop.permute.xlu0 %7433
    %7435 = vrot.lane.b32.xlu0 %v7375, 83
    %v7436 = vpop.permute.xlu0 %7435
    %7437 = vrot.lane.b32.xlu0 %v7377, 83
    %v7438 = vpop.permute.xlu0 %7437
    %7439 = vrot.lane.b32.xlu0 %v7379, 83
    %v7440 = vpop.permute.xlu0 %7439
    %7441 = vrot.lane.b32.xlu0 %v7381, 83
    %v7442 = vpop.permute.xlu0 %7441
    %7443 = vrot.lane.b32.xlu0 %v7383, 83
    %v7444 = vpop.permute.xlu0 %7443
    %7445 = vrot.lane.b32.xlu0 %v7385, 83
    %v7446 = vpop.permute.xlu0 %7445
    %7447 = vrot.lane.b32.xlu0 %v7391, 83
    %v7448 = vpop.permute.xlu0 %7447
    %7449 = vrot.lane.b32.xlu0 %v7393, 83
    %v7450 = vpop.permute.xlu0 %7449
    %7451 = vrot.lane.b32.xlu0 %v7395, 83
    %v7452 = vpop.permute.xlu0 %7451
    %7453 = vrot.lane.b32.xlu0 %v7397, 83
    %v7454 = vpop.permute.xlu0 %7453
    %v7455 = vrot.slane %v7400, 4
    %v7456 = vrot.slane %v7402, 4
    %v7457 = vrot.slane %v7404, 4
    %v7458 = vrot.slane %v7406, 4
    %v7459 = vrot.slane %v7408, 4
    %v7460 = vrot.slane %v7410, 4
    %v7461 = vrot.slane %v7412, 4
    %v7462 = vrot.slane %v7414, 4
    %v7463 = vrot.slane %v7416, 4
    %v7464 = vrot.slane %v7418, 4
    %v7465 = vrot.slane %v7420, 4
    %v7466 = vrot.slane %v7422, 4
    %v7467 = vrot.slane %v7424, 4
    %v7468 = vrot.slane %v7426, 4
    %v7469 = vrot.slane %v7428, 4
    %v7470 = vrot.slane %v7430, 4
    %v7471 = vrot.slane %v7432, 4
    %v7472 = vrot.slane %v7434, 4
    %v7473 = vrot.slane %v7436, 4
    %v7474 = vrot.slane %v7438, 4
    %v7475 = vrot.slane %v7440, 4
    %v7476 = vrot.slane %v7442, 4
    %v7477 = vrot.slane %v7444, 4
    %v7478 = vrot.slane %v7446, 4
    %v7479 = vrot.slane %v7448, 4
    %v7480 = vrot.slane %v7450, 4
    %v7481 = vrot.slane %v7452, 4
    %v7482 = vrot.slane %v7454, 4
    %v7483 = vsel %vm414, %v7455, %v7456
    %vm7484 = vcmask 678912
    %v7485 = vsel %vm7484, %v7400, %v7483
    %v7486 = vsel %vm414, %v7456, %v7457
    %v7487 = vsel %vm7484, %v7402, %v7486
    %v7488 = vsel %vm414, %v7457, %v7458
    %v7489 = vsel %vm7484, %v7404, %v7488
    %v7490 = vsel %vm414, %v7458, %v7459
    %v7491 = vsel %vm7484, %v7406, %v7490
    %v7492 = vsel %vm414, %v7459, %v7460
    %v7493 = vsel %vm7484, %v7408, %v7492
    %v7494 = vsel %vm414, %v7460, %v7461
    %v7495 = vsel %vm7484, %v7410, %v7494
    %v7496 = vsel %vm414, %v7461, %v7462
    %v7497 = vsel %vm7484, %v7412, %v7496
    %v7498 = vsel %vm414, %v7462, %v7463
    %v7499 = vsel %vm7484, %v7414, %v7498
    %v7500 = vsel %vm414, %v7463, %v7464
    %v7501 = vsel %vm7484, %v7416, %v7500
    %v7502 = vsel %vm414, %v7464, %v7465
    %v7503 = vsel %vm7484, %v7418, %v7502
    %v7504 = vsel %vm414, %v7465, %v7466
    %v7505 = vsel %vm7484, %v7420, %v7504
    %v7506 = vsel %vm414, %v7466, %v7467
    %v7507 = vsel %vm7484, %v7422, %v7506
    %v7508 = vsel %vm414, %v7467, %v7468
    %v7509 = vsel %vm7484, %v7424, %v7508
    %v7510 = vsel %vm414, %v7468, %v7469
    %v7511 = vsel %vm7484, %v7426, %v7510
    %v7512 = vsel %vm414, %v7469, %v7470
    %v7513 = vsel %vm7484, %v7428, %v7512
    %v7514 = vsel %vm414, %v7470, %v7471
    %v7515 = vsel %vm7484, %v7430, %v7514
    %v7516 = vsel %vm414, %v7471, %v7472
    %v7517 = vsel %vm7484, %v7432, %v7516
    %v7518 = vsel %vm414, %v7472, %v7473
    %v7519 = vsel %vm7484, %v7434, %v7518
    %v7520 = vsel %vm414, %v7473, %v7474
    %v7521 = vsel %vm7484, %v7436, %v7520
    %v7522 = vsel %vm414, %v7474, %v7475
    %v7523 = vsel %vm7484, %v7438, %v7522
    %v7524 = vsel %vm414, %v7475, %v7476
    %v7525 = vsel %vm7484, %v7440, %v7524
    %v7526 = vsel %vm414, %v7476, %v7477
    %v7527 = vsel %vm7484, %v7442, %v7526
    %v7528 = vsel %vm414, %v7477, %v7478
    %v7529 = vsel %vm7484, %v7444, %v7528
    %v7530 = vsel %vm414, %v7478, %v7479
    %v7531 = vsel %vm7484, %v7446, %v7530
    %v7532 = vsel %vm414, %v7479, %v7480
    %v7533 = vsel %vm7484, %v7448, %v7532
    %v7534 = vsel %vm414, %v7480, %v7481
    %v7535 = vsel %vm7484, %v7450, %v7534
    %v7536 = vsel %vm414, %v7481, %v7482
    %v7537 = vsel %vm7484, %v7452, %v7536
    %7565 = vst [vmem:[#allocation3 + $0xa20] sm:$0xcc] %v7485
    %7566 = vst [vmem:[#allocation3 + $0xa28] sm:$0xcc] %v7487
    %7567 = vst [vmem:[#allocation3 + $0xa30] sm:$0xcc] %v7489
    %7568 = vst [vmem:[#allocation3 + $0xa38] sm:$0xcc] %v7491
    %7569 = vst [vmem:[#allocation3 + $0xa40] sm:$0xcc] %v7493
    %7570 = vst [vmem:[#allocation3 + $0xa48] sm:$0xcc] %v7495
    %7571 = vst [vmem:[#allocation3 + $0xa50] sm:$0xcc] %v7497
    %7572 = vst [vmem:[#allocation3 + $0xa58] sm:$0xcc] %v7499
    %7573 = vst [vmem:[#allocation3 + $0xa60] sm:$0xcc] %v7501
    %7574 = vst [vmem:[#allocation3 + $0xa68] sm:$0xcc] %v7503
    %7575 = vst [vmem:[#allocation3 + $0xa70] sm:$0xcc] %v7505
    %7576 = vst [vmem:[#allocation3 + $0xa78] sm:$0xcc] %v7507
    %7577 = vst [vmem:[#allocation3 + $0xa80] sm:$0xcc] %v7509
    %7578 = vst [vmem:[#allocation3 + $0xa88] sm:$0xcc] %v7511
    %7579 = vst [vmem:[#allocation3 + $0xa90] sm:$0xcc] %v7513
    %7580 = vst [vmem:[#allocation3 + $0xa98] sm:$0xcc] %v7515
    %7581 = vst [vmem:[#allocation3 + $0xaa0] sm:$0xcc] %v7517
    %7582 = vst [vmem:[#allocation3 + $0xaa8] sm:$0xcc] %v7519
    %7583 = vst [vmem:[#allocation3 + $0xab0] sm:$0xcc] %v7521
    %7584 = vst [vmem:[#allocation3 + $0xab8] sm:$0xcc] %v7523
    %7585 = vst [vmem:[#allocation3 + $0xac0] sm:$0xcc] %v7525
    %7586 = vst [vmem:[#allocation3 + $0xac8] sm:$0xcc] %v7527
    %7587 = vst [vmem:[#allocation3 + $0xad0] sm:$0xcc] %v7529
    %7588 = vst [vmem:[#allocation3 + $0xad8] sm:$0xcc] %v7531
    %7589 = vst [vmem:[#allocation3 + $0xae0] sm:$0xcc] %v7533
    %7590 = vst [vmem:[#allocation3 + $0xae8] sm:$0xcc] %v7535
    %7591 = vst [vmem:[#allocation3 + $0xaf0] sm:$0xcc] %v7537
    %v7592 = vld [vmem:[#allocation2 + $0xa] sm:$0xff]
    %v7593 = vld [vmem:[#allocation2 + $0x12] sm:$0xff]
    %v7594 = vld [vmem:[#allocation2 + $0x1a] sm:$0xff]
    %v7595 = vld [vmem:[#allocation2 + $0x22] sm:$0xff]
    %v7596 = vld [vmem:[#allocation2 + $0x2a] sm:$0xff]
    %v7597 = vld [vmem:[#allocation2 + $0x32] sm:$0xff]
    %v7598 = vld [vmem:[#allocation2 + $0x3a] sm:$0xff]
    %v7599 = vld [vmem:[#allocation2 + $0x42] sm:$0xff]
    %v7600 = vld [vmem:[#allocation2 + $0x4a] sm:$0xff]
    %v7601 = vld [vmem:[#allocation2 + $0x52] sm:$0xff]
    %v7602 = vld [vmem:[#allocation2 + $0x5a] sm:$0xff]
    %v7603 = vld [vmem:[#allocation2 + $0x62] sm:$0xff]
    %v7604 = vld [vmem:[#allocation2 + $0x6a] sm:$0xff]
    %v7605 = vld [vmem:[#allocation2 + $0x72] sm:$0x3f]
    %7607 = vst [vmem:[#allocation1] ss:$2 sm:$0xff] %v7592
    %s7609 = scalar_lea.vmem [#allocation1], 16
    %7610 = vst [vmem:[%s7609] ss:$2 sm:$0xff] %v7593
    %s7612 = scalar_lea.vmem [#allocation1], 32
    %7613 = vst [vmem:[%s7612] ss:$2 sm:$0xff] %v7594
    %s7615 = scalar_lea.vmem [#allocation1], 48
    %7616 = vst [vmem:[%s7615] ss:$2 sm:$0xff] %v7595
    %v7617 = vld.sshfl [vmem:[#allocation1] sm:$0xff pattern:$0x75643120]
    %v7619 = vld.sshfl [vmem:[#allocation1 + $0x8] sm:$0xff pattern:$0x75643120]
    %v7621 = vld.sshfl [vmem:[#allocation1 + $0x10] sm:$0xff pattern:$0x75643120]
    %v7623 = vld.sshfl [vmem:[#allocation1 + $0x18] sm:$0xff pattern:$0x75643120]
    %v7625 = vld.sshfl [vmem:[#allocation1 + $0x20] sm:$0xff pattern:$0x75643120]
    %v7627 = vld.sshfl [vmem:[#allocation1 + $0x28] sm:$0xff pattern:$0x75643120]
    %v7629 = vld.sshfl [vmem:[#allocation1 + $0x30] sm:$0xff pattern:$0x75643120]
    %v7631 = vld.sshfl [vmem:[#allocation1 + $0x38] sm:$0xff pattern:$0x75643120]
    %7634 = vst [vmem:[#allocation1] ss:$2 sm:$0xff] %v7596
    %7636 = vst [vmem:[%s7609] ss:$2 sm:$0xff] %v7597
    %7638 = vst [vmem:[%s7612] ss:$2 sm:$0xff] %v7598
    %7640 = vst [vmem:[%s7615] ss:$2 sm:$0xff] %v7599
    %v7641 = vld.sshfl [vmem:[#allocation1] sm:$0xff pattern:$0x75643120]
    %v7643 = vld.sshfl [vmem:[#allocation1 + $0x8] sm:$0xff pattern:$0x75643120]
    %v7645 = vld.sshfl [vmem:[#allocation1 + $0x10] sm:$0xff pattern:$0x75643120]
    %v7647 = vld.sshfl [vmem:[#allocation1 + $0x18] sm:$0xff pattern:$0x75643120]
    %v7649 = vld.sshfl [vmem:[#allocation1 + $0x20] sm:$0xff pattern:$0x75643120]
    %v7651 = vld.sshfl [vmem:[#allocation1 + $0x28] sm:$0xff pattern:$0x75643120]
    %v7653 = vld.sshfl [vmem:[#allocation1 + $0x30] sm:$0xff pattern:$0x75643120]
    %v7655 = vld.sshfl [vmem:[#allocation1 + $0x38] sm:$0xff pattern:$0x75643120]
    %7658 = vst [vmem:[#allocation1] ss:$2 sm:$0xff] %v7600
    %7660 = vst [vmem:[%s7609] ss:$2 sm:$0xff] %v7601
    %7662 = vst [vmem:[%s7612] ss:$2 sm:$0xff] %v7602
    %7664 = vst [vmem:[%s7615] ss:$2 sm:$0xff] %v7603
    %v7665 = vld.sshfl [vmem:[#allocation1] sm:$0xff pattern:$0x75643120]
    %v7667 = vld.sshfl [vmem:[#allocation1 + $0x8] sm:$0xff pattern:$0x75643120]
    %v7669 = vld.sshfl [vmem:[#allocation1 + $0x10] sm:$0xff pattern:$0x75643120]
    %v7671 = vld.sshfl [vmem:[#allocation1 + $0x18] sm:$0xff pattern:$0x75643120]
    %v7673 = vld.sshfl [vmem:[#allocation1 + $0x20] sm:$0xff pattern:$0x75643120]
    %v7675 = vld.sshfl [vmem:[#allocation1 + $0x28] sm:$0xff pattern:$0x75643120]
    %v7677 = vld.sshfl [vmem:[#allocation1 + $0x30] sm:$0xff pattern:$0x75643120]
    %v7679 = vld.sshfl [vmem:[#allocation1 + $0x38] sm:$0xff pattern:$0x75643120]
    %7682 = vst [vmem:[#allocation1] ss:$2 sm:$0xff] %v7604
    %7684 = vst [vmem:[%s7609] ss:$2 sm:$0xff] %v7605
    %v7685 = vld.sshfl [vmem:[#allocation1] sm:$0xff pattern:$0x75643120]
    %v7687 = vld.sshfl [vmem:[#allocation1 + $0x8] sm:$0xff pattern:$0x75643120]
    %v7689 = vld.sshfl [vmem:[#allocation1 + $0x10] sm:$0xff pattern:$0x75643120]
    %v7691 = vld.sshfl [vmem:[#allocation1 + $0x18] sm:$0xff pattern:$0x75643120]
    %7693 = vrot.lane.b32.xlu0 %v7617, 82
    %v7694 = vpop.permute.xlu0 %7693
    %7695 = vrot.lane.b32.xlu0 %v7619, 82
    %v7696 = vpop.permute.xlu0 %7695
    %7697 = vrot.lane.b32.xlu0 %v7621, 82
    %v7698 = vpop.permute.xlu0 %7697
    %7699 = vrot.lane.b32.xlu0 %v7623, 82
    %v7700 = vpop.permute.xlu0 %7699
    %7701 = vrot.lane.b32.xlu0 %v7625, 82
    %v7702 = vpop.permute.xlu0 %7701
    %7703 = vrot.lane.b32.xlu0 %v7627, 82
    %v7704 = vpop.permute.xlu0 %7703
    %7705 = vrot.lane.b32.xlu0 %v7629, 82
    %v7706 = vpop.permute.xlu0 %7705
    %7707 = vrot.lane.b32.xlu0 %v7631, 82
    %v7708 = vpop.permute.xlu0 %7707
    %7709 = vrot.lane.b32.xlu0 %v7641, 82
    %v7710 = vpop.permute.xlu0 %7709
    %7711 = vrot.lane.b32.xlu0 %v7643, 82
    %v7712 = vpop.permute.xlu0 %7711
    %7713 = vrot.lane.b32.xlu0 %v7645, 82
    %v7714 = vpop.permute.xlu0 %7713
    %7715 = vrot.lane.b32.xlu0 %v7647, 82
    %v7716 = vpop.permute.xlu0 %7715
    %7717 = vrot.lane.b32.xlu0 %v7649, 82
    %v7718 = vpop.permute.xlu0 %7717
    %7719 = vrot.lane.b32.xlu0 %v7651, 82
    %v7720 = vpop.permute.xlu0 %7719
    %7721 = vrot.lane.b32.xlu0 %v7653, 82
    %v7722 = vpop.permute.xlu0 %7721
    %7723 = vrot.lane.b32.xlu0 %v7655, 82
    %v7724 = vpop.permute.xlu0 %7723
    %7725 = vrot.lane.b32.xlu0 %v7665, 82
    %v7726 = vpop.permute.xlu0 %7725
    %7727 = vrot.lane.b32.xlu0 %v7667, 82
    %v7728 = vpop.permute.xlu0 %7727
    %7729 = vrot.lane.b32.xlu0 %v7669, 82
    %v7730 = vpop.permute.xlu0 %7729
    %7731 = vrot.lane.b32.xlu0 %v7671, 82
    %v7732 = vpop.permute.xlu0 %7731
    %7733 = vrot.lane.b32.xlu0 %v7673, 82
    %v7734 = vpop.permute.xlu0 %7733
    %7735 = vrot.lane.b32.xlu0 %v7675, 82
    %v7736 = vpop.permute.xlu0 %7735
    %7737 = vrot.lane.b32.xlu0 %v7677, 82
    %v7738 = vpop.permute.xlu0 %7737
    %7739 = vrot.lane.b32.xlu0 %v7679, 82
    %v7740 = vpop.permute.xlu0 %7739
    %7741 = vrot.lane.b32.xlu0 %v7685, 82
    %v7742 = vpop.permute.xlu0 %7741
    %7743 = vrot.lane.b32.xlu0 %v7687, 82
    %v7744 = vpop.permute.xlu0 %7743
    %7745 = vrot.lane.b32.xlu0 %v7689, 82
    %v7746 = vpop.permute.xlu0 %7745
    %7747 = vrot.lane.b32.xlu0 %v7691, 82
    %v7748 = vpop.permute.xlu0 %7747
    %v7749 = vrot.slane %v7694, 4
    %v7750 = vrot.slane %v7696, 4
    %v7751 = vrot.slane %v7698, 4
    %v7752 = vrot.slane %v7700, 4
    %v7753 = vrot.slane %v7702, 4
    %v7754 = vrot.slane %v7704, 4
    %v7755 = vrot.slane %v7706, 4
    %v7756 = vrot.slane %v7708, 4
    %v7757 = vrot.slane %v7710, 4
    %v7758 = vrot.slane %v7712, 4
    %v7759 = vrot.slane %v7714, 4
    %v7760 = vrot.slane %v7716, 4
    %v7761 = vrot.slane %v7718, 4
    %v7762 = vrot.slane %v7720, 4
    %v7763 = vrot.slane %v7722, 4
    %v7764 = vrot.slane %v7724, 4
    %v7765 = vrot.slane %v7726, 4
    %v7766 = vrot.slane %v7728, 4
    %v7767 = vrot.slane %v7730, 4
    %v7768 = vrot.slane %v7732, 4
    %v7769 = vrot.slane %v7734, 4
    %v7770 = vrot.slane %v7736, 4
    %v7771 = vrot.slane %v7738, 4
    %v7772 = vrot.slane %v7740, 4
    %v7773 = vrot.slane %v7742, 4
    %v7774 = vrot.slane %v7744, 4
    %v7775 = vrot.slane %v7746, 4
    %v7776 = vrot.slane %v7748, 4
    %v7777 = vsel %vm414, %v7749, %v7750
    %vm7778 = vcmask 670720
    %v7779 = vsel %vm7778, %v7694, %v7777
    %v7780 = vsel %vm414, %v7750, %v7751
    %v7781 = vsel %vm7778, %v7696, %v7780
    %v7782 = vsel %vm414, %v7751, %v7752
    %v7783 = vsel %vm7778, %v7698, %v7782
    %v7784 = vsel %vm414, %v7752, %v7753
    %v7785 = vsel %vm7778, %v7700, %v7784
    %v7786 = vsel %vm414, %v7753, %v7754
    %v7787 = vsel %vm7778, %v7702, %v7786
    %v7788 = vsel %vm414, %v7754, %v7755
    %v7789 = vsel %vm7778, %v7704, %v7788
    %v7790 = vsel %vm414, %v7755, %v7756
    %v7791 = vsel %vm7778, %v7706, %v7790
    %v7792 = vsel %vm414, %v7756, %v7757
    %v7793 = vsel %vm7778, %v7708, %v7792
    %v7794 = vsel %vm414, %v7757, %v7758
    %v7795 = vsel %vm7778, %v7710, %v7794
    %v7796 = vsel %vm414, %v7758, %v7759
    %v7797 = vsel %vm7778, %v7712, %v7796
    %v7798 = vsel %vm414, %v7759, %v7760
    %v7799 = vsel %vm7778, %v7714, %v7798
    %v7800 = vsel %vm414, %v7760, %v7761
    %v7801 = vsel %vm7778, %v7716, %v7800
    %v7802 = vsel %vm414, %v7761, %v7762
    %v7803 = vsel %vm7778, %v7718, %v7802
    %v7804 = vsel %vm414, %v7762, %v7763
    %v7805 = vsel %vm7778, %v7720, %v7804
    %v7806 = vsel %vm414, %v7763, %v7764
    %v7807 = vsel %vm7778, %v7722, %v7806
    %v7808 = vsel %vm414, %v7764, %v7765
    %v7809 = vsel %vm7778, %v7724, %v7808
    %v7810 = vsel %vm414, %v7765, %v7766
    %v7811 = vsel %vm7778, %v7726, %v7810
    %v7812 = vsel %vm414, %v7766, %v7767
    %v7813 = vsel %vm7778, %v7728, %v7812
    %v7814 = vsel %vm414, %v7767, %v7768
    %v7815 = vsel %vm7778, %v7730, %v7814
    %v7816 = vsel %vm414, %v7768, %v7769
    %v7817 = vsel %vm7778, %v7732, %v7816
    %v7818 = vsel %vm414, %v7769, %v7770
    %v7819 = vsel %vm7778, %v7734, %v7818
    %v7820 = vsel %vm414, %v7770, %v7771
    %v7821 = vsel %vm7778, %v7736, %v7820
    %v7822 = vsel %vm414, %v7771, %v7772
    %v7823 = vsel %vm7778, %v7738, %v7822
    %v7824 = vsel %vm414, %v7772, %v7773
    %v7825 = vsel %vm7778, %v7740, %v7824
    %v7826 = vsel %vm414, %v7773, %v7774
    %v7827 = vsel %vm7778, %v7742, %v7826
    %v7828 = vsel %vm414, %v7774, %v7775
    %v7829 = vsel %vm7778, %v7744, %v7828
    %v7830 = vsel %vm414, %v7775, %v7776
    %v7831 = vsel %vm7778, %v7746, %v7830
    %7859 = vst [vmem:[#allocation3 + $0xaf8] sm:$0x33] %v7779
    %7860 = vst [vmem:[#allocation3 + $0xb00] sm:$0x33] %v7781
    %7861 = vst [vmem:[#allocation3 + $0xb08] sm:$0x33] %v7783
    %7862 = vst [vmem:[#allocation3 + $0xb10] sm:$0x33] %v7785
    %7863 = vst [vmem:[#allocation3 + $0xb18] sm:$0x33] %v7787
    %7864 = vst [vmem:[#allocation3 + $0xb20] sm:$0x33] %v7789
    %7865 = vst [vmem:[#allocation3 + $0xb28] sm:$0x33] %v7791
    %7866 = vst [vmem:[#allocation3 + $0xb30] sm:$0x33] %v7793
    %7867 = vst [vmem:[#allocation3 + $0xb38] sm:$0x33] %v7795
    %7868 = vst [vmem:[#allocation3 + $0xb40] sm:$0x33] %v7797
    %7869 = vst [vmem:[#allocation3 + $0xb48] sm:$0x33] %v7799
    %7870 = vst [vmem:[#allocation3 + $0xb50] sm:$0x33] %v7801
    %7871 = vst [vmem:[#allocation3 + $0xb58] sm:$0x33] %v7803
    %7872 = vst [vmem:[#allocation3 + $0xb60] sm:$0x33] %v7805
    %7873 = vst [vmem:[#allocation3 + $0xb68] sm:$0x33] %v7807
    %7874 = vst [vmem:[#allocation3 + $0xb70] sm:$0x33] %v7809
    %7875 = vst [vmem:[#allocation3 + $0xb78] sm:$0x33] %v7811
    %7876 = vst [vmem:[#allocation3 + $0xb80] sm:$0x33] %v7813
    %7877 = vst [vmem:[#allocation3 + $0xb88] sm:$0x33] %v7815
    %7878 = vst [vmem:[#allocation3 + $0xb90] sm:$0x33] %v7817
    %7879 = vst [vmem:[#allocation3 + $0xb98] sm:$0x33] %v7819
    %7880 = vst [vmem:[#allocation3 + $0xba0] sm:$0x33] %v7821
    %7881 = vst [vmem:[#allocation3 + $0xba8] sm:$0x33] %v7823
    %7882 = vst [vmem:[#allocation3 + $0xbb0] sm:$0x33] %v7825
    %7883 = vst [vmem:[#allocation3 + $0xbb8] sm:$0x33] %v7827
    %7884 = vst [vmem:[#allocation3 + $0xbc0] sm:$0x33] %v7829
    %7885 = vst [vmem:[#allocation3 + $0xbc8] sm:$0x33] %v7831
    %v7886 = vld [vmem:[%s2] sm:$0x3]
    %v7887 = vld [vmem:[#allocation3] sm:$0xff]
    %v7888 = vld [vmem:[#allocation3 + $0x8] sm:$0xff]
    %v7889 = vld [vmem:[#allocation3 + $0x10] sm:$0xff]
    %v7890 = vld [vmem:[#allocation3 + $0x18] sm:$0xff]
    %v7891 = vld [vmem:[#allocation3 + $0x20] sm:$0xff]
    %v7892 = vld [vmem:[#allocation3 + $0x28] sm:$0xff]
    %v7893 = vld [vmem:[#allocation3 + $0x30] sm:$0xff]
    %v7894 = vld [vmem:[#allocation3 + $0x38] sm:$0xff]
    %v7895 = vld [vmem:[#allocation3 + $0x40] sm:$0xff]
    %v7896 = vld [vmem:[#allocation3 + $0x48] sm:$0xff]
    %v7897 = vld [vmem:[#allocation3 + $0x50] sm:$0xff]
    %v7898 = vld [vmem:[#allocation3 + $0x58] sm:$0xff]
    %v7899 = vld [vmem:[#allocation3 + $0x60] sm:$0xff]
    %v7900 = vld [vmem:[#allocation3 + $0x68] sm:$0xff]
    %v7901 = vld [vmem:[#allocation3 + $0x70] sm:$0xff]
    %v7902 = vld [vmem:[#allocation3 + $0x78] sm:$0xff]
    %v7903 = vld [vmem:[#allocation3 + $0x80] sm:$0xff]
    %v7904 = vld [vmem:[#allocation3 + $0x88] sm:$0xff]
    %v7905 = vld [vmem:[#allocation3 + $0x90] sm:$0xff]
    %v7906 = vld [vmem:[#allocation3 + $0x98] sm:$0xff]
    %v7907 = vld [vmem:[#allocation3 + $0xa0] sm:$0xff]
    %v7908 = vld [vmem:[#allocation3 + $0xa8] sm:$0xff]
    %v7909 = vld [vmem:[#allocation3 + $0xb0] sm:$0xff]
    %v7910 = vld [vmem:[#allocation3 + $0xb8] sm:$0xff]
    %v7911 = vld [vmem:[#allocation3 + $0xc0] sm:$0xff]
    %v7912 = vld [vmem:[#allocation3 + $0xc8] sm:$0xff]
    %v7913 = vld [vmem:[#allocation3 + $0xd0] sm:$0xff]
    %v7914 = vld [vmem:[#allocation3 + $0xd8] sm:$0xff]
    %v7915 = vld [vmem:[#allocation3 + $0xe0] sm:$0xff]
    %v7916 = vld [vmem:[#allocation3 + $0xe8] sm:$0xff]
    %v7917 = vld [vmem:[#allocation3 + $0xf0] sm:$0xff]
    %v7918 = vld [vmem:[#allocation3 + $0xf8] sm:$0xff]
    %v7919 = vld [vmem:[#allocation3 + $0x100] sm:$0xff]
    %v7920 = vld [vmem:[#allocation3 + $0x108] sm:$0xff]
    %v7921 = vld [vmem:[#allocation3 + $0x110] sm:$0xff]
    %v7922 = vld [vmem:[#allocation3 + $0x118] sm:$0xff]
    %v7923 = vld [vmem:[#allocation3 + $0x120] sm:$0xff]
    %v7924 = vld [vmem:[#allocation3 + $0x128] sm:$0xff]
    %v7925 = vld [vmem:[#allocation3 + $0x130] sm:$0xff]
    %v7926 = vld [vmem:[#allocation3 + $0x138] sm:$0xff]
    %v7927 = vld [vmem:[#allocation3 + $0x140] sm:$0xff]
    %v7928 = vld [vmem:[#allocation3 + $0x148] sm:$0xff]
    %v7929 = vld [vmem:[#allocation3 + $0x150] sm:$0xff]
    %v7930 = vld [vmem:[#allocation3 + $0x158] sm:$0xff]
    %v7931 = vld [vmem:[#allocation3 + $0x160] sm:$0xff]
    %v7932 = vld [vmem:[#allocation3 + $0x168] sm:$0xff]
    %v7933 = vld [vmem:[#allocation3 + $0x170] sm:$0xff]
    %v7934 = vld [vmem:[#allocation3 + $0x178] sm:$0xff]
    %v7935 = vld [vmem:[#allocation3 + $0x180] sm:$0xff]
    %v7936 = vld [vmem:[#allocation3 + $0x188] sm:$0xff]
    %v7937 = vld [vmem:[#allocation3 + $0x190] sm:$0xff]
    %v7938 = vld [vmem:[#allocation3 + $0x198] sm:$0xff]
    %v7939 = vld [vmem:[#allocation3 + $0x1a0] sm:$0xff]
    %v7940 = vld [vmem:[#allocation3 + $0x1a8] sm:$0xff]
    %v7941 = vld [vmem:[#allocation3 + $0x1b0] sm:$0xff]
    %v7942 = vld [vmem:[#allocation3 + $0x1b8] sm:$0xff]
    %v7943 = vld [vmem:[#allocation3 + $0x1c0] sm:$0xff]
    %v7944 = vld [vmem:[#allocation3 + $0x1c8] sm:$0xff]
    %v7945 = vld [vmem:[#allocation3 + $0x1d0] sm:$0xff]
    %v7946 = vld [vmem:[#allocation3 + $0x1d8] sm:$0xff]
    %v7947 = vld [vmem:[#allocation3 + $0x1e0] sm:$0xff]
    %v7948 = vld [vmem:[#allocation3 + $0x1e8] sm:$0xff]
    %v7949 = vld [vmem:[#allocation3 + $0x1f0] sm:$0xff]
    %v7950 = vld [vmem:[#allocation3 + $0x1f8] sm:$0xff]
    %v7951 = vld [vmem:[#allocation3 + $0x200] sm:$0xff]
    %v7952 = vld [vmem:[#allocation3 + $0x208] sm:$0xff]
    %v7953 = vld [vmem:[#allocation3 + $0x210] sm:$0xff]
    %v7954 = vld [vmem:[#allocation3 + $0x218] sm:$0xff]
    %v7955 = vld [vmem:[#allocation3 + $0x220] sm:$0xff]
    %v7956 = vld [vmem:[#allocation3 + $0x228] sm:$0xff]
    %v7957 = vld [vmem:[#allocation3 + $0x230] sm:$0xff]
    %v7958 = vld [vmem:[#allocation3 + $0x238] sm:$0xff]
    %v7959 = vld [vmem:[#allocation3 + $0x240] sm:$0xff]
    %v7960 = vld [vmem:[#allocation3 + $0x248] sm:$0xff]
    %v7961 = vld [vmem:[#allocation3 + $0x250] sm:$0xff]
    %v7962 = vld [vmem:[#allocation3 + $0x258] sm:$0xff]
    %v7963 = vld [vmem:[#allocation3 + $0x260] sm:$0xff]
    %v7964 = vld [vmem:[#allocation3 + $0x268] sm:$0xff]
    %v7965 = vld [vmem:[#allocation3 + $0x270] sm:$0xff]
    %v7966 = vld [vmem:[#allocation3 + $0x278] sm:$0xff]
    %v7967 = vld [vmem:[#allocation3 + $0x280] sm:$0xff]
    %v7968 = vld [vmem:[#allocation3 + $0x288] sm:$0xff]
    %v7969 = vld [vmem:[#allocation3 + $0x290] sm:$0xff]
    %v7970 = vld [vmem:[#allocation3 + $0x298] sm:$0xff]
    %v7971 = vld [vmem:[#allocation3 + $0x2a0] sm:$0xff]
    %v7972 = vld [vmem:[#allocation3 + $0x2a8] sm:$0xff]
    %v7973 = vld [vmem:[#allocation3 + $0x2b0] sm:$0xff]
    %v7974 = vld [vmem:[#allocation3 + $0x2b8] sm:$0xff]
    %v7975 = vld [vmem:[#allocation3 + $0x2c0] sm:$0xff]
    %v7976 = vld [vmem:[#allocation3 + $0x2c8] sm:$0xff]
    %v7977 = vld [vmem:[#allocation3 + $0x2d0] sm:$0xff]
    %v7978 = vld [vmem:[#allocation3 + $0x2d8] sm:$0xff]
    %v7979 = vld [vmem:[#allocation3 + $0x2e0] sm:$0xff]
    %v7980 = vld [vmem:[#allocation3 + $0x2e8] sm:$0xff]
    %v7981 = vld [vmem:[#allocation3 + $0x2f0] sm:$0xff]
    %v7982 = vld [vmem:[#allocation3 + $0x2f8] sm:$0xff]
    %v7983 = vld [vmem:[#allocation3 + $0x300] sm:$0xff]
    %v7984 = vld [vmem:[#allocation3 + $0x308] sm:$0xff]
    %v7985 = vld [vmem:[#allocation3 + $0x310] sm:$0xff]
    %v7986 = vld [vmem:[#allocation3 + $0x318] sm:$0xff]
    %v7987 = vld [vmem:[#allocation3 + $0x320] sm:$0xff]
    %v7988 = vld [vmem:[#allocation3 + $0x328] sm:$0xff]
    %v7989 = vld [vmem:[#allocation3 + $0x330] sm:$0xff]
    %v7990 = vld [vmem:[#allocation3 + $0x338] sm:$0xff]
    %v7991 = vld [vmem:[#allocation3 + $0x340] sm:$0xff]
    %v7992 = vld [vmem:[#allocation3 + $0x348] sm:$0xff]
    %v7993 = vld [vmem:[#allocation3 + $0x350] sm:$0xff]
    %v7994 = vld [vmem:[#allocation3 + $0x358] sm:$0xff]
    %v7995 = vld [vmem:[#allocation3 + $0x360] sm:$0xff]
    %v7996 = vld [vmem:[#allocation3 + $0x368] sm:$0xff]
    %v7997 = vld [vmem:[#allocation3 + $0x370] sm:$0xff]
    %v7998 = vld [vmem:[#allocation3 + $0x378] sm:$0xff]
    %v7999 = vld [vmem:[#allocation3 + $0x380] sm:$0xff]
    %v8000 = vld [vmem:[#allocation3 + $0x388] sm:$0xff]
    %v8001 = vld [vmem:[#allocation3 + $0x390] sm:$0xff]
    %v8002 = vld [vmem:[#allocation3 + $0x398] sm:$0xff]
    %v8003 = vld [vmem:[#allocation3 + $0x3a0] sm:$0xff]
    %v8004 = vld [vmem:[#allocation3 + $0x3a8] sm:$0xff]
    %v8005 = vld [vmem:[#allocation3 + $0x3b0] sm:$0xff]
    %v8006 = vld [vmem:[#allocation3 + $0x3b8] sm:$0xff]
    %v8007 = vld [vmem:[#allocation3 + $0x3c0] sm:$0xff]
    %v8008 = vld [vmem:[#allocation3 + $0x3c8] sm:$0xff]
    %v8009 = vld [vmem:[#allocation3 + $0x3d0] sm:$0xff]
    %v8010 = vld [vmem:[#allocation3 + $0x3d8] sm:$0xff]
    %v8011 = vld [vmem:[#allocation3 + $0x3e0] sm:$0xff]
    %v8012 = vld [vmem:[#allocation3 + $0x3e8] sm:$0xff]
    %v8013 = vld [vmem:[#allocation3 + $0x3f0] sm:$0xff]
    %v8014 = vld [vmem:[#allocation3 + $0x3f8] sm:$0xff]
    %v8015 = vld [vmem:[#allocation3 + $0x400] sm:$0xff]
    %v8016 = vld [vmem:[#allocation3 + $0x408] sm:$0xff]
    %v8017 = vld [vmem:[#allocation3 + $0x410] sm:$0xff]
    %v8018 = vld [vmem:[#allocation3 + $0x418] sm:$0xff]
    %v8019 = vld [vmem:[#allocation3 + $0x420] sm:$0xff]
    %v8020 = vld [vmem:[#allocation3 + $0x428] sm:$0xff]
    %v8021 = vld [vmem:[#allocation3 + $0x430] sm:$0xff]
    %v8022 = vld [vmem:[#allocation3 + $0x438] sm:$0xff]
    %v8023 = vld [vmem:[#allocation3 + $0x440] sm:$0xff]
    %v8024 = vld [vmem:[#allocation3 + $0x448] sm:$0xff]
    %v8025 = vld [vmem:[#allocation3 + $0x450] sm:$0xff]
    %v8026 = vld [vmem:[#allocation3 + $0x458] sm:$0xff]
    %v8027 = vld [vmem:[#allocation3 + $0x460] sm:$0xff]
    %v8028 = vld [vmem:[#allocation3 + $0x468] sm:$0xff]
    %v8029 = vld [vmem:[#allocation3 + $0x470] sm:$0xff]
    %v8030 = vld [vmem:[#allocation3 + $0x478] sm:$0xff]
    %v8031 = vld [vmem:[#allocation3 + $0x480] sm:$0xff]
    %v8032 = vld [vmem:[#allocation3 + $0x488] sm:$0xff]
    %v8033 = vld [vmem:[#allocation3 + $0x490] sm:$0xff]
    %v8034 = vld [vmem:[#allocation3 + $0x498] sm:$0xff]
    %v8035 = vld [vmem:[#allocation3 + $0x4a0] sm:$0xff]
    %v8036 = vld [vmem:[#allocation3 + $0x4a8] sm:$0xff]
    %v8037 = vld [vmem:[#allocation3 + $0x4b0] sm:$0xff]
    %v8038 = vld [vmem:[#allocation3 + $0x4b8] sm:$0xff]
    %v8039 = vld [vmem:[#allocation3 + $0x4c0] sm:$0xff]
    %v8040 = vld [vmem:[#allocation3 + $0x4c8] sm:$0xff]
    %v8041 = vld [vmem:[#allocation3 + $0x4d0] sm:$0xff]
    %v8042 = vld [vmem:[#allocation3 + $0x4d8] sm:$0xff]
    %v8043 = vld [vmem:[#allocation3 + $0x4e0] sm:$0xff]
    %v8044 = vld [vmem:[#allocation3 + $0x4e8] sm:$0xff]
    %v8045 = vld [vmem:[#allocation3 + $0x4f0] sm:$0xff]
    %v8046 = vld [vmem:[#allocation3 + $0x4f8] sm:$0xff]
    %v8047 = vld [vmem:[#allocation3 + $0x500] sm:$0xff]
    %v8048 = vld [vmem:[#allocation3 + $0x508] sm:$0xff]
    %v8049 = vld [vmem:[#allocation3 + $0x510] sm:$0xff]
    %v8050 = vld [vmem:[#allocation3 + $0x518] sm:$0xff]
    %v8051 = vld [vmem:[#allocation3 + $0x520] sm:$0xff]
    %v8052 = vld [vmem:[#allocation3 + $0x528] sm:$0xff]
    %v8053 = vld [vmem:[#allocation3 + $0x530] sm:$0xff]
    %v8054 = vld [vmem:[#allocation3 + $0x538] sm:$0xff]
    %v8055 = vld [vmem:[#allocation3 + $0x540] sm:$0xff]
    %v8056 = vld [vmem:[#allocation3 + $0x548] sm:$0xff]
    %v8057 = vld [vmem:[#allocation3 + $0x550] sm:$0xff]
    %v8058 = vld [vmem:[#allocation3 + $0x558] sm:$0xff]
    %v8059 = vld [vmem:[#allocation3 + $0x560] sm:$0xff]
    %v8060 = vld [vmem:[#allocation3 + $0x568] sm:$0xff]
    %v8061 = vld [vmem:[#allocation3 + $0x570] sm:$0xff]
    %v8062 = vld [vmem:[#allocation3 + $0x578] sm:$0xff]
    %v8063 = vld [vmem:[#allocation3 + $0x580] sm:$0xff]
    %v8064 = vld [vmem:[#allocation3 + $0x588] sm:$0xff]
    %v8065 = vld [vmem:[#allocation3 + $0x590] sm:$0xff]
    %v8066 = vld [vmem:[#allocation3 + $0x598] sm:$0xff]
    %v8067 = vld [vmem:[#allocation3 + $0x5a0] sm:$0xff]
    %v8068 = vld [vmem:[#allocation3 + $0x5a8] sm:$0xff]
    %v8069 = vld [vmem:[#allocation3 + $0x5b0] sm:$0xff]
    %v8070 = vld [vmem:[#allocation3 + $0x5b8] sm:$0xff]
    %v8071 = vld [vmem:[#allocation3 + $0x5c0] sm:$0xff]
    %v8072 = vld [vmem:[#allocation3 + $0x5c8] sm:$0xff]
    %v8073 = vld [vmem:[#allocation3 + $0x5d0] sm:$0xff]
    %v8074 = vld [vmem:[#allocation3 + $0x5d8] sm:$0xff]
    %v8075 = vld [vmem:[#allocation3 + $0x5e0] sm:$0xff]
    %v8076 = vld [vmem:[#allocation3 + $0x5e8] sm:$0xff]
    %v8077 = vld [vmem:[#allocation3 + $0x5f0] sm:$0xff]
    %v8078 = vld [vmem:[#allocation3 + $0x5f8] sm:$0xff]
    %v8079 = vld [vmem:[#allocation3 + $0x600] sm:$0xff]
    %v8080 = vld [vmem:[#allocation3 + $0x608] sm:$0xff]
    %v8081 = vld [vmem:[#allocation3 + $0x610] sm:$0xff]
    %v8082 = vld [vmem:[#allocation3 + $0x618] sm:$0xff]
    %v8083 = vld [vmem:[#allocation3 + $0x620] sm:$0xff]
    %v8084 = vld [vmem:[#allocation3 + $0x628] sm:$0xff]
    %v8085 = vld [vmem:[#allocation3 + $0x630] sm:$0xff]
    %v8086 = vld [vmem:[#allocation3 + $0x638] sm:$0xff]
    %v8087 = vld [vmem:[#allocation3 + $0x640] sm:$0xff]
    %v8088 = vld [vmem:[#allocation3 + $0x648] sm:$0xff]
    %v8089 = vld [vmem:[#allocation3 + $0x650] sm:$0xff]
    %v8090 = vld [vmem:[#allocation3 + $0x658] sm:$0xff]
    %v8091 = vld [vmem:[#allocation3 + $0x660] sm:$0xff]
    %v8092 = vld [vmem:[#allocation3 + $0x668] sm:$0xff]
    %v8093 = vld [vmem:[#allocation3 + $0x670] sm:$0xff]
    %v8094 = vld [vmem:[#allocation3 + $0x678] sm:$0xff]
    %v8095 = vld [vmem:[#allocation3 + $0x680] sm:$0xff]
    %v8096 = vld [vmem:[#allocation3 + $0x688] sm:$0xff]
    %v8097 = vld [vmem:[#allocation3 + $0x690] sm:$0xff]
    %v8098 = vld [vmem:[#allocation3 + $0x698] sm:$0xff]
    %v8099 = vld [vmem:[#allocation3 + $0x6a0] sm:$0xff]
    %v8100 = vld [vmem:[#allocation3 + $0x6a8] sm:$0xff]
    %v8101 = vld [vmem:[#allocation3 + $0x6b0] sm:$0xff]
    %v8102 = vld [vmem:[#allocation3 + $0x6b8] sm:$0xff]
    %v8103 = vld [vmem:[#allocation3 + $0x6c0] sm:$0xff]
    %v8104 = vld [vmem:[#allocation3 + $0x6c8] sm:$0xff]
    %v8105 = vld [vmem:[#allocation3 + $0x6d0] sm:$0xff]
    %v8106 = vld [vmem:[#allocation3 + $0x6d8] sm:$0xff]
    %v8107 = vld [vmem:[#allocation3 + $0x6e0] sm:$0xff]
    %v8108 = vld [vmem:[#allocation3 + $0x6e8] sm:$0xff]
    %v8109 = vld [vmem:[#allocation3 + $0x6f0] sm:$0xff]
    %v8110 = vld [vmem:[#allocation3 + $0x6f8] sm:$0xff]
    %v8111 = vld [vmem:[#allocation3 + $0x700] sm:$0xff]
    %v8112 = vld [vmem:[#allocation3 + $0x708] sm:$0xff]
    %v8113 = vld [vmem:[#allocation3 + $0x710] sm:$0xff]
    %v8114 = vld [vmem:[#allocation3 + $0x718] sm:$0xff]
    %v8115 = vld [vmem:[#allocation3 + $0x720] sm:$0xff]
    %v8116 = vld [vmem:[#allocation3 + $0x728] sm:$0xff]
    %v8117 = vld [vmem:[#allocation3 + $0x730] sm:$0xff]
    %v8118 = vld [vmem:[#allocation3 + $0x738] sm:$0xff]
    %v8119 = vld [vmem:[#allocation3 + $0x740] sm:$0xff]
    %v8120 = vld [vmem:[#allocation3 + $0x748] sm:$0xff]
    %v8121 = vld [vmem:[#allocation3 + $0x750] sm:$0xff]
    %v8122 = vld [vmem:[#allocation3 + $0x758] sm:$0xff]
    %v8123 = vld [vmem:[#allocation3 + $0x760] sm:$0xff]
    %v8124 = vld [vmem:[#allocation3 + $0x768] sm:$0xff]
    %v8125 = vld [vmem:[#allocation3 + $0x770] sm:$0xff]
    %v8126 = vld [vmem:[#allocation3 + $0x778] sm:$0xff]
    %v8127 = vld [vmem:[#allocation3 + $0x780] sm:$0xff]
    %v8128 = vld [vmem:[#allocation3 + $0x788] sm:$0xff]
    %v8129 = vld [vmem:[#allocation3 + $0x790] sm:$0xff]
    %v8130 = vld [vmem:[#allocation3 + $0x798] sm:$0xff]
    %v8131 = vld [vmem:[#allocation3 + $0x7a0] sm:$0xff]
    %v8132 = vld [vmem:[#allocation3 + $0x7a8] sm:$0xff]
    %v8133 = vld [vmem:[#allocation3 + $0x7b0] sm:$0xff]
    %v8134 = vld [vmem:[#allocation3 + $0x7b8] sm:$0xff]
    %v8135 = vld [vmem:[#allocation3 + $0x7c0] sm:$0xff]
    %v8136 = vld [vmem:[#allocation3 + $0x7c8] sm:$0xff]
    %v8137 = vld [vmem:[#allocation3 + $0x7d0] sm:$0xff]
    %v8138 = vld [vmem:[#allocation3 + $0x7d8] sm:$0xff]
    %v8139 = vld [vmem:[#allocation3 + $0x7e0] sm:$0xff]
    %v8140 = vld [vmem:[#allocation3 + $0x7e8] sm:$0xff]
    %v8141 = vld [vmem:[#allocation3 + $0x7f0] sm:$0xff]
    %v8142 = vld [vmem:[#allocation3 + $0x7f8] sm:$0xff]
    %v8143 = vld [vmem:[#allocation3 + $0x800] sm:$0xff]
    %v8144 = vld [vmem:[#allocation3 + $0x808] sm:$0xff]
    %v8145 = vld [vmem:[#allocation3 + $0x810] sm:$0xff]
    %v8146 = vld [vmem:[#allocation3 + $0x818] sm:$0xff]
    %v8147 = vld [vmem:[#allocation3 + $0x820] sm:$0xff]
    %v8148 = vld [vmem:[#allocation3 + $0x828] sm:$0xff]
    %v8149 = vld [vmem:[#allocation3 + $0x830] sm:$0xff]
    %v8150 = vld [vmem:[#allocation3 + $0x838] sm:$0xff]
    %v8151 = vld [vmem:[#allocation3 + $0x840] sm:$0xff]
    %v8152 = vld [vmem:[#allocation3 + $0x848] sm:$0xff]
    %v8153 = vld [vmem:[#allocation3 + $0x850] sm:$0xff]
    %v8154 = vld [vmem:[#allocation3 + $0x858] sm:$0xff]
    %v8155 = vld [vmem:[#allocation3 + $0x860] sm:$0xff]
    %v8156 = vld [vmem:[#allocation3 + $0x868] sm:$0xff]
    %v8157 = vld [vmem:[#allocation3 + $0x870] sm:$0xff]
    %v8158 = vld [vmem:[#allocation3 + $0x878] sm:$0xff]
    %v8159 = vld [vmem:[#allocation3 + $0x880] sm:$0xff]
    %v8160 = vld [vmem:[#allocation3 + $0x888] sm:$0xff]
    %v8161 = vld [vmem:[#allocation3 + $0x890] sm:$0xff]
    %v8162 = vld [vmem:[#allocation3 + $0x898] sm:$0xff]
    %v8163 = vld [vmem:[#allocation3 + $0x8a0] sm:$0xff]
    %v8164 = vld [vmem:[#allocation3 + $0x8a8] sm:$0xff]
    %v8165 = vld [vmem:[#allocation3 + $0x8b0] sm:$0xff]
    %v8166 = vld [vmem:[#allocation3 + $0x8b8] sm:$0xff]
    %v8167 = vld [vmem:[#allocation3 + $0x8c0] sm:$0xff]
    %v8168 = vld [vmem:[#allocation3 + $0x8c8] sm:$0xff]
    %v8169 = vld [vmem:[#allocation3 + $0x8d0] sm:$0xff]
    %v8170 = vld [vmem:[#allocation3 + $0x8d8] sm:$0xff]
    %v8171 = vld [vmem:[#allocation3 + $0x8e0] sm:$0xff]
    %v8172 = vld [vmem:[#allocation3 + $0x8e8] sm:$0xff]
    %v8173 = vld [vmem:[#allocation3 + $0x8f0] sm:$0xff]
    %v8174 = vld [vmem:[#allocation3 + $0x8f8] sm:$0xff]
    %v8175 = vld [vmem:[#allocation3 + $0x900] sm:$0xff]
    %v8176 = vld [vmem:[#allocation3 + $0x908] sm:$0xff]
    %v8177 = vld [vmem:[#allocation3 + $0x910] sm:$0xff]
    %v8178 = vld [vmem:[#allocation3 + $0x918] sm:$0xff]
    %v8179 = vld [vmem:[#allocation3 + $0x920] sm:$0xff]
    %v8180 = vld [vmem:[#allocation3 + $0x928] sm:$0xff]
    %v8181 = vld [vmem:[#allocation3 + $0x930] sm:$0xff]
    %v8182 = vld [vmem:[#allocation3 + $0x938] sm:$0xff]
    %v8183 = vld [vmem:[#allocation3 + $0x940] sm:$0xff]
    %v8184 = vld [vmem:[#allocation3 + $0x948] sm:$0xff]
    %v8185 = vld [vmem:[#allocation3 + $0x950] sm:$0xff]
    %v8186 = vld [vmem:[#allocation3 + $0x958] sm:$0xff]
    %v8187 = vld [vmem:[#allocation3 + $0x960] sm:$0xff]
    %v8188 = vld [vmem:[#allocation3 + $0x968] sm:$0xff]
    %v8189 = vld [vmem:[#allocation3 + $0x970] sm:$0xff]
    %v8190 = vld [vmem:[#allocation3 + $0x978] sm:$0xff]
    %v8191 = vld [vmem:[#allocation3 + $0x980] sm:$0xff]
    %v8192 = vld [vmem:[#allocation3 + $0x988] sm:$0xff]
    %v8193 = vld [vmem:[#allocation3 + $0x990] sm:$0xff]
    %v8194 = vld [vmem:[#allocation3 + $0x998] sm:$0xff]
    %v8195 = vld [vmem:[#allocation3 + $0x9a0] sm:$0xff]
    %v8196 = vld [vmem:[#allocation3 + $0x9a8] sm:$0xff]
    %v8197 = vld [vmem:[#allocation3 + $0x9b0] sm:$0xff]
    %v8198 = vld [vmem:[#allocation3 + $0x9b8] sm:$0xff]
    %v8199 = vld [vmem:[#allocation3 + $0x9c0] sm:$0xff]
    %v8200 = vld [vmem:[#allocation3 + $0x9c8] sm:$0xff]
    %v8201 = vld [vmem:[#allocation3 + $0x9d0] sm:$0xff]
    %v8202 = vld [vmem:[#allocation3 + $0x9d8] sm:$0xff]
    %v8203 = vld [vmem:[#allocation3 + $0x9e0] sm:$0xff]
    %v8204 = vld [vmem:[#allocation3 + $0x9e8] sm:$0xff]
    %v8205 = vld [vmem:[#allocation3 + $0x9f0] sm:$0xff]
    %v8206 = vld [vmem:[#allocation3 + $0x9f8] sm:$0xff]
    %v8207 = vld [vmem:[#allocation3 + $0xa00] sm:$0xff]
    %v8208 = vld [vmem:[#allocation3 + $0xa08] sm:$0xff]
    %v8209 = vld [vmem:[#allocation3 + $0xa10] sm:$0xff]
    %v8210 = vld [vmem:[#allocation3 + $0xa18] sm:$0xff]
    %v8211 = vld [vmem:[#allocation3 + $0xa20] sm:$0xff]
    %v8212 = vld [vmem:[#allocation3 + $0xa28] sm:$0xff]
    %v8213 = vld [vmem:[#allocation3 + $0xa30] sm:$0xff]
    %v8214 = vld [vmem:[#allocation3 + $0xa38] sm:$0xff]
    %v8215 = vld [vmem:[#allocation3 + $0xa40] sm:$0xff]
    %v8216 = vld [vmem:[#allocation3 + $0xa48] sm:$0xff]
    %v8217 = vld [vmem:[#allocation3 + $0xa50] sm:$0xff]
    %v8218 = vld [vmem:[#allocation3 + $0xa58] sm:$0xff]
    %v8219 = vld [vmem:[#allocation3 + $0xa60] sm:$0xff]
    %v8220 = vld [vmem:[#allocation3 + $0xa68] sm:$0xff]
    %v8221 = vld [vmem:[#allocation3 + $0xa70] sm:$0xff]
    %v8222 = vld [vmem:[#allocation3 + $0xa78] sm:$0xff]
    %v8223 = vld [vmem:[#allocation3 + $0xa80] sm:$0xff]
    %v8224 = vld [vmem:[#allocation3 + $0xa88] sm:$0xff]
    %v8225 = vld [vmem:[#allocation3 + $0xa90] sm:$0xff]
    %v8226 = vld [vmem:[#allocation3 + $0xa98] sm:$0xff]
    %v8227 = vld [vmem:[#allocation3 + $0xaa0] sm:$0xff]
    %v8228 = vld [vmem:[#allocation3 + $0xaa8] sm:$0xff]
    %v8229 = vld [vmem:[#allocation3 + $0xab0] sm:$0xff]
    %v8230 = vld [vmem:[#allocation3 + $0xab8] sm:$0xff]
    %v8231 = vld [vmem:[#allocation3 + $0xac0] sm:$0xff]
    %v8232 = vld [vmem:[#allocation3 + $0xac8] sm:$0xff]
    %v8233 = vld [vmem:[#allocation3 + $0xad0] sm:$0xff]
    %v8234 = vld [vmem:[#allocation3 + $0xad8] sm:$0xff]
    %v8235 = vld [vmem:[#allocation3 + $0xae0] sm:$0xff]
    %v8236 = vld [vmem:[#allocation3 + $0xae8] sm:$0xff]
    %v8237 = vld [vmem:[#allocation3 + $0xaf0] sm:$0xff]
    %v8238 = vld [vmem:[#allocation3 + $0xaf8] sm:$0x33]
    %v8239 = vld [vmem:[#allocation3 + $0xb00] sm:$0x33]
    %v8240 = vld [vmem:[#allocation3 + $0xb08] sm:$0x33]
    %v8241 = vld [vmem:[#allocation3 + $0xb10] sm:$0x33]
    %v8242 = vld [vmem:[#allocation3 + $0xb18] sm:$0x33]
    %v8243 = vld [vmem:[#allocation3 + $0xb20] sm:$0x33]
    %v8244 = vld [vmem:[#allocation3 + $0xb28] sm:$0x33]
    %v8245 = vld [vmem:[#allocation3 + $0xb30] sm:$0x33]
    %v8246 = vld [vmem:[#allocation3 + $0xb38] sm:$0x33]
    %v8247 = vld [vmem:[#allocation3 + $0xb40] sm:$0x33]
    %v8248 = vld [vmem:[#allocation3 + $0xb48] sm:$0x33]
    %v8249 = vld [vmem:[#allocation3 + $0xb50] sm:$0x33]
    %v8250 = vld [vmem:[#allocation3 + $0xb58] sm:$0x33]
    %v8251 = vld [vmem:[#allocation3 + $0xb60] sm:$0x33]
    %v8252 = vld [vmem:[#allocation3 + $0xb68] sm:$0x33]
    %v8253 = vld [vmem:[#allocation3 + $0xb70] sm:$0x33]
    %v8254 = vld [vmem:[#allocation3 + $0xb78] sm:$0x33]
    %v8255 = vld [vmem:[#allocation3 + $0xb80] sm:$0x33]
    %v8256 = vld [vmem:[#allocation3 + $0xb88] sm:$0x33]
    %v8257 = vld [vmem:[#allocation3 + $0xb90] sm:$0x33]
    %v8258 = vld [vmem:[#allocation3 + $0xb98] sm:$0x33]
    %v8259 = vld [vmem:[#allocation3 + $0xba0] sm:$0x33]
    %v8260 = vld [vmem:[#allocation3 + $0xba8] sm:$0x33]
    %v8261 = vld [vmem:[#allocation3 + $0xbb0] sm:$0x33]
    %v8262 = vld [vmem:[#allocation3 + $0xbb8] sm:$0x33]
    %v8263 = vld [vmem:[#allocation3 + $0xbc0] sm:$0x33]
    %v8264 = vld [vmem:[#allocation3 + $0xbc8] sm:$0x33]
    %v8265 = vld [vmem:[%s3] sm:$0xf]
    %8267 = vset.pattern.permute.xlu0 0
    %8268 = vperm.xlu0 %8267, %v8265
    %v8269 = vpop.permute.xlu0 %8268
    %v8649 = vunpack.c.l.b16 %v7887
    %v8650 = vunpack.c.h.b16 %v7887
    %v8651 = vunpack.c.l.b16 %v7888
    %v8652 = vunpack.c.h.b16 %v7888
    %v8653 = vunpack.c.l.b16 %v7889
    %v8654 = vunpack.c.h.b16 %v7889
    %v8655 = vunpack.c.l.b16 %v7890
    %v8656 = vunpack.c.h.b16 %v7890
    %v8657 = vunpack.c.l.b16 %v7891
    %v8658 = vunpack.c.h.b16 %v7891
    %v8659 = vunpack.c.l.b16 %v7892
    %v8660 = vunpack.c.h.b16 %v7892
    %v8661 = vunpack.c.l.b16 %v7893
    %v8662 = vunpack.c.h.b16 %v7893
    %v8663 = vunpack.c.l.b16 %v7894
    %v8664 = vunpack.c.h.b16 %v7894
    %v8665 = vunpack.c.l.b16 %v7895
    %v8666 = vunpack.c.h.b16 %v7895
    %v8667 = vunpack.c.l.b16 %v7896
    %v8668 = vunpack.c.h.b16 %v7896
    %v8669 = vunpack.c.l.b16 %v7897
    %v8670 = vunpack.c.h.b16 %v7897
    %v8671 = vunpack.c.l.b16 %v7898
    %v8672 = vunpack.c.h.b16 %v7898
    %v8673 = vunpack.c.l.b16 %v7899
    %v8674 = vunpack.c.h.b16 %v7899
    %v8675 = vunpack.c.l.b16 %v7900
    %v8676 = vunpack.c.h.b16 %v7900
    %v8677 = vunpack.c.l.b16 %v7901
    %v8678 = vunpack.c.h.b16 %v7901
    %v8679 = vunpack.c.l.b16 %v7902
    %v8680 = vunpack.c.h.b16 %v7902
    %v8681 = vunpack.c.l.b16 %v7903
    %v8682 = vunpack.c.h.b16 %v7903
    %v8683 = vunpack.c.l.b16 %v7904
    %v8684 = vunpack.c.h.b16 %v7904
    %v8685 = vunpack.c.l.b16 %v7905
    %v8686 = vunpack.c.h.b16 %v7905
    %v8687 = vunpack.c.l.b16 %v7906
    %v8688 = vunpack.c.h.b16 %v7906
    %v8689 = vunpack.c.l.b16 %v7907
    %v8690 = vunpack.c.h.b16 %v7907
    %v8691 = vunpack.c.l.b16 %v7908
    %v8692 = vunpack.c.h.b16 %v7908
    %v8693 = vunpack.c.l.b16 %v7909
    %v8694 = vunpack.c.h.b16 %v7909
    %v8695 = vunpack.c.l.b16 %v7910
    %v8696 = vunpack.c.h.b16 %v7910
    %v8697 = vunpack.c.l.b16 %v7911
    %v8698 = vunpack.c.h.b16 %v7911
    %v8699 = vunpack.c.l.b16 %v7912
    %v8700 = vunpack.c.h.b16 %v7912
    %v8701 = vunpack.c.l.b16 %v7913
    %v8702 = vunpack.c.h.b16 %v7913
    %v8703 = vunpack.c.l.b16 %v7914
    %v8704 = vunpack.c.h.b16 %v7914
    %v8705 = vunpack.c.l.b16 %v7915
    %v8706 = vunpack.c.h.b16 %v7915
    %v8707 = vunpack.c.l.b16 %v7916
    %v8708 = vunpack.c.h.b16 %v7916
    %v8709 = vunpack.c.l.b16 %v7917
    %v8710 = vunpack.c.h.b16 %v7917
    %v8711 = vunpack.c.l.b16 %v7918
    %v8712 = vunpack.c.h.b16 %v7918
    %v8713 = vunpack.c.l.b16 %v7919
    %v8714 = vunpack.c.h.b16 %v7919
    %v8715 = vunpack.c.l.b16 %v7920
    %v8716 = vunpack.c.h.b16 %v7920
    %v8717 = vunpack.c.l.b16 %v7921
    %v8718 = vunpack.c.h.b16 %v7921
    %v8719 = vunpack.c.l.b16 %v7922
    %v8720 = vunpack.c.h.b16 %v7922
    %v8721 = vunpack.c.l.b16 %v7923
    %v8722 = vunpack.c.h.b16 %v7923
    %v8723 = vunpack.c.l.b16 %v7924
    %v8724 = vunpack.c.h.b16 %v7924
    %v8725 = vunpack.c.l.b16 %v7925
    %v8726 = vunpack.c.h.b16 %v7925
    %v8727 = vunpack.c.l.b16 %v7926
    %v8728 = vunpack.c.h.b16 %v7926
    %v8729 = vunpack.c.l.b16 %v7927
    %v8730 = vunpack.c.h.b16 %v7927
    %v8731 = vunpack.c.l.b16 %v7928
    %v8732 = vunpack.c.h.b16 %v7928
    %v8733 = vunpack.c.l.b16 %v7929
    %v8734 = vunpack.c.h.b16 %v7929
    %v8735 = vunpack.c.l.b16 %v7930
    %v8736 = vunpack.c.h.b16 %v7930
    %v8737 = vunpack.c.l.b16 %v7931
    %v8738 = vunpack.c.h.b16 %v7931
    %v8739 = vunpack.c.l.b16 %v7932
    %v8740 = vunpack.c.h.b16 %v7932
    %v8741 = vunpack.c.l.b16 %v7933
    %v8742 = vunpack.c.h.b16 %v7933
    %v8743 = vunpack.c.l.b16 %v7934
    %v8744 = vunpack.c.h.b16 %v7934
    %v8745 = vunpack.c.l.b16 %v7935
    %v8746 = vunpack.c.h.b16 %v7935
    %v8747 = vunpack.c.l.b16 %v7936
    %v8748 = vunpack.c.h.b16 %v7936
    %v8749 = vunpack.c.l.b16 %v7937
    %v8750 = vunpack.c.h.b16 %v7937
    %v8751 = vunpack.c.l.b16 %v7938
    %v8752 = vunpack.c.h.b16 %v7938
    %v8753 = vunpack.c.l.b16 %v7939
    %v8754 = vunpack.c.h.b16 %v7939
    %v8755 = vunpack.c.l.b16 %v7940
    %v8756 = vunpack.c.h.b16 %v7940
    %v8757 = vunpack.c.l.b16 %v7941
    %v8758 = vunpack.c.h.b16 %v7941
    %v8759 = vunpack.c.l.b16 %v7942
    %v8760 = vunpack.c.h.b16 %v7942
    %v8761 = vunpack.c.l.b16 %v7943
    %v8762 = vunpack.c.h.b16 %v7943
    %v8763 = vunpack.c.l.b16 %v7944
    %v8764 = vunpack.c.h.b16 %v7944
    %v8765 = vunpack.c.l.b16 %v7945
    %v8766 = vunpack.c.h.b16 %v7945
    %v8767 = vunpack.c.l.b16 %v7946
    %v8768 = vunpack.c.h.b16 %v7946
    %v8769 = vunpack.c.l.b16 %v7947
    %v8770 = vunpack.c.h.b16 %v7947
    %v8771 = vunpack.c.l.b16 %v7948
    %v8772 = vunpack.c.h.b16 %v7948
    %v8773 = vunpack.c.l.b16 %v7949
    %v8774 = vunpack.c.h.b16 %v7949
    %v8775 = vunpack.c.l.b16 %v7950
    %v8776 = vunpack.c.h.b16 %v7950
    %v8777 = vunpack.c.l.b16 %v7951
    %v8778 = vunpack.c.h.b16 %v7951
    %v8779 = vunpack.c.l.b16 %v7952
    %v8780 = vunpack.c.h.b16 %v7952
    %v8781 = vunpack.c.l.b16 %v7953
    %v8782 = vunpack.c.h.b16 %v7953
    %v8783 = vunpack.c.l.b16 %v7954
    %v8784 = vunpack.c.h.b16 %v7954
    %v8785 = vunpack.c.l.b16 %v7955
    %v8786 = vunpack.c.h.b16 %v7955
    %v8787 = vunpack.c.l.b16 %v7956
    %v8788 = vunpack.c.h.b16 %v7956
    %v8789 = vunpack.c.l.b16 %v7957
    %v8790 = vunpack.c.h.b16 %v7957
    %v8791 = vunpack.c.l.b16 %v7958
    %v8792 = vunpack.c.h.b16 %v7958
    %v8793 = vunpack.c.l.b16 %v7959
    %v8794 = vunpack.c.h.b16 %v7959
    %v8795 = vunpack.c.l.b16 %v7960
    %v8796 = vunpack.c.h.b16 %v7960
    %v8797 = vunpack.c.l.b16 %v7961
    %v8798 = vunpack.c.h.b16 %v7961
    %v8799 = vunpack.c.l.b16 %v7962
    %v8800 = vunpack.c.h.b16 %v7962
    %v8801 = vunpack.c.l.b16 %v7963
    %v8802 = vunpack.c.h.b16 %v7963
    %v8803 = vunpack.c.l.b16 %v7964
    %v8804 = vunpack.c.h.b16 %v7964
    %v8805 = vunpack.c.l.b16 %v7965
    %v8806 = vunpack.c.h.b16 %v7965
    %v8807 = vunpack.c.l.b16 %v7966
    %v8808 = vunpack.c.h.b16 %v7966
    %v8809 = vunpack.c.l.b16 %v7967
    %v8810 = vunpack.c.h.b16 %v7967
    %v8811 = vunpack.c.l.b16 %v7968
    %v8812 = vunpack.c.h.b16 %v7968
    %v8813 = vunpack.c.l.b16 %v7969
    %v8814 = vunpack.c.h.b16 %v7969
    %v8815 = vunpack.c.l.b16 %v7970
    %v8816 = vunpack.c.h.b16 %v7970
    %v8817 = vunpack.c.l.b16 %v7971
    %v8818 = vunpack.c.h.b16 %v7971
    %v8819 = vunpack.c.l.b16 %v7972
    %v8820 = vunpack.c.h.b16 %v7972
    %v8821 = vunpack.c.l.b16 %v7973
    %v8822 = vunpack.c.h.b16 %v7973
    %v8823 = vunpack.c.l.b16 %v7974
    %v8824 = vunpack.c.h.b16 %v7974
    %v8825 = vunpack.c.l.b16 %v7975
    %v8826 = vunpack.c.h.b16 %v7975
    %v8827 = vunpack.c.l.b16 %v7976
    %v8828 = vunpack.c.h.b16 %v7976
    %v8829 = vunpack.c.l.b16 %v7977
    %v8830 = vunpack.c.h.b16 %v7977
    %v8831 = vunpack.c.l.b16 %v7978
    %v8832 = vunpack.c.h.b16 %v7978
    %v8833 = vunpack.c.l.b16 %v7979
    %v8834 = vunpack.c.h.b16 %v7979
    %v8835 = vunpack.c.l.b16 %v7980
    %v8836 = vunpack.c.h.b16 %v7980
    %v8837 = vunpack.c.l.b16 %v7981
    %v8838 = vunpack.c.h.b16 %v7981
    %v8839 = vunpack.c.l.b16 %v7982
    %v8840 = vunpack.c.h.b16 %v7982
    %v8841 = vunpack.c.l.b16 %v7983
    %v8842 = vunpack.c.h.b16 %v7983
    %v8843 = vunpack.c.l.b16 %v7984
    %v8844 = vunpack.c.h.b16 %v7984
    %v8845 = vunpack.c.l.b16 %v7985
    %v8846 = vunpack.c.h.b16 %v7985
    %v8847 = vunpack.c.l.b16 %v7986
    %v8848 = vunpack.c.h.b16 %v7986
    %v8849 = vunpack.c.l.b16 %v7987
    %v8850 = vunpack.c.h.b16 %v7987
    %v8851 = vunpack.c.l.b16 %v7988
    %v8852 = vunpack.c.h.b16 %v7988
    %v8853 = vunpack.c.l.b16 %v7989
    %v8854 = vunpack.c.h.b16 %v7989
    %v8855 = vunpack.c.l.b16 %v7990
    %v8856 = vunpack.c.h.b16 %v7990
    %v8857 = vunpack.c.l.b16 %v7991
    %v8858 = vunpack.c.h.b16 %v7991
    %v8859 = vunpack.c.l.b16 %v7992
    %v8860 = vunpack.c.h.b16 %v7992
    %v8861 = vunpack.c.l.b16 %v7993
    %v8862 = vunpack.c.h.b16 %v7993
    %v8863 = vunpack.c.l.b16 %v7994
    %v8864 = vunpack.c.h.b16 %v7994
    %v8865 = vunpack.c.l.b16 %v7995
    %v8866 = vunpack.c.h.b16 %v7995
    %v8867 = vunpack.c.l.b16 %v7996
    %v8868 = vunpack.c.h.b16 %v7996
    %v8869 = vunpack.c.l.b16 %v7997
    %v8870 = vunpack.c.h.b16 %v7997
    %v8871 = vunpack.c.l.b16 %v7998
    %v8872 = vunpack.c.h.b16 %v7998
    %v8873 = vunpack.c.l.b16 %v7999
    %v8874 = vunpack.c.h.b16 %v7999
    %v8875 = vunpack.c.l.b16 %v8000
    %v8876 = vunpack.c.h.b16 %v8000
    %v8877 = vunpack.c.l.b16 %v8001
    %v8878 = vunpack.c.h.b16 %v8001
    %v8879 = vunpack.c.l.b16 %v8002
    %v8880 = vunpack.c.h.b16 %v8002
    %v8881 = vunpack.c.l.b16 %v8003
    %v8882 = vunpack.c.h.b16 %v8003
    %v8883 = vunpack.c.l.b16 %v8004
    %v8884 = vunpack.c.h.b16 %v8004
    %v8885 = vunpack.c.l.b16 %v8005
    %v8886 = vunpack.c.h.b16 %v8005
    %v8887 = vunpack.c.l.b16 %v8006
    %v8888 = vunpack.c.h.b16 %v8006
    %v8889 = vunpack.c.l.b16 %v8007
    %v8890 = vunpack.c.h.b16 %v8007
    %v8891 = vunpack.c.l.b16 %v8008
    %v8892 = vunpack.c.h.b16 %v8008
    %v8893 = vunpack.c.l.b16 %v8009
    %v8894 = vunpack.c.h.b16 %v8009
    %v8895 = vunpack.c.l.b16 %v8010
    %v8896 = vunpack.c.h.b16 %v8010
    %v8897 = vunpack.c.l.b16 %v8011
    %v8898 = vunpack.c.h.b16 %v8011
    %v8899 = vunpack.c.l.b16 %v8012
    %v8900 = vunpack.c.h.b16 %v8012
    %v8901 = vunpack.c.l.b16 %v8013
    %v8902 = vunpack.c.h.b16 %v8013
    %v8903 = vunpack.c.l.b16 %v8014
    %v8904 = vunpack.c.h.b16 %v8014
    %v8905 = vunpack.c.l.b16 %v8015
    %v8906 = vunpack.c.h.b16 %v8015
    %v8907 = vunpack.c.l.b16 %v8016
    %v8908 = vunpack.c.h.b16 %v8016
    %v8909 = vunpack.c.l.b16 %v8017
    %v8910 = vunpack.c.h.b16 %v8017
    %v8911 = vunpack.c.l.b16 %v8018
    %v8912 = vunpack.c.h.b16 %v8018
    %v8913 = vunpack.c.l.b16 %v8019
    %v8914 = vunpack.c.h.b16 %v8019
    %v8915 = vunpack.c.l.b16 %v8020
    %v8916 = vunpack.c.h.b16 %v8020
    %v8917 = vunpack.c.l.b16 %v8021
    %v8918 = vunpack.c.h.b16 %v8021
    %v8919 = vunpack.c.l.b16 %v8022
    %v8920 = vunpack.c.h.b16 %v8022
    %v8921 = vunpack.c.l.b16 %v8023
    %v8922 = vunpack.c.h.b16 %v8023
    %v8923 = vunpack.c.l.b16 %v8024
    %v8924 = vunpack.c.h.b16 %v8024
    %v8925 = vunpack.c.l.b16 %v8025
    %v8926 = vunpack.c.h.b16 %v8025
    %v8927 = vunpack.c.l.b16 %v8026
    %v8928 = vunpack.c.h.b16 %v8026
    %v8929 = vunpack.c.l.b16 %v8027
    %v8930 = vunpack.c.h.b16 %v8027
    %v8931 = vunpack.c.l.b16 %v8028
    %v8932 = vunpack.c.h.b16 %v8028
    %v8933 = vunpack.c.l.b16 %v8029
    %v8934 = vunpack.c.h.b16 %v8029
    %v8935 = vunpack.c.l.b16 %v8030
    %v8936 = vunpack.c.h.b16 %v8030
    %v8937 = vunpack.c.l.b16 %v8031
    %v8938 = vunpack.c.h.b16 %v8031
    %v8939 = vunpack.c.l.b16 %v8032
    %v8940 = vunpack.c.h.b16 %v8032
    %v8941 = vunpack.c.l.b16 %v8033
    %v8942 = vunpack.c.h.b16 %v8033
    %v8943 = vunpack.c.l.b16 %v8034
    %v8944 = vunpack.c.h.b16 %v8034
    %v8945 = vunpack.c.l.b16 %v8035
    %v8946 = vunpack.c.h.b16 %v8035
    %v8947 = vunpack.c.l.b16 %v8036
    %v8948 = vunpack.c.h.b16 %v8036
    %v8949 = vunpack.c.l.b16 %v8037
    %v8950 = vunpack.c.h.b16 %v8037
    %v8951 = vunpack.c.l.b16 %v8038
    %v8952 = vunpack.c.h.b16 %v8038
    %v8953 = vunpack.c.l.b16 %v8039
    %v8954 = vunpack.c.h.b16 %v8039
    %v8955 = vunpack.c.l.b16 %v8040
    %v8956 = vunpack.c.h.b16 %v8040
    %v8957 = vunpack.c.l.b16 %v8041
    %v8958 = vunpack.c.h.b16 %v8041
    %v8959 = vunpack.c.l.b16 %v8042
    %v8960 = vunpack.c.h.b16 %v8042
    %v8961 = vunpack.c.l.b16 %v8043
    %v8962 = vunpack.c.h.b16 %v8043
    %v8963 = vunpack.c.l.b16 %v8044
    %v8964 = vunpack.c.h.b16 %v8044
    %v8965 = vunpack.c.l.b16 %v8045
    %v8966 = vunpack.c.h.b16 %v8045
    %v8967 = vunpack.c.l.b16 %v8046
    %v8968 = vunpack.c.h.b16 %v8046
    %v8969 = vunpack.c.l.b16 %v8047
    %v8970 = vunpack.c.h.b16 %v8047
    %v8971 = vunpack.c.l.b16 %v8048
    %v8972 = vunpack.c.h.b16 %v8048
    %v8973 = vunpack.c.l.b16 %v8049
    %v8974 = vunpack.c.h.b16 %v8049
    %v8975 = vunpack.c.l.b16 %v8050
    %v8976 = vunpack.c.h.b16 %v8050
    %v8977 = vunpack.c.l.b16 %v8051
    %v8978 = vunpack.c.h.b16 %v8051
    %v8979 = vunpack.c.l.b16 %v8052
    %v8980 = vunpack.c.h.b16 %v8052
    %v8981 = vunpack.c.l.b16 %v8053
    %v8982 = vunpack.c.h.b16 %v8053
    %v8983 = vunpack.c.l.b16 %v8054
    %v8984 = vunpack.c.h.b16 %v8054
    %v8985 = vunpack.c.l.b16 %v8055
    %v8986 = vunpack.c.h.b16 %v8055
    %v8987 = vunpack.c.l.b16 %v8056
    %v8988 = vunpack.c.h.b16 %v8056
    %v8989 = vunpack.c.l.b16 %v8057
    %v8990 = vunpack.c.h.b16 %v8057
    %v8991 = vunpack.c.l.b16 %v8058
    %v8992 = vunpack.c.h.b16 %v8058
    %v8993 = vunpack.c.l.b16 %v8059
    %v8994 = vunpack.c.h.b16 %v8059
    %v8995 = vunpack.c.l.b16 %v8060
    %v8996 = vunpack.c.h.b16 %v8060
    %v8997 = vunpack.c.l.b16 %v8061
    %v8998 = vunpack.c.h.b16 %v8061
    %v8999 = vunpack.c.l.b16 %v8062
    %v9000 = vunpack.c.h.b16 %v8062
    %v9001 = vunpack.c.l.b16 %v8063
    %v9002 = vunpack.c.h.b16 %v8063
    %v9003 = vunpack.c.l.b16 %v8064
    %v9004 = vunpack.c.h.b16 %v8064
    %v9005 = vunpack.c.l.b16 %v8065
    %v9006 = vunpack.c.h.b16 %v8065
    %v9007 = vunpack.c.l.b16 %v8066
    %v9008 = vunpack.c.h.b16 %v8066
    %v9009 = vunpack.c.l.b16 %v8067
    %v9010 = vunpack.c.h.b16 %v8067
    %v9011 = vunpack.c.l.b16 %v8068
    %v9012 = vunpack.c.h.b16 %v8068
    %v9013 = vunpack.c.l.b16 %v8069
    %v9014 = vunpack.c.h.b16 %v8069
    %v9015 = vunpack.c.l.b16 %v8070
    %v9016 = vunpack.c.h.b16 %v8070
    %v9017 = vunpack.c.l.b16 %v8071
    %v9018 = vunpack.c.h.b16 %v8071
    %v9019 = vunpack.c.l.b16 %v8072
    %v9020 = vunpack.c.h.b16 %v8072
    %v9021 = vunpack.c.l.b16 %v8073
    %v9022 = vunpack.c.h.b16 %v8073
    %v9023 = vunpack.c.l.b16 %v8074
    %v9024 = vunpack.c.h.b16 %v8074
    %v9025 = vunpack.c.l.b16 %v8075
    %v9026 = vunpack.c.h.b16 %v8075
    %v9027 = vunpack.c.l.b16 %v8076
    %v9028 = vunpack.c.h.b16 %v8076
    %v9029 = vunpack.c.l.b16 %v8077
    %v9030 = vunpack.c.h.b16 %v8077
    %v9031 = vunpack.c.l.b16 %v8078
    %v9032 = vunpack.c.h.b16 %v8078
    %v9033 = vunpack.c.l.b16 %v8079
    %v9034 = vunpack.c.h.b16 %v8079
    %v9035 = vunpack.c.l.b16 %v8080
    %v9036 = vunpack.c.h.b16 %v8080
    %v9037 = vunpack.c.l.b16 %v8081
    %v9038 = vunpack.c.h.b16 %v8081
    %v9039 = vunpack.c.l.b16 %v8082
    %v9040 = vunpack.c.h.b16 %v8082
    %v9041 = vunpack.c.l.b16 %v8083
    %v9042 = vunpack.c.h.b16 %v8083
    %v9043 = vunpack.c.l.b16 %v8084
    %v9044 = vunpack.c.h.b16 %v8084
    %v9045 = vunpack.c.l.b16 %v8085
    %v9046 = vunpack.c.h.b16 %v8085
    %v9047 = vunpack.c.l.b16 %v8086
    %v9048 = vunpack.c.h.b16 %v8086
    %v9049 = vunpack.c.l.b16 %v8087
    %v9050 = vunpack.c.h.b16 %v8087
    %v9051 = vunpack.c.l.b16 %v8088
    %v9052 = vunpack.c.h.b16 %v8088
    %v9053 = vunpack.c.l.b16 %v8089
    %v9054 = vunpack.c.h.b16 %v8089
    %v9055 = vunpack.c.l.b16 %v8090
    %v9056 = vunpack.c.h.b16 %v8090
    %v9057 = vunpack.c.l.b16 %v8091
    %v9058 = vunpack.c.h.b16 %v8091
    %v9059 = vunpack.c.l.b16 %v8092
    %v9060 = vunpack.c.h.b16 %v8092
    %v9061 = vunpack.c.l.b16 %v8093
    %v9062 = vunpack.c.h.b16 %v8093
    %v9063 = vunpack.c.l.b16 %v8094
    %v9064 = vunpack.c.h.b16 %v8094
    %v9065 = vunpack.c.l.b16 %v8095
    %v9066 = vunpack.c.h.b16 %v8095
    %v9067 = vunpack.c.l.b16 %v8096
    %v9068 = vunpack.c.h.b16 %v8096
    %v9069 = vunpack.c.l.b16 %v8097
    %v9070 = vunpack.c.h.b16 %v8097
    %v9071 = vunpack.c.l.b16 %v8098
    %v9072 = vunpack.c.h.b16 %v8098
    %v9073 = vunpack.c.l.b16 %v8099
    %v9074 = vunpack.c.h.b16 %v8099
    %v9075 = vunpack.c.l.b16 %v8100
    %v9076 = vunpack.c.h.b16 %v8100
    %v9077 = vunpack.c.l.b16 %v8101
    %v9078 = vunpack.c.h.b16 %v8101
    %v9079 = vunpack.c.l.b16 %v8102
    %v9080 = vunpack.c.h.b16 %v8102
    %v9081 = vunpack.c.l.b16 %v8103
    %v9082 = vunpack.c.h.b16 %v8103
    %v9083 = vunpack.c.l.b16 %v8104
    %v9084 = vunpack.c.h.b16 %v8104
    %v9085 = vunpack.c.l.b16 %v8105
    %v9086 = vunpack.c.h.b16 %v8105
    %v9087 = vunpack.c.l.b16 %v8106
    %v9088 = vunpack.c.h.b16 %v8106
    %v9089 = vunpack.c.l.b16 %v8107
    %v9090 = vunpack.c.h.b16 %v8107
    %v9091 = vunpack.c.l.b16 %v8108
    %v9092 = vunpack.c.h.b16 %v8108
    %v9093 = vunpack.c.l.b16 %v8109
    %v9094 = vunpack.c.h.b16 %v8109
    %v9095 = vunpack.c.l.b16 %v8110
    %v9096 = vunpack.c.h.b16 %v8110
    %v9097 = vunpack.c.l.b16 %v8111
    %v9098 = vunpack.c.h.b16 %v8111
    %v9099 = vunpack.c.l.b16 %v8112
    %v9100 = vunpack.c.h.b16 %v8112
    %v9101 = vunpack.c.l.b16 %v8113
    %v9102 = vunpack.c.h.b16 %v8113
    %v9103 = vunpack.c.l.b16 %v8114
    %v9104 = vunpack.c.h.b16 %v8114
    %v9105 = vunpack.c.l.b16 %v8115
    %v9106 = vunpack.c.h.b16 %v8115
    %v9107 = vunpack.c.l.b16 %v8116
    %v9108 = vunpack.c.h.b16 %v8116
    %v9109 = vunpack.c.l.b16 %v8117
    %v9110 = vunpack.c.h.b16 %v8117
    %v9111 = vunpack.c.l.b16 %v8118
    %v9112 = vunpack.c.h.b16 %v8118
    %v9113 = vunpack.c.l.b16 %v8119
    %v9114 = vunpack.c.h.b16 %v8119
    %v9115 = vunpack.c.l.b16 %v8120
    %v9116 = vunpack.c.h.b16 %v8120
    %v9117 = vunpack.c.l.b16 %v8121
    %v9118 = vunpack.c.h.b16 %v8121
    %v9119 = vunpack.c.l.b16 %v8122
    %v9120 = vunpack.c.h.b16 %v8122
    %v9121 = vunpack.c.l.b16 %v8123
    %v9122 = vunpack.c.h.b16 %v8123
    %v9123 = vunpack.c.l.b16 %v8124
    %v9124 = vunpack.c.h.b16 %v8124
    %v9125 = vunpack.c.l.b16 %v8125
    %v9126 = vunpack.c.h.b16 %v8125
    %v9127 = vunpack.c.l.b16 %v8126
    %v9128 = vunpack.c.h.b16 %v8126
    %v9129 = vunpack.c.l.b16 %v8127
    %v9130 = vunpack.c.h.b16 %v8127
    %v9131 = vunpack.c.l.b16 %v8128
    %v9132 = vunpack.c.h.b16 %v8128
    %v9133 = vunpack.c.l.b16 %v8129
    %v9134 = vunpack.c.h.b16 %v8129
    %v9135 = vunpack.c.l.b16 %v8130
    %v9136 = vunpack.c.h.b16 %v8130
    %v9137 = vunpack.c.l.b16 %v8131
    %v9138 = vunpack.c.h.b16 %v8131
    %v9139 = vunpack.c.l.b16 %v8132
    %v9140 = vunpack.c.h.b16 %v8132
    %v9141 = vunpack.c.l.b16 %v8133
    %v9142 = vunpack.c.h.b16 %v8133
    %v9143 = vunpack.c.l.b16 %v8134
    %v9144 = vunpack.c.h.b16 %v8134
    %v9145 = vunpack.c.l.b16 %v8135
    %v9146 = vunpack.c.h.b16 %v8135
    %v9147 = vunpack.c.l.b16 %v8136
    %v9148 = vunpack.c.h.b16 %v8136
    %v9149 = vunpack.c.l.b16 %v8137
    %v9150 = vunpack.c.h.b16 %v8137
    %v9151 = vunpack.c.l.b16 %v8138
    %v9152 = vunpack.c.h.b16 %v8138
    %v9153 = vunpack.c.l.b16 %v8139
    %v9154 = vunpack.c.h.b16 %v8139
    %v9155 = vunpack.c.l.b16 %v8140
    %v9156 = vunpack.c.h.b16 %v8140
    %v9157 = vunpack.c.l.b16 %v8141
    %v9158 = vunpack.c.h.b16 %v8141
    %v9159 = vunpack.c.l.b16 %v8142
    %v9160 = vunpack.c.h.b16 %v8142
    %v9161 = vunpack.c.l.b16 %v8143
    %v9162 = vunpack.c.h.b16 %v8143
    %v9163 = vunpack.c.l.b16 %v8144
    %v9164 = vunpack.c.h.b16 %v8144
    %v9165 = vunpack.c.l.b16 %v8145
    %v9166 = vunpack.c.h.b16 %v8145
    %v9167 = vunpack.c.l.b16 %v8146
    %v9168 = vunpack.c.h.b16 %v8146
    %v9169 = vunpack.c.l.b16 %v8147
    %v9170 = vunpack.c.h.b16 %v8147
    %v9171 = vunpack.c.l.b16 %v8148
    %v9172 = vunpack.c.h.b16 %v8148
    %v9173 = vunpack.c.l.b16 %v8149
    %v9174 = vunpack.c.h.b16 %v8149
    %v9175 = vunpack.c.l.b16 %v8150
    %v9176 = vunpack.c.h.b16 %v8150
    %v9177 = vunpack.c.l.b16 %v8151
    %v9178 = vunpack.c.h.b16 %v8151
    %v9179 = vunpack.c.l.b16 %v8152
    %v9180 = vunpack.c.h.b16 %v8152
    %v9181 = vunpack.c.l.b16 %v8153
    %v9182 = vunpack.c.h.b16 %v8153
    %v9183 = vunpack.c.l.b16 %v8154
    %v9184 = vunpack.c.h.b16 %v8154
    %v9185 = vunpack.c.l.b16 %v8155
    %v9186 = vunpack.c.h.b16 %v8155
    %v9187 = vunpack.c.l.b16 %v8156
    %v9188 = vunpack.c.h.b16 %v8156
    %v9189 = vunpack.c.l.b16 %v8157
    %v9190 = vunpack.c.h.b16 %v8157
    %v9191 = vunpack.c.l.b16 %v8158
    %v9192 = vunpack.c.h.b16 %v8158
    %v9193 = vunpack.c.l.b16 %v8159
    %v9194 = vunpack.c.h.b16 %v8159
    %v9195 = vunpack.c.l.b16 %v8160
    %v9196 = vunpack.c.h.b16 %v8160
    %v9197 = vunpack.c.l.b16 %v8161
    %v9198 = vunpack.c.h.b16 %v8161
    %v9199 = vunpack.c.l.b16 %v8162
    %v9200 = vunpack.c.h.b16 %v8162
    %v9201 = vunpack.c.l.b16 %v8163
    %v9202 = vunpack.c.h.b16 %v8163
    %v9203 = vunpack.c.l.b16 %v8164
    %v9204 = vunpack.c.h.b16 %v8164
    %v9205 = vunpack.c.l.b16 %v8165
    %v9206 = vunpack.c.h.b16 %v8165
    %v9207 = vunpack.c.l.b16 %v8166
    %v9208 = vunpack.c.h.b16 %v8166
    %v9209 = vunpack.c.l.b16 %v8167
    %v9210 = vunpack.c.h.b16 %v8167
    %v9211 = vunpack.c.l.b16 %v8168
    %v9212 = vunpack.c.h.b16 %v8168
    %v9213 = vunpack.c.l.b16 %v8169
    %v9214 = vunpack.c.h.b16 %v8169
    %v9215 = vunpack.c.l.b16 %v8170
    %v9216 = vunpack.c.h.b16 %v8170
    %v9217 = vunpack.c.l.b16 %v8171
    %v9218 = vunpack.c.h.b16 %v8171
    %v9219 = vunpack.c.l.b16 %v8172
    %v9220 = vunpack.c.h.b16 %v8172
    %v9221 = vunpack.c.l.b16 %v8173
    %v9222 = vunpack.c.h.b16 %v8173
    %v9223 = vunpack.c.l.b16 %v8174
    %v9224 = vunpack.c.h.b16 %v8174
    %v9225 = vunpack.c.l.b16 %v8175
    %v9226 = vunpack.c.h.b16 %v8175
    %v9227 = vunpack.c.l.b16 %v8176
    %v9228 = vunpack.c.h.b16 %v8176
    %v9229 = vunpack.c.l.b16 %v8177
    %v9230 = vunpack.c.h.b16 %v8177
    %v9231 = vunpack.c.l.b16 %v8178
    %v9232 = vunpack.c.h.b16 %v8178
    %v9233 = vunpack.c.l.b16 %v8179
    %v9234 = vunpack.c.h.b16 %v8179
    %v9235 = vunpack.c.l.b16 %v8180
    %v9236 = vunpack.c.h.b16 %v8180
    %v9237 = vunpack.c.l.b16 %v8181
    %v9238 = vunpack.c.h.b16 %v8181
    %v9239 = vunpack.c.l.b16 %v8182
    %v9240 = vunpack.c.h.b16 %v8182
    %v9241 = vunpack.c.l.b16 %v8183
    %v9242 = vunpack.c.h.b16 %v8183
    %v9243 = vunpack.c.l.b16 %v8184
    %v9244 = vunpack.c.h.b16 %v8184
    %v9245 = vunpack.c.l.b16 %v8185
    %v9246 = vunpack.c.h.b16 %v8185
    %v9247 = vunpack.c.l.b16 %v8186
    %v9248 = vunpack.c.h.b16 %v8186
    %v9249 = vunpack.c.l.b16 %v8187
    %v9250 = vunpack.c.h.b16 %v8187
    %v9251 = vunpack.c.l.b16 %v8188
    %v9252 = vunpack.c.h.b16 %v8188
    %v9253 = vunpack.c.l.b16 %v8189
    %v9254 = vunpack.c.h.b16 %v8189
    %v9255 = vunpack.c.l.b16 %v8190
    %v9256 = vunpack.c.h.b16 %v8190
    %v9257 = vunpack.c.l.b16 %v8191
    %v9258 = vunpack.c.h.b16 %v8191
    %v9259 = vunpack.c.l.b16 %v8192
    %v9260 = vunpack.c.h.b16 %v8192
    %v9261 = vunpack.c.l.b16 %v8193
    %v9262 = vunpack.c.h.b16 %v8193
    %v9263 = vunpack.c.l.b16 %v8194
    %v9264 = vunpack.c.h.b16 %v8194
    %v9265 = vunpack.c.l.b16 %v8195
    %v9266 = vunpack.c.h.b16 %v8195
    %v9267 = vunpack.c.l.b16 %v8196
    %v9268 = vunpack.c.h.b16 %v8196
    %v9269 = vunpack.c.l.b16 %v8197
    %v9270 = vunpack.c.h.b16 %v8197
    %v9271 = vunpack.c.l.b16 %v8198
    %v9272 = vunpack.c.h.b16 %v8198
    %v9273 = vunpack.c.l.b16 %v8199
    %v9274 = vunpack.c.h.b16 %v8199
    %v9275 = vunpack.c.l.b16 %v8200
    %v9276 = vunpack.c.h.b16 %v8200
    %v9277 = vunpack.c.l.b16 %v8201
    %v9278 = vunpack.c.h.b16 %v8201
    %v9279 = vunpack.c.l.b16 %v8202
    %v9280 = vunpack.c.h.b16 %v8202
    %v9281 = vunpack.c.l.b16 %v8203
    %v9282 = vunpack.c.h.b16 %v8203
    %v9283 = vunpack.c.l.b16 %v8204
    %v9284 = vunpack.c.h.b16 %v8204
    %v9285 = vunpack.c.l.b16 %v8205
    %v9286 = vunpack.c.h.b16 %v8205
    %v9287 = vunpack.c.l.b16 %v8206
    %v9288 = vunpack.c.h.b16 %v8206
    %v9289 = vunpack.c.l.b16 %v8207
    %v9290 = vunpack.c.h.b16 %v8207
    %v9291 = vunpack.c.l.b16 %v8208
    %v9292 = vunpack.c.h.b16 %v8208
    %v9293 = vunpack.c.l.b16 %v8209
    %v9294 = vunpack.c.h.b16 %v8209
    %v9295 = vunpack.c.l.b16 %v8210
    %v9296 = vunpack.c.h.b16 %v8210
    %v9297 = vunpack.c.l.b16 %v8211
    %v9298 = vunpack.c.h.b16 %v8211
    %v9299 = vunpack.c.l.b16 %v8212
    %v9300 = vunpack.c.h.b16 %v8212
    %v9301 = vunpack.c.l.b16 %v8213
    %v9302 = vunpack.c.h.b16 %v8213
    %v9303 = vunpack.c.l.b16 %v8214
    %v9304 = vunpack.c.h.b16 %v8214
    %v9305 = vunpack.c.l.b16 %v8215
    %v9306 = vunpack.c.h.b16 %v8215
    %v9307 = vunpack.c.l.b16 %v8216
    %v9308 = vunpack.c.h.b16 %v8216
    %v9309 = vunpack.c.l.b16 %v8217
    %v9310 = vunpack.c.h.b16 %v8217
    %v9311 = vunpack.c.l.b16 %v8218
    %v9312 = vunpack.c.h.b16 %v8218
    %v9313 = vunpack.c.l.b16 %v8219
    %v9314 = vunpack.c.h.b16 %v8219
    %v9315 = vunpack.c.l.b16 %v8220
    %v9316 = vunpack.c.h.b16 %v8220
    %v9317 = vunpack.c.l.b16 %v8221
    %v9318 = vunpack.c.h.b16 %v8221
    %v9319 = vunpack.c.l.b16 %v8222
    %v9320 = vunpack.c.h.b16 %v8222
    %v9321 = vunpack.c.l.b16 %v8223
    %v9322 = vunpack.c.h.b16 %v8223
    %v9323 = vunpack.c.l.b16 %v8224
    %v9324 = vunpack.c.h.b16 %v8224
    %v9325 = vunpack.c.l.b16 %v8225
    %v9326 = vunpack.c.h.b16 %v8225
    %v9327 = vunpack.c.l.b16 %v8226
    %v9328 = vunpack.c.h.b16 %v8226
    %v9329 = vunpack.c.l.b16 %v8227
    %v9330 = vunpack.c.h.b16 %v8227
    %v9331 = vunpack.c.l.b16 %v8228
    %v9332 = vunpack.c.h.b16 %v8228
    %v9333 = vunpack.c.l.b16 %v8229
    %v9334 = vunpack.c.h.b16 %v8229
    %v9335 = vunpack.c.l.b16 %v8230
    %v9336 = vunpack.c.h.b16 %v8230
    %v9337 = vunpack.c.l.b16 %v8231
    %v9338 = vunpack.c.h.b16 %v8231
    %v9339 = vunpack.c.l.b16 %v8232
    %v9340 = vunpack.c.h.b16 %v8232
    %v9341 = vunpack.c.l.b16 %v8233
    %v9342 = vunpack.c.h.b16 %v8233
    %v9343 = vunpack.c.l.b16 %v8234
    %v9344 = vunpack.c.h.b16 %v8234
    %v9345 = vunpack.c.l.b16 %v8235
    %v9346 = vunpack.c.h.b16 %v8235
    %v9347 = vunpack.c.l.b16 %v8236
    %v9348 = vunpack.c.h.b16 %v8236
    %v9349 = vunpack.c.l.b16 %v8237
    %v9350 = vunpack.c.h.b16 %v8237
    %v9351 = vunpack.c.l.b16 %v8238
    %v9352 = vunpack.c.h.b16 %v8238
    %v9353 = vunpack.c.l.b16 %v8239
    %v9354 = vunpack.c.h.b16 %v8239
    %v9355 = vunpack.c.l.b16 %v8240
    %v9356 = vunpack.c.h.b16 %v8240
    %v9357 = vunpack.c.l.b16 %v8241
    %v9358 = vunpack.c.h.b16 %v8241
    %v9359 = vunpack.c.l.b16 %v8242
    %v9360 = vunpack.c.h.b16 %v8242
    %v9361 = vunpack.c.l.b16 %v8243
    %v9362 = vunpack.c.h.b16 %v8243
    %v9363 = vunpack.c.l.b16 %v8244
    %v9364 = vunpack.c.h.b16 %v8244
    %v9365 = vunpack.c.l.b16 %v8245
    %v9366 = vunpack.c.h.b16 %v8245
    %v9367 = vunpack.c.l.b16 %v8246
    %v9368 = vunpack.c.h.b16 %v8246
    %v9369 = vunpack.c.l.b16 %v8247
    %v9370 = vunpack.c.h.b16 %v8247
    %v9371 = vunpack.c.l.b16 %v8248
    %v9372 = vunpack.c.h.b16 %v8248
    %v9373 = vunpack.c.l.b16 %v8249
    %v9374 = vunpack.c.h.b16 %v8249
    %v9375 = vunpack.c.l.b16 %v8250
    %v9376 = vunpack.c.h.b16 %v8250
    %v9377 = vunpack.c.l.b16 %v8251
    %v9378 = vunpack.c.h.b16 %v8251
    %v9379 = vunpack.c.l.b16 %v8252
    %v9380 = vunpack.c.h.b16 %v8252
    %v9381 = vunpack.c.l.b16 %v8253
    %v9382 = vunpack.c.h.b16 %v8253
    %v9383 = vunpack.c.l.b16 %v8254
    %v9384 = vunpack.c.h.b16 %v8254
    %v9385 = vunpack.c.l.b16 %v8255
    %v9386 = vunpack.c.h.b16 %v8255
    %v9387 = vunpack.c.l.b16 %v8256
    %v9388 = vunpack.c.h.b16 %v8256
    %v9389 = vunpack.c.l.b16 %v8257
    %v9390 = vunpack.c.h.b16 %v8257
    %v9391 = vunpack.c.l.b16 %v8258
    %v9392 = vunpack.c.h.b16 %v8258
    %v9393 = vunpack.c.l.b16 %v8259
    %v9394 = vunpack.c.h.b16 %v8259
    %v9395 = vunpack.c.l.b16 %v8260
    %v9396 = vunpack.c.h.b16 %v8260
    %v9397 = vunpack.c.l.b16 %v8261
    %v9398 = vunpack.c.h.b16 %v8261
    %v9399 = vunpack.c.l.b16 %v8262
    %v9400 = vunpack.c.h.b16 %v8262
    %v9401 = vunpack.c.l.b16 %v8263
    %v9402 = vunpack.c.h.b16 %v8263
    %v9403 = vunpack.c.l.b16 %v8264
    %v9404 = vunpack.c.h.b16 %v8264
    %v9405 = vpack.c.b16 %v8703, %v8649
    %v9406 = vpack.c.b16 %v8704, %v8650
    %v9407 = vpack.c.b16 %v8705, %v8651
    %v9408 = vpack.c.b16 %v8706, %v8652
    %v9409 = vpack.c.b16 %v8707, %v8653
    %v9410 = vpack.c.b16 %v8708, %v8654
    %v9411 = vpack.c.b16 %v8709, %v8655
    %v9412 = vpack.c.b16 %v8710, %v8656
    %v9413 = vpack.c.b16 %v8711, %v8657
    %v9414 = vpack.c.b16 %v8712, %v8658
    %v9415 = vpack.c.b16 %v8713, %v8659
    %v9416 = vpack.c.b16 %v8714, %v8660
    %v9417 = vpack.c.b16 %v8715, %v8661
    %v9418 = vpack.c.b16 %v8716, %v8662
    %v9419 = vpack.c.b16 %v8717, %v8663
    %v9420 = vpack.c.b16 %v8718, %v8664
    %v9421 = vpack.c.b16 %v8719, %v8665
    %v9422 = vpack.c.b16 %v8720, %v8666
    %v9423 = vpack.c.b16 %v8721, %v8667
    %v9424 = vpack.c.b16 %v8722, %v8668
    %v9425 = vpack.c.b16 %v8723, %v8669
    %v9426 = vpack.c.b16 %v8724, %v8670
    %v9427 = vpack.c.b16 %v8725, %v8671
    %v9428 = vpack.c.b16 %v8726, %v8672
    %v9429 = vpack.c.b16 %v8727, %v8673
    %v9430 = vpack.c.b16 %v8728, %v8674
    %v9431 = vpack.c.b16 %v8729, %v8675
    %v9432 = vpack.c.b16 %v8730, %v8676
    %v9433 = vpack.c.b16 %v8731, %v8677
    %v9434 = vpack.c.b16 %v8732, %v8678
    %v9435 = vpack.c.b16 %v8733, %v8679
    %v9436 = vpack.c.b16 %v8734, %v8680
    %v9437 = vpack.c.b16 %v8735, %v8681
    %v9438 = vpack.c.b16 %v8736, %v8682
    %v9439 = vpack.c.b16 %v8737, %v8683
    %v9440 = vpack.c.b16 %v8738, %v8684
    %v9441 = vpack.c.b16 %v8739, %v8685
    %v9442 = vpack.c.b16 %v8740, %v8686
    %v9443 = vpack.c.b16 %v8741, %v8687
    %v9444 = vpack.c.b16 %v8742, %v8688
    %v9445 = vpack.c.b16 %v8743, %v8689
    %v9446 = vpack.c.b16 %v8744, %v8690
    %v9447 = vpack.c.b16 %v8745, %v8691
    %v9448 = vpack.c.b16 %v8746, %v8692
    %v9449 = vpack.c.b16 %v8747, %v8693
    %v9450 = vpack.c.b16 %v8748, %v8694
    %v9451 = vpack.c.b16 %v8749, %v8695
    %v9452 = vpack.c.b16 %v8750, %v8696
    %v9453 = vpack.c.b16 %v8751, %v8697
    %v9454 = vpack.c.b16 %v8752, %v8698
    %v9455 = vpack.c.b16 %v8753, %v8699
    %v9456 = vpack.c.b16 %v8754, %v8700
    %v9457 = vpack.c.b16 %v8755, %v8701
    %v9458 = vpack.c.b16 %v8756, %v8702
    %v9459 = vpack.c.b16 %v8811, %v8757
    %v9460 = vpack.c.b16 %v8812, %v8758
    %v9461 = vpack.c.b16 %v8813, %v8759
    %v9462 = vpack.c.b16 %v8814, %v8760
    %v9463 = vpack.c.b16 %v8815, %v8761
    %v9464 = vpack.c.b16 %v8816, %v8762
    %v9465 = vpack.c.b16 %v8817, %v8763
    %v9466 = vpack.c.b16 %v8818, %v8764
    %v9467 = vpack.c.b16 %v8819, %v8765
    %v9468 = vpack.c.b16 %v8820, %v8766
    %v9469 = vpack.c.b16 %v8821, %v8767
    %v9470 = vpack.c.b16 %v8822, %v8768
    %v9471 = vpack.c.b16 %v8823, %v8769
    %v9472 = vpack.c.b16 %v8824, %v8770
    %v9473 = vpack.c.b16 %v8825, %v8771
    %v9474 = vpack.c.b16 %v8826, %v8772
    %v9475 = vpack.c.b16 %v8827, %v8773
    %v9476 = vpack.c.b16 %v8828, %v8774
    %v9477 = vpack.c.b16 %v8829, %v8775
    %v9478 = vpack.c.b16 %v8830, %v8776
    %v9479 = vpack.c.b16 %v8831, %v8777
    %v9480 = vpack.c.b16 %v8832, %v8778
    %v9481 = vpack.c.b16 %v8833, %v8779
    %v9482 = vpack.c.b16 %v8834, %v8780
    %v9483 = vpack.c.b16 %v8835, %v8781
    %v9484 = vpack.c.b16 %v8836, %v8782
    %v9485 = vpack.c.b16 %v8837, %v8783
    %v9486 = vpack.c.b16 %v8838, %v8784
    %v9487 = vpack.c.b16 %v8839, %v8785
    %v9488 = vpack.c.b16 %v8840, %v8786
    %v9489 = vpack.c.b16 %v8841, %v8787
    %v9490 = vpack.c.b16 %v8842, %v8788
    %v9491 = vpack.c.b16 %v8843, %v8789
    %v9492 = vpack.c.b16 %v8844, %v8790
    %v9493 = vpack.c.b16 %v8845, %v8791
    %v9494 = vpack.c.b16 %v8846, %v8792
    %v9495 = vpack.c.b16 %v8847, %v8793
    %v9496 = vpack.c.b16 %v8848, %v8794
    %v9497 = vpack.c.b16 %v8849, %v8795
    %v9498 = vpack.c.b16 %v8850, %v8796
    %v9499 = vpack.c.b16 %v8851, %v8797
    %v9500 = vpack.c.b16 %v8852, %v8798
    %v9501 = vpack.c.b16 %v8853, %v8799
    %v9502 = vpack.c.b16 %v8854, %v8800
    %v9503 = vpack.c.b16 %v8855, %v8801
    %v9504 = vpack.c.b16 %v8856, %v8802
    %v9505 = vpack.c.b16 %v8857, %v8803
    %v9506 = vpack.c.b16 %v8858, %v8804
    %v9507 = vpack.c.b16 %v8859, %v8805
    %v9508 = vpack.c.b16 %v8860, %v8806
    %v9509 = vpack.c.b16 %v8861, %v8807
    %v9510 = vpack.c.b16 %v8862, %v8808
    %v9511 = vpack.c.b16 %v8863, %v8809
    %v9512 = vpack.c.b16 %v8864, %v8810
    %v9513 = vpack.c.b16 %v8919, %v8865
    %v9514 = vpack.c.b16 %v8920, %v8866
    %v9515 = vpack.c.b16 %v8921, %v8867
    %v9516 = vpack.c.b16 %v8922, %v8868
    %v9517 = vpack.c.b16 %v8923, %v8869
    %v9518 = vpack.c.b16 %v8924, %v8870
    %v9519 = vpack.c.b16 %v8925, %v8871
    %v9520 = vpack.c.b16 %v8926, %v8872
    %v9521 = vpack.c.b16 %v8927, %v8873
    %v9522 = vpack.c.b16 %v8928, %v8874
    %v9523 = vpack.c.b16 %v8929, %v8875
    %v9524 = vpack.c.b16 %v8930, %v8876
    %v9525 = vpack.c.b16 %v8931, %v8877
    %v9526 = vpack.c.b16 %v8932, %v8878
    %v9527 = vpack.c.b16 %v8933, %v8879
    %v9528 = vpack.c.b16 %v8934, %v8880
    %v9529 = vpack.c.b16 %v8935, %v8881
    %v9530 = vpack.c.b16 %v8936, %v8882
    %v9531 = vpack.c.b16 %v8937, %v8883
    %v9532 = vpack.c.b16 %v8938, %v8884
    %v9533 = vpack.c.b16 %v8939, %v8885
    %v9534 = vpack.c.b16 %v8940, %v8886
    %v9535 = vpack.c.b16 %v8941, %v8887
    %v9536 = vpack.c.b16 %v8942, %v8888
    %v9537 = vpack.c.b16 %v8943, %v8889
    %v9538 = vpack.c.b16 %v8944, %v8890
    %v9539 = vpack.c.b16 %v8945, %v8891
    %v9540 = vpack.c.b16 %v8946, %v8892
    %v9541 = vpack.c.b16 %v8947, %v8893
    %v9542 = vpack.c.b16 %v8948, %v8894
    %v9543 = vpack.c.b16 %v8949, %v8895
    %v9544 = vpack.c.b16 %v8950, %v8896
    %v9545 = vpack.c.b16 %v8951, %v8897
    %v9546 = vpack.c.b16 %v8952, %v8898
    %v9547 = vpack.c.b16 %v8953, %v8899
    %v9548 = vpack.c.b16 %v8954, %v8900
    %v9549 = vpack.c.b16 %v8955, %v8901
    %v9550 = vpack.c.b16 %v8956, %v8902
    %v9551 = vpack.c.b16 %v8957, %v8903
    %v9552 = vpack.c.b16 %v8958, %v8904
    %v9553 = vpack.c.b16 %v8959, %v8905
    %v9554 = vpack.c.b16 %v8960, %v8906
    %v9555 = vpack.c.b16 %v8961, %v8907
    %v9556 = vpack.c.b16 %v8962, %v8908
    %v9557 = vpack.c.b16 %v8963, %v8909
    %v9558 = vpack.c.b16 %v8964, %v8910
    %v9559 = vpack.c.b16 %v8965, %v8911
    %v9560 = vpack.c.b16 %v8966, %v8912
    %v9561 = vpack.c.b16 %v8967, %v8913
    %v9562 = vpack.c.b16 %v8968, %v8914
    %v9563 = vpack.c.b16 %v8969, %v8915
    %v9564 = vpack.c.b16 %v8970, %v8916
    %v9565 = vpack.c.b16 %v8971, %v8917
    %v9566 = vpack.c.b16 %v8972, %v8918
    %v9567 = vpack.c.b16 %v9027, %v8973
    %v9568 = vpack.c.b16 %v9028, %v8974
    %v9569 = vpack.c.b16 %v9029, %v8975
    %v9570 = vpack.c.b16 %v9030, %v8976
    %v9571 = vpack.c.b16 %v9031, %v8977
    %v9572 = vpack.c.b16 %v9032, %v8978
    %v9573 = vpack.c.b16 %v9033, %v8979
    %v9574 = vpack.c.b16 %v9034, %v8980
    %v9575 = vpack.c.b16 %v9035, %v8981
    %v9576 = vpack.c.b16 %v9036, %v8982
    %v9577 = vpack.c.b16 %v9037, %v8983
    %v9578 = vpack.c.b16 %v9038, %v8984
    %v9579 = vpack.c.b16 %v9039, %v8985
    %v9580 = vpack.c.b16 %v9040, %v8986
    %v9581 = vpack.c.b16 %v9041, %v8987
    %v9582 = vpack.c.b16 %v9042, %v8988
    %v9583 = vpack.c.b16 %v9043, %v8989
    %v9584 = vpack.c.b16 %v9044, %v8990
    %v9585 = vpack.c.b16 %v9045, %v8991
    %v9586 = vpack.c.b16 %v9046, %v8992
    %v9587 = vpack.c.b16 %v9047, %v8993
    %v9588 = vpack.c.b16 %v9048, %v8994
    %v9589 = vpack.c.b16 %v9049, %v8995
    %v9590 = vpack.c.b16 %v9050, %v8996
    %v9591 = vpack.c.b16 %v9051, %v8997
    %v9592 = vpack.c.b16 %v9052, %v8998
    %v9593 = vpack.c.b16 %v9053, %v8999
    %v9594 = vpack.c.b16 %v9054, %v9000
    %v9595 = vpack.c.b16 %v9055, %v9001
    %v9596 = vpack.c.b16 %v9056, %v9002
    %v9597 = vpack.c.b16 %v9057, %v9003
    %v9598 = vpack.c.b16 %v9058, %v9004
    %v9599 = vpack.c.b16 %v9059, %v9005
    %v9600 = vpack.c.b16 %v9060, %v9006
    %v9601 = vpack.c.b16 %v9061, %v9007
    %v9602 = vpack.c.b16 %v9062, %v9008
    %v9603 = vpack.c.b16 %v9063, %v9009
    %v9604 = vpack.c.b16 %v9064, %v9010
    %v9605 = vpack.c.b16 %v9065, %v9011
    %v9606 = vpack.c.b16 %v9066, %v9012
    %v9607 = vpack.c.b16 %v9067, %v9013
    %v9608 = vpack.c.b16 %v9068, %v9014
    %v9609 = vpack.c.b16 %v9069, %v9015
    %v9610 = vpack.c.b16 %v9070, %v9016
    %v9611 = vpack.c.b16 %v9071, %v9017
    %v9612 = vpack.c.b16 %v9072, %v9018
    %v9613 = vpack.c.b16 %v9073, %v9019
    %v9614 = vpack.c.b16 %v9074, %v9020
    %v9615 = vpack.c.b16 %v9075, %v9021
    %v9616 = vpack.c.b16 %v9076, %v9022
    %v9617 = vpack.c.b16 %v9077, %v9023
    %v9618 = vpack.c.b16 %v9078, %v9024
    %v9619 = vpack.c.b16 %v9079, %v9025
    %v9620 = vpack.c.b16 %v9080, %v9026
    %v9621 = vpack.c.b16 %v9135, %v9081
    %v9622 = vpack.c.b16 %v9136, %v9082
    %v9623 = vpack.c.b16 %v9137, %v9083
    %v9624 = vpack.c.b16 %v9138, %v9084
    %v9625 = vpack.c.b16 %v9139, %v9085
    %v9626 = vpack.c.b16 %v9140, %v9086
    %v9627 = vpack.c.b16 %v9141, %v9087
    %v9628 = vpack.c.b16 %v9142, %v9088
    %v9629 = vpack.c.b16 %v9143, %v9089
    %v9630 = vpack.c.b16 %v9144, %v9090
    %v9631 = vpack.c.b16 %v9145, %v9091
    %v9632 = vpack.c.b16 %v9146, %v9092
    %v9633 = vpack.c.b16 %v9147, %v9093
    %v9634 = vpack.c.b16 %v9148, %v9094
    %v9635 = vpack.c.b16 %v9149, %v9095
    %v9636 = vpack.c.b16 %v9150, %v9096
    %v9637 = vpack.c.b16 %v9151, %v9097
    %v9638 = vpack.c.b16 %v9152, %v9098
    %v9639 = vpack.c.b16 %v9153, %v9099
    %v9640 = vpack.c.b16 %v9154, %v9100
    %v9641 = vpack.c.b16 %v9155, %v9101
    %v9642 = vpack.c.b16 %v9156, %v9102
    %v9643 = vpack.c.b16 %v9157, %v9103
    %v9644 = vpack.c.b16 %v9158, %v9104
    %v9645 = vpack.c.b16 %v9159, %v9105
    %v9646 = vpack.c.b16 %v9160, %v9106
    %v9647 = vpack.c.b16 %v9161, %v9107
    %v9648 = vpack.c.b16 %v9162, %v9108
    %v9649 = vpack.c.b16 %v9163, %v9109
    %v9650 = vpack.c.b16 %v9164, %v9110
    %v9651 = vpack.c.b16 %v9165, %v9111
    %v9652 = vpack.c.b16 %v9166, %v9112
    %v9653 = vpack.c.b16 %v9167, %v9113
    %v9654 = vpack.c.b16 %v9168, %v9114
    %v9655 = vpack.c.b16 %v9169, %v9115
    %v9656 = vpack.c.b16 %v9170, %v9116
    %v9657 = vpack.c.b16 %v9171, %v9117
    %v9658 = vpack.c.b16 %v9172, %v9118
    %v9659 = vpack.c.b16 %v9173, %v9119
    %v9660 = vpack.c.b16 %v9174, %v9120
    %v9661 = vpack.c.b16 %v9175, %v9121
    %v9662 = vpack.c.b16 %v9176, %v9122
    %v9663 = vpack.c.b16 %v9177, %v9123
    %v9664 = vpack.c.b16 %v9178, %v9124
    %v9665 = vpack.c.b16 %v9179, %v9125
    %v9666 = vpack.c.b16 %v9180, %v9126
    %v9667 = vpack.c.b16 %v9181, %v9127
    %v9668 = vpack.c.b16 %v9182, %v9128
    %v9669 = vpack.c.b16 %v9183, %v9129
    %v9670 = vpack.c.b16 %v9184, %v9130
    %v9671 = vpack.c.b16 %v9185, %v9131
    %v9672 = vpack.c.b16 %v9186, %v9132
    %v9673 = vpack.c.b16 %v9187, %v9133
    %v9674 = vpack.c.b16 %v9188, %v9134
    %v9675 = vpack.c.b16 %v9243, %v9189
    %v9676 = vpack.c.b16 %v9244, %v9190
    %v9677 = vpack.c.b16 %v9245, %v9191
    %v9678 = vpack.c.b16 %v9246, %v9192
    %v9679 = vpack.c.b16 %v9247, %v9193
    %v9680 = vpack.c.b16 %v9248, %v9194
    %v9681 = vpack.c.b16 %v9249, %v9195
    %v9682 = vpack.c.b16 %v9250, %v9196
    %v9683 = vpack.c.b16 %v9251, %v9197
    %v9684 = vpack.c.b16 %v9252, %v9198
    %v9685 = vpack.c.b16 %v9253, %v9199
    %v9686 = vpack.c.b16 %v9254, %v9200
    %v9687 = vpack.c.b16 %v9255, %v9201
    %v9688 = vpack.c.b16 %v9256, %v9202
    %v9689 = vpack.c.b16 %v9257, %v9203
    %v9690 = vpack.c.b16 %v9258, %v9204
    %v9691 = vpack.c.b16 %v9259, %v9205
    %v9692 = vpack.c.b16 %v9260, %v9206
    %v9693 = vpack.c.b16 %v9261, %v9207
    %v9694 = vpack.c.b16 %v9262, %v9208
    %v9695 = vpack.c.b16 %v9263, %v9209
    %v9696 = vpack.c.b16 %v9264, %v9210
    %v9697 = vpack.c.b16 %v9265, %v9211
    %v9698 = vpack.c.b16 %v9266, %v9212
    %v9699 = vpack.c.b16 %v9267, %v9213
    %v9700 = vpack.c.b16 %v9268, %v9214
    %v9701 = vpack.c.b16 %v9269, %v9215
    %v9702 = vpack.c.b16 %v9270, %v9216
    %v9703 = vpack.c.b16 %v9271, %v9217
    %v9704 = vpack.c.b16 %v9272, %v9218
    %v9705 = vpack.c.b16 %v9273, %v9219
    %v9706 = vpack.c.b16 %v9274, %v9220
    %v9707 = vpack.c.b16 %v9275, %v9221
    %v9708 = vpack.c.b16 %v9276, %v9222
    %v9709 = vpack.c.b16 %v9277, %v9223
    %v9710 = vpack.c.b16 %v9278, %v9224
    %v9711 = vpack.c.b16 %v9279, %v9225
    %v9712 = vpack.c.b16 %v9280, %v9226
    %v9713 = vpack.c.b16 %v9281, %v9227
    %v9714 = vpack.c.b16 %v9282, %v9228
    %v9715 = vpack.c.b16 %v9283, %v9229
    %v9716 = vpack.c.b16 %v9284, %v9230
    %v9717 = vpack.c.b16 %v9285, %v9231
    %v9718 = vpack.c.b16 %v9286, %v9232
    %v9719 = vpack.c.b16 %v9287, %v9233
    %v9720 = vpack.c.b16 %v9288, %v9234
    %v9721 = vpack.c.b16 %v9289, %v9235
    %v9722 = vpack.c.b16 %v9290, %v9236
    %v9723 = vpack.c.b16 %v9291, %v9237
    %v9724 = vpack.c.b16 %v9292, %v9238
    %v9725 = vpack.c.b16 %v9293, %v9239
    %v9726 = vpack.c.b16 %v9294, %v9240
    %v9727 = vpack.c.b16 %v9295, %v9241
    %v9728 = vpack.c.b16 %v9296, %v9242
    %v9729 = vpack.c.b16 %v9351, %v9297
    %v9730 = vpack.c.b16 %v9352, %v9298
    %v9731 = vpack.c.b16 %v9353, %v9299
    %v9732 = vpack.c.b16 %v9354, %v9300
    %v9733 = vpack.c.b16 %v9355, %v9301
    %v9734 = vpack.c.b16 %v9356, %v9302
    %v9735 = vpack.c.b16 %v9357, %v9303
    %v9736 = vpack.c.b16 %v9358, %v9304
    %v9737 = vpack.c.b16 %v9359, %v9305
    %v9738 = vpack.c.b16 %v9360, %v9306
    %v9739 = vpack.c.b16 %v9361, %v9307
    %v9740 = vpack.c.b16 %v9362, %v9308
    %v9741 = vpack.c.b16 %v9363, %v9309
    %v9742 = vpack.c.b16 %v9364, %v9310
    %v9743 = vpack.c.b16 %v9365, %v9311
    %v9744 = vpack.c.b16 %v9366, %v9312
    %v9745 = vpack.c.b16 %v9367, %v9313
    %v9746 = vpack.c.b16 %v9368, %v9314
    %v9747 = vpack.c.b16 %v9369, %v9315
    %v9748 = vpack.c.b16 %v9370, %v9316
    %v9749 = vpack.c.b16 %v9371, %v9317
    %v9750 = vpack.c.b16 %v9372, %v9318
    %v9751 = vpack.c.b16 %v9373, %v9319
    %v9752 = vpack.c.b16 %v9374, %v9320
    %v9753 = vpack.c.b16 %v9375, %v9321
    %v9754 = vpack.c.b16 %v9376, %v9322
    %v9755 = vpack.c.b16 %v9377, %v9323
    %v9756 = vpack.c.b16 %v9378, %v9324
    %v9757 = vpack.c.b16 %v9379, %v9325
    %v9758 = vpack.c.b16 %v9380, %v9326
    %v9759 = vpack.c.b16 %v9381, %v9327
    %v9760 = vpack.c.b16 %v9382, %v9328
    %v9761 = vpack.c.b16 %v9383, %v9329
    %v9762 = vpack.c.b16 %v9384, %v9330
    %v9763 = vpack.c.b16 %v9385, %v9331
    %v9764 = vpack.c.b16 %v9386, %v9332
    %v9765 = vpack.c.b16 %v9387, %v9333
    %v9766 = vpack.c.b16 %v9388, %v9334
    %v9767 = vpack.c.b16 %v9389, %v9335
    %v9768 = vpack.c.b16 %v9390, %v9336
    %v9769 = vpack.c.b16 %v9391, %v9337
    %v9770 = vpack.c.b16 %v9392, %v9338
    %v9771 = vpack.c.b16 %v9393, %v9339
    %v9772 = vpack.c.b16 %v9394, %v9340
    %v9773 = vpack.c.b16 %v9395, %v9341
    %v9774 = vpack.c.b16 %v9396, %v9342
    %v9775 = vpack.c.b16 %v9397, %v9343
    %v9776 = vpack.c.b16 %v9398, %v9344
    %v9777 = vpack.c.b16 %v9399, %v9345
    %v9778 = vpack.c.b16 %v9400, %v9346
    %v9779 = vpack.c.b16 %v9401, %v9347
    %v9780 = vpack.c.b16 %v9402, %v9348
    %v9781 = vpack.c.b16 %v9403, %v9349
    %v9782 = vpack.c.b16 %v9404, %v9350
    %vm10107 = vcmask 883712
    %v10109 = vsel %vm10107, %v7886, 0
    %vm10111 = vcmask 1045504
    %v10113 = vsel %vm10111, %v9729, 0
    %v10116 = vsel %vm10111, %v9730, 0
    %v10119 = vsel %vm10111, %v9731, 0
    %v10122 = vsel %vm10111, %v9732, 0
    %v10125 = vsel %vm10111, %v9733, 0
    %v10128 = vsel %vm10111, %v9734, 0
    %v10131 = vsel %vm10111, %v9735, 0
    %v10134 = vsel %vm10111, %v9736, 0
    %v10137 = vsel %vm10111, %v9737, 0
    %v10140 = vsel %vm10111, %v9738, 0
    %v10143 = vsel %vm10111, %v9739, 0
    %v10146 = vsel %vm10111, %v9740, 0
    %v10149 = vsel %vm10111, %v9741, 0
    %v10152 = vsel %vm10111, %v9742, 0
    %v10155 = vsel %vm10111, %v9743, 0
    %v10158 = vsel %vm10111, %v9744, 0
    %v10161 = vsel %vm10111, %v9745, 0
    %v10164 = vsel %vm10111, %v9746, 0
    %v10167 = vsel %vm10111, %v9747, 0
    %v10170 = vsel %vm10111, %v9748, 0
    %v10173 = vsel %vm10111, %v9749, 0
    %v10176 = vsel %vm10111, %v9750, 0
    %v10179 = vsel %vm10111, %v9751, 0
    %v10182 = vsel %vm10111, %v9752, 0
    %v10185 = vsel %vm10111, %v9753, 0
    %v10188 = vsel %vm10111, %v9754, 0
    %v10191 = vsel %vm10111, %v9755, 0
    %v10194 = vsel %vm10111, %v9756, 0
    %v10197 = vsel %vm10111, %v9757, 0
    %v10200 = vsel %vm10111, %v9758, 0
    %v10203 = vsel %vm10111, %v9759, 0
    %v10206 = vsel %vm10111, %v9760, 0
    %v10209 = vsel %vm10111, %v9761, 0
    %v10212 = vsel %vm10111, %v9762, 0
    %v10215 = vsel %vm10111, %v9763, 0
    %v10218 = vsel %vm10111, %v9764, 0
    %v10221 = vsel %vm10111, %v9765, 0
    %v10224 = vsel %vm10111, %v9766, 0
    %v10227 = vsel %vm10111, %v9767, 0
    %v10230 = vsel %vm10111, %v9768, 0
    %v10233 = vsel %vm10111, %v9769, 0
    %v10236 = vsel %vm10111, %v9770, 0
    %v10239 = vsel %vm10111, %v9771, 0
    %v10242 = vsel %vm10111, %v9772, 0
    %v10245 = vsel %vm10111, %v9773, 0
    %v10248 = vsel %vm10111, %v9774, 0
    %v10251 = vsel %vm10111, %v9775, 0
    %v10254 = vsel %vm10111, %v9776, 0
    %v10257 = vsel %vm10111, %v9777, 0
    %v10260 = vsel %vm10111, %v9778, 0
    %v10263 = vsel %vm10111, %v9779, 0
    %v10266 = vsel %vm10111, %v9780, 0
    %v10269 = vsel %vm10111, %v9781, 0
    %v10272 = vsel %vm10111, %v9782, 0
    %10274 = vmatpush.bf16.msra.mxu0 0
    %10275 = vmatpush.bf16.msra.mxu0 %v10113
    %10276 = vmatpush.bf16.msra.mxu0 %v9675
    %10277 = vmatpush.bf16.msra.mxu0 %v9621
    %10278 = vmatpush.bf16.msra.mxu0 %v9567
    %10279 = vmatpush.bf16.msra.mxu0 %v9513
    %10280 = vmatpush.bf16.msra.mxu0 %v9459
    %10281 = vmatpush.bf16.msra.mxu0 %v9405
    %10282 = vmatmul.bf16.gmra.mxu0 %v10109
    %v10283 = vpop.f32.mrf.mxu0
    %v10284 = vadd.f32 %v8269, %v10283
    %v10285 = vpop.f32.mrf.mxu0
    %10286 = vdwg.mxu0
    %10287 = vmatpush.bf16.msra.mxu0 0
    %10288 = vmatpush.bf16.msra.mxu0 %v10116
    %10289 = vmatpush.bf16.msra.mxu0 %v9676
    %10290 = vmatpush.bf16.msra.mxu0 %v9622
    %10291 = vmatpush.bf16.msra.mxu0 %v9568
    %10292 = vmatpush.bf16.msra.mxu0 %v9514
    %10293 = vmatpush.bf16.msra.mxu0 %v9460
    %10294 = vmatpush.bf16.msra.mxu0 %v9406
    %10295 = vmatmul.bf16.gmra.mxu0 %v10109
    %v10296 = vpop.f32.mrf.mxu0
    %v10297 = vadd.f32 %v8269, %v10296
    %v10298 = vpop.f32.mrf.mxu0
    %10299 = vdwg.mxu0
    %10300 = vmatpush.bf16.msra.mxu0 0
    %10301 = vmatpush.bf16.msra.mxu0 %v10119
    %10302 = vmatpush.bf16.msra.mxu0 %v9677
    %10303 = vmatpush.bf16.msra.mxu0 %v9623
    %10304 = vmatpush.bf16.msra.mxu0 %v9569
    %10305 = vmatpush.bf16.msra.mxu0 %v9515
    %10306 = vmatpush.bf16.msra.mxu0 %v9461
    %10307 = vmatpush.bf16.msra.mxu0 %v9407
    %10308 = vmatmul.bf16.gmra.mxu0 %v10109
    %v10309 = vpop.f32.mrf.mxu0
    %v10310 = vadd.f32 %v8269, %v10309
    %v10311 = vpop.f32.mrf.mxu0
    %10312 = vdwg.mxu0
    %10313 = vmatpush.bf16.msra.mxu0 0
    %10314 = vmatpush.bf16.msra.mxu0 %v10122
    %10315 = vmatpush.bf16.msra.mxu0 %v9678
    %10316 = vmatpush.bf16.msra.mxu0 %v9624
    %10317 = vmatpush.bf16.msra.mxu0 %v9570
    %10318 = vmatpush.bf16.msra.mxu0 %v9516
    %10319 = vmatpush.bf16.msra.mxu0 %v9462
    %10320 = vmatpush.bf16.msra.mxu0 %v9408
    %10321 = vmatmul.bf16.gmra.mxu0 %v10109
    %v10322 = vpop.f32.mrf.mxu0
    %v10323 = vadd.f32 %v8269, %v10322
    %v10324 = vpop.f32.mrf.mxu0
    %10325 = vdwg.mxu0
    %10326 = vmatpush.bf16.msra.mxu0 0
    %10327 = vmatpush.bf16.msra.mxu0 %v10125
    %10328 = vmatpush.bf16.msra.mxu0 %v9679
    %10329 = vmatpush.bf16.msra.mxu0 %v9625
    %10330 = vmatpush.bf16.msra.mxu0 %v9571
    %10331 = vmatpush.bf16.msra.mxu0 %v9517
    %10332 = vmatpush.bf16.msra.mxu0 %v9463
    %10333 = vmatpush.bf16.msra.mxu0 %v9409
    %10334 = vmatmul.bf16.gmra.mxu0 %v10109
    %v10335 = vpop.f32.mrf.mxu0
    %v10336 = vadd.f32 %v8269, %v10335
    %v10337 = vpop.f32.mrf.mxu0
    %10338 = vdwg.mxu0
    %10339 = vmatpush.bf16.msra.mxu0 0
    %10340 = vmatpush.bf16.msra.mxu0 %v10128
    %10341 = vmatpush.bf16.msra.mxu0 %v9680
    %10342 = vmatpush.bf16.msra.mxu0 %v9626
    %10343 = vmatpush.bf16.msra.mxu0 %v9572
    %10344 = vmatpush.bf16.msra.mxu0 %v9518
    %10345 = vmatpush.bf16.msra.mxu0 %v9464
    %10346 = vmatpush.bf16.msra.mxu0 %v9410
    %10347 = vmatmul.bf16.gmra.mxu0 %v10109
    %v10348 = vpop.f32.mrf.mxu0
    %v10349 = vadd.f32 %v8269, %v10348
    %v10350 = vpop.f32.mrf.mxu0
    %10351 = vdwg.mxu0
    %10352 = vmatpush.bf16.msra.mxu0 0
    %10353 = vmatpush.bf16.msra.mxu0 %v10131
    %10354 = vmatpush.bf16.msra.mxu0 %v9681
    %10355 = vmatpush.bf16.msra.mxu0 %v9627
    %10356 = vmatpush.bf16.msra.mxu0 %v9573
    %10357 = vmatpush.bf16.msra.mxu0 %v9519
    %10358 = vmatpush.bf16.msra.mxu0 %v9465
    %10359 = vmatpush.bf16.msra.mxu0 %v9411
    %10360 = vmatmul.bf16.gmra.mxu0 %v10109
    %v10361 = vpop.f32.mrf.mxu0
    %v10362 = vadd.f32 %v8269, %v10361
    %v10363 = vpop.f32.mrf.mxu0
    %10364 = vdwg.mxu0
    %10365 = vmatpush.bf16.msra.mxu0 0
    %10366 = vmatpush.bf16.msra.mxu0 %v10134
    %10367 = vmatpush.bf16.msra.mxu0 %v9682
    %10368 = vmatpush.bf16.msra.mxu0 %v9628
    %10369 = vmatpush.bf16.msra.mxu0 %v9574
    %10370 = vmatpush.bf16.msra.mxu0 %v9520
    %10371 = vmatpush.bf16.msra.mxu0 %v9466
    %10372 = vmatpush.bf16.msra.mxu0 %v9412
    %10373 = vmatmul.bf16.gmra.mxu0 %v10109
    %v10374 = vpop.f32.mrf.mxu0
    %v10375 = vadd.f32 %v8269, %v10374
    %v10376 = vpop.f32.mrf.mxu0
    %10377 = vdwg.mxu0
    %10378 = vmatpush.bf16.msra.mxu0 0
    %10379 = vmatpush.bf16.msra.mxu0 %v10137
    %10380 = vmatpush.bf16.msra.mxu0 %v9683
    %10381 = vmatpush.bf16.msra.mxu0 %v9629
    %10382 = vmatpush.bf16.msra.mxu0 %v9575
    %10383 = vmatpush.bf16.msra.mxu0 %v9521
    %10384 = vmatpush.bf16.msra.mxu0 %v9467
    %10385 = vmatpush.bf16.msra.mxu0 %v9413
    %10386 = vmatmul.bf16.gmra.mxu0 %v10109
    %v10387 = vpop.f32.mrf.mxu0
    %v10388 = vadd.f32 %v8269, %v10387
    %v10389 = vpop.f32.mrf.mxu0
    %10390 = vdwg.mxu0
    %10391 = vmatpush.bf16.msra.mxu0 0
    %10392 = vmatpush.bf16.msra.mxu0 %v10140
    %10393 = vmatpush.bf16.msra.mxu0 %v9684
    %10394 = vmatpush.bf16.msra.mxu0 %v9630
    %10395 = vmatpush.bf16.msra.mxu0 %v9576
    %10396 = vmatpush.bf16.msra.mxu0 %v9522
    %10397 = vmatpush.bf16.msra.mxu0 %v9468
    %10398 = vmatpush.bf16.msra.mxu0 %v9414
    %10399 = vmatmul.bf16.gmra.mxu0 %v10109
    %v10400 = vpop.f32.mrf.mxu0
    %v10401 = vadd.f32 %v8269, %v10400
    %v10402 = vpop.f32.mrf.mxu0
    %10403 = vdwg.mxu0
    %10404 = vmatpush.bf16.msra.mxu0 0
    %10405 = vmatpush.bf16.msra.mxu0 %v10143
    %10406 = vmatpush.bf16.msra.mxu0 %v9685
    %10407 = vmatpush.bf16.msra.mxu0 %v9631
    %10408 = vmatpush.bf16.msra.mxu0 %v9577
    %10409 = vmatpush.bf16.msra.mxu0 %v9523
    %10410 = vmatpush.bf16.msra.mxu0 %v9469
    %10411 = vmatpush.bf16.msra.mxu0 %v9415
    %10412 = vmatmul.bf16.gmra.mxu0 %v10109
    %v10413 = vpop.f32.mrf.mxu0
    %v10414 = vadd.f32 %v8269, %v10413
    %v10415 = vpop.f32.mrf.mxu0
    %10416 = vdwg.mxu0
    %10417 = vmatpush.bf16.msra.mxu0 0
    %10418 = vmatpush.bf16.msra.mxu0 %v10146
    %10419 = vmatpush.bf16.msra.mxu0 %v9686
    %10420 = vmatpush.bf16.msra.mxu0 %v9632
    %10421 = vmatpush.bf16.msra.mxu0 %v9578
    %10422 = vmatpush.bf16.msra.mxu0 %v9524
    %10423 = vmatpush.bf16.msra.mxu0 %v9470
    %10424 = vmatpush.bf16.msra.mxu0 %v9416
    %10425 = vmatmul.bf16.gmra.mxu0 %v10109
    %v10426 = vpop.f32.mrf.mxu0
    %v10427 = vadd.f32 %v8269, %v10426
    %v10428 = vpop.f32.mrf.mxu0
    %10429 = vdwg.mxu0
    %10430 = vmatpush.bf16.msra.mxu0 0
    %10431 = vmatpush.bf16.msra.mxu0 %v10149
    %10432 = vmatpush.bf16.msra.mxu0 %v9687
    %10433 = vmatpush.bf16.msra.mxu0 %v9633
    %10434 = vmatpush.bf16.msra.mxu0 %v9579
    %10435 = vmatpush.bf16.msra.mxu0 %v9525
    %10436 = vmatpush.bf16.msra.mxu0 %v9471
    %10437 = vmatpush.bf16.msra.mxu0 %v9417
    %10438 = vmatmul.bf16.gmra.mxu0 %v10109
    %v10439 = vpop.f32.mrf.mxu0
    %v10440 = vadd.f32 %v8269, %v10439
    %v10441 = vpop.f32.mrf.mxu0
    %10442 = vdwg.mxu0
    %10443 = vmatpush.bf16.msra.mxu0 0
    %10444 = vmatpush.bf16.msra.mxu0 %v10152
    %10445 = vmatpush.bf16.msra.mxu0 %v9688
    %10446 = vmatpush.bf16.msra.mxu0 %v9634
    %10447 = vmatpush.bf16.msra.mxu0 %v9580
    %10448 = vmatpush.bf16.msra.mxu0 %v9526
    %10449 = vmatpush.bf16.msra.mxu0 %v9472
    %10450 = vmatpush.bf16.msra.mxu0 %v9418
    %10451 = vmatmul.bf16.gmra.mxu0 %v10109
    %v10452 = vpop.f32.mrf.mxu0
    %v10453 = vadd.f32 %v8269, %v10452
    %v10454 = vpop.f32.mrf.mxu0
    %10455 = vdwg.mxu0
    %10456 = vmatpush.bf16.msra.mxu0 0
    %10457 = vmatpush.bf16.msra.mxu0 %v10155
    %10458 = vmatpush.bf16.msra.mxu0 %v9689
    %10459 = vmatpush.bf16.msra.mxu0 %v9635
    %10460 = vmatpush.bf16.msra.mxu0 %v9581
    %10461 = vmatpush.bf16.msra.mxu0 %v9527
    %10462 = vmatpush.bf16.msra.mxu0 %v9473
    %10463 = vmatpush.bf16.msra.mxu0 %v9419
    %10464 = vmatmul.bf16.gmra.mxu0 %v10109
    %v10465 = vpop.f32.mrf.mxu0
    %v10466 = vadd.f32 %v8269, %v10465
    %v10467 = vpop.f32.mrf.mxu0
    %10468 = vdwg.mxu0
    %10469 = vmatpush.bf16.msra.mxu0 0
    %10470 = vmatpush.bf16.msra.mxu0 %v10158
    %10471 = vmatpush.bf16.msra.mxu0 %v9690
    %10472 = vmatpush.bf16.msra.mxu0 %v9636
    %10473 = vmatpush.bf16.msra.mxu0 %v9582
    %10474 = vmatpush.bf16.msra.mxu0 %v9528
    %10475 = vmatpush.bf16.msra.mxu0 %v9474
    %10476 = vmatpush.bf16.msra.mxu0 %v9420
    %10477 = vmatmul.bf16.gmra.mxu0 %v10109
    %v10478 = vpop.f32.mrf.mxu0
    %v10479 = vadd.f32 %v8269, %v10478
    %v10480 = vpop.f32.mrf.mxu0
    %10481 = vdwg.mxu0
    %10482 = vmatpush.bf16.msra.mxu0 0
    %10483 = vmatpush.bf16.msra.mxu0 %v10161
    %10484 = vmatpush.bf16.msra.mxu0 %v9691
    %10485 = vmatpush.bf16.msra.mxu0 %v9637
    %10486 = vmatpush.bf16.msra.mxu0 %v9583
    %10487 = vmatpush.bf16.msra.mxu0 %v9529
    %10488 = vmatpush.bf16.msra.mxu0 %v9475
    %10489 = vmatpush.bf16.msra.mxu0 %v9421
    %10490 = vmatmul.bf16.gmra.mxu0 %v10109
    %v10491 = vpop.f32.mrf.mxu0
    %v10492 = vadd.f32 %v8269, %v10491
    %v10493 = vpop.f32.mrf.mxu0
    %10494 = vdwg.mxu0
    %10495 = vmatpush.bf16.msra.mxu0 0
    %10496 = vmatpush.bf16.msra.mxu0 %v10164
    %10497 = vmatpush.bf16.msra.mxu0 %v9692
    %10498 = vmatpush.bf16.msra.mxu0 %v9638
    %10499 = vmatpush.bf16.msra.mxu0 %v9584
    %10500 = vmatpush.bf16.msra.mxu0 %v9530
    %10501 = vmatpush.bf16.msra.mxu0 %v9476
    %10502 = vmatpush.bf16.msra.mxu0 %v9422
    %10503 = vmatmul.bf16.gmra.mxu0 %v10109
    %v10504 = vpop.f32.mrf.mxu0
    %v10505 = vadd.f32 %v8269, %v10504
    %v10506 = vpop.f32.mrf.mxu0
    %10507 = vdwg.mxu0
    %10508 = vmatpush.bf16.msra.mxu0 0
    %10509 = vmatpush.bf16.msra.mxu0 %v10167
    %10510 = vmatpush.bf16.msra.mxu0 %v9693
    %10511 = vmatpush.bf16.msra.mxu0 %v9639
    %10512 = vmatpush.bf16.msra.mxu0 %v9585
    %10513 = vmatpush.bf16.msra.mxu0 %v9531
    %10514 = vmatpush.bf16.msra.mxu0 %v9477
    %10515 = vmatpush.bf16.msra.mxu0 %v9423
    %10516 = vmatmul.bf16.gmra.mxu0 %v10109
    %v10517 = vpop.f32.mrf.mxu0
    %v10518 = vadd.f32 %v8269, %v10517
    %v10519 = vpop.f32.mrf.mxu0
    %10520 = vdwg.mxu0
    %10521 = vmatpush.bf16.msra.mxu0 0
    %10522 = vmatpush.bf16.msra.mxu0 %v10170
    %10523 = vmatpush.bf16.msra.mxu0 %v9694
    %10524 = vmatpush.bf16.msra.mxu0 %v9640
    %10525 = vmatpush.bf16.msra.mxu0 %v9586
    %10526 = vmatpush.bf16.msra.mxu0 %v9532
    %10527 = vmatpush.bf16.msra.mxu0 %v9478
    %10528 = vmatpush.bf16.msra.mxu0 %v9424
    %10529 = vmatmul.bf16.gmra.mxu0 %v10109
    %v10530 = vpop.f32.mrf.mxu0
    %v10531 = vadd.f32 %v8269, %v10530
    %v10532 = vpop.f32.mrf.mxu0
    %10533 = vdwg.mxu0
    %10534 = vmatpush.bf16.msra.mxu0 0
    %10535 = vmatpush.bf16.msra.mxu0 %v10173
    %10536 = vmatpush.bf16.msra.mxu0 %v9695
    %10537 = vmatpush.bf16.msra.mxu0 %v9641
    %10538 = vmatpush.bf16.msra.mxu0 %v9587
    %10539 = vmatpush.bf16.msra.mxu0 %v9533
    %10540 = vmatpush.bf16.msra.mxu0 %v9479
    %10541 = vmatpush.bf16.msra.mxu0 %v9425
    %10542 = vmatmul.bf16.gmra.mxu0 %v10109
    %v10543 = vpop.f32.mrf.mxu0
    %v10544 = vadd.f32 %v8269, %v10543
    %v10545 = vpop.f32.mrf.mxu0
    %10546 = vdwg.mxu0
    %10547 = vmatpush.bf16.msra.mxu0 0
    %10548 = vmatpush.bf16.msra.mxu0 %v10176
    %10549 = vmatpush.bf16.msra.mxu0 %v9696
    %10550 = vmatpush.bf16.msra.mxu0 %v9642
    %10551 = vmatpush.bf16.msra.mxu0 %v9588
    %10552 = vmatpush.bf16.msra.mxu0 %v9534
    %10553 = vmatpush.bf16.msra.mxu0 %v9480
    %10554 = vmatpush.bf16.msra.mxu0 %v9426
    %10555 = vmatmul.bf16.gmra.mxu0 %v10109
    %v10556 = vpop.f32.mrf.mxu0
    %v10557 = vadd.f32 %v8269, %v10556
    %v10558 = vpop.f32.mrf.mxu0
    %10559 = vdwg.mxu0
    %10560 = vmatpush.bf16.msra.mxu0 0
    %10561 = vmatpush.bf16.msra.mxu0 %v10179
    %10562 = vmatpush.bf16.msra.mxu0 %v9697
    %10563 = vmatpush.bf16.msra.mxu0 %v9643
    %10564 = vmatpush.bf16.msra.mxu0 %v9589
    %10565 = vmatpush.bf16.msra.mxu0 %v9535
    %10566 = vmatpush.bf16.msra.mxu0 %v9481
    %10567 = vmatpush.bf16.msra.mxu0 %v9427
    %10568 = vmatmul.bf16.gmra.mxu0 %v10109
    %v10569 = vpop.f32.mrf.mxu0
    %v10570 = vadd.f32 %v8269, %v10569
    %v10571 = vpop.f32.mrf.mxu0
    %10572 = vdwg.mxu0
    %10573 = vmatpush.bf16.msra.mxu0 0
    %10574 = vmatpush.bf16.msra.mxu0 %v10182
    %10575 = vmatpush.bf16.msra.mxu0 %v9698
    %10576 = vmatpush.bf16.msra.mxu0 %v9644
    %10577 = vmatpush.bf16.msra.mxu0 %v9590
    %10578 = vmatpush.bf16.msra.mxu0 %v9536
    %10579 = vmatpush.bf16.msra.mxu0 %v9482
    %10580 = vmatpush.bf16.msra.mxu0 %v9428
    %10581 = vmatmul.bf16.gmra.mxu0 %v10109
    %v10582 = vpop.f32.mrf.mxu0
    %v10583 = vadd.f32 %v8269, %v10582
    %v10584 = vpop.f32.mrf.mxu0
    %10585 = vdwg.mxu0
    %10586 = vmatpush.bf16.msra.mxu0 0
    %10587 = vmatpush.bf16.msra.mxu0 %v10185
    %10588 = vmatpush.bf16.msra.mxu0 %v9699
    %10589 = vmatpush.bf16.msra.mxu0 %v9645
    %10590 = vmatpush.bf16.msra.mxu0 %v9591
    %10591 = vmatpush.bf16.msra.mxu0 %v9537
    %10592 = vmatpush.bf16.msra.mxu0 %v9483
    %10593 = vmatpush.bf16.msra.mxu0 %v9429
    %10594 = vmatmul.bf16.gmra.mxu0 %v10109
    %v10595 = vpop.f32.mrf.mxu0
    %v10596 = vadd.f32 %v8269, %v10595
    %v10597 = vpop.f32.mrf.mxu0
    %10598 = vdwg.mxu0
    %10599 = vmatpush.bf16.msra.mxu0 0
    %10600 = vmatpush.bf16.msra.mxu0 %v10188
    %10601 = vmatpush.bf16.msra.mxu0 %v9700
    %10602 = vmatpush.bf16.msra.mxu0 %v9646
    %10603 = vmatpush.bf16.msra.mxu0 %v9592
    %10604 = vmatpush.bf16.msra.mxu0 %v9538
    %10605 = vmatpush.bf16.msra.mxu0 %v9484
    %10606 = vmatpush.bf16.msra.mxu0 %v9430
    %10607 = vmatmul.bf16.gmra.mxu0 %v10109
    %v10608 = vpop.f32.mrf.mxu0
    %v10609 = vadd.f32 %v8269, %v10608
    %v10610 = vpop.f32.mrf.mxu0
    %10611 = vdwg.mxu0
    %10612 = vmatpush.bf16.msra.mxu0 0
    %10613 = vmatpush.bf16.msra.mxu0 %v10191
    %10614 = vmatpush.bf16.msra.mxu0 %v9701
    %10615 = vmatpush.bf16.msra.mxu0 %v9647
    %10616 = vmatpush.bf16.msra.mxu0 %v9593
    %10617 = vmatpush.bf16.msra.mxu0 %v9539
    %10618 = vmatpush.bf16.msra.mxu0 %v9485
    %10619 = vmatpush.bf16.msra.mxu0 %v9431
    %10620 = vmatmul.bf16.gmra.mxu0 %v10109
    %v10621 = vpop.f32.mrf.mxu0
    %v10622 = vadd.f32 %v8269, %v10621
    %v10623 = vpop.f32.mrf.mxu0
    %10624 = vdwg.mxu0
    %10625 = vmatpush.bf16.msra.mxu0 0
    %10626 = vmatpush.bf16.msra.mxu0 %v10194
    %10627 = vmatpush.bf16.msra.mxu0 %v9702
    %10628 = vmatpush.bf16.msra.mxu0 %v9648
    %10629 = vmatpush.bf16.msra.mxu0 %v9594
    %10630 = vmatpush.bf16.msra.mxu0 %v9540
    %10631 = vmatpush.bf16.msra.mxu0 %v9486
    %10632 = vmatpush.bf16.msra.mxu0 %v9432
    %10633 = vmatmul.bf16.gmra.mxu0 %v10109
    %v10634 = vpop.f32.mrf.mxu0
    %v10635 = vadd.f32 %v8269, %v10634
    %v10636 = vpop.f32.mrf.mxu0
    %10637 = vdwg.mxu0
    %10638 = vmatpush.bf16.msra.mxu0 0
    %10639 = vmatpush.bf16.msra.mxu0 %v10197
    %10640 = vmatpush.bf16.msra.mxu0 %v9703
    %10641 = vmatpush.bf16.msra.mxu0 %v9649
    %10642 = vmatpush.bf16.msra.mxu0 %v9595
    %10643 = vmatpush.bf16.msra.mxu0 %v9541
    %10644 = vmatpush.bf16.msra.mxu0 %v9487
    %10645 = vmatpush.bf16.msra.mxu0 %v9433
    %10646 = vmatmul.bf16.gmra.mxu0 %v10109
    %v10647 = vpop.f32.mrf.mxu0
    %v10648 = vadd.f32 %v8269, %v10647
    %v10649 = vpop.f32.mrf.mxu0
    %10650 = vdwg.mxu0
    %10651 = vmatpush.bf16.msra.mxu0 0
    %10652 = vmatpush.bf16.msra.mxu0 %v10200
    %10653 = vmatpush.bf16.msra.mxu0 %v9704
    %10654 = vmatpush.bf16.msra.mxu0 %v9650
    %10655 = vmatpush.bf16.msra.mxu0 %v9596
    %10656 = vmatpush.bf16.msra.mxu0 %v9542
    %10657 = vmatpush.bf16.msra.mxu0 %v9488
    %10658 = vmatpush.bf16.msra.mxu0 %v9434
    %10659 = vmatmul.bf16.gmra.mxu0 %v10109
    %v10660 = vpop.f32.mrf.mxu0
    %v10661 = vadd.f32 %v8269, %v10660
    %v10662 = vpop.f32.mrf.mxu0
    %10663 = vdwg.mxu0
    %10664 = vmatpush.bf16.msra.mxu0 0
    %10665 = vmatpush.bf16.msra.mxu0 %v10203
    %10666 = vmatpush.bf16.msra.mxu0 %v9705
    %10667 = vmatpush.bf16.msra.mxu0 %v9651
    %10668 = vmatpush.bf16.msra.mxu0 %v9597
    %10669 = vmatpush.bf16.msra.mxu0 %v9543
    %10670 = vmatpush.bf16.msra.mxu0 %v9489
    %10671 = vmatpush.bf16.msra.mxu0 %v9435
    %10672 = vmatmul.bf16.gmra.mxu0 %v10109
    %v10673 = vpop.f32.mrf.mxu0
    %v10674 = vadd.f32 %v8269, %v10673
    %v10675 = vpop.f32.mrf.mxu0
    %10676 = vdwg.mxu0
    %10677 = vmatpush.bf16.msra.mxu0 0
    %10678 = vmatpush.bf16.msra.mxu0 %v10206
    %10679 = vmatpush.bf16.msra.mxu0 %v9706
    %10680 = vmatpush.bf16.msra.mxu0 %v9652
    %10681 = vmatpush.bf16.msra.mxu0 %v9598
    %10682 = vmatpush.bf16.msra.mxu0 %v9544
    %10683 = vmatpush.bf16.msra.mxu0 %v9490
    %10684 = vmatpush.bf16.msra.mxu0 %v9436
    %10685 = vmatmul.bf16.gmra.mxu0 %v10109
    %v10686 = vpop.f32.mrf.mxu0
    %v10687 = vadd.f32 %v8269, %v10686
    %v10688 = vpop.f32.mrf.mxu0
    %10689 = vdwg.mxu0
    %10690 = vmatpush.bf16.msra.mxu0 0
    %10691 = vmatpush.bf16.msra.mxu0 %v10209
    %10692 = vmatpush.bf16.msra.mxu0 %v9707
    %10693 = vmatpush.bf16.msra.mxu0 %v9653
    %10694 = vmatpush.bf16.msra.mxu0 %v9599
    %10695 = vmatpush.bf16.msra.mxu0 %v9545
    %10696 = vmatpush.bf16.msra.mxu0 %v9491
    %10697 = vmatpush.bf16.msra.mxu0 %v9437
    %10698 = vmatmul.bf16.gmra.mxu0 %v10109
    %v10699 = vpop.f32.mrf.mxu0
    %v10700 = vadd.f32 %v8269, %v10699
    %v10701 = vpop.f32.mrf.mxu0
    %10702 = vdwg.mxu0
    %10703 = vmatpush.bf16.msra.mxu0 0
    %10704 = vmatpush.bf16.msra.mxu0 %v10212
    %10705 = vmatpush.bf16.msra.mxu0 %v9708
    %10706 = vmatpush.bf16.msra.mxu0 %v9654
    %10707 = vmatpush.bf16.msra.mxu0 %v9600
    %10708 = vmatpush.bf16.msra.mxu0 %v9546
    %10709 = vmatpush.bf16.msra.mxu0 %v9492
    %10710 = vmatpush.bf16.msra.mxu0 %v9438
    %10711 = vmatmul.bf16.gmra.mxu0 %v10109
    %v10712 = vpop.f32.mrf.mxu0
    %v10713 = vadd.f32 %v8269, %v10712
    %v10714 = vpop.f32.mrf.mxu0
    %10715 = vdwg.mxu0
    %10716 = vmatpush.bf16.msra.mxu0 0
    %10717 = vmatpush.bf16.msra.mxu0 %v10215
    %10718 = vmatpush.bf16.msra.mxu0 %v9709
    %10719 = vmatpush.bf16.msra.mxu0 %v9655
    %10720 = vmatpush.bf16.msra.mxu0 %v9601
    %10721 = vmatpush.bf16.msra.mxu0 %v9547
    %10722 = vmatpush.bf16.msra.mxu0 %v9493
    %10723 = vmatpush.bf16.msra.mxu0 %v9439
    %10724 = vmatmul.bf16.gmra.mxu0 %v10109
    %v10725 = vpop.f32.mrf.mxu0
    %v10726 = vadd.f32 %v8269, %v10725
    %v10727 = vpop.f32.mrf.mxu0
    %10728 = vdwg.mxu0
    %10729 = vmatpush.bf16.msra.mxu0 0
    %10730 = vmatpush.bf16.msra.mxu0 %v10218
    %10731 = vmatpush.bf16.msra.mxu0 %v9710
    %10732 = vmatpush.bf16.msra.mxu0 %v9656
    %10733 = vmatpush.bf16.msra.mxu0 %v9602
    %10734 = vmatpush.bf16.msra.mxu0 %v9548
    %10735 = vmatpush.bf16.msra.mxu0 %v9494
    %10736 = vmatpush.bf16.msra.mxu0 %v9440
    %10737 = vmatmul.bf16.gmra.mxu0 %v10109
    %v10738 = vpop.f32.mrf.mxu0
    %v10739 = vadd.f32 %v8269, %v10738
    %v10740 = vpop.f32.mrf.mxu0
    %10741 = vdwg.mxu0
    %10742 = vmatpush.bf16.msra.mxu0 0
    %10743 = vmatpush.bf16.msra.mxu0 %v10221
    %10744 = vmatpush.bf16.msra.mxu0 %v9711
    %10745 = vmatpush.bf16.msra.mxu0 %v9657
    %10746 = vmatpush.bf16.msra.mxu0 %v9603
    %10747 = vmatpush.bf16.msra.mxu0 %v9549
    %10748 = vmatpush.bf16.msra.mxu0 %v9495
    %10749 = vmatpush.bf16.msra.mxu0 %v9441
    %10750 = vmatmul.bf16.gmra.mxu0 %v10109
    %v10751 = vpop.f32.mrf.mxu0
    %v10752 = vadd.f32 %v8269, %v10751
    %v10753 = vpop.f32.mrf.mxu0
    %10754 = vdwg.mxu0
    %10755 = vmatpush.bf16.msra.mxu0 0
    %10756 = vmatpush.bf16.msra.mxu0 %v10224
    %10757 = vmatpush.bf16.msra.mxu0 %v9712
    %10758 = vmatpush.bf16.msra.mxu0 %v9658
    %10759 = vmatpush.bf16.msra.mxu0 %v9604
    %10760 = vmatpush.bf16.msra.mxu0 %v9550
    %10761 = vmatpush.bf16.msra.mxu0 %v9496
    %10762 = vmatpush.bf16.msra.mxu0 %v9442
    %10763 = vmatmul.bf16.gmra.mxu0 %v10109
    %v10764 = vpop.f32.mrf.mxu0
    %v10765 = vadd.f32 %v8269, %v10764
    %v10766 = vpop.f32.mrf.mxu0
    %10767 = vdwg.mxu0
    %10768 = vmatpush.bf16.msra.mxu0 0
    %10769 = vmatpush.bf16.msra.mxu0 %v10227
    %10770 = vmatpush.bf16.msra.mxu0 %v9713
    %10771 = vmatpush.bf16.msra.mxu0 %v9659
    %10772 = vmatpush.bf16.msra.mxu0 %v9605
    %10773 = vmatpush.bf16.msra.mxu0 %v9551
    %10774 = vmatpush.bf16.msra.mxu0 %v9497
    %10775 = vmatpush.bf16.msra.mxu0 %v9443
    %10776 = vmatmul.bf16.gmra.mxu0 %v10109
    %v10777 = vpop.f32.mrf.mxu0
    %v10778 = vadd.f32 %v8269, %v10777
    %v10779 = vpop.f32.mrf.mxu0
    %10780 = vdwg.mxu0
    %10781 = vmatpush.bf16.msra.mxu0 0
    %10782 = vmatpush.bf16.msra.mxu0 %v10230
    %10783 = vmatpush.bf16.msra.mxu0 %v9714
    %10784 = vmatpush.bf16.msra.mxu0 %v9660
    %10785 = vmatpush.bf16.msra.mxu0 %v9606
    %10786 = vmatpush.bf16.msra.mxu0 %v9552
    %10787 = vmatpush.bf16.msra.mxu0 %v9498
    %10788 = vmatpush.bf16.msra.mxu0 %v9444
    %10789 = vmatmul.bf16.gmra.mxu0 %v10109
    %v10790 = vpop.f32.mrf.mxu0
    %v10791 = vadd.f32 %v8269, %v10790
    %v10792 = vpop.f32.mrf.mxu0
    %10793 = vdwg.mxu0
    %10794 = vmatpush.bf16.msra.mxu0 0
    %10795 = vmatpush.bf16.msra.mxu0 %v10233
    %10796 = vmatpush.bf16.msra.mxu0 %v9715
    %10797 = vmatpush.bf16.msra.mxu0 %v9661
    %10798 = vmatpush.bf16.msra.mxu0 %v9607
    %10799 = vmatpush.bf16.msra.mxu0 %v9553
    %10800 = vmatpush.bf16.msra.mxu0 %v9499
    %10801 = vmatpush.bf16.msra.mxu0 %v9445
    %10802 = vmatmul.bf16.gmra.mxu0 %v10109
    %v10803 = vpop.f32.mrf.mxu0
    %v10804 = vadd.f32 %v8269, %v10803
    %v10805 = vpop.f32.mrf.mxu0
    %10806 = vdwg.mxu0
    %10807 = vmatpush.bf16.msra.mxu0 0
    %10808 = vmatpush.bf16.msra.mxu0 %v10236
    %10809 = vmatpush.bf16.msra.mxu0 %v9716
    %10810 = vmatpush.bf16.msra.mxu0 %v9662
    %10811 = vmatpush.bf16.msra.mxu0 %v9608
    %10812 = vmatpush.bf16.msra.mxu0 %v9554
    %10813 = vmatpush.bf16.msra.mxu0 %v9500
    %10814 = vmatpush.bf16.msra.mxu0 %v9446
    %10815 = vmatmul.bf16.gmra.mxu0 %v10109
    %v10816 = vpop.f32.mrf.mxu0
    %v10817 = vadd.f32 %v8269, %v10816
    %v10818 = vpop.f32.mrf.mxu0
    %10819 = vdwg.mxu0
    %10820 = vmatpush.bf16.msra.mxu0 0
    %10821 = vmatpush.bf16.msra.mxu0 %v10239
    %10822 = vmatpush.bf16.msra.mxu0 %v9717
    %10823 = vmatpush.bf16.msra.mxu0 %v9663
    %10824 = vmatpush.bf16.msra.mxu0 %v9609
    %10825 = vmatpush.bf16.msra.mxu0 %v9555
    %10826 = vmatpush.bf16.msra.mxu0 %v9501
    %10827 = vmatpush.bf16.msra.mxu0 %v9447
    %10828 = vmatmul.bf16.gmra.mxu0 %v10109
    %v10829 = vpop.f32.mrf.mxu0
    %v10830 = vadd.f32 %v8269, %v10829
    %v10831 = vpop.f32.mrf.mxu0
    %10832 = vdwg.mxu0
    %10833 = vmatpush.bf16.msra.mxu0 0
    %10834 = vmatpush.bf16.msra.mxu0 %v10242
    %10835 = vmatpush.bf16.msra.mxu0 %v9718
    %10836 = vmatpush.bf16.msra.mxu0 %v9664
    %10837 = vmatpush.bf16.msra.mxu0 %v9610
    %10838 = vmatpush.bf16.msra.mxu0 %v9556
    %10839 = vmatpush.bf16.msra.mxu0 %v9502
    %10840 = vmatpush.bf16.msra.mxu0 %v9448
    %10841 = vmatmul.bf16.gmra.mxu0 %v10109
    %v10842 = vpop.f32.mrf.mxu0
    %v10843 = vadd.f32 %v8269, %v10842
    %v10844 = vpop.f32.mrf.mxu0
    %10845 = vdwg.mxu0
    %10846 = vmatpush.bf16.msra.mxu0 0
    %10847 = vmatpush.bf16.msra.mxu0 %v10245
    %10848 = vmatpush.bf16.msra.mxu0 %v9719
    %10849 = vmatpush.bf16.msra.mxu0 %v9665
    %10850 = vmatpush.bf16.msra.mxu0 %v9611
    %10851 = vmatpush.bf16.msra.mxu0 %v9557
    %10852 = vmatpush.bf16.msra.mxu0 %v9503
    %10853 = vmatpush.bf16.msra.mxu0 %v9449
    %10854 = vmatmul.bf16.gmra.mxu0 %v10109
    %v10855 = vpop.f32.mrf.mxu0
    %v10856 = vadd.f32 %v8269, %v10855
    %v10857 = vpop.f32.mrf.mxu0
    %10858 = vdwg.mxu0
    %10859 = vmatpush.bf16.msra.mxu0 0
    %10860 = vmatpush.bf16.msra.mxu0 %v10248
    %10861 = vmatpush.bf16.msra.mxu0 %v9720
    %10862 = vmatpush.bf16.msra.mxu0 %v9666
    %10863 = vmatpush.bf16.msra.mxu0 %v9612
    %10864 = vmatpush.bf16.msra.mxu0 %v9558
    %10865 = vmatpush.bf16.msra.mxu0 %v9504
    %10866 = vmatpush.bf16.msra.mxu0 %v9450
    %10867 = vmatmul.bf16.gmra.mxu0 %v10109
    %v10868 = vpop.f32.mrf.mxu0
    %v10869 = vadd.f32 %v8269, %v10868
    %v10870 = vpop.f32.mrf.mxu0
    %10871 = vdwg.mxu0
    %10872 = vmatpush.bf16.msra.mxu0 0
    %10873 = vmatpush.bf16.msra.mxu0 %v10251
    %10874 = vmatpush.bf16.msra.mxu0 %v9721
    %10875 = vmatpush.bf16.msra.mxu0 %v9667
    %10876 = vmatpush.bf16.msra.mxu0 %v9613
    %10877 = vmatpush.bf16.msra.mxu0 %v9559
    %10878 = vmatpush.bf16.msra.mxu0 %v9505
    %10879 = vmatpush.bf16.msra.mxu0 %v9451
    %10880 = vmatmul.bf16.gmra.mxu0 %v10109
    %v10881 = vpop.f32.mrf.mxu0
    %v10882 = vadd.f32 %v8269, %v10881
    %v10883 = vpop.f32.mrf.mxu0
    %10884 = vdwg.mxu0
    %10885 = vmatpush.bf16.msra.mxu0 0
    %10886 = vmatpush.bf16.msra.mxu0 %v10254
    %10887 = vmatpush.bf16.msra.mxu0 %v9722
    %10888 = vmatpush.bf16.msra.mxu0 %v9668
    %10889 = vmatpush.bf16.msra.mxu0 %v9614
    %10890 = vmatpush.bf16.msra.mxu0 %v9560
    %10891 = vmatpush.bf16.msra.mxu0 %v9506
    %10892 = vmatpush.bf16.msra.mxu0 %v9452
    %10893 = vmatmul.bf16.gmra.mxu0 %v10109
    %v10894 = vpop.f32.mrf.mxu0
    %v10895 = vadd.f32 %v8269, %v10894
    %v10896 = vpop.f32.mrf.mxu0
    %10897 = vdwg.mxu0
    %10898 = vmatpush.bf16.msra.mxu0 0
    %10899 = vmatpush.bf16.msra.mxu0 %v10257
    %10900 = vmatpush.bf16.msra.mxu0 %v9723
    %10901 = vmatpush.bf16.msra.mxu0 %v9669
    %10902 = vmatpush.bf16.msra.mxu0 %v9615
    %10903 = vmatpush.bf16.msra.mxu0 %v9561
    %10904 = vmatpush.bf16.msra.mxu0 %v9507
    %10905 = vmatpush.bf16.msra.mxu0 %v9453
    %10906 = vmatmul.bf16.gmra.mxu0 %v10109
    %v10907 = vpop.f32.mrf.mxu0
    %v10908 = vadd.f32 %v8269, %v10907
    %v10909 = vpop.f32.mrf.mxu0
    %10910 = vdwg.mxu0
    %10911 = vmatpush.bf16.msra.mxu0 0
    %10912 = vmatpush.bf16.msra.mxu0 %v10260
    %10913 = vmatpush.bf16.msra.mxu0 %v9724
    %10914 = vmatpush.bf16.msra.mxu0 %v9670
    %10915 = vmatpush.bf16.msra.mxu0 %v9616
    %10916 = vmatpush.bf16.msra.mxu0 %v9562
    %10917 = vmatpush.bf16.msra.mxu0 %v9508
    %10918 = vmatpush.bf16.msra.mxu0 %v9454
    %10919 = vmatmul.bf16.gmra.mxu0 %v10109
    %v10920 = vpop.f32.mrf.mxu0
    %v10921 = vadd.f32 %v8269, %v10920
    %v10922 = vpop.f32.mrf.mxu0
    %10923 = vdwg.mxu0
    %10924 = vmatpush.bf16.msra.mxu0 0
    %10925 = vmatpush.bf16.msra.mxu0 %v10263
    %10926 = vmatpush.bf16.msra.mxu0 %v9725
    %10927 = vmatpush.bf16.msra.mxu0 %v9671
    %10928 = vmatpush.bf16.msra.mxu0 %v9617
    %10929 = vmatpush.bf16.msra.mxu0 %v9563
    %10930 = vmatpush.bf16.msra.mxu0 %v9509
    %10931 = vmatpush.bf16.msra.mxu0 %v9455
    %10932 = vmatmul.bf16.gmra.mxu0 %v10109
    %v10933 = vpop.f32.mrf.mxu0
    %v10934 = vadd.f32 %v8269, %v10933
    %v10935 = vpop.f32.mrf.mxu0
    %10936 = vdwg.mxu0
    %10937 = vmatpush.bf16.msra.mxu0 0
    %10938 = vmatpush.bf16.msra.mxu0 %v10266
    %10939 = vmatpush.bf16.msra.mxu0 %v9726
    %10940 = vmatpush.bf16.msra.mxu0 %v9672
    %10941 = vmatpush.bf16.msra.mxu0 %v9618
    %10942 = vmatpush.bf16.msra.mxu0 %v9564
    %10943 = vmatpush.bf16.msra.mxu0 %v9510
    %10944 = vmatpush.bf16.msra.mxu0 %v9456
    %10945 = vmatmul.bf16.gmra.mxu0 %v10109
    %v10946 = vpop.f32.mrf.mxu0
    %v10947 = vadd.f32 %v8269, %v10946
    %v10948 = vpop.f32.mrf.mxu0
    %10949 = vdwg.mxu0
    %10950 = vmatpush.bf16.msra.mxu0 0
    %10951 = vmatpush.bf16.msra.mxu0 %v10269
    %10952 = vmatpush.bf16.msra.mxu0 %v9727
    %10953 = vmatpush.bf16.msra.mxu0 %v9673
    %10954 = vmatpush.bf16.msra.mxu0 %v9619
    %10955 = vmatpush.bf16.msra.mxu0 %v9565
    %10956 = vmatpush.bf16.msra.mxu0 %v9511
    %10957 = vmatpush.bf16.msra.mxu0 %v9457
    %10958 = vmatmul.bf16.gmra.mxu0 %v10109
    %v10959 = vpop.f32.mrf.mxu0
    %v10960 = vadd.f32 %v8269, %v10959
    %v10961 = vpop.f32.mrf.mxu0
    %10962 = vdwg.mxu0
    %10963 = vmatpush.bf16.msra.mxu0 0
    %10964 = vmatpush.bf16.msra.mxu0 %v10272
    %10965 = vmatpush.bf16.msra.mxu0 %v9728
    %10966 = vmatpush.bf16.msra.mxu0 %v9674
    %10967 = vmatpush.bf16.msra.mxu0 %v9620
    %10968 = vmatpush.bf16.msra.mxu0 %v9566
    %10969 = vmatpush.bf16.msra.mxu0 %v9512
    %10970 = vmatpush.bf16.msra.mxu0 %v9458
    %10971 = vmatmul.bf16.gmra.mxu0 %v10109
    %v10972 = vpop.f32.mrf.mxu0
    %v10973 = vadd.f32 %v8269, %v10972
    %v10974 = vpop.f32.mrf.mxu0
    %10975 = vdwg.mxu0
    %v10976 = vld [vmem:[#allocation8] sm:$0xff]
    %v10977 = vld [vmem:[#allocation8 + $0x8] sm:$0xff]
    %v10978 = vld [vmem:[#allocation8 + $0x10] sm:$0xff]
    %v10979 = vld [vmem:[#allocation8 + $0x18] sm:$0xff]
    %v10980 = vld [vmem:[#allocation8 + $0x20] sm:$0xff]
    %v10981 = vld [vmem:[#allocation8 + $0x28] sm:$0xff]
    %v10982 = vld [vmem:[#allocation8 + $0x30] sm:$0x3f]
    %v10983 = vunpack.c.l.bf16 %v10976
    %v10984 = vunpack.c.h.bf16 %v10976
    %v10985 = vunpack.c.l.bf16 %v10977
    %v10986 = vunpack.c.h.bf16 %v10977
    %v10987 = vunpack.c.l.bf16 %v10978
    %v10988 = vunpack.c.h.bf16 %v10978
    %v10989 = vunpack.c.l.bf16 %v10979
    %v10990 = vunpack.c.h.bf16 %v10979
    %v10991 = vunpack.c.l.bf16 %v10980
    %v10992 = vunpack.c.h.bf16 %v10980
    %v10993 = vunpack.c.l.bf16 %v10981
    %v10994 = vunpack.c.h.bf16 %v10981
    %v10995 = vunpack.c.l.bf16 %v10982
    %v10996 = vunpack.c.h.bf16 %v10982
    %v11011 = vperm.slane %v10983, 0
    %v11012 = vperm.slane %v10983, 2
    %v11013 = vperm.slane %v10983, 4
    %v11014 = vperm.slane %v10983, 6
    %v11015 = vperm.slane %v10984, 0
    %v11016 = vperm.slane %v10984, 2
    %v11017 = vperm.slane %v10984, 4
    %v11018 = vperm.slane %v10984, 6
    %v11019 = vperm.slane %v10985, 0
    %v11020 = vperm.slane %v10985, 2
    %v11021 = vperm.slane %v10985, 4
    %v11022 = vperm.slane %v10985, 6
    %v11023 = vperm.slane %v10986, 0
    %v11024 = vperm.slane %v10986, 2
    %v11025 = vperm.slane %v10986, 4
    %v11026 = vperm.slane %v10986, 6
    %v11027 = vperm.slane %v10987, 0
    %v11028 = vperm.slane %v10987, 2
    %v11029 = vperm.slane %v10987, 4
    %v11030 = vperm.slane %v10987, 6
    %v11031 = vperm.slane %v10988, 0
    %v11032 = vperm.slane %v10988, 2
    %v11033 = vperm.slane %v10988, 4
    %v11034 = vperm.slane %v10988, 6
    %v11035 = vperm.slane %v10989, 0
    %v11036 = vperm.slane %v10989, 2
    %v11037 = vperm.slane %v10989, 4
    %v11038 = vperm.slane %v10989, 6
    %v11039 = vperm.slane %v10990, 0
    %v11040 = vperm.slane %v10990, 2
    %v11041 = vperm.slane %v10990, 4
    %v11042 = vperm.slane %v10990, 6
    %v11043 = vperm.slane %v10991, 0
    %v11044 = vperm.slane %v10991, 2
    %v11045 = vperm.slane %v10991, 4
    %v11046 = vperm.slane %v10991, 6
    %v11047 = vperm.slane %v10992, 0
    %v11048 = vperm.slane %v10992, 2
    %v11049 = vperm.slane %v10992, 4
    %v11050 = vperm.slane %v10992, 6
    %v11051 = vperm.slane %v10993, 0
    %v11052 = vperm.slane %v10993, 2
    %v11053 = vperm.slane %v10993, 4
    %v11054 = vperm.slane %v10993, 6
    %v11055 = vperm.slane %v10994, 0
    %v11056 = vperm.slane %v10994, 2
    %v11057 = vperm.slane %v10994, 4
    %v11058 = vperm.slane %v10994, 6
    %v11059 = vperm.slane %v10995, 0
    %v11060 = vperm.slane %v10995, 2
    %v11061 = vperm.slane %v10995, 4
    %v11062 = vperm.slane %v10995, 6
    %v11063 = vperm.slane %v10996, 0
    %v11064 = vperm.slane %v10996, 2
    %v11119 = vperm.slane %v11011, 0
    %v11120 = vperm.slane %v11012, 0
    %v11121 = vperm.slane %v11013, 0
    %v11122 = vperm.slane %v11014, 0
    %v11123 = vperm.slane %v11015, 0
    %v11124 = vperm.slane %v11016, 0
    %v11125 = vperm.slane %v11017, 0
    %v11126 = vperm.slane %v11018, 0
    %v11127 = vperm.slane %v11019, 0
    %v11128 = vperm.slane %v11020, 0
    %v11129 = vperm.slane %v11021, 0
    %v11130 = vperm.slane %v11022, 0
    %v11131 = vperm.slane %v11023, 0
    %v11132 = vperm.slane %v11024, 0
    %v11133 = vperm.slane %v11025, 0
    %v11134 = vperm.slane %v11026, 0
    %v11135 = vperm.slane %v11027, 0
    %v11136 = vperm.slane %v11028, 0
    %v11137 = vperm.slane %v11029, 0
    %v11138 = vperm.slane %v11030, 0
    %v11139 = vperm.slane %v11031, 0
    %v11140 = vperm.slane %v11032, 0
    %v11141 = vperm.slane %v11033, 0
    %v11142 = vperm.slane %v11034, 0
    %v11143 = vperm.slane %v11035, 0
    %v11144 = vperm.slane %v11036, 0
    %v11145 = vperm.slane %v11037, 0
    %v11146 = vperm.slane %v11038, 0
    %v11147 = vperm.slane %v11039, 0
    %v11148 = vperm.slane %v11040, 0
    %v11149 = vperm.slane %v11041, 0
    %v11150 = vperm.slane %v11042, 0
    %v11151 = vperm.slane %v11043, 0
    %v11152 = vperm.slane %v11044, 0
    %v11153 = vperm.slane %v11045, 0
    %v11154 = vperm.slane %v11046, 0
    %v11155 = vperm.slane %v11047, 0
    %v11156 = vperm.slane %v11048, 0
    %v11157 = vperm.slane %v11049, 0
    %v11158 = vperm.slane %v11050, 0
    %v11159 = vperm.slane %v11051, 0
    %v11160 = vperm.slane %v11052, 0
    %v11161 = vperm.slane %v11053, 0
    %v11162 = vperm.slane %v11054, 0
    %v11163 = vperm.slane %v11055, 0
    %v11164 = vperm.slane %v11056, 0
    %v11165 = vperm.slane %v11057, 0
    %v11166 = vperm.slane %v11058, 0
    %v11167 = vperm.slane %v11059, 0
    %v11168 = vperm.slane %v11060, 0
    %v11169 = vperm.slane %v11061, 0
    %v11170 = vperm.slane %v11062, 0
    %v11171 = vperm.slane %v11063, 0
    %v11172 = vperm.slane %v11064, 0
    %v11173 = vmul.f32 %v10284, %v11119
    %v11174 = vmul.f32 %v10297, %v11120
    %v11175 = vmul.f32 %v10310, %v11121
    %v11176 = vmul.f32 %v10323, %v11122
    %v11177 = vmul.f32 %v10336, %v11123
    %v11178 = vmul.f32 %v10349, %v11124
    %v11179 = vmul.f32 %v10362, %v11125
    %v11180 = vmul.f32 %v10375, %v11126
    %v11181 = vmul.f32 %v10388, %v11127
    %v11182 = vmul.f32 %v10401, %v11128
    %v11183 = vmul.f32 %v10414, %v11129
    %v11184 = vmul.f32 %v10427, %v11130
    %v11185 = vmul.f32 %v10440, %v11131
    %v11186 = vmul.f32 %v10453, %v11132
    %v11187 = vmul.f32 %v10466, %v11133
    %v11188 = vmul.f32 %v10479, %v11134
    %v11189 = vmul.f32 %v10492, %v11135
    %v11190 = vmul.f32 %v10505, %v11136
    %v11191 = vmul.f32 %v10518, %v11137
    %v11192 = vmul.f32 %v10531, %v11138
    %v11193 = vmul.f32 %v10544, %v11139
    %v11194 = vmul.f32 %v10557, %v11140
    %v11195 = vmul.f32 %v10570, %v11141
    %v11196 = vmul.f32 %v10583, %v11142
    %v11197 = vmul.f32 %v10596, %v11143
    %v11198 = vmul.f32 %v10609, %v11144
    %v11199 = vmul.f32 %v10622, %v11145
    %v11200 = vmul.f32 %v10635, %v11146
    %v11201 = vmul.f32 %v10648, %v11147
    %v11202 = vmul.f32 %v10661, %v11148
    %v11203 = vmul.f32 %v10674, %v11149
    %v11204 = vmul.f32 %v10687, %v11150
    %v11205 = vmul.f32 %v10700, %v11151
    %v11206 = vmul.f32 %v10713, %v11152
    %v11207 = vmul.f32 %v10726, %v11153
    %v11208 = vmul.f32 %v10739, %v11154
    %v11209 = vmul.f32 %v10752, %v11155
    %v11210 = vmul.f32 %v10765, %v11156
    %v11211 = vmul.f32 %v10778, %v11157
    %v11212 = vmul.f32 %v10791, %v11158
    %v11213 = vmul.f32 %v10804, %v11159
    %v11214 = vmul.f32 %v10817, %v11160
    %v11215 = vmul.f32 %v10830, %v11161
    %v11216 = vmul.f32 %v10843, %v11162
    %v11217 = vmul.f32 %v10856, %v11163
    %v11218 = vmul.f32 %v10869, %v11164
    %v11219 = vmul.f32 %v10882, %v11165
    %v11220 = vmul.f32 %v10895, %v11166
    %v11221 = vmul.f32 %v10908, %v11167
    %v11222 = vmul.f32 %v10921, %v11168
    %v11223 = vmul.f32 %v10934, %v11169
    %v11224 = vmul.f32 %v10947, %v11170
    %v11225 = vmul.f32 %v10960, %v11171
    %v11226 = vmul.f32 %v10973, %v11172
    %vm11227 = vcmask 1043456
    %v11228 = vsel %vm11227, %v11173, 0.0
    %v11229 = vsel %vm11227, %v11174, 0.0
    %v11230 = vadd.f32 %v11228, %v11229
    %v11231 = vsel %vm11227, %v11175, 0.0
    %v11232 = vadd.f32 %v11230, %v11231
    %v11233 = vsel %vm11227, %v11176, 0.0
    %v11234 = vadd.f32 %v11232, %v11233
    %v11235 = vsel %vm11227, %v11177, 0.0
    %v11236 = vadd.f32 %v11234, %v11235
    %v11237 = vsel %vm11227, %v11178, 0.0
    %v11238 = vadd.f32 %v11236, %v11237
    %v11239 = vsel %vm11227, %v11179, 0.0
    %v11240 = vadd.f32 %v11238, %v11239
    %v11241 = vsel %vm11227, %v11180, 0.0
    %v11242 = vadd.f32 %v11240, %v11241
    %v11243 = vsel %vm11227, %v11181, 0.0
    %v11244 = vadd.f32 %v11242, %v11243
    %v11245 = vsel %vm11227, %v11182, 0.0
    %v11246 = vadd.f32 %v11244, %v11245
    %v11247 = vsel %vm11227, %v11183, 0.0
    %v11248 = vadd.f32 %v11246, %v11247
    %v11249 = vsel %vm11227, %v11184, 0.0
    %v11250 = vadd.f32 %v11248, %v11249
    %v11251 = vsel %vm11227, %v11185, 0.0
    %v11252 = vadd.f32 %v11250, %v11251
    %v11253 = vsel %vm11227, %v11186, 0.0
    %v11254 = vadd.f32 %v11252, %v11253
    %v11255 = vsel %vm11227, %v11187, 0.0
    %v11256 = vadd.f32 %v11254, %v11255
    %v11257 = vsel %vm11227, %v11188, 0.0
    %v11258 = vadd.f32 %v11256, %v11257
    %v11259 = vsel %vm11227, %v11189, 0.0
    %v11260 = vadd.f32 %v11258, %v11259
    %v11261 = vsel %vm11227, %v11190, 0.0
    %v11262 = vadd.f32 %v11260, %v11261
    %v11263 = vsel %vm11227, %v11191, 0.0
    %v11264 = vadd.f32 %v11262, %v11263
    %v11265 = vsel %vm11227, %v11192, 0.0
    %v11266 = vadd.f32 %v11264, %v11265
    %v11267 = vsel %vm11227, %v11193, 0.0
    %v11268 = vadd.f32 %v11266, %v11267
    %v11269 = vsel %vm11227, %v11194, 0.0
    %v11270 = vadd.f32 %v11268, %v11269
    %v11271 = vsel %vm11227, %v11195, 0.0
    %v11272 = vadd.f32 %v11270, %v11271
    %v11273 = vsel %vm11227, %v11196, 0.0
    %v11274 = vadd.f32 %v11272, %v11273
    %v11275 = vsel %vm11227, %v11197, 0.0
    %v11276 = vadd.f32 %v11274, %v11275
    %v11277 = vsel %vm11227, %v11198, 0.0
    %v11278 = vadd.f32 %v11276, %v11277
    %v11279 = vsel %vm11227, %v11199, 0.0
    %v11280 = vadd.f32 %v11278, %v11279
    %v11281 = vsel %vm11227, %v11200, 0.0
    %v11282 = vadd.f32 %v11280, %v11281
    %v11283 = vsel %vm11227, %v11201, 0.0
    %v11284 = vadd.f32 %v11282, %v11283
    %v11285 = vsel %vm11227, %v11202, 0.0
    %v11286 = vadd.f32 %v11284, %v11285
    %v11287 = vsel %vm11227, %v11203, 0.0
    %v11288 = vadd.f32 %v11286, %v11287
    %v11289 = vsel %vm11227, %v11204, 0.0
    %v11290 = vadd.f32 %v11288, %v11289
    %v11291 = vsel %vm11227, %v11205, 0.0
    %v11292 = vadd.f32 %v11290, %v11291
    %v11293 = vsel %vm11227, %v11206, 0.0
    %v11294 = vadd.f32 %v11292, %v11293
    %v11295 = vsel %vm11227, %v11207, 0.0
    %v11296 = vadd.f32 %v11294, %v11295
    %v11297 = vsel %vm11227, %v11208, 0.0
    %v11298 = vadd.f32 %v11296, %v11297
    %v11299 = vsel %vm11227, %v11209, 0.0
    %v11300 = vadd.f32 %v11298, %v11299
    %v11301 = vsel %vm11227, %v11210, 0.0
    %v11302 = vadd.f32 %v11300, %v11301
    %v11303 = vsel %vm11227, %v11211, 0.0
    %v11304 = vadd.f32 %v11302, %v11303
    %v11305 = vsel %vm11227, %v11212, 0.0
    %v11306 = vadd.f32 %v11304, %v11305
    %v11307 = vsel %vm11227, %v11213, 0.0
    %v11308 = vadd.f32 %v11306, %v11307
    %v11309 = vsel %vm11227, %v11214, 0.0
    %v11310 = vadd.f32 %v11308, %v11309
    %v11311 = vsel %vm11227, %v11215, 0.0
    %v11312 = vadd.f32 %v11310, %v11311
    %v11313 = vsel %vm11227, %v11216, 0.0
    %v11314 = vadd.f32 %v11312, %v11313
    %v11315 = vsel %vm11227, %v11217, 0.0
    %v11316 = vadd.f32 %v11314, %v11315
    %v11317 = vsel %vm11227, %v11218, 0.0
    %v11318 = vadd.f32 %v11316, %v11317
    %v11319 = vsel %vm11227, %v11219, 0.0
    %v11320 = vadd.f32 %v11318, %v11319
    %v11321 = vsel %vm11227, %v11220, 0.0
    %v11322 = vadd.f32 %v11320, %v11321
    %v11323 = vsel %vm11227, %v11221, 0.0
    %v11324 = vadd.f32 %v11322, %v11323
    %v11325 = vsel %vm11227, %v11222, 0.0
    %v11326 = vadd.f32 %v11324, %v11325
    %v11327 = vsel %vm11227, %v11223, 0.0
    %v11328 = vadd.f32 %v11326, %v11327
    %v11329 = vsel %vm11227, %v11224, 0.0
    %v11330 = vadd.f32 %v11328, %v11329
    %v11331 = vsel %vm11227, %v11225, 0.0
    %v11332 = vadd.f32 %v11330, %v11331
    %v11333 = vsel %vm11227, %v11226, 0.0
    %v11334 = vadd.f32 %v11332, %v11333
    %11335 = vadd.xlane.f32.xlu0 %v11334
    %v11336 = vpop.xlane.xlu0 %11335
    %v11337 = vmul.f32 %v11173, %v10284
    %v11338 = vmul.f32 %v11174, %v10297
    %v11339 = vmul.f32 %v11175, %v10310
    %v11340 = vmul.f32 %v11176, %v10323
    %v11341 = vmul.f32 %v11177, %v10336
    %v11342 = vmul.f32 %v11178, %v10349
    %v11343 = vmul.f32 %v11179, %v10362
    %v11344 = vmul.f32 %v11180, %v10375
    %v11345 = vmul.f32 %v11181, %v10388
    %v11346 = vmul.f32 %v11182, %v10401
    %v11347 = vmul.f32 %v11183, %v10414
    %v11348 = vmul.f32 %v11184, %v10427
    %v11349 = vmul.f32 %v11185, %v10440
    %v11350 = vmul.f32 %v11186, %v10453
    %v11351 = vmul.f32 %v11187, %v10466
    %v11352 = vmul.f32 %v11188, %v10479
    %v11353 = vmul.f32 %v11189, %v10492
    %v11354 = vmul.f32 %v11190, %v10505
    %v11355 = vmul.f32 %v11191, %v10518
    %v11356 = vmul.f32 %v11192, %v10531
    %v11357 = vmul.f32 %v11193, %v10544
    %v11358 = vmul.f32 %v11194, %v10557
    %v11359 = vmul.f32 %v11195, %v10570
    %v11360 = vmul.f32 %v11196, %v10583
    %v11361 = vmul.f32 %v11197, %v10596
    %v11362 = vmul.f32 %v11198, %v10609
    %v11363 = vmul.f32 %v11199, %v10622
    %v11364 = vmul.f32 %v11200, %v10635
    %v11365 = vmul.f32 %v11201, %v10648
    %v11366 = vmul.f32 %v11202, %v10661
    %v11367 = vmul.f32 %v11203, %v10674
    %v11368 = vmul.f32 %v11204, %v10687
    %v11369 = vmul.f32 %v11205, %v10700
    %v11370 = vmul.f32 %v11206, %v10713
    %v11371 = vmul.f32 %v11207, %v10726
    %v11372 = vmul.f32 %v11208, %v10739
    %v11373 = vmul.f32 %v11209, %v10752
    %v11374 = vmul.f32 %v11210, %v10765
    %v11375 = vmul.f32 %v11211, %v10778
    %v11376 = vmul.f32 %v11212, %v10791
    %v11377 = vmul.f32 %v11213, %v10804
    %v11378 = vmul.f32 %v11214, %v10817
    %v11379 = vmul.f32 %v11215, %v10830
    %v11380 = vmul.f32 %v11216, %v10843
    %v11381 = vmul.f32 %v11217, %v10856
    %v11382 = vmul.f32 %v11218, %v10869
    %v11383 = vmul.f32 %v11219, %v10882
    %v11384 = vmul.f32 %v11220, %v10895
    %v11385 = vmul.f32 %v11221, %v10908
    %v11386 = vmul.f32 %v11222, %v10921
    %v11387 = vmul.f32 %v11223, %v10934
    %v11388 = vmul.f32 %v11224, %v10947
    %v11389 = vmul.f32 %v11225, %v10960
    %v11390 = vmul.f32 %v11226, %v10973
    %v11391 = vsel %vm11227, %v11337, 0.0
    %v11392 = vsel %vm11227, %v11338, 0.0
    %v11393 = vadd.f32 %v11391, %v11392
    %v11394 = vsel %vm11227, %v11339, 0.0
    %v11395 = vadd.f32 %v11393, %v11394
    %v11396 = vsel %vm11227, %v11340, 0.0
    %v11397 = vadd.f32 %v11395, %v11396
    %v11398 = vsel %vm11227, %v11341, 0.0
    %v11399 = vadd.f32 %v11397, %v11398
    %v11400 = vsel %vm11227, %v11342, 0.0
    %v11401 = vadd.f32 %v11399, %v11400
    %v11402 = vsel %vm11227, %v11343, 0.0
    %v11403 = vadd.f32 %v11401, %v11402
    %v11404 = vsel %vm11227, %v11344, 0.0
    %v11405 = vadd.f32 %v11403, %v11404
    %v11406 = vsel %vm11227, %v11345, 0.0
    %v11407 = vadd.f32 %v11405, %v11406
    %v11408 = vsel %vm11227, %v11346, 0.0
    %v11409 = vadd.f32 %v11407, %v11408
    %v11410 = vsel %vm11227, %v11347, 0.0
    %v11411 = vadd.f32 %v11409, %v11410
    %v11412 = vsel %vm11227, %v11348, 0.0
    %v11413 = vadd.f32 %v11411, %v11412
    %v11414 = vsel %vm11227, %v11349, 0.0
    %v11415 = vadd.f32 %v11413, %v11414
    %v11416 = vsel %vm11227, %v11350, 0.0
    %v11417 = vadd.f32 %v11415, %v11416
    %v11418 = vsel %vm11227, %v11351, 0.0
    %v11419 = vadd.f32 %v11417, %v11418
    %v11420 = vsel %vm11227, %v11352, 0.0
    %v11421 = vadd.f32 %v11419, %v11420
    %v11422 = vsel %vm11227, %v11353, 0.0
    %v11423 = vadd.f32 %v11421, %v11422
    %v11424 = vsel %vm11227, %v11354, 0.0
    %v11425 = vadd.f32 %v11423, %v11424
    %v11426 = vsel %vm11227, %v11355, 0.0
    %v11427 = vadd.f32 %v11425, %v11426
    %v11428 = vsel %vm11227, %v11356, 0.0
    %v11429 = vadd.f32 %v11427, %v11428
    %v11430 = vsel %vm11227, %v11357, 0.0
    %v11431 = vadd.f32 %v11429, %v11430
    %v11432 = vsel %vm11227, %v11358, 0.0
    %v11433 = vadd.f32 %v11431, %v11432
    %v11434 = vsel %vm11227, %v11359, 0.0
    %v11435 = vadd.f32 %v11433, %v11434
    %v11436 = vsel %vm11227, %v11360, 0.0
    %v11437 = vadd.f32 %v11435, %v11436
    %v11438 = vsel %vm11227, %v11361, 0.0
    %v11439 = vadd.f32 %v11437, %v11438
    %v11440 = vsel %vm11227, %v11362, 0.0
    %v11441 = vadd.f32 %v11439, %v11440
    %v11442 = vsel %vm11227, %v11363, 0.0
    %v11443 = vadd.f32 %v11441, %v11442
    %v11444 = vsel %vm11227, %v11364, 0.0
    %v11445 = vadd.f32 %v11443, %v11444
    %v11446 = vsel %vm11227, %v11365, 0.0
    %v11447 = vadd.f32 %v11445, %v11446
    %v11448 = vsel %vm11227, %v11366, 0.0
    %v11449 = vadd.f32 %v11447, %v11448
    %v11450 = vsel %vm11227, %v11367, 0.0
    %v11451 = vadd.f32 %v11449, %v11450
    %v11452 = vsel %vm11227, %v11368, 0.0
    %v11453 = vadd.f32 %v11451, %v11452
    %v11454 = vsel %vm11227, %v11369, 0.0
    %v11455 = vadd.f32 %v11453, %v11454
    %v11456 = vsel %vm11227, %v11370, 0.0
    %v11457 = vadd.f32 %v11455, %v11456
    %v11458 = vsel %vm11227, %v11371, 0.0
    %v11459 = vadd.f32 %v11457, %v11458
    %v11460 = vsel %vm11227, %v11372, 0.0
    %v11461 = vadd.f32 %v11459, %v11460
    %v11462 = vsel %vm11227, %v11373, 0.0
    %v11463 = vadd.f32 %v11461, %v11462
    %v11464 = vsel %vm11227, %v11374, 0.0
    %v11465 = vadd.f32 %v11463, %v11464
    %v11466 = vsel %vm11227, %v11375, 0.0
    %v11467 = vadd.f32 %v11465, %v11466
    %v11468 = vsel %vm11227, %v11376, 0.0
    %v11469 = vadd.f32 %v11467, %v11468
    %v11470 = vsel %vm11227, %v11377, 0.0
    %v11471 = vadd.f32 %v11469, %v11470
    %v11472 = vsel %vm11227, %v11378, 0.0
    %v11473 = vadd.f32 %v11471, %v11472
    %v11474 = vsel %vm11227, %v11379, 0.0
    %v11475 = vadd.f32 %v11473, %v11474
    %v11476 = vsel %vm11227, %v11380, 0.0
    %v11477 = vadd.f32 %v11475, %v11476
    %v11478 = vsel %vm11227, %v11381, 0.0
    %v11479 = vadd.f32 %v11477, %v11478
    %v11480 = vsel %vm11227, %v11382, 0.0
    %v11481 = vadd.f32 %v11479, %v11480
    %v11482 = vsel %vm11227, %v11383, 0.0
    %v11483 = vadd.f32 %v11481, %v11482
    %v11484 = vsel %vm11227, %v11384, 0.0
    %v11485 = vadd.f32 %v11483, %v11484
    %v11486 = vsel %vm11227, %v11385, 0.0
    %v11487 = vadd.f32 %v11485, %v11486
    %v11488 = vsel %vm11227, %v11386, 0.0
    %v11489 = vadd.f32 %v11487, %v11488
    %v11490 = vsel %vm11227, %v11387, 0.0
    %v11491 = vadd.f32 %v11489, %v11490
    %v11492 = vsel %vm11227, %v11388, 0.0
    %v11493 = vadd.f32 %v11491, %v11492
    %v11494 = vsel %vm11227, %v11389, 0.0
    %v11495 = vadd.f32 %v11493, %v11494
    %v11496 = vsel %vm11227, %v11390, 0.0
    %v11497 = vadd.f32 %v11495, %v11496
    %11498 = vadd.xlane.f32.xlu0 %v11497
    %v11499 = vpop.xlane.xlu0 %11498
    %v11501 = vrot.slane %v11499, 4
    %v11503 = vsel %vm11227, %v11336, %v11501
    %vm11504 = vcmask 7168
    %11505 = vst.msk [vmem:[%s5] sm:$0xff] %vm11504, %v11503
    // Predicated region
    $region34: #{tpu_custom_call.1} parent=1 // pred_check
      _
    $region35: #{tpu_custom_call.1} parent=1 // pred_check_branch
      %11507 = sbr.rel (0) target = $region37
    $region36: #{tpu_custom_call.1} parent=1 // pred_region
      _
    $region37: #{tpu_custom_call.1} parent=1 // pred_fallthru
      _
    // Predicated region
    $region38: #{tpu_custom_call.1} parent=1 // pred_check
      _
    $region39: #{tpu_custom_call.1} parent=1 // pred_check_branch
      %11509 = sbr.rel (0) target = $region41
    $region40: #{tpu_custom_call.1} parent=1 // pred_region
      _
    $region41: #{tpu_custom_call.1} parent=1 // pred_fallthru
      _
    %11510 = vsyncpa [#allocation5], 1
    %11511 = vsyncpa [#allocation7], 1

</llo_original>
